<compile_context>
chip_gen: v7x
topology: tpu7x:2x2x1
jax: 0.10.0
libtpu: 0.0.40
codegen_flags: <defaults>
</compile_context>

<pallas_src>
import numpy as np
import jax
import jax.numpy as jnp
from jax import lax
from jax.experimental import pallas as pl
from jax.experimental.pallas import tpu as pltpu

CONV_DTYPE = jnp.bfloat16   # jnp.float32 for strict 1e-4 numerics
BLOCK_B = 128               # samples per grid step (lane dim -> must be k*128)
_NEG = -1e30                # "bias" of padded (non-existent) classes


def _round_up(v, m):
    return ((v + m - 1) // m) * m


# Static selection tensor S[w, j, ry, rc, ky, kx] = 1 iff the conv tap (ky,kx) of
# pooled column j and pool phase w = 2*dy+dx reads padded-image pixel (ry, rc)
# of the 6x24 input slab belonging to one pooled output row.
_S = np.zeros((4, 10, 6, 24, 5, 5), np.float32)
for _w in range(4):
    _dy, _dx = divmod(_w, 2)
    for _ky in range(5):
        for _kx in range(5):
            for _j in range(10):
                _S[_w, _j, _dy + _ky, 2 * _j + _dx + _kx, _ky, _kx] = 1.0


# ----------------------------- Pallas kernel --------------------------------
def conv_model_kernel(x_ref, w3_ref, bc_ref, wf_ref, bf_ref, o_ref):
    # x_ref : (576, B)       padded 24x24 image, pixel-in-sublane, sample-in-lane
    # w3_ref: (640, 144)     block-Toeplitz conv weights: row = w*160 + c*10 + j
    # bc_ref: (160, 1)       conv bias, repeated per pooled column (c*10 + j)
    # wf_ref: (10, 16, 160)  FC weights per pooled row i; classes padded 10 -> 16
    # bf_ref: (16, 1)        FC bias; padded classes hold -1e30
    # o_ref : (16, B)        log-softmax output block (rows >= 10 are discarded)
    b = o_ref.shape[1]
    w3 = w3_ref[...]                                        # (640, 144)
    bc = bc_ref[...]                                        # (160, 1) f32

    y = jnp.zeros((16, b), jnp.float32)
    for i in range(10):                                     # pooled output rows
        # 6 padded-image rows feeding pooled row i — aligned static slice.
        xr = x_ref[i * 48:i * 48 + 144, :]                  # (144, B)
        # Conv at both row parities / both column parities in one matmul.
        ci = jnp.dot(w3, xr, preferred_element_type=jnp.float32)   # (640, B)
        # 2x2 max-pool = elementwise max of the four contiguous phase groups.
        pooled = jnp.maximum(jnp.maximum(ci[0:160], ci[160:320]),
                             jnp.maximum(ci[320:480], ci[480:640]))  # (160, B)
        # per-channel bias + ReLU (commute with the max / monotone).
        h = jnp.maximum(pooled + bc, 0.0)                   # (160, B) f32
        # FC contribution of this pooled row: (16,160) @ (160,B) -> (16,B).
        y = y + jnp.dot(wf_ref[i], h, preferred_element_type=jnp.float32)

    y = y + bf_ref[...]                                     # padded classes -> -1e30
    # log_softmax over the (padded) class axis (sublanes).
    m = jnp.max(y, axis=0, keepdims=True)
    z = y - m
    lse = jnp.log(jnp.sum(jnp.exp(z), axis=0, keepdims=True))
    o_ref[...] = z - lse


# ----------------------------- JAX glue --------------------------------------
@jax.jit
def conv_model_forward(x, conv_w, conv_b, fc_w, fc_b):
    """x: (N,20,20); conv_w: (16,1,5,5); conv_b: (16,); fc_w: (10,1600); fc_b: (10,).
    Returns (N,10) log-probabilities, matching the PyTorch module."""
    n = x.shape[0]
    npad = _round_up(n, BLOCK_B)

    # Raw input only: pad samples, pad spatially by 2, flatten, put samples in lanes.
    xp = jnp.pad(x.astype(CONV_DTYPE), ((0, npad - n), (2, 2), (2, 2)))  # (npad,24,24)
    x2 = xp.reshape(npad, 576).T                                         # (576, npad)

    # Block-Toeplitz conv weights: W3[(w,c,j), (ry,rc)] = conv_w[c, ry-dy, rc-2j-dx].
    w3 = jnp.einsum("cab,wjrsab->wcjrs",
                    conv_w.reshape(16, 5, 5).astype(jnp.float32),
                    jnp.asarray(_S)).reshape(640, 144).astype(CONV_DTYPE)

    bc2 = jnp.repeat(conv_b.astype(jnp.float32), 10).reshape(160, 1)     # (c*10+j, 1)

    # FC weights regrouped per pooled row i: Wf[i, o, c*10+j] = fc_w[o, c*100+i*10+j].
    wf2 = fc_w.astype(jnp.float32).reshape(10, 16, 10, 10)               # (o, c, i, j)
    wf2 = wf2.transpose(2, 0, 1, 3).reshape(10, 10, 160)                 # (i, o, c*10+j)
    wf2 = jnp.pad(wf2, ((0, 0), (0, 6), (0, 0)))                         # classes -> 16

    bf2 = jnp.full((16, 1), _NEG, jnp.float32).at[:10, 0].set(
        fc_b.astype(jnp.float32))

    grid = (npad // BLOCK_B,)
    out = pl.pallas_call(
        conv_model_kernel,
        out_shape=jax.ShapeDtypeStruct((16, npad), jnp.float32),
        grid_spec=pltpu.PrefetchScalarGridSpec(
            num_scalar_prefetch=0,
            grid=grid,
            in_specs=[
                pl.BlockSpec((576, BLOCK_B), lambda i: (0, i)),
                pl.BlockSpec((640, 144), lambda i: (0, 0)),
                pl.BlockSpec((160, 1), lambda i: (0, 0)),
                pl.BlockSpec((10, 16, 160), lambda i: (0, 0, 0)),
                pl.BlockSpec((16, 1), lambda i: (0, 0)),
            ],
            out_specs=pl.BlockSpec((16, BLOCK_B), lambda i: (0, i)),
        ),
        compiler_params=pltpu.CompilerParams(
            dimension_semantics=("parallel",),
            vmem_limit_bytes=32 * 1024 * 1024,
        ),
    )(x2, w3, bc2, wf2, bf2)
    return out[:10, :n].T


# -------------------------- pure-JAX reference --------------------------------
def reference(x, conv_w, conv_b, fc_w, fc_b):
    xi = x[:, None, :, :]                                   # NCHW
    conv = lax.conv_general_dilated(
        xi, conv_w, window_strides=(1, 1), padding=((2, 2), (2, 2)),
        dimension_numbers=("NCHW", "OIHW", "NCHW"))
    conv = conv + conv_b[None, :, None, None]
    r = jnp.maximum(conv, 0.0)
    p = lax.reduce_window(r, -jnp.inf, lax.max,
                          (1, 1, 2, 2), (1, 1, 2, 2), "VALID")
    flat = p.reshape(x.shape[0], 1600)
    y = flat @ fc_w.T + fc_b
    return jax.nn.log_softmax(y, axis=1)


# ------------------------------- main -----------------------------------------
if __name__ == "__main__":
    key = jax.random.PRNGKey(0)
    kx, kw1, kb1, kw2, kb2 = jax.random.split(key, 5)

    N = 520  # -> npad = 640, grid = 5: exercises padding and keeps 2 TCs busy
    x = jax.random.normal(kx, (N, 20, 20), jnp.float32)

    # Deterministic parameter init (PyTorch-like uniform bounds).
    bound_c = 1.0 / 5.0                           # 1/sqrt(1*5*5)
    conv_w = jax.random.uniform(kw1, (16, 1, 5, 5), jnp.float32, -bound_c, bound_c)
    conv_b = jax.random.uniform(kb1, (16,), jnp.float32, -bound_c, bound_c)
    bound_f = 1.0 / (1600.0 ** 0.5)
    fc_w = jax.random.uniform(kw2, (10, 1600), jnp.float32, -bound_f, bound_f)
    fc_b = jax.random.uniform(kb2, (10,), jnp.float32, -bound_f, bound_f)

    out = jax.block_until_ready(conv_model_forward(x, conv_w, conv_b, fc_w, fc_b))

    ref = reference(x, conv_w, conv_b, fc_w, fc_b)
    tol = 2e-2 if CONV_DTYPE == jnp.bfloat16 else 1e-4
    assert out.shape == (N, 10)
    assert bool(jnp.allclose(out, ref, rtol=tol, atol=tol)), "kernel != reference"

    print("KERNEL_OK")
</pallas_src>

<mosaic_0001>
module attributes {stable_mosaic.version = 11 : i64} {
  func.func @conv_model_kernel(%arg0: i32, %arg1: memref<576x128xbf16, #tpu.memory_space<vmem>>, %arg2: memref<640x144xbf16, #tpu.memory_space<vmem>>, %arg3: memref<160x1xf32, #tpu.memory_space<vmem>>, %arg4: memref<10x16x160xf32, #tpu.memory_space<vmem>>, %arg5: memref<16x1xf32, #tpu.memory_space<vmem>>, %arg6: memref<16x128xf32, #tpu.memory_space<vmem>>) attributes {dimension_semantics = [#tpu.dimension_semantics<parallel>], iteration_bounds = array<i64: 5>, scalar_prefetch = 0 : i64, scratch_operands = 0 : i64, tpu.core_type = #tpu.core_type<tc>, window_params = [{transform_indices = @transform_0, window_bounds = array<i64: 576, 128>}, {pipeline_mode = #tpu.pipeline_mode<synchronous>, transform_indices = @transform_1, window_bounds = array<i64: 640, 144>}, {pipeline_mode = #tpu.pipeline_mode<synchronous>, transform_indices = @transform_2, window_bounds = array<i64: 160, 1>}, {pipeline_mode = #tpu.pipeline_mode<synchronous>, transform_indices = @transform_3, window_bounds = array<i64: 10, 16, 160>}, {pipeline_mode = #tpu.pipeline_mode<synchronous>, transform_indices = @transform_4, window_bounds = array<i64: 16, 1>}, {transform_indices = @transform_5, window_bounds = array<i64: 16, 128>}]} {
    %c0 = arith.constant 0 : index
    %c0_0 = arith.constant 0 : index
    %0 = vector.load %arg2[%c0, %c0_0] : memref<640x144xbf16, #tpu.memory_space<vmem>>, vector<640x144xbf16>
    %c0_1 = arith.constant 0 : index
    %c0_2 = arith.constant 0 : index
    %1 = vector.load %arg3[%c0_1, %c0_2] : memref<160x1xf32, #tpu.memory_space<vmem>>, vector<160x1xf32>
    %cst = arith.constant 0.000000e+00 : f32
    %2 = vector.broadcast %cst : f32 to vector<16x128xf32>
    %c0_3 = arith.constant 0 : index
    %c0_4 = arith.constant 0 : index
    %3 = vector.load %arg1[%c0_3, %c0_4] : memref<576x128xbf16, #tpu.memory_space<vmem>>, vector<144x128xbf16>
    %cst_5 = arith.constant dense<0.000000e+00> : vector<640x128xf32>
    %4 = tpu.matmul %0, %3, %cst_5 {dimension_numbers = #tpu.dot_dimension_numbers<[1], [0], [0], [1], [0, 0, 1, 1], [], []>} : vector<640x144xbf16>, vector<144x128xbf16>, vector<640x128xf32> -> vector<640x128xf32>
    %5 = vector.extract_strided_slice %4 {offsets = [0, 0], sizes = [160, 128], strides = [1, 1]} : vector<640x128xf32> to vector<160x128xf32>
    %6 = vector.extract_strided_slice %4 {offsets = [160, 0], sizes = [160, 128], strides = [1, 1]} : vector<640x128xf32> to vector<160x128xf32>
    %7 = arith.maximumf %5, %6 : vector<160x128xf32>
    %8 = vector.extract_strided_slice %4 {offsets = [320, 0], sizes = [160, 128], strides = [1, 1]} : vector<640x128xf32> to vector<160x128xf32>
    %9 = vector.extract_strided_slice %4 {offsets = [480, 0], sizes = [160, 128], strides = [1, 1]} : vector<640x128xf32> to vector<160x128xf32>
    %10 = arith.maximumf %8, %9 : vector<160x128xf32>
    %11 = arith.maximumf %7, %10 : vector<160x128xf32>
    %12 = vector.broadcast %1 : vector<160x1xf32> to vector<160x128xf32>
    %13 = arith.addf %11, %12 : vector<160x128xf32>
    %cst_6 = arith.constant 0.000000e+00 : f32
    %14 = vector.broadcast %cst_6 : f32 to vector<160x128xf32>
    %15 = arith.maximumf %13, %14 : vector<160x128xf32>
    %c0_7 = arith.constant 0 : index
    %c0_8 = arith.constant 0 : index
    %c0_9 = arith.constant 0 : index
    %16 = vector.load %arg4[%c0_7, %c0_8, %c0_9] : memref<10x16x160xf32, #tpu.memory_space<vmem>>, vector<1x16x160xf32>
    %17 = vector.shape_cast %16 : vector<1x16x160xf32> to vector<16x160xf32>
    %cst_10 = arith.constant dense<0.000000e+00> : vector<16x128xf32>
    %18 = tpu.matmul %17, %15, %cst_10 {dimension_numbers = #tpu.dot_dimension_numbers<[1], [0], [0], [1], [0, 0, 1, 1], [], []>} : vector<16x160xf32>, vector<160x128xf32>, vector<16x128xf32> -> vector<16x128xf32>
    %19 = arith.addf %2, %18 : vector<16x128xf32>
    %c48 = arith.constant 48 : index
    %c0_11 = arith.constant 0 : index
    %20 = vector.load %arg1[%c48, %c0_11] : memref<576x128xbf16, #tpu.memory_space<vmem>>, vector<144x128xbf16>
    %cst_12 = arith.constant dense<0.000000e+00> : vector<640x128xf32>
    %21 = tpu.matmul %0, %20, %cst_12 {dimension_numbers = #tpu.dot_dimension_numbers<[1], [0], [0], [1], [0, 0, 1, 1], [], []>} : vector<640x144xbf16>, vector<144x128xbf16>, vector<640x128xf32> -> vector<640x128xf32>
    %22 = vector.extract_strided_slice %21 {offsets = [0, 0], sizes = [160, 128], strides = [1, 1]} : vector<640x128xf32> to vector<160x128xf32>
    %23 = vector.extract_strided_slice %21 {offsets = [160, 0], sizes = [160, 128], strides = [1, 1]} : vector<640x128xf32> to vector<160x128xf32>
    %24 = arith.maximumf %22, %23 : vector<160x128xf32>
    %25 = vector.extract_strided_slice %21 {offsets = [320, 0], sizes = [160, 128], strides = [1, 1]} : vector<640x128xf32> to vector<160x128xf32>
    %26 = vector.extract_strided_slice %21 {offsets = [480, 0], sizes = [160, 128], strides = [1, 1]} : vector<640x128xf32> to vector<160x128xf32>
    %27 = arith.maximumf %25, %26 : vector<160x128xf32>
    %28 = arith.maximumf %24, %27 : vector<160x128xf32>
    %29 = vector.broadcast %1 : vector<160x1xf32> to vector<160x128xf32>
    %30 = arith.addf %28, %29 : vector<160x128xf32>
    %cst_13 = arith.constant 0.000000e+00 : f32
    %31 = vector.broadcast %cst_13 : f32 to vector<160x128xf32>
    %32 = arith.maximumf %30, %31 : vector<160x128xf32>
    %c1 = arith.constant 1 : index
    %c0_14 = arith.constant 0 : index
    %c0_15 = arith.constant 0 : index
    %33 = vector.load %arg4[%c1, %c0_14, %c0_15] : memref<10x16x160xf32, #tpu.memory_space<vmem>>, vector<1x16x160xf32>
    %34 = vector.shape_cast %33 : vector<1x16x160xf32> to vector<16x160xf32>
    %cst_16 = arith.constant dense<0.000000e+00> : vector<16x128xf32>
    %35 = tpu.matmul %34, %32, %cst_16 {dimension_numbers = #tpu.dot_dimension_numbers<[1], [0], [0], [1], [0, 0, 1, 1], [], []>} : vector<16x160xf32>, vector<160x128xf32>, vector<16x128xf32> -> vector<16x128xf32>
    %36 = arith.addf %19, %35 : vector<16x128xf32>
    %c96 = arith.constant 96 : index
    %c0_17 = arith.constant 0 : index
    %37 = vector.load %arg1[%c96, %c0_17] : memref<576x128xbf16, #tpu.memory_space<vmem>>, vector<144x128xbf16>
    %cst_18 = arith.constant dense<0.000000e+00> : vector<640x128xf32>
    %38 = tpu.matmul %0, %37, %cst_18 {dimension_numbers = #tpu.dot_dimension_numbers<[1], [0], [0], [1], [0, 0, 1, 1], [], []>} : vector<640x144xbf16>, vector<144x128xbf16>, vector<640x128xf32> -> vector<640x128xf32>
    %39 = vector.extract_strided_slice %38 {offsets = [0, 0], sizes = [160, 128], strides = [1, 1]} : vector<640x128xf32> to vector<160x128xf32>
    %40 = vector.extract_strided_slice %38 {offsets = [160, 0], sizes = [160, 128], strides = [1, 1]} : vector<640x128xf32> to vector<160x128xf32>
    %41 = arith.maximumf %39, %40 : vector<160x128xf32>
    %42 = vector.extract_strided_slice %38 {offsets = [320, 0], sizes = [160, 128], strides = [1, 1]} : vector<640x128xf32> to vector<160x128xf32>
    %43 = vector.extract_strided_slice %38 {offsets = [480, 0], sizes = [160, 128], strides = [1, 1]} : vector<640x128xf32> to vector<160x128xf32>
    %44 = arith.maximumf %42, %43 : vector<160x128xf32>
    %45 = arith.maximumf %41, %44 : vector<160x128xf32>
    %46 = vector.broadcast %1 : vector<160x1xf32> to vector<160x128xf32>
    %47 = arith.addf %45, %46 : vector<160x128xf32>
    %cst_19 = arith.constant 0.000000e+00 : f32
    %48 = vector.broadcast %cst_19 : f32 to vector<160x128xf32>
    %49 = arith.maximumf %47, %48 : vector<160x128xf32>
    %c2 = arith.constant 2 : index
    %c0_20 = arith.constant 0 : index
    %c0_21 = arith.constant 0 : index
    %50 = vector.load %arg4[%c2, %c0_20, %c0_21] : memref<10x16x160xf32, #tpu.memory_space<vmem>>, vector<1x16x160xf32>
    %51 = vector.shape_cast %50 : vector<1x16x160xf32> to vector<16x160xf32>
    %cst_22 = arith.constant dense<0.000000e+00> : vector<16x128xf32>
    %52 = tpu.matmul %51, %49, %cst_22 {dimension_numbers = #tpu.dot_dimension_numbers<[1], [0], [0], [1], [0, 0, 1, 1], [], []>} : vector<16x160xf32>, vector<160x128xf32>, vector<16x128xf32> -> vector<16x128xf32>
    %53 = arith.addf %36, %52 : vector<16x128xf32>
    %c144 = arith.constant 144 : index
    %c0_23 = arith.constant 0 : index
    %54 = vector.load %arg1[%c144, %c0_23] : memref<576x128xbf16, #tpu.memory_space<vmem>>, vector<144x128xbf16>
    %cst_24 = arith.constant dense<0.000000e+00> : vector<640x128xf32>
    %55 = tpu.matmul %0, %54, %cst_24 {dimension_numbers = #tpu.dot_dimension_numbers<[1], [0], [0], [1], [0, 0, 1, 1], [], []>} : vector<640x144xbf16>, vector<144x128xbf16>, vector<640x128xf32> -> vector<640x128xf32>
    %56 = vector.extract_strided_slice %55 {offsets = [0, 0], sizes = [160, 128], strides = [1, 1]} : vector<640x128xf32> to vector<160x128xf32>
    %57 = vector.extract_strided_slice %55 {offsets = [160, 0], sizes = [160, 128], strides = [1, 1]} : vector<640x128xf32> to vector<160x128xf32>
    %58 = arith.maximumf %56, %57 : vector<160x128xf32>
    %59 = vector.extract_strided_slice %55 {offsets = [320, 0], sizes = [160, 128], strides = [1, 1]} : vector<640x128xf32> to vector<160x128xf32>
    %60 = vector.extract_strided_slice %55 {offsets = [480, 0], sizes = [160, 128], strides = [1, 1]} : vector<640x128xf32> to vector<160x128xf32>
    %61 = arith.maximumf %59, %60 : vector<160x128xf32>
    %62 = arith.maximumf %58, %61 : vector<160x128xf32>
    %63 = vector.broadcast %1 : vector<160x1xf32> to vector<160x128xf32>
    %64 = arith.addf %62, %63 : vector<160x128xf32>
    %cst_25 = arith.constant 0.000000e+00 : f32
    %65 = vector.broadcast %cst_25 : f32 to vector<160x128xf32>
    %66 = arith.maximumf %64, %65 : vector<160x128xf32>
    %c3 = arith.constant 3 : index
    %c0_26 = arith.constant 0 : index
    %c0_27 = arith.constant 0 : index
    %67 = vector.load %arg4[%c3, %c0_26, %c0_27] : memref<10x16x160xf32, #tpu.memory_space<vmem>>, vector<1x16x160xf32>
    %68 = vector.shape_cast %67 : vector<1x16x160xf32> to vector<16x160xf32>
    %cst_28 = arith.constant dense<0.000000e+00> : vector<16x128xf32>
    %69 = tpu.matmul %68, %66, %cst_28 {dimension_numbers = #tpu.dot_dimension_numbers<[1], [0], [0], [1], [0, 0, 1, 1], [], []>} : vector<16x160xf32>, vector<160x128xf32>, vector<16x128xf32> -> vector<16x128xf32>
    %70 = arith.addf %53, %69 : vector<16x128xf32>
    %c192 = arith.constant 192 : index
    %c0_29 = arith.constant 0 : index
    %71 = vector.load %arg1[%c192, %c0_29] : memref<576x128xbf16, #tpu.memory_space<vmem>>, vector<144x128xbf16>
    %cst_30 = arith.constant dense<0.000000e+00> : vector<640x128xf32>
    %72 = tpu.matmul %0, %71, %cst_30 {dimension_numbers = #tpu.dot_dimension_numbers<[1], [0], [0], [1], [0, 0, 1, 1], [], []>} : vector<640x144xbf16>, vector<144x128xbf16>, vector<640x128xf32> -> vector<640x128xf32>
    %73 = vector.extract_strided_slice %72 {offsets = [0, 0], sizes = [160, 128], strides = [1, 1]} : vector<640x128xf32> to vector<160x128xf32>
    %74 = vector.extract_strided_slice %72 {offsets = [160, 0], sizes = [160, 128], strides = [1, 1]} : vector<640x128xf32> to vector<160x128xf32>
    %75 = arith.maximumf %73, %74 : vector<160x128xf32>
    %76 = vector.extract_strided_slice %72 {offsets = [320, 0], sizes = [160, 128], strides = [1, 1]} : vector<640x128xf32> to vector<160x128xf32>
    %77 = vector.extract_strided_slice %72 {offsets = [480, 0], sizes = [160, 128], strides = [1, 1]} : vector<640x128xf32> to vector<160x128xf32>
    %78 = arith.maximumf %76, %77 : vector<160x128xf32>
    %79 = arith.maximumf %75, %78 : vector<160x128xf32>
    %80 = vector.broadcast %1 : vector<160x1xf32> to vector<160x128xf32>
    %81 = arith.addf %79, %80 : vector<160x128xf32>
    %cst_31 = arith.constant 0.000000e+00 : f32
    %82 = vector.broadcast %cst_31 : f32 to vector<160x128xf32>
    %83 = arith.maximumf %81, %82 : vector<160x128xf32>
    %c4 = arith.constant 4 : index
    %c0_32 = arith.constant 0 : index
    %c0_33 = arith.constant 0 : index
    %84 = vector.load %arg4[%c4, %c0_32, %c0_33] : memref<10x16x160xf32, #tpu.memory_space<vmem>>, vector<1x16x160xf32>
    %85 = vector.shape_cast %84 : vector<1x16x160xf32> to vector<16x160xf32>
    %cst_34 = arith.constant dense<0.000000e+00> : vector<16x128xf32>
    %86 = tpu.matmul %85, %83, %cst_34 {dimension_numbers = #tpu.dot_dimension_numbers<[1], [0], [0], [1], [0, 0, 1, 1], [], []>} : vector<16x160xf32>, vector<160x128xf32>, vector<16x128xf32> -> vector<16x128xf32>
    %87 = arith.addf %70, %86 : vector<16x128xf32>
    %c240 = arith.constant 240 : index
    %c0_35 = arith.constant 0 : index
    %88 = vector.load %arg1[%c240, %c0_35] : memref<576x128xbf16, #tpu.memory_space<vmem>>, vector<144x128xbf16>
    %cst_36 = arith.constant dense<0.000000e+00> : vector<640x128xf32>
    %89 = tpu.matmul %0, %88, %cst_36 {dimension_numbers = #tpu.dot_dimension_numbers<[1], [0], [0], [1], [0, 0, 1, 1], [], []>} : vector<640x144xbf16>, vector<144x128xbf16>, vector<640x128xf32> -> vector<640x128xf32>
    %90 = vector.extract_strided_slice %89 {offsets = [0, 0], sizes = [160, 128], strides = [1, 1]} : vector<640x128xf32> to vector<160x128xf32>
    %91 = vector.extract_strided_slice %89 {offsets = [160, 0], sizes = [160, 128], strides = [1, 1]} : vector<640x128xf32> to vector<160x128xf32>
    %92 = arith.maximumf %90, %91 : vector<160x128xf32>
    %93 = vector.extract_strided_slice %89 {offsets = [320, 0], sizes = [160, 128], strides = [1, 1]} : vector<640x128xf32> to vector<160x128xf32>
    %94 = vector.extract_strided_slice %89 {offsets = [480, 0], sizes = [160, 128], strides = [1, 1]} : vector<640x128xf32> to vector<160x128xf32>
    %95 = arith.maximumf %93, %94 : vector<160x128xf32>
    %96 = arith.maximumf %92, %95 : vector<160x128xf32>
    %97 = vector.broadcast %1 : vector<160x1xf32> to vector<160x128xf32>
    %98 = arith.addf %96, %97 : vector<160x128xf32>
    %cst_37 = arith.constant 0.000000e+00 : f32
    %99 = vector.broadcast %cst_37 : f32 to vector<160x128xf32>
    %100 = arith.maximumf %98, %99 : vector<160x128xf32>
    %c5 = arith.constant 5 : index
    %c0_38 = arith.constant 0 : index
    %c0_39 = arith.constant 0 : index
    %101 = vector.load %arg4[%c5, %c0_38, %c0_39] : memref<10x16x160xf32, #tpu.memory_space<vmem>>, vector<1x16x160xf32>
    %102 = vector.shape_cast %101 : vector<1x16x160xf32> to vector<16x160xf32>
    %cst_40 = arith.constant dense<0.000000e+00> : vector<16x128xf32>
    %103 = tpu.matmul %102, %100, %cst_40 {dimension_numbers = #tpu.dot_dimension_numbers<[1], [0], [0], [1], [0, 0, 1, 1], [], []>} : vector<16x160xf32>, vector<160x128xf32>, vector<16x128xf32> -> vector<16x128xf32>
    %104 = arith.addf %87, %103 : vector<16x128xf32>
    %c288 = arith.constant 288 : index
    %c0_41 = arith.constant 0 : index
    %105 = vector.load %arg1[%c288, %c0_41] : memref<576x128xbf16, #tpu.memory_space<vmem>>, vector<144x128xbf16>
    %cst_42 = arith.constant dense<0.000000e+00> : vector<640x128xf32>
    %106 = tpu.matmul %0, %105, %cst_42 {dimension_numbers = #tpu.dot_dimension_numbers<[1], [0], [0], [1], [0, 0, 1, 1], [], []>} : vector<640x144xbf16>, vector<144x128xbf16>, vector<640x128xf32> -> vector<640x128xf32>
    %107 = vector.extract_strided_slice %106 {offsets = [0, 0], sizes = [160, 128], strides = [1, 1]} : vector<640x128xf32> to vector<160x128xf32>
    %108 = vector.extract_strided_slice %106 {offsets = [160, 0], sizes = [160, 128], strides = [1, 1]} : vector<640x128xf32> to vector<160x128xf32>
    %109 = arith.maximumf %107, %108 : vector<160x128xf32>
    %110 = vector.extract_strided_slice %106 {offsets = [320, 0], sizes = [160, 128], strides = [1, 1]} : vector<640x128xf32> to vector<160x128xf32>
    %111 = vector.extract_strided_slice %106 {offsets = [480, 0], sizes = [160, 128], strides = [1, 1]} : vector<640x128xf32> to vector<160x128xf32>
    %112 = arith.maximumf %110, %111 : vector<160x128xf32>
    %113 = arith.maximumf %109, %112 : vector<160x128xf32>
    %114 = vector.broadcast %1 : vector<160x1xf32> to vector<160x128xf32>
    %115 = arith.addf %113, %114 : vector<160x128xf32>
    %cst_43 = arith.constant 0.000000e+00 : f32
    %116 = vector.broadcast %cst_43 : f32 to vector<160x128xf32>
    %117 = arith.maximumf %115, %116 : vector<160x128xf32>
    %c6 = arith.constant 6 : index
    %c0_44 = arith.constant 0 : index
    %c0_45 = arith.constant 0 : index
    %118 = vector.load %arg4[%c6, %c0_44, %c0_45] : memref<10x16x160xf32, #tpu.memory_space<vmem>>, vector<1x16x160xf32>
    %119 = vector.shape_cast %118 : vector<1x16x160xf32> to vector<16x160xf32>
    %cst_46 = arith.constant dense<0.000000e+00> : vector<16x128xf32>
    %120 = tpu.matmul %119, %117, %cst_46 {dimension_numbers = #tpu.dot_dimension_numbers<[1], [0], [0], [1], [0, 0, 1, 1], [], []>} : vector<16x160xf32>, vector<160x128xf32>, vector<16x128xf32> -> vector<16x128xf32>
    %121 = arith.addf %104, %120 : vector<16x128xf32>
    %c336 = arith.constant 336 : index
    %c0_47 = arith.constant 0 : index
    %122 = vector.load %arg1[%c336, %c0_47] : memref<576x128xbf16, #tpu.memory_space<vmem>>, vector<144x128xbf16>
    %cst_48 = arith.constant dense<0.000000e+00> : vector<640x128xf32>
    %123 = tpu.matmul %0, %122, %cst_48 {dimension_numbers = #tpu.dot_dimension_numbers<[1], [0], [0], [1], [0, 0, 1, 1], [], []>} : vector<640x144xbf16>, vector<144x128xbf16>, vector<640x128xf32> -> vector<640x128xf32>
    %124 = vector.extract_strided_slice %123 {offsets = [0, 0], sizes = [160, 128], strides = [1, 1]} : vector<640x128xf32> to vector<160x128xf32>
    %125 = vector.extract_strided_slice %123 {offsets = [160, 0], sizes = [160, 128], strides = [1, 1]} : vector<640x128xf32> to vector<160x128xf32>
    %126 = arith.maximumf %124, %125 : vector<160x128xf32>
    %127 = vector.extract_strided_slice %123 {offsets = [320, 0], sizes = [160, 128], strides = [1, 1]} : vector<640x128xf32> to vector<160x128xf32>
    %128 = vector.extract_strided_slice %123 {offsets = [480, 0], sizes = [160, 128], strides = [1, 1]} : vector<640x128xf32> to vector<160x128xf32>
    %129 = arith.maximumf %127, %128 : vector<160x128xf32>
    %130 = arith.maximumf %126, %129 : vector<160x128xf32>
    %131 = vector.broadcast %1 : vector<160x1xf32> to vector<160x128xf32>
    %132 = arith.addf %130, %131 : vector<160x128xf32>
    %cst_49 = arith.constant 0.000000e+00 : f32
    %133 = vector.broadcast %cst_49 : f32 to vector<160x128xf32>
    %134 = arith.maximumf %132, %133 : vector<160x128xf32>
    %c7 = arith.constant 7 : index
    %c0_50 = arith.constant 0 : index
    %c0_51 = arith.constant 0 : index
    %135 = vector.load %arg4[%c7, %c0_50, %c0_51] : memref<10x16x160xf32, #tpu.memory_space<vmem>>, vector<1x16x160xf32>
    %136 = vector.shape_cast %135 : vector<1x16x160xf32> to vector<16x160xf32>
    %cst_52 = arith.constant dense<0.000000e+00> : vector<16x128xf32>
    %137 = tpu.matmul %136, %134, %cst_52 {dimension_numbers = #tpu.dot_dimension_numbers<[1], [0], [0], [1], [0, 0, 1, 1], [], []>} : vector<16x160xf32>, vector<160x128xf32>, vector<16x128xf32> -> vector<16x128xf32>
    %138 = arith.addf %121, %137 : vector<16x128xf32>
    %c384 = arith.constant 384 : index
    %c0_53 = arith.constant 0 : index
    %139 = vector.load %arg1[%c384, %c0_53] : memref<576x128xbf16, #tpu.memory_space<vmem>>, vector<144x128xbf16>
    %cst_54 = arith.constant dense<0.000000e+00> : vector<640x128xf32>
    %140 = tpu.matmul %0, %139, %cst_54 {dimension_numbers = #tpu.dot_dimension_numbers<[1], [0], [0], [1], [0, 0, 1, 1], [], []>} : vector<640x144xbf16>, vector<144x128xbf16>, vector<640x128xf32> -> vector<640x128xf32>
    %141 = vector.extract_strided_slice %140 {offsets = [0, 0], sizes = [160, 128], strides = [1, 1]} : vector<640x128xf32> to vector<160x128xf32>
    %142 = vector.extract_strided_slice %140 {offsets = [160, 0], sizes = [160, 128], strides = [1, 1]} : vector<640x128xf32> to vector<160x128xf32>
    %143 = arith.maximumf %141, %142 : vector<160x128xf32>
    %144 = vector.extract_strided_slice %140 {offsets = [320, 0], sizes = [160, 128], strides = [1, 1]} : vector<640x128xf32> to vector<160x128xf32>
    %145 = vector.extract_strided_slice %140 {offsets = [480, 0], sizes = [160, 128], strides = [1, 1]} : vector<640x128xf32> to vector<160x128xf32>
    %146 = arith.maximumf %144, %145 : vector<160x128xf32>
    %147 = arith.maximumf %143, %146 : vector<160x128xf32>
    %148 = vector.broadcast %1 : vector<160x1xf32> to vector<160x128xf32>
    %149 = arith.addf %147, %148 : vector<160x128xf32>
    %cst_55 = arith.constant 0.000000e+00 : f32
    %150 = vector.broadcast %cst_55 : f32 to vector<160x128xf32>
    %151 = arith.maximumf %149, %150 : vector<160x128xf32>
    %c8 = arith.constant 8 : index
    %c0_56 = arith.constant 0 : index
    %c0_57 = arith.constant 0 : index
    %152 = vector.load %arg4[%c8, %c0_56, %c0_57] : memref<10x16x160xf32, #tpu.memory_space<vmem>>, vector<1x16x160xf32>
    %153 = vector.shape_cast %152 : vector<1x16x160xf32> to vector<16x160xf32>
    %cst_58 = arith.constant dense<0.000000e+00> : vector<16x128xf32>
    %154 = tpu.matmul %153, %151, %cst_58 {dimension_numbers = #tpu.dot_dimension_numbers<[1], [0], [0], [1], [0, 0, 1, 1], [], []>} : vector<16x160xf32>, vector<160x128xf32>, vector<16x128xf32> -> vector<16x128xf32>
    %155 = arith.addf %138, %154 : vector<16x128xf32>
    %c432 = arith.constant 432 : index
    %c0_59 = arith.constant 0 : index
    %156 = vector.load %arg1[%c432, %c0_59] : memref<576x128xbf16, #tpu.memory_space<vmem>>, vector<144x128xbf16>
    %cst_60 = arith.constant dense<0.000000e+00> : vector<640x128xf32>
    %157 = tpu.matmul %0, %156, %cst_60 {dimension_numbers = #tpu.dot_dimension_numbers<[1], [0], [0], [1], [0, 0, 1, 1], [], []>} : vector<640x144xbf16>, vector<144x128xbf16>, vector<640x128xf32> -> vector<640x128xf32>
    %158 = vector.extract_strided_slice %157 {offsets = [0, 0], sizes = [160, 128], strides = [1, 1]} : vector<640x128xf32> to vector<160x128xf32>
    %159 = vector.extract_strided_slice %157 {offsets = [160, 0], sizes = [160, 128], strides = [1, 1]} : vector<640x128xf32> to vector<160x128xf32>
    %160 = arith.maximumf %158, %159 : vector<160x128xf32>
    %161 = vector.extract_strided_slice %157 {offsets = [320, 0], sizes = [160, 128], strides = [1, 1]} : vector<640x128xf32> to vector<160x128xf32>
    %162 = vector.extract_strided_slice %157 {offsets = [480, 0], sizes = [160, 128], strides = [1, 1]} : vector<640x128xf32> to vector<160x128xf32>
    %163 = arith.maximumf %161, %162 : vector<160x128xf32>
    %164 = arith.maximumf %160, %163 : vector<160x128xf32>
    %165 = vector.broadcast %1 : vector<160x1xf32> to vector<160x128xf32>
    %166 = arith.addf %164, %165 : vector<160x128xf32>
    %cst_61 = arith.constant 0.000000e+00 : f32
    %167 = vector.broadcast %cst_61 : f32 to vector<160x128xf32>
    %168 = arith.maximumf %166, %167 : vector<160x128xf32>
    %c9 = arith.constant 9 : index
    %c0_62 = arith.constant 0 : index
    %c0_63 = arith.constant 0 : index
    %169 = vector.load %arg4[%c9, %c0_62, %c0_63] : memref<10x16x160xf32, #tpu.memory_space<vmem>>, vector<1x16x160xf32>
    %170 = vector.shape_cast %169 : vector<1x16x160xf32> to vector<16x160xf32>
    %cst_64 = arith.constant dense<0.000000e+00> : vector<16x128xf32>
    %171 = tpu.matmul %170, %168, %cst_64 {dimension_numbers = #tpu.dot_dimension_numbers<[1], [0], [0], [1], [0, 0, 1, 1], [], []>} : vector<16x160xf32>, vector<160x128xf32>, vector<16x128xf32> -> vector<16x128xf32>
    %172 = arith.addf %155, %171 : vector<16x128xf32>
    %c0_65 = arith.constant 0 : index
    %c0_66 = arith.constant 0 : index
    %173 = vector.load %arg5[%c0_65, %c0_66] : memref<16x1xf32, #tpu.memory_space<vmem>>, vector<16x1xf32>
    %174 = vector.broadcast %173 : vector<16x1xf32> to vector<16x128xf32>
    %175 = arith.addf %172, %174 : vector<16x128xf32>
    %cst_67 = arith.constant dense<0xFF800000> : vector<128xf32>
    %176 = vector.multi_reduction <maximumf>, %175, %cst_67 [0] : vector<16x128xf32> to vector<128xf32>
    %177 = vector.shape_cast %176 : vector<128xf32> to vector<1x128xf32>
    %178 = vector.broadcast %177 : vector<1x128xf32> to vector<16x128xf32>
    %179 = arith.subf %175, %178 : vector<16x128xf32>
    %180 = math.exp %179 : vector<16x128xf32>
    %cst_68 = arith.constant dense<0.000000e+00> : vector<128xf32>
    %181 = vector.multi_reduction <add>, %180, %cst_68 [0] : vector<16x128xf32> to vector<128xf32>
    %182 = vector.shape_cast %181 : vector<128xf32> to vector<1x128xf32>
    %183 = math.log %182 : vector<1x128xf32>
    %184 = vector.broadcast %183 : vector<1x128xf32> to vector<16x128xf32>
    %185 = arith.subf %179, %184 : vector<16x128xf32>
    %c0_69 = arith.constant 0 : index
    %c0_70 = arith.constant 0 : index
    %186 = vector.load %arg6[%c0_69, %c0_70] : memref<16x128xf32, #tpu.memory_space<vmem>>, vector<16x128xf32>
    tpu.vector_store %arg6[%c0_69, %c0_70], %185 {strides = array<i32>} : memref<16x128xf32, #tpu.memory_space<vmem>>, vector<16x128xf32>,
    return
  }
  func.func @transform_0(%arg0: i32) -> (i32, i32) {
    %c0_i32 = arith.constant 0 : i32
    %c0_i32_0 = arith.constant 0 : i32
    return %c0_i32, %arg0 : i32, i32
  }
  func.func @transform_1(%arg0: i32) -> (i32, i32) {
    %c0_i32 = arith.constant 0 : i32
    %c0_i32_0 = arith.constant 0 : i32
    %c0_i32_1 = arith.constant 0 : i32
    return %c0_i32, %c0_i32_0 : i32, i32
  }
  func.func @transform_2(%arg0: i32) -> (i32, i32) {
    %c0_i32 = arith.constant 0 : i32
    %c0_i32_0 = arith.constant 0 : i32
    %c0_i32_1 = arith.constant 0 : i32
    return %c0_i32, %c0_i32_0 : i32, i32
  }
  func.func @transform_3(%arg0: i32) -> (i32, i32, i32) {
    %c0_i32 = arith.constant 0 : i32
    %c0_i32_0 = arith.constant 0 : i32
    %c0_i32_1 = arith.constant 0 : i32
    %c0_i32_2 = arith.constant 0 : i32
    return %c0_i32, %c0_i32_0, %c0_i32_1 : i32, i32, i32
  }
  func.func @transform_4(%arg0: i32) -> (i32, i32) {
    %c0_i32 = arith.constant 0 : i32
    %c0_i32_0 = arith.constant 0 : i32
    %c0_i32_1 = arith.constant 0 : i32
    return %c0_i32, %c0_i32_0 : i32, i32
  }
  func.func @transform_5(%arg0: i32) -> (i32, i32) {
    %c0_i32 = arith.constant 0 : i32
    %c0_i32_0 = arith.constant 0 : i32
    return %c0_i32, %arg0 : i32, i32
  }
}

</mosaic_0001>

<llo_original>
// kernel: conv_model_forward.1
$region0: #{conv_model_forward.1}
  #allocation0 [shape = 'u32[]', space=smem, size = 0x4, offset = 0x4, fixed_abs, tag = 'smem constant byte address 0x4 - core index']
  #allocation1 [shape = 'u32[144,128]{1,0:T(1,128)}', space=vmem, size = 0x12000, scoped, tag = 'internal scratch']
  %s0 = inlined_call_operand.vmem [shape: bf16[576,640], index: 0, kind: input, shape index: {}]
  %s1 = inlined_call_operand.vmem [shape: bf16[640,144], index: 1, kind: input, shape index: {}]
  %s2 = inlined_call_operand.vmem [shape: f32[160,1], index: 2, kind: input, shape index: {}]
  %s3 = inlined_call_operand.vmem [shape: f32[10,16,160], index: 3, kind: input, shape index: {}]
  %s4 = inlined_call_operand.vmem [shape: f32[16,1], index: 4, kind: input, shape index: {}]
  %s5 = inlined_call_operand.vmem [shape: f32[16,640], index: 5, kind: output, shape index: {}]
  %s6 = sld [smem:[#allocation0]]
  $region128: #{conv_model_forward.1} parent=0
    _
  %s8 = ssub.s32 1, %s6
  %s9 = scalar_select 0, %s8, %s6
  $region1: #{conv_model_forward.1} parent=0
    #allocation2 [shape = 'u8[294912]{0}', space=vmem, size = 0x48000, scoped, tag = 'input window, operand 0']
    #allocation3 [shape = 'u8[16384]{0}', space=vmem, size = 0x4000, scoped, tag = 'output window, operand 0']
    loop: start=0, step=1, limit=7
    $region2: #{conv_model_forward.1} parent=1 // loop_pre_header
      _
    $region3: #{conv_model_forward.1} parent=1 // loop_header
      %s11 = sphi 0, %s15
      %p12 = scmp.ge.s32.totalorder %s11, 7
      %s21 = sphi 0, %s23
      %s24 = sphi 0, %s21
      %s25 = sphi 0, %s24
      %s41 = sphi 0, %s25
      %s45 = sphi 0, %s45
      %s47 = sphi 0, %s45
      %s48 = sphi 0, %s47
      %s62 = sphi 0, %s48
      %s66 = sphi 0, %s66
      %s68 = sphi 0, %s66
      %s69 = sphi 0, %s68
      %s83 = sphi 0, %s69
      %s87 = sphi 0, %s87
      %s89 = sphi 0, %s87
      %s90 = sphi 0, %s89
      %s104 = sphi 0, %s90
      %s108 = sphi 0, %s108
      %s110 = sphi 0, %s108
      %s111 = sphi 0, %s110
      %s125 = sphi 0, %s111
      %s131 = sphi 0, %s133
      %s134 = sphi 0, %s131
      %s135 = sphi 0, %s134
      %s151 = sphi 0, %s135
    $region4: #{conv_model_forward.1} parent=1 // loop_header_branch
      %14 = sbr.rel (%p12) target = $region8
    $region5: #{conv_model_forward.1} parent=1 // loop_body
      %s16 = ssub.s32 %s11, 1
      %s17 = ssub.s32 %s11, 2
      %s18 = sadd.s32 %s11, 1
      %s19 = ssub.s32 %s11, %s18
      %p20 = scmp.eq.s32.totalorder %s19, 0
      %s22 = sadd.s32 %s21, 1
      %s23 = scalar_select %p20, %s21, %s22
      %p26 = pneg %p20
      %p27 = scmp.eq.s32.totalorder %s11, 4
      %p28 = por %p26, %p27
      %p29 = scmp.ne.s32.totalorder %s21, %s24
      %p30 = scmp.eq.s32.totalorder %s11, 0
      %p31 = por %p29, %p30
      %p32 = scmp.ne.s32.totalorder %s21, %s24
      %p33 = scmp.eq.s32.totalorder %s16, 4
      %p34 = por %p32, %p33
      %p35 = scmp.ne.s32.totalorder %s24, %s25
      %p36 = scmp.eq.s32.totalorder %s16, 0
      %p37 = por %p35, %p36
      %p38 = scmp.ne.s32.totalorder %s24, %s25
      %p39 = scmp.eq.s32.totalorder %s17, 4
      %p40 = por %p38, %p39
      %p42 = scmp.ne.s32.totalorder %s25, %s41
      %p43 = scmp.eq.s32.totalorder %s17, 0
      %p44 = por %p42, %p43
      %s46 = sadd.s32 %s45, 1
      %p49 = scmp.eq.s32.totalorder %s11, 4
      %p50 = scmp.ne.s32.totalorder %s45, %s47
      %p51 = scmp.eq.s32.totalorder %s11, 0
      %p52 = por %p50, %p51
      %p53 = scmp.ne.s32.totalorder %s45, %s47
      %p54 = scmp.eq.s32.totalorder %s16, 4
      %p55 = por %p53, %p54
      %p56 = scmp.ne.s32.totalorder %s47, %s48
      %p57 = scmp.eq.s32.totalorder %s16, 0
      %p58 = por %p56, %p57
      %p59 = scmp.ne.s32.totalorder %s47, %s48
      %p60 = scmp.eq.s32.totalorder %s17, 4
      %p61 = por %p59, %p60
      %p63 = scmp.ne.s32.totalorder %s48, %s62
      %p64 = scmp.eq.s32.totalorder %s17, 0
      %p65 = por %p63, %p64
      %s67 = sadd.s32 %s66, 1
      %p70 = scmp.eq.s32.totalorder %s11, 4
      %p71 = scmp.ne.s32.totalorder %s66, %s68
      %p72 = scmp.eq.s32.totalorder %s11, 0
      %p73 = por %p71, %p72
      %p74 = scmp.ne.s32.totalorder %s66, %s68
      %p75 = scmp.eq.s32.totalorder %s16, 4
      %p76 = por %p74, %p75
      %p77 = scmp.ne.s32.totalorder %s68, %s69
      %p78 = scmp.eq.s32.totalorder %s16, 0
      %p79 = por %p77, %p78
      %p80 = scmp.ne.s32.totalorder %s68, %s69
      %p81 = scmp.eq.s32.totalorder %s17, 4
      %p82 = por %p80, %p81
      %p84 = scmp.ne.s32.totalorder %s69, %s83
      %p85 = scmp.eq.s32.totalorder %s17, 0
      %p86 = por %p84, %p85
      %s88 = sadd.s32 %s87, 1
      %p91 = scmp.eq.s32.totalorder %s11, 4
      %p92 = scmp.ne.s32.totalorder %s87, %s89
      %p93 = scmp.eq.s32.totalorder %s11, 0
      %p94 = por %p92, %p93
      %p95 = scmp.ne.s32.totalorder %s87, %s89
      %p96 = scmp.eq.s32.totalorder %s16, 4
      %p97 = por %p95, %p96
      %p98 = scmp.ne.s32.totalorder %s89, %s90
      %p99 = scmp.eq.s32.totalorder %s16, 0
      %p100 = por %p98, %p99
      %p101 = scmp.ne.s32.totalorder %s89, %s90
      %p102 = scmp.eq.s32.totalorder %s17, 4
      %p103 = por %p101, %p102
      %p105 = scmp.ne.s32.totalorder %s90, %s104
      %p106 = scmp.eq.s32.totalorder %s17, 0
      %p107 = por %p105, %p106
      %s109 = sadd.s32 %s108, 1
      %p112 = scmp.eq.s32.totalorder %s11, 4
      %p113 = scmp.ne.s32.totalorder %s108, %s110
      %p114 = scmp.eq.s32.totalorder %s11, 0
      %p115 = por %p113, %p114
      %p116 = scmp.ne.s32.totalorder %s108, %s110
      %p117 = scmp.eq.s32.totalorder %s16, 4
      %p118 = por %p116, %p117
      %p119 = scmp.ne.s32.totalorder %s110, %s111
      %p120 = scmp.eq.s32.totalorder %s16, 0
      %p121 = por %p119, %p120
      %p122 = scmp.ne.s32.totalorder %s110, %s111
      %p123 = scmp.eq.s32.totalorder %s17, 4
      %p124 = por %p122, %p123
      %p126 = scmp.ne.s32.totalorder %s111, %s125
      %p127 = scmp.eq.s32.totalorder %s17, 0
      %p128 = por %p126, %p127
      %s129 = ssub.s32 %s11, %s18
      %p130 = scmp.eq.s32.totalorder %s129, 0
      %s132 = sadd.s32 %s131, 1
      %s133 = scalar_select %p130, %s131, %s132
      %p136 = pneg %p130
      %p137 = scmp.eq.s32.totalorder %s11, 4
      %p138 = por %p136, %p137
      %p139 = scmp.ne.s32.totalorder %s131, %s134
      %p140 = scmp.eq.s32.totalorder %s11, 0
      %p141 = por %p139, %p140
      %p142 = scmp.ne.s32.totalorder %s131, %s134
      %p143 = scmp.eq.s32.totalorder %s16, 4
      %p144 = por %p142, %p143
      %p145 = scmp.ne.s32.totalorder %s134, %s135
      %p146 = scmp.eq.s32.totalorder %s16, 0
      %p147 = por %p145, %p146
      %p148 = scmp.ne.s32.totalorder %s134, %s135
      %p149 = scmp.eq.s32.totalorder %s17, 4
      %p150 = por %p148, %p149
      %p152 = scmp.ne.s32.totalorder %s135, %s151
      %p153 = scmp.eq.s32.totalorder %s17, 0
      %p154 = por %p152, %p153
      %p155 = scmp.le.s32.totalorder 1, %s11
      %p156 = scmp.lt.s32.totalorder %s11, 6
      %p157 = pnand %p155, %p156
      %p158 = pneg %p157
      // Predicated region
      $region9: #{conv_model_forward.1} parent=5 // pred_check
        _
      $region10: #{conv_model_forward.1} parent=5 // pred_check_branch
        %160 = sbr.rel (%p157) target = $region12
      $region11: #{conv_model_forward.1} parent=5 // pred_region
        %s161 = ssub.s32 %s11, 1
        // Predicated region
        $region13: #{conv_model_forward.1} parent=11 // pred_check
          %p162 = pneg %p58
        $region14: #{conv_model_forward.1} parent=11 // pred_check_branch
          %164 = sbr.rel (%p162) target = $region16
        $region15: #{conv_model_forward.1} parent=11 // pred_region
          _
        $region16: #{conv_model_forward.1} parent=11 // pred_fallthru
          _
        // Predicated region
        $region17: #{conv_model_forward.1} parent=11 // pred_check
          %p165 = pneg %p79
        $region18: #{conv_model_forward.1} parent=11 // pred_check_branch
          %167 = sbr.rel (%p165) target = $region20
        $region19: #{conv_model_forward.1} parent=11 // pred_region
          _
        $region20: #{conv_model_forward.1} parent=11 // pred_fallthru
          _
        // Predicated region
        $region21: #{conv_model_forward.1} parent=11 // pred_check
          %p168 = pneg %p100
        $region22: #{conv_model_forward.1} parent=11 // pred_check_branch
          %170 = sbr.rel (%p168) target = $region24
        $region23: #{conv_model_forward.1} parent=11 // pred_region
          _
        $region24: #{conv_model_forward.1} parent=11 // pred_fallthru
          _
        // Predicated region
        $region25: #{conv_model_forward.1} parent=11 // pred_check
          %p171 = pneg %p121
        $region26: #{conv_model_forward.1} parent=11 // pred_check_branch
          %173 = sbr.rel (%p171) target = $region28
        $region27: #{conv_model_forward.1} parent=11 // pred_region
          _
        $region28: #{conv_model_forward.1} parent=11 // pred_fallthru
          _
      $region12: #{conv_model_forward.1} parent=5 // pred_fallthru
        _
      %p174 = scmp.lt.s32.totalorder %s11, 5
      // Predicated region
      $region29: #{conv_model_forward.1} parent=5 // pred_check
        %p175 = pneg %p174
      $region30: #{conv_model_forward.1} parent=5 // pred_check_branch
        %177 = sbr.rel (%p175) target = $region32
      $region31: #{conv_model_forward.1} parent=5 // pred_region
        // Predicated region
        $region33: #{conv_model_forward.1} parent=31 // pred_check
          %p178 = pneg %p31
        $region34: #{conv_model_forward.1} parent=31 // pred_check_branch
          %180 = sbr.rel (%p178) target = $region36
        $region35: #{conv_model_forward.1} parent=31 // pred_region
          %s181 = sand.u32 %s21, 1
          %s182 = sand.u32 %s21, 1
          %s183 = smul.addr %s182, 288
          %s184 = scalar_lea.vmem [#allocation2], %s183
          %s185 = smul.addr %s11, 4
          %s186 = scalar_lea.vmem %s0, %s185
          // Predicated region
          $region37: #{conv_model_forward.1} parent=35 // pred_check
            _
          $region38: #{conv_model_forward.1} parent=35 // pred_check_branch
            %188 = sbr.rel (0) target = $region40
          $region39: #{conv_model_forward.1} parent=35 // pred_region
            // Predicated region
            $region41: #{conv_model_forward.1} parent=39 // pred_check
              _
            $region42: #{conv_model_forward.1} parent=39 // pred_check_branch
              %190 = sbr.rel target = $region44
            $region43: #{conv_model_forward.1} parent=39 // pred_region
              // Predicated region
              $region56: #{conv_model_forward.1} parent=43 // pred_check
                _
              $region57: #{conv_model_forward.1} parent=43 // pred_check_branch
                %347 = sbr.rel (0) target = $region59
              $region58: #{conv_model_forward.1} parent=43 // pred_region
                loop: start=0, step=1, limit=1
                $region60: #{conv_model_forward.1} parent=58 // loop_pre_header
                  _
                $region61: #{conv_model_forward.1} parent=58 // loop_header
                  %s349 = sphi 0, %s353
                  %p350 = scmp.ge.s32.totalorder %s349, 1
                  %s354 = sphi %s186, %s186
                  %s355 = sphi %s184, %s184
                $region62: #{conv_model_forward.1} parent=58 // loop_header_branch
                  %352 = sbr.rel (%p350) target = $region66
                $region63: #{conv_model_forward.1} parent=58 // loop_body
                  _
                $region64: #{conv_model_forward.1} parent=58 // loop_footer
                  %s353 = sadd.s32 1, %s349
                $region65: #{conv_model_forward.1} parent=58 // loop_footer_branch
                  %348 = sbr.rel target = $region61
                $region66: #{conv_model_forward.1} parent=58 // loop_exit
                  _
                loop: start=0, step=1, limit=1
                $region67: #{conv_model_forward.1} parent=58 // loop_pre_header
                  _
                $region68: #{conv_model_forward.1} parent=58 // loop_header
                  %s358 = sphi 0, %s362
                  %p359 = scmp.ge.s32.totalorder %s358, 1
                  %s363 = sphi %s186, %s186
                  %s364 = sphi %s184, %s184
                $region69: #{conv_model_forward.1} parent=58 // loop_header_branch
                  %361 = sbr.rel (%p359) target = $region73
                $region70: #{conv_model_forward.1} parent=58 // loop_body
                  %v365 = vld [vmem:[%s363] sm:$0xf]
                  %366 = vst [vmem:[%s364] sm:$0xf] %v365
                  %v367 = vld [vmem:[%s363 + $0x14] sm:$0xf]
                  %368 = vst [vmem:[%s364 + $0x4] sm:$0xf] %v367
                  %v369 = vld [vmem:[%s363 + $0x28] sm:$0xf]
                  %370 = vst [vmem:[%s364 + $0x8] sm:$0xf] %v369
                  %v371 = vld [vmem:[%s363 + $0x3c] sm:$0xf]
                  %372 = vst [vmem:[%s364 + $0xc] sm:$0xf] %v371
                  %v373 = vld [vmem:[%s363 + $0x50] sm:$0xf]
                  %374 = vst [vmem:[%s364 + $0x10] sm:$0xf] %v373
                  %v375 = vld [vmem:[%s363 + $0x64] sm:$0xf]
                  %376 = vst [vmem:[%s364 + $0x14] sm:$0xf] %v375
                  %v377 = vld [vmem:[%s363 + $0x78] sm:$0xf]
                  %378 = vst [vmem:[%s364 + $0x18] sm:$0xf] %v377
                  %v379 = vld [vmem:[%s363 + $0x8c] sm:$0xf]
                  %380 = vst [vmem:[%s364 + $0x1c] sm:$0xf] %v379
                  %v381 = vld [vmem:[%s363 + $0xa0] sm:$0xf]
                  %382 = vst [vmem:[%s364 + $0x20] sm:$0xf] %v381
                  %v383 = vld [vmem:[%s363 + $0xb4] sm:$0xf]
                  %384 = vst [vmem:[%s364 + $0x24] sm:$0xf] %v383
                  %v385 = vld [vmem:[%s363 + $0xc8] sm:$0xf]
                  %386 = vst [vmem:[%s364 + $0x28] sm:$0xf] %v385
                  %v387 = vld [vmem:[%s363 + $0xdc] sm:$0xf]
                  %388 = vst [vmem:[%s364 + $0x2c] sm:$0xf] %v387
                  %v389 = vld [vmem:[%s363 + $0xf0] sm:$0xf]
                  %390 = vst [vmem:[%s364 + $0x30] sm:$0xf] %v389
                  %v391 = vld [vmem:[%s363 + $0x104] sm:$0xf]
                  %392 = vst [vmem:[%s364 + $0x34] sm:$0xf] %v391
                  %v393 = vld [vmem:[%s363 + $0x118] sm:$0xf]
                  %394 = vst [vmem:[%s364 + $0x38] sm:$0xf] %v393
                  %v395 = vld [vmem:[%s363 + $0x12c] sm:$0xf]
                  %396 = vst [vmem:[%s364 + $0x3c] sm:$0xf] %v395
                  %v397 = vld [vmem:[%s363 + $0x140] sm:$0xf]
                  %398 = vst [vmem:[%s364 + $0x40] sm:$0xf] %v397
                  %v399 = vld [vmem:[%s363 + $0x154] sm:$0xf]
                  %400 = vst [vmem:[%s364 + $0x44] sm:$0xf] %v399
                  %v401 = vld [vmem:[%s363 + $0x168] sm:$0xf]
                  %402 = vst [vmem:[%s364 + $0x48] sm:$0xf] %v401
                  %v403 = vld [vmem:[%s363 + $0x17c] sm:$0xf]
                  %404 = vst [vmem:[%s364 + $0x4c] sm:$0xf] %v403
                  %v405 = vld [vmem:[%s363 + $0x190] sm:$0xf]
                  %406 = vst [vmem:[%s364 + $0x50] sm:$0xf] %v405
                  %v407 = vld [vmem:[%s363 + $0x1a4] sm:$0xf]
                  %408 = vst [vmem:[%s364 + $0x54] sm:$0xf] %v407
                  %v409 = vld [vmem:[%s363 + $0x1b8] sm:$0xf]
                  %410 = vst [vmem:[%s364 + $0x58] sm:$0xf] %v409
                  %v411 = vld [vmem:[%s363 + $0x1cc] sm:$0xf]
                  %412 = vst [vmem:[%s364 + $0x5c] sm:$0xf] %v411
                  %v413 = vld [vmem:[%s363 + $0x1e0] sm:$0xf]
                  %414 = vst [vmem:[%s364 + $0x60] sm:$0xf] %v413
                  %v415 = vld [vmem:[%s363 + $0x1f4] sm:$0xf]
                  %416 = vst [vmem:[%s364 + $0x64] sm:$0xf] %v415
                  %v417 = vld [vmem:[%s363 + $0x208] sm:$0xf]
                  %418 = vst [vmem:[%s364 + $0x68] sm:$0xf] %v417
                  %v419 = vld [vmem:[%s363 + $0x21c] sm:$0xf]
                  %420 = vst [vmem:[%s364 + $0x6c] sm:$0xf] %v419
                  %v421 = vld [vmem:[%s363 + $0x230] sm:$0xf]
                  %422 = vst [vmem:[%s364 + $0x70] sm:$0xf] %v421
                  %v423 = vld [vmem:[%s363 + $0x244] sm:$0xf]
                  %424 = vst [vmem:[%s364 + $0x74] sm:$0xf] %v423
                  %v425 = vld [vmem:[%s363 + $0x258] sm:$0xf]
                  %426 = vst [vmem:[%s364 + $0x78] sm:$0xf] %v425
                  %v427 = vld [vmem:[%s363 + $0x26c] sm:$0xf]
                  %428 = vst [vmem:[%s364 + $0x7c] sm:$0xf] %v427
                  %v429 = vld [vmem:[%s363 + $0x280] sm:$0xf]
                  %430 = vst [vmem:[%s364 + $0x80] sm:$0xf] %v429
                  %v431 = vld [vmem:[%s363 + $0x294] sm:$0xf]
                  %432 = vst [vmem:[%s364 + $0x84] sm:$0xf] %v431
                  %v433 = vld [vmem:[%s363 + $0x2a8] sm:$0xf]
                  %434 = vst [vmem:[%s364 + $0x88] sm:$0xf] %v433
                  %v435 = vld [vmem:[%s363 + $0x2bc] sm:$0xf]
                  %436 = vst [vmem:[%s364 + $0x8c] sm:$0xf] %v435
                  %v437 = vld [vmem:[%s363 + $0x2d0] sm:$0xf]
                  %438 = vst [vmem:[%s364 + $0x90] sm:$0xf] %v437
                  %v439 = vld [vmem:[%s363 + $0x2e4] sm:$0xf]
                  %440 = vst [vmem:[%s364 + $0x94] sm:$0xf] %v439
                  %v441 = vld [vmem:[%s363 + $0x2f8] sm:$0xf]
                  %442 = vst [vmem:[%s364 + $0x98] sm:$0xf] %v441
                  %v443 = vld [vmem:[%s363 + $0x30c] sm:$0xf]
                  %444 = vst [vmem:[%s364 + $0x9c] sm:$0xf] %v443
                  %v445 = vld [vmem:[%s363 + $0x320] sm:$0xf]
                  %446 = vst [vmem:[%s364 + $0xa0] sm:$0xf] %v445
                  %v447 = vld [vmem:[%s363 + $0x334] sm:$0xf]
                  %448 = vst [vmem:[%s364 + $0xa4] sm:$0xf] %v447
                  %v449 = vld [vmem:[%s363 + $0x348] sm:$0xf]
                  %450 = vst [vmem:[%s364 + $0xa8] sm:$0xf] %v449
                  %v451 = vld [vmem:[%s363 + $0x35c] sm:$0xf]
                  %452 = vst [vmem:[%s364 + $0xac] sm:$0xf] %v451
                  %v453 = vld [vmem:[%s363 + $0x370] sm:$0xf]
                  %454 = vst [vmem:[%s364 + $0xb0] sm:$0xf] %v453
                  %v455 = vld [vmem:[%s363 + $0x384] sm:$0xf]
                  %456 = vst [vmem:[%s364 + $0xb4] sm:$0xf] %v455
                  %v457 = vld [vmem:[%s363 + $0x398] sm:$0xf]
                  %458 = vst [vmem:[%s364 + $0xb8] sm:$0xf] %v457
                  %v459 = vld [vmem:[%s363 + $0x3ac] sm:$0xf]
                  %460 = vst [vmem:[%s364 + $0xbc] sm:$0xf] %v459
                  %v461 = vld [vmem:[%s363 + $0x3c0] sm:$0xf]
                  %462 = vst [vmem:[%s364 + $0xc0] sm:$0xf] %v461
                  %v463 = vld [vmem:[%s363 + $0x3d4] sm:$0xf]
                  %464 = vst [vmem:[%s364 + $0xc4] sm:$0xf] %v463
                  %v465 = vld [vmem:[%s363 + $0x3e8] sm:$0xf]
                  %466 = vst [vmem:[%s364 + $0xc8] sm:$0xf] %v465
                  %v467 = vld [vmem:[%s363 + $0x3fc] sm:$0xf]
                  %468 = vst [vmem:[%s364 + $0xcc] sm:$0xf] %v467
                  %v469 = vld [vmem:[%s363 + $0x410] sm:$0xf]
                  %470 = vst [vmem:[%s364 + $0xd0] sm:$0xf] %v469
                  %v471 = vld [vmem:[%s363 + $0x424] sm:$0xf]
                  %472 = vst [vmem:[%s364 + $0xd4] sm:$0xf] %v471
                  %v473 = vld [vmem:[%s363 + $0x438] sm:$0xf]
                  %474 = vst [vmem:[%s364 + $0xd8] sm:$0xf] %v473
                  %v475 = vld [vmem:[%s363 + $0x44c] sm:$0xf]
                  %476 = vst [vmem:[%s364 + $0xdc] sm:$0xf] %v475
                  %v477 = vld [vmem:[%s363 + $0x460] sm:$0xf]
                  %478 = vst [vmem:[%s364 + $0xe0] sm:$0xf] %v477
                  %v479 = vld [vmem:[%s363 + $0x474] sm:$0xf]
                  %480 = vst [vmem:[%s364 + $0xe4] sm:$0xf] %v479
                  %v481 = vld [vmem:[%s363 + $0x488] sm:$0xf]
                  %482 = vst [vmem:[%s364 + $0xe8] sm:$0xf] %v481
                  %v483 = vld [vmem:[%s363 + $0x49c] sm:$0xf]
                  %484 = vst [vmem:[%s364 + $0xec] sm:$0xf] %v483
                  %v485 = vld [vmem:[%s363 + $0x4b0] sm:$0xf]
                  %486 = vst [vmem:[%s364 + $0xf0] sm:$0xf] %v485
                  %v487 = vld [vmem:[%s363 + $0x4c4] sm:$0xf]
                  %488 = vst [vmem:[%s364 + $0xf4] sm:$0xf] %v487
                  %v489 = vld [vmem:[%s363 + $0x4d8] sm:$0xf]
                  %490 = vst [vmem:[%s364 + $0xf8] sm:$0xf] %v489
                  %v491 = vld [vmem:[%s363 + $0x4ec] sm:$0xf]
                  %492 = vst [vmem:[%s364 + $0xfc] sm:$0xf] %v491
                  %v493 = vld [vmem:[%s363 + $0x500] sm:$0xf]
                  %494 = vst [vmem:[%s364 + $0x100] sm:$0xf] %v493
                  %v495 = vld [vmem:[%s363 + $0x514] sm:$0xf]
                  %496 = vst [vmem:[%s364 + $0x104] sm:$0xf] %v495
                  %v497 = vld [vmem:[%s363 + $0x528] sm:$0xf]
                  %498 = vst [vmem:[%s364 + $0x108] sm:$0xf] %v497
                  %v499 = vld [vmem:[%s363 + $0x53c] sm:$0xf]
                  %500 = vst [vmem:[%s364 + $0x10c] sm:$0xf] %v499
                  %v501 = vld [vmem:[%s363 + $0x550] sm:$0xf]
                  %502 = vst [vmem:[%s364 + $0x110] sm:$0xf] %v501
                  %v503 = vld [vmem:[%s363 + $0x564] sm:$0xf]
                  %504 = vst [vmem:[%s364 + $0x114] sm:$0xf] %v503
                  %v505 = vld [vmem:[%s363 + $0x578] sm:$0xf]
                  %506 = vst [vmem:[%s364 + $0x118] sm:$0xf] %v505
                  %v507 = vld [vmem:[%s363 + $0x58c] sm:$0xf]
                  %508 = vst [vmem:[%s364 + $0x11c] sm:$0xf] %v507
                $region71: #{conv_model_forward.1} parent=58 // loop_footer
                  %s362 = sadd.s32 1, %s358
                $region72: #{conv_model_forward.1} parent=58 // loop_footer_branch
                  %357 = sbr.rel target = $region68
                $region73: #{conv_model_forward.1} parent=58 // loop_exit
                  _
              $region59: #{conv_model_forward.1} parent=43 // pred_fallthru
                _
            $region44: #{conv_model_forward.1} parent=39 // pred_fallthru
              _
            // Predicated region
            $region45: #{conv_model_forward.1} parent=39 // pred_check
              _
            $region46: #{conv_model_forward.1} parent=39 // pred_check_branch
              %192 = sbr.rel (0) target = $region48
            $region47: #{conv_model_forward.1} parent=39 // pred_region
              loop: start=0, step=1, limit=1
              $region49: #{conv_model_forward.1} parent=47 // loop_pre_header
                _
              $region50: #{conv_model_forward.1} parent=47 // loop_header
                %s195 = sphi 0, %s199
                %p196 = scmp.ge.s32.totalorder %s195, 1
                %s200 = sphi %s186, %s186
                %s201 = sphi %s184, %s184
              $region51: #{conv_model_forward.1} parent=47 // loop_header_branch
                %198 = sbr.rel (%p196) target = $region55
              $region52: #{conv_model_forward.1} parent=47 // loop_body
                %v202 = vld [vmem:[%s200] sm:$0xf]
                %203 = vst [vmem:[%s201] sm:$0xf] %v202
                %v204 = vld [vmem:[%s200 + $0x14] sm:$0xf]
                %205 = vst [vmem:[%s201 + $0x4] sm:$0xf] %v204
                %v206 = vld [vmem:[%s200 + $0x28] sm:$0xf]
                %207 = vst [vmem:[%s201 + $0x8] sm:$0xf] %v206
                %v208 = vld [vmem:[%s200 + $0x3c] sm:$0xf]
                %209 = vst [vmem:[%s201 + $0xc] sm:$0xf] %v208
                %v210 = vld [vmem:[%s200 + $0x50] sm:$0xf]
                %211 = vst [vmem:[%s201 + $0x10] sm:$0xf] %v210
                %v212 = vld [vmem:[%s200 + $0x64] sm:$0xf]
                %213 = vst [vmem:[%s201 + $0x14] sm:$0xf] %v212
                %v214 = vld [vmem:[%s200 + $0x78] sm:$0xf]
                %215 = vst [vmem:[%s201 + $0x18] sm:$0xf] %v214
                %v216 = vld [vmem:[%s200 + $0x8c] sm:$0xf]
                %217 = vst [vmem:[%s201 + $0x1c] sm:$0xf] %v216
                %v218 = vld [vmem:[%s200 + $0xa0] sm:$0xf]
                %219 = vst [vmem:[%s201 + $0x20] sm:$0xf] %v218
                %v220 = vld [vmem:[%s200 + $0xb4] sm:$0xf]
                %221 = vst [vmem:[%s201 + $0x24] sm:$0xf] %v220
                %v222 = vld [vmem:[%s200 + $0xc8] sm:$0xf]
                %223 = vst [vmem:[%s201 + $0x28] sm:$0xf] %v222
                %v224 = vld [vmem:[%s200 + $0xdc] sm:$0xf]
                %225 = vst [vmem:[%s201 + $0x2c] sm:$0xf] %v224
                %v226 = vld [vmem:[%s200 + $0xf0] sm:$0xf]
                %227 = vst [vmem:[%s201 + $0x30] sm:$0xf] %v226
                %v228 = vld [vmem:[%s200 + $0x104] sm:$0xf]
                %229 = vst [vmem:[%s201 + $0x34] sm:$0xf] %v228
                %v230 = vld [vmem:[%s200 + $0x118] sm:$0xf]
                %231 = vst [vmem:[%s201 + $0x38] sm:$0xf] %v230
                %v232 = vld [vmem:[%s200 + $0x12c] sm:$0xf]
                %233 = vst [vmem:[%s201 + $0x3c] sm:$0xf] %v232
                %v234 = vld [vmem:[%s200 + $0x140] sm:$0xf]
                %235 = vst [vmem:[%s201 + $0x40] sm:$0xf] %v234
                %v236 = vld [vmem:[%s200 + $0x154] sm:$0xf]
                %237 = vst [vmem:[%s201 + $0x44] sm:$0xf] %v236
                %v238 = vld [vmem:[%s200 + $0x168] sm:$0xf]
                %239 = vst [vmem:[%s201 + $0x48] sm:$0xf] %v238
                %v240 = vld [vmem:[%s200 + $0x17c] sm:$0xf]
                %241 = vst [vmem:[%s201 + $0x4c] sm:$0xf] %v240
                %v242 = vld [vmem:[%s200 + $0x190] sm:$0xf]
                %243 = vst [vmem:[%s201 + $0x50] sm:$0xf] %v242
                %v244 = vld [vmem:[%s200 + $0x1a4] sm:$0xf]
                %245 = vst [vmem:[%s201 + $0x54] sm:$0xf] %v244
                %v246 = vld [vmem:[%s200 + $0x1b8] sm:$0xf]
                %247 = vst [vmem:[%s201 + $0x58] sm:$0xf] %v246
                %v248 = vld [vmem:[%s200 + $0x1cc] sm:$0xf]
                %249 = vst [vmem:[%s201 + $0x5c] sm:$0xf] %v248
                %v250 = vld [vmem:[%s200 + $0x1e0] sm:$0xf]
                %251 = vst [vmem:[%s201 + $0x60] sm:$0xf] %v250
                %v252 = vld [vmem:[%s200 + $0x1f4] sm:$0xf]
                %253 = vst [vmem:[%s201 + $0x64] sm:$0xf] %v252
                %v254 = vld [vmem:[%s200 + $0x208] sm:$0xf]
                %255 = vst [vmem:[%s201 + $0x68] sm:$0xf] %v254
                %v256 = vld [vmem:[%s200 + $0x21c] sm:$0xf]
                %257 = vst [vmem:[%s201 + $0x6c] sm:$0xf] %v256
                %v258 = vld [vmem:[%s200 + $0x230] sm:$0xf]
                %259 = vst [vmem:[%s201 + $0x70] sm:$0xf] %v258
                %v260 = vld [vmem:[%s200 + $0x244] sm:$0xf]
                %261 = vst [vmem:[%s201 + $0x74] sm:$0xf] %v260
                %v262 = vld [vmem:[%s200 + $0x258] sm:$0xf]
                %263 = vst [vmem:[%s201 + $0x78] sm:$0xf] %v262
                %v264 = vld [vmem:[%s200 + $0x26c] sm:$0xf]
                %265 = vst [vmem:[%s201 + $0x7c] sm:$0xf] %v264
                %v266 = vld [vmem:[%s200 + $0x280] sm:$0xf]
                %267 = vst [vmem:[%s201 + $0x80] sm:$0xf] %v266
                %v268 = vld [vmem:[%s200 + $0x294] sm:$0xf]
                %269 = vst [vmem:[%s201 + $0x84] sm:$0xf] %v268
                %v270 = vld [vmem:[%s200 + $0x2a8] sm:$0xf]
                %271 = vst [vmem:[%s201 + $0x88] sm:$0xf] %v270
                %v272 = vld [vmem:[%s200 + $0x2bc] sm:$0xf]
                %273 = vst [vmem:[%s201 + $0x8c] sm:$0xf] %v272
                %v274 = vld [vmem:[%s200 + $0x2d0] sm:$0xf]
                %275 = vst [vmem:[%s201 + $0x90] sm:$0xf] %v274
                %v276 = vld [vmem:[%s200 + $0x2e4] sm:$0xf]
                %277 = vst [vmem:[%s201 + $0x94] sm:$0xf] %v276
                %v278 = vld [vmem:[%s200 + $0x2f8] sm:$0xf]
                %279 = vst [vmem:[%s201 + $0x98] sm:$0xf] %v278
                %v280 = vld [vmem:[%s200 + $0x30c] sm:$0xf]
                %281 = vst [vmem:[%s201 + $0x9c] sm:$0xf] %v280
                %v282 = vld [vmem:[%s200 + $0x320] sm:$0xf]
                %283 = vst [vmem:[%s201 + $0xa0] sm:$0xf] %v282
                %v284 = vld [vmem:[%s200 + $0x334] sm:$0xf]
                %285 = vst [vmem:[%s201 + $0xa4] sm:$0xf] %v284
                %v286 = vld [vmem:[%s200 + $0x348] sm:$0xf]
                %287 = vst [vmem:[%s201 + $0xa8] sm:$0xf] %v286
                %v288 = vld [vmem:[%s200 + $0x35c] sm:$0xf]
                %289 = vst [vmem:[%s201 + $0xac] sm:$0xf] %v288
                %v290 = vld [vmem:[%s200 + $0x370] sm:$0xf]
                %291 = vst [vmem:[%s201 + $0xb0] sm:$0xf] %v290
                %v292 = vld [vmem:[%s200 + $0x384] sm:$0xf]
                %293 = vst [vmem:[%s201 + $0xb4] sm:$0xf] %v292
                %v294 = vld [vmem:[%s200 + $0x398] sm:$0xf]
                %295 = vst [vmem:[%s201 + $0xb8] sm:$0xf] %v294
                %v296 = vld [vmem:[%s200 + $0x3ac] sm:$0xf]
                %297 = vst [vmem:[%s201 + $0xbc] sm:$0xf] %v296
                %v298 = vld [vmem:[%s200 + $0x3c0] sm:$0xf]
                %299 = vst [vmem:[%s201 + $0xc0] sm:$0xf] %v298
                %v300 = vld [vmem:[%s200 + $0x3d4] sm:$0xf]
                %301 = vst [vmem:[%s201 + $0xc4] sm:$0xf] %v300
                %v302 = vld [vmem:[%s200 + $0x3e8] sm:$0xf]
                %303 = vst [vmem:[%s201 + $0xc8] sm:$0xf] %v302
                %v304 = vld [vmem:[%s200 + $0x3fc] sm:$0xf]
                %305 = vst [vmem:[%s201 + $0xcc] sm:$0xf] %v304
                %v306 = vld [vmem:[%s200 + $0x410] sm:$0xf]
                %307 = vst [vmem:[%s201 + $0xd0] sm:$0xf] %v306
                %v308 = vld [vmem:[%s200 + $0x424] sm:$0xf]
                %309 = vst [vmem:[%s201 + $0xd4] sm:$0xf] %v308
                %v310 = vld [vmem:[%s200 + $0x438] sm:$0xf]
                %311 = vst [vmem:[%s201 + $0xd8] sm:$0xf] %v310
                %v312 = vld [vmem:[%s200 + $0x44c] sm:$0xf]
                %313 = vst [vmem:[%s201 + $0xdc] sm:$0xf] %v312
                %v314 = vld [vmem:[%s200 + $0x460] sm:$0xf]
                %315 = vst [vmem:[%s201 + $0xe0] sm:$0xf] %v314
                %v316 = vld [vmem:[%s200 + $0x474] sm:$0xf]
                %317 = vst [vmem:[%s201 + $0xe4] sm:$0xf] %v316
                %v318 = vld [vmem:[%s200 + $0x488] sm:$0xf]
                %319 = vst [vmem:[%s201 + $0xe8] sm:$0xf] %v318
                %v320 = vld [vmem:[%s200 + $0x49c] sm:$0xf]
                %321 = vst [vmem:[%s201 + $0xec] sm:$0xf] %v320
                %v322 = vld [vmem:[%s200 + $0x4b0] sm:$0xf]
                %323 = vst [vmem:[%s201 + $0xf0] sm:$0xf] %v322
                %v324 = vld [vmem:[%s200 + $0x4c4] sm:$0xf]
                %325 = vst [vmem:[%s201 + $0xf4] sm:$0xf] %v324
                %v326 = vld [vmem:[%s200 + $0x4d8] sm:$0xf]
                %327 = vst [vmem:[%s201 + $0xf8] sm:$0xf] %v326
                %v328 = vld [vmem:[%s200 + $0x4ec] sm:$0xf]
                %329 = vst [vmem:[%s201 + $0xfc] sm:$0xf] %v328
                %v330 = vld [vmem:[%s200 + $0x500] sm:$0xf]
                %331 = vst [vmem:[%s201 + $0x100] sm:$0xf] %v330
                %v332 = vld [vmem:[%s200 + $0x514] sm:$0xf]
                %333 = vst [vmem:[%s201 + $0x104] sm:$0xf] %v332
                %v334 = vld [vmem:[%s200 + $0x528] sm:$0xf]
                %335 = vst [vmem:[%s201 + $0x108] sm:$0xf] %v334
                %v336 = vld [vmem:[%s200 + $0x53c] sm:$0xf]
                %337 = vst [vmem:[%s201 + $0x10c] sm:$0xf] %v336
                %v338 = vld [vmem:[%s200 + $0x550] sm:$0xf]
                %339 = vst [vmem:[%s201 + $0x110] sm:$0xf] %v338
                %v340 = vld [vmem:[%s200 + $0x564] sm:$0xf]
                %341 = vst [vmem:[%s201 + $0x114] sm:$0xf] %v340
                %v342 = vld [vmem:[%s200 + $0x578] sm:$0xf]
                %343 = vst [vmem:[%s201 + $0x118] sm:$0xf] %v342
                %v344 = vld [vmem:[%s200 + $0x58c] sm:$0xf]
                %345 = vst [vmem:[%s201 + $0x11c] sm:$0xf] %v344
              $region53: #{conv_model_forward.1} parent=47 // loop_footer
                %s199 = sadd.s32 1, %s195
              $region54: #{conv_model_forward.1} parent=47 // loop_footer_branch
                %194 = sbr.rel target = $region50
              $region55: #{conv_model_forward.1} parent=47 // loop_exit
                _
            $region48: #{conv_model_forward.1} parent=39 // pred_fallthru
              _
          $region40: #{conv_model_forward.1} parent=35 // pred_fallthru
            _
          %509 = vnop
        $region36: #{conv_model_forward.1} parent=31 // pred_fallthru
          _
      $region32: #{conv_model_forward.1} parent=5 // pred_fallthru
        _
      %p510 = scmp.le.s32.totalorder 1, %s11
      %p511 = scmp.lt.s32.totalorder %s11, 6
      %p512 = pnand %p510, %p511
      %p513 = pneg %p512
      // Predicated region
      $region74: #{conv_model_forward.1} parent=5 // pred_check
        _
      $region75: #{conv_model_forward.1} parent=5 // pred_check_branch
        %515 = sbr.rel (%p512) target = $region77
      $region76: #{conv_model_forward.1} parent=5 // pred_region
        %s516 = ssub.s32 %s11, 1
        %s517 = sand.u32 %s24, 1
        %s518 = sand.u32 %s24, 1
        %s519 = smul.addr %s518, 288
        %s520 = scalar_lea.vmem [#allocation2], %s519
        // Predicated region
        $region78: #{conv_model_forward.1} parent=76 // pred_check
          %p521 = pneg %p37
        $region79: #{conv_model_forward.1} parent=76 // pred_check_branch
          %523 = sbr.rel (%p521) target = $region81
        $region80: #{conv_model_forward.1} parent=76 // pred_region
          _
        $region81: #{conv_model_forward.1} parent=76 // pred_fallthru
          _
        %s524 = sand.u32 %s24, 1
        %s525 = sand.u32 %s24, 1
        %s526 = smul.addr %s525, 288
        %s527 = scalar_lea.vmem [#allocation2], %s526
        %p528 = pneg %p37
        %p529 = pneg %p34
        %p530 = pneg %p58
        %p531 = pneg %p55
        %p532 = pneg %p79
        %p533 = pneg %p76
        %p534 = pneg %p100
        %p535 = pneg %p97
        %p536 = pneg %p121
        %p537 = pneg %p118
        %p538 = pneg %p147
        %p539 = pneg %p144
        %s540 = sand.u32 %s134, 1
        %s541 = sand.u32 %s134, 1
        %s542 = smul.addr %s541, 16
        %s543 = scalar_lea.vmem [#allocation3], %s542
        %v545 = vld [vmem:[%s1] sm:$0xff]
        %v546 = vld [vmem:[%s1 + $0x8] sm:$0xff]
        %v547 = vld [vmem:[%s1 + $0x10] sm:$0xff]
        %v548 = vld [vmem:[%s1 + $0x18] sm:$0xff]
        %v549 = vld [vmem:[%s1 + $0x20] sm:$0xff]
        %v550 = vld [vmem:[%s1 + $0x28] sm:$0xff]
        %v551 = vld [vmem:[%s1 + $0x30] sm:$0xff]
        %v552 = vld [vmem:[%s1 + $0x38] sm:$0xff]
        %v553 = vld [vmem:[%s1 + $0x40] sm:$0xff]
        %v554 = vld [vmem:[%s1 + $0x48] sm:$0xff]
        %v555 = vld [vmem:[%s1 + $0x50] sm:$0xff]
        %v556 = vld [vmem:[%s1 + $0x58] sm:$0xff]
        %v557 = vld [vmem:[%s1 + $0x60] sm:$0xff]
        %v558 = vld [vmem:[%s1 + $0x68] sm:$0xff]
        %v559 = vld [vmem:[%s1 + $0x70] sm:$0xff]
        %v560 = vld [vmem:[%s1 + $0x78] sm:$0xff]
        %v561 = vld [vmem:[%s1 + $0x80] sm:$0xff]
        %v562 = vld [vmem:[%s1 + $0x88] sm:$0xff]
        %v563 = vld [vmem:[%s1 + $0x90] sm:$0xff]
        %v564 = vld [vmem:[%s1 + $0x98] sm:$0xff]
        %v565 = vld [vmem:[%s1 + $0xa0] sm:$0xff]
        %v566 = vld [vmem:[%s1 + $0xa8] sm:$0xff]
        %v567 = vld [vmem:[%s1 + $0xb0] sm:$0xff]
        %v568 = vld [vmem:[%s1 + $0xb8] sm:$0xff]
        %v569 = vld [vmem:[%s1 + $0xc0] sm:$0xff]
        %v570 = vld [vmem:[%s1 + $0xc8] sm:$0xff]
        %v571 = vld [vmem:[%s1 + $0xd0] sm:$0xff]
        %v572 = vld [vmem:[%s1 + $0xd8] sm:$0xff]
        %v573 = vld [vmem:[%s1 + $0xe0] sm:$0xff]
        %v574 = vld [vmem:[%s1 + $0xe8] sm:$0xff]
        %v575 = vld [vmem:[%s1 + $0xf0] sm:$0xff]
        %v576 = vld [vmem:[%s1 + $0xf8] sm:$0xff]
        %v577 = vld [vmem:[%s1 + $0x100] sm:$0xff]
        %v578 = vld [vmem:[%s1 + $0x108] sm:$0xff]
        %v579 = vld [vmem:[%s1 + $0x110] sm:$0xff]
        %v580 = vld [vmem:[%s1 + $0x118] sm:$0xff]
        %v581 = vld [vmem:[%s1 + $0x120] sm:$0xff]
        %v582 = vld [vmem:[%s1 + $0x128] sm:$0xff]
        %v583 = vld [vmem:[%s1 + $0x130] sm:$0xff]
        %v584 = vld [vmem:[%s1 + $0x138] sm:$0xff]
        %v585 = vld [vmem:[%s1 + $0x140] sm:$0xff]
        %v586 = vld [vmem:[%s1 + $0x148] sm:$0xff]
        %v587 = vld [vmem:[%s1 + $0x150] sm:$0xff]
        %v588 = vld [vmem:[%s1 + $0x158] sm:$0xff]
        %v589 = vld [vmem:[%s1 + $0x160] sm:$0xff]
        %v590 = vld [vmem:[%s1 + $0x168] sm:$0xff]
        %v591 = vld [vmem:[%s1 + $0x170] sm:$0xff]
        %v592 = vld [vmem:[%s1 + $0x178] sm:$0xff]
        %v593 = vld [vmem:[%s1 + $0x180] sm:$0xff]
        %v594 = vld [vmem:[%s1 + $0x188] sm:$0xff]
        %v595 = vld [vmem:[%s1 + $0x190] sm:$0xff]
        %v596 = vld [vmem:[%s1 + $0x198] sm:$0xff]
        %v597 = vld [vmem:[%s1 + $0x1a0] sm:$0xff]
        %v598 = vld [vmem:[%s1 + $0x1a8] sm:$0xff]
        %v599 = vld [vmem:[%s1 + $0x1b0] sm:$0xff]
        %v600 = vld [vmem:[%s1 + $0x1b8] sm:$0xff]
        %v601 = vld [vmem:[%s1 + $0x1c0] sm:$0xff]
        %v602 = vld [vmem:[%s1 + $0x1c8] sm:$0xff]
        %v603 = vld [vmem:[%s1 + $0x1d0] sm:$0xff]
        %v604 = vld [vmem:[%s1 + $0x1d8] sm:$0xff]
        %v605 = vld [vmem:[%s1 + $0x1e0] sm:$0xff]
        %v606 = vld [vmem:[%s1 + $0x1e8] sm:$0xff]
        %v607 = vld [vmem:[%s1 + $0x1f0] sm:$0xff]
        %v608 = vld [vmem:[%s1 + $0x1f8] sm:$0xff]
        %v609 = vld [vmem:[%s1 + $0x200] sm:$0xff]
        %v610 = vld [vmem:[%s1 + $0x208] sm:$0xff]
        %v611 = vld [vmem:[%s1 + $0x210] sm:$0xff]
        %v612 = vld [vmem:[%s1 + $0x218] sm:$0xff]
        %v613 = vld [vmem:[%s1 + $0x220] sm:$0xff]
        %v614 = vld [vmem:[%s1 + $0x228] sm:$0xff]
        %v615 = vld [vmem:[%s1 + $0x230] sm:$0xff]
        %v616 = vld [vmem:[%s1 + $0x238] sm:$0xff]
        %v617 = vld [vmem:[%s1 + $0x240] sm:$0xff]
        %v618 = vld [vmem:[%s1 + $0x248] sm:$0xff]
        %v619 = vld [vmem:[%s1 + $0x250] sm:$0xff]
        %v620 = vld [vmem:[%s1 + $0x258] sm:$0xff]
        %v621 = vld [vmem:[%s1 + $0x260] sm:$0xff]
        %v622 = vld [vmem:[%s1 + $0x268] sm:$0xff]
        %v623 = vld [vmem:[%s1 + $0x270] sm:$0xff]
        %v624 = vld [vmem:[%s1 + $0x278] sm:$0xff]
        %v625 = vld [vmem:[%s2] sm:$0xff]
        %v626 = vld [vmem:[%s2 + $0x8] sm:$0xff]
        %v627 = vld [vmem:[%s2 + $0x10] sm:$0xff]
        %v628 = vld [vmem:[%s2 + $0x18] sm:$0xff]
        %v629 = vld [vmem:[%s2 + $0x20] sm:$0xff]
        %v630 = vld [vmem:[%s2 + $0x28] sm:$0xff]
        %v631 = vld [vmem:[%s2 + $0x30] sm:$0xff]
        %v632 = vld [vmem:[%s2 + $0x38] sm:$0xff]
        %v633 = vld [vmem:[%s2 + $0x40] sm:$0xff]
        %v634 = vld [vmem:[%s2 + $0x48] sm:$0xff]
        %v635 = vld [vmem:[%s2 + $0x50] sm:$0xff]
        %v636 = vld [vmem:[%s2 + $0x58] sm:$0xff]
        %v637 = vld [vmem:[%s2 + $0x60] sm:$0xff]
        %v638 = vld [vmem:[%s2 + $0x68] sm:$0xff]
        %v639 = vld [vmem:[%s2 + $0x70] sm:$0xff]
        %v640 = vld [vmem:[%s2 + $0x78] sm:$0xff]
        %v641 = vld [vmem:[%s2 + $0x80] sm:$0xff]
        %v642 = vld [vmem:[%s2 + $0x88] sm:$0xff]
        %v643 = vld [vmem:[%s2 + $0x90] sm:$0xff]
        %v644 = vld [vmem:[%s2 + $0x98] sm:$0xff]
        %v645 = vld [vmem:[%s520] sm:$0xf]
        %v646 = vld [vmem:[%s520 + $0x4] sm:$0xf]
        %v647 = vld [vmem:[%s520 + $0x8] sm:$0xf]
        %v648 = vld [vmem:[%s520 + $0xc] sm:$0xf]
        %v649 = vld [vmem:[%s520 + $0x10] sm:$0xf]
        %v650 = vld [vmem:[%s520 + $0x14] sm:$0xf]
        %v651 = vld [vmem:[%s520 + $0x18] sm:$0xf]
        %v652 = vld [vmem:[%s520 + $0x1c] sm:$0xf]
        %v653 = vld [vmem:[%s520 + $0x20] sm:$0xf]
        %v654 = vld [vmem:[%s520 + $0x24] sm:$0xf]
        %v655 = vld [vmem:[%s520 + $0x28] sm:$0xf]
        %v656 = vld [vmem:[%s520 + $0x2c] sm:$0xf]
        %v657 = vld [vmem:[%s520 + $0x30] sm:$0xf]
        %v658 = vld [vmem:[%s520 + $0x34] sm:$0xf]
        %v659 = vld [vmem:[%s520 + $0x38] sm:$0xf]
        %v660 = vld [vmem:[%s520 + $0x3c] sm:$0xf]
        %v661 = vld [vmem:[%s520 + $0x40] sm:$0xf]
        %v662 = vld [vmem:[%s520 + $0x44] sm:$0xf]
        %v743 = vunpack.c.l.b16 %v545
        %v744 = vunpack.c.h.b16 %v545
        %v745 = vunpack.c.l.b16 %v546
        %v746 = vunpack.c.h.b16 %v546
        %v747 = vunpack.c.l.b16 %v547
        %v748 = vunpack.c.h.b16 %v547
        %v749 = vunpack.c.l.b16 %v548
        %v750 = vunpack.c.h.b16 %v548
        %v751 = vunpack.c.l.b16 %v549
        %v752 = vunpack.c.h.b16 %v549
        %v753 = vunpack.c.l.b16 %v550
        %v754 = vunpack.c.h.b16 %v550
        %v755 = vunpack.c.l.b16 %v551
        %v756 = vunpack.c.h.b16 %v551
        %v757 = vunpack.c.l.b16 %v552
        %v758 = vunpack.c.h.b16 %v552
        %v759 = vunpack.c.l.b16 %v553
        %v760 = vunpack.c.h.b16 %v553
        %v761 = vunpack.c.l.b16 %v554
        %v762 = vunpack.c.h.b16 %v554
        %v763 = vunpack.c.l.b16 %v555
        %v764 = vunpack.c.h.b16 %v555
        %v765 = vunpack.c.l.b16 %v556
        %v766 = vunpack.c.h.b16 %v556
        %v767 = vunpack.c.l.b16 %v557
        %v768 = vunpack.c.h.b16 %v557
        %v769 = vunpack.c.l.b16 %v558
        %v770 = vunpack.c.h.b16 %v558
        %v771 = vunpack.c.l.b16 %v559
        %v772 = vunpack.c.h.b16 %v559
        %v773 = vunpack.c.l.b16 %v560
        %v774 = vunpack.c.h.b16 %v560
        %v775 = vunpack.c.l.b16 %v561
        %v776 = vunpack.c.h.b16 %v561
        %v777 = vunpack.c.l.b16 %v562
        %v778 = vunpack.c.h.b16 %v562
        %v779 = vunpack.c.l.b16 %v563
        %v780 = vunpack.c.h.b16 %v563
        %v781 = vunpack.c.l.b16 %v564
        %v782 = vunpack.c.h.b16 %v564
        %v783 = vunpack.c.l.b16 %v565
        %v784 = vunpack.c.h.b16 %v565
        %v785 = vunpack.c.l.b16 %v566
        %v786 = vunpack.c.h.b16 %v566
        %v787 = vunpack.c.l.b16 %v567
        %v788 = vunpack.c.h.b16 %v567
        %v789 = vunpack.c.l.b16 %v568
        %v790 = vunpack.c.h.b16 %v568
        %v791 = vunpack.c.l.b16 %v569
        %v792 = vunpack.c.h.b16 %v569
        %v793 = vunpack.c.l.b16 %v570
        %v794 = vunpack.c.h.b16 %v570
        %v795 = vunpack.c.l.b16 %v571
        %v796 = vunpack.c.h.b16 %v571
        %v797 = vunpack.c.l.b16 %v572
        %v798 = vunpack.c.h.b16 %v572
        %v799 = vunpack.c.l.b16 %v573
        %v800 = vunpack.c.h.b16 %v573
        %v801 = vunpack.c.l.b16 %v574
        %v802 = vunpack.c.h.b16 %v574
        %v803 = vunpack.c.l.b16 %v575
        %v804 = vunpack.c.h.b16 %v575
        %v805 = vunpack.c.l.b16 %v576
        %v806 = vunpack.c.h.b16 %v576
        %v807 = vunpack.c.l.b16 %v577
        %v808 = vunpack.c.h.b16 %v577
        %v809 = vunpack.c.l.b16 %v578
        %v810 = vunpack.c.h.b16 %v578
        %v811 = vunpack.c.l.b16 %v579
        %v812 = vunpack.c.h.b16 %v579
        %v813 = vunpack.c.l.b16 %v580
        %v814 = vunpack.c.h.b16 %v580
        %v815 = vunpack.c.l.b16 %v581
        %v816 = vunpack.c.h.b16 %v581
        %v817 = vunpack.c.l.b16 %v582
        %v818 = vunpack.c.h.b16 %v582
        %v819 = vunpack.c.l.b16 %v583
        %v820 = vunpack.c.h.b16 %v583
        %v821 = vunpack.c.l.b16 %v584
        %v822 = vunpack.c.h.b16 %v584
        %v823 = vunpack.c.l.b16 %v585
        %v824 = vunpack.c.h.b16 %v585
        %v825 = vunpack.c.l.b16 %v586
        %v826 = vunpack.c.h.b16 %v586
        %v827 = vunpack.c.l.b16 %v587
        %v828 = vunpack.c.h.b16 %v587
        %v829 = vunpack.c.l.b16 %v588
        %v830 = vunpack.c.h.b16 %v588
        %v831 = vunpack.c.l.b16 %v589
        %v832 = vunpack.c.h.b16 %v589
        %v833 = vunpack.c.l.b16 %v590
        %v834 = vunpack.c.h.b16 %v590
        %v835 = vunpack.c.l.b16 %v591
        %v836 = vunpack.c.h.b16 %v591
        %v837 = vunpack.c.l.b16 %v592
        %v838 = vunpack.c.h.b16 %v592
        %v839 = vunpack.c.l.b16 %v593
        %v840 = vunpack.c.h.b16 %v593
        %v841 = vunpack.c.l.b16 %v594
        %v842 = vunpack.c.h.b16 %v594
        %v843 = vunpack.c.l.b16 %v595
        %v844 = vunpack.c.h.b16 %v595
        %v845 = vunpack.c.l.b16 %v596
        %v846 = vunpack.c.h.b16 %v596
        %v847 = vunpack.c.l.b16 %v597
        %v848 = vunpack.c.h.b16 %v597
        %v849 = vunpack.c.l.b16 %v598
        %v850 = vunpack.c.h.b16 %v598
        %v851 = vunpack.c.l.b16 %v599
        %v852 = vunpack.c.h.b16 %v599
        %v853 = vunpack.c.l.b16 %v600
        %v854 = vunpack.c.h.b16 %v600
        %v855 = vunpack.c.l.b16 %v601
        %v856 = vunpack.c.h.b16 %v601
        %v857 = vunpack.c.l.b16 %v602
        %v858 = vunpack.c.h.b16 %v602
        %v859 = vunpack.c.l.b16 %v603
        %v860 = vunpack.c.h.b16 %v603
        %v861 = vunpack.c.l.b16 %v604
        %v862 = vunpack.c.h.b16 %v604
        %v863 = vunpack.c.l.b16 %v605
        %v864 = vunpack.c.h.b16 %v605
        %v865 = vunpack.c.l.b16 %v606
        %v866 = vunpack.c.h.b16 %v606
        %v867 = vunpack.c.l.b16 %v607
        %v868 = vunpack.c.h.b16 %v607
        %v869 = vunpack.c.l.b16 %v608
        %v870 = vunpack.c.h.b16 %v608
        %v871 = vunpack.c.l.b16 %v609
        %v872 = vunpack.c.h.b16 %v609
        %v873 = vunpack.c.l.b16 %v610
        %v874 = vunpack.c.h.b16 %v610
        %v875 = vunpack.c.l.b16 %v611
        %v876 = vunpack.c.h.b16 %v611
        %v877 = vunpack.c.l.b16 %v612
        %v878 = vunpack.c.h.b16 %v612
        %v879 = vunpack.c.l.b16 %v613
        %v880 = vunpack.c.h.b16 %v613
        %v881 = vunpack.c.l.b16 %v614
        %v882 = vunpack.c.h.b16 %v614
        %v883 = vunpack.c.l.b16 %v615
        %v884 = vunpack.c.h.b16 %v615
        %v885 = vunpack.c.l.b16 %v616
        %v886 = vunpack.c.h.b16 %v616
        %v887 = vunpack.c.l.b16 %v617
        %v888 = vunpack.c.h.b16 %v617
        %v889 = vunpack.c.l.b16 %v618
        %v890 = vunpack.c.h.b16 %v618
        %v891 = vunpack.c.l.b16 %v619
        %v892 = vunpack.c.h.b16 %v619
        %v893 = vunpack.c.l.b16 %v620
        %v894 = vunpack.c.h.b16 %v620
        %v895 = vunpack.c.l.b16 %v621
        %v896 = vunpack.c.h.b16 %v621
        %v897 = vunpack.c.l.b16 %v622
        %v898 = vunpack.c.h.b16 %v622
        %v899 = vunpack.c.l.b16 %v623
        %v900 = vunpack.c.h.b16 %v623
        %v901 = vunpack.c.l.b16 %v624
        %v902 = vunpack.c.h.b16 %v624
        %v903 = vpack.c.b16 %v745, %v743
        %v904 = vpack.c.b16 %v746, %v744
        %v905 = vpack.c.b16 %v749, %v747
        %v906 = vpack.c.b16 %v750, %v748
        %v907 = vpack.c.b16 %v753, %v751
        %v908 = vpack.c.b16 %v754, %v752
        %v909 = vpack.c.b16 %v757, %v755
        %v910 = vpack.c.b16 %v758, %v756
        %v911 = vpack.c.b16 %v761, %v759
        %v912 = vpack.c.b16 %v762, %v760
        %v913 = vpack.c.b16 %v765, %v763
        %v914 = vpack.c.b16 %v766, %v764
        %v915 = vpack.c.b16 %v769, %v767
        %v916 = vpack.c.b16 %v770, %v768
        %v917 = vpack.c.b16 %v773, %v771
        %v918 = vpack.c.b16 %v774, %v772
        %v919 = vpack.c.b16 %v777, %v775
        %v920 = vpack.c.b16 %v778, %v776
        %v921 = vpack.c.b16 %v781, %v779
        %v922 = vpack.c.b16 %v782, %v780
        %v923 = vpack.c.b16 %v785, %v783
        %v924 = vpack.c.b16 %v786, %v784
        %v925 = vpack.c.b16 %v789, %v787
        %v926 = vpack.c.b16 %v790, %v788
        %v927 = vpack.c.b16 %v793, %v791
        %v928 = vpack.c.b16 %v794, %v792
        %v929 = vpack.c.b16 %v797, %v795
        %v930 = vpack.c.b16 %v798, %v796
        %v931 = vpack.c.b16 %v801, %v799
        %v932 = vpack.c.b16 %v802, %v800
        %v933 = vpack.c.b16 %v805, %v803
        %v934 = vpack.c.b16 %v806, %v804
        %v935 = vpack.c.b16 %v809, %v807
        %v936 = vpack.c.b16 %v810, %v808
        %v937 = vpack.c.b16 %v813, %v811
        %v938 = vpack.c.b16 %v814, %v812
        %v939 = vpack.c.b16 %v817, %v815
        %v940 = vpack.c.b16 %v818, %v816
        %v941 = vpack.c.b16 %v821, %v819
        %v942 = vpack.c.b16 %v822, %v820
        %v943 = vpack.c.b16 %v825, %v823
        %v944 = vpack.c.b16 %v826, %v824
        %v945 = vpack.c.b16 %v829, %v827
        %v946 = vpack.c.b16 %v830, %v828
        %v947 = vpack.c.b16 %v833, %v831
        %v948 = vpack.c.b16 %v834, %v832
        %v949 = vpack.c.b16 %v837, %v835
        %v950 = vpack.c.b16 %v838, %v836
        %v951 = vpack.c.b16 %v841, %v839
        %v952 = vpack.c.b16 %v842, %v840
        %v953 = vpack.c.b16 %v845, %v843
        %v954 = vpack.c.b16 %v846, %v844
        %v955 = vpack.c.b16 %v849, %v847
        %v956 = vpack.c.b16 %v850, %v848
        %v957 = vpack.c.b16 %v853, %v851
        %v958 = vpack.c.b16 %v854, %v852
        %v959 = vpack.c.b16 %v857, %v855
        %v960 = vpack.c.b16 %v858, %v856
        %v961 = vpack.c.b16 %v861, %v859
        %v962 = vpack.c.b16 %v862, %v860
        %v963 = vpack.c.b16 %v865, %v863
        %v964 = vpack.c.b16 %v866, %v864
        %v965 = vpack.c.b16 %v869, %v867
        %v966 = vpack.c.b16 %v870, %v868
        %v967 = vpack.c.b16 %v873, %v871
        %v968 = vpack.c.b16 %v874, %v872
        %v969 = vpack.c.b16 %v877, %v875
        %v970 = vpack.c.b16 %v878, %v876
        %v971 = vpack.c.b16 %v881, %v879
        %v972 = vpack.c.b16 %v882, %v880
        %v973 = vpack.c.b16 %v885, %v883
        %v974 = vpack.c.b16 %v886, %v884
        %v975 = vpack.c.b16 %v889, %v887
        %v976 = vpack.c.b16 %v890, %v888
        %v977 = vpack.c.b16 %v893, %v891
        %v978 = vpack.c.b16 %v894, %v892
        %v979 = vpack.c.b16 %v897, %v895
        %v980 = vpack.c.b16 %v898, %v896
        %v981 = vpack.c.b16 %v901, %v899
        %v982 = vpack.c.b16 %v902, %v900
        %v1041 = vunpack.c.l.b16 %v645
        %v1042 = vunpack.c.l.b16 %v646
        %v1043 = vunpack.c.l.b16 %v647
        %v1044 = vunpack.c.l.b16 %v648
        %v1045 = vunpack.c.l.b16 %v649
        %v1046 = vunpack.c.l.b16 %v650
        %v1047 = vunpack.c.l.b16 %v651
        %v1048 = vunpack.c.l.b16 %v652
        %v1049 = vunpack.c.l.b16 %v653
        %v1050 = vunpack.c.l.b16 %v654
        %v1051 = vunpack.c.l.b16 %v655
        %v1052 = vunpack.c.l.b16 %v656
        %v1053 = vunpack.c.l.b16 %v657
        %v1054 = vunpack.c.l.b16 %v658
        %v1055 = vunpack.c.l.b16 %v659
        %v1056 = vunpack.c.l.b16 %v660
        %v1057 = vunpack.c.l.b16 %v661
        %v1058 = vunpack.c.l.b16 %v662
        %v1059 = vpack.c.b16 %v1042, %v1041
        %v1060 = vpack.c.b16 %v1044, %v1043
        %v1061 = vpack.c.b16 %v1046, %v1045
        %v1062 = vpack.c.b16 %v1048, %v1047
        %v1063 = vpack.c.b16 %v1050, %v1049
        %v1064 = vpack.c.b16 %v1052, %v1051
        %v1065 = vpack.c.b16 %v1054, %v1053
        %v1066 = vpack.c.b16 %v1056, %v1055
        %v1067 = vpack.c.b16 %v1058, %v1057
        %vm1077 = vcmask 130048
        %v1079 = vsel %vm1077, %v904, 0
        %v1082 = vsel %vm1077, %v906, 0
        %v1085 = vsel %vm1077, %v908, 0
        %v1088 = vsel %vm1077, %v910, 0
        %v1091 = vsel %vm1077, %v912, 0
        %v1094 = vsel %vm1077, %v914, 0
        %v1097 = vsel %vm1077, %v916, 0
        %v1100 = vsel %vm1077, %v918, 0
        %v1103 = vsel %vm1077, %v920, 0
        %v1106 = vsel %vm1077, %v922, 0
        %v1109 = vsel %vm1077, %v924, 0
        %v1112 = vsel %vm1077, %v926, 0
        %v1115 = vsel %vm1077, %v928, 0
        %v1118 = vsel %vm1077, %v930, 0
        %v1121 = vsel %vm1077, %v932, 0
        %v1124 = vsel %vm1077, %v934, 0
        %v1127 = vsel %vm1077, %v936, 0
        %v1130 = vsel %vm1077, %v938, 0
        %v1133 = vsel %vm1077, %v940, 0
        %v1136 = vsel %vm1077, %v942, 0
        %v1139 = vsel %vm1077, %v944, 0
        %v1142 = vsel %vm1077, %v946, 0
        %v1145 = vsel %vm1077, %v948, 0
        %v1148 = vsel %vm1077, %v950, 0
        %v1151 = vsel %vm1077, %v952, 0
        %v1154 = vsel %vm1077, %v954, 0
        %v1157 = vsel %vm1077, %v956, 0
        %v1160 = vsel %vm1077, %v958, 0
        %v1163 = vsel %vm1077, %v960, 0
        %v1166 = vsel %vm1077, %v962, 0
        %v1169 = vsel %vm1077, %v964, 0
        %v1172 = vsel %vm1077, %v966, 0
        %v1175 = vsel %vm1077, %v968, 0
        %v1178 = vsel %vm1077, %v970, 0
        %v1181 = vsel %vm1077, %v972, 0
        %v1184 = vsel %vm1077, %v974, 0
        %v1187 = vsel %vm1077, %v976, 0
        %v1190 = vsel %vm1077, %v978, 0
        %v1193 = vsel %vm1077, %v980, 0
        %v1196 = vsel %vm1077, %v982, 0
        %1198 = vmatprep.subr.bf16.mxu0 0
        %1199 = vmatpush1.bf16.msra.mxu0 %v1059
        %1200 = vmatprep.subr.bf16.mxu0 0
        %1201 = vmatpush1.bf16.msra.mxu0 %v1060
        %1202 = vmatprep.subr.bf16.mxu0 0
        %1203 = vmatpush1.bf16.msra.mxu0 %v1061
        %1204 = vmatprep.subr.bf16.mxu0 0
        %1205 = vmatpush1.bf16.msra.mxu0 %v1062
        %1206 = vmatprep.subr.bf16.mxu0 0
        %1207 = vmatpush1.bf16.msra.mxu0 %v1063
        %1208 = vmatprep.subr.bf16.mxu0 0
        %1209 = vmatpush1.bf16.msra.mxu0 %v1064
        %1210 = vmatprep.subr.bf16.mxu0 0
        %1211 = vmatpush1.bf16.msra.mxu0 %v1065
        %1212 = vmatprep.subr.bf16.mxu0 0
        %1213 = vmatpush1.bf16.msra.mxu0 %v1066
        %1214 = vmatprep.subr.bf16.mxu0 0
        %1215 = vmatpush1.bf16.msra.mxu0 %v1067
        %1216 = vmatprep.subr.bf16.mxu0 0
        %1217 = vmatpush1.bf16.msra.mxu0 0
        %1218 = vmatprep.subr.bf16.mxu0 0
        %1219 = vmatpush1.bf16.msra.mxu0 0
        %1220 = vmatprep.subr.bf16.mxu0 0
        %1221 = vmatpush1.bf16.msra.mxu0 0
        %1222 = vmatprep.subr.bf16.mxu0 0
        %1223 = vmatpush1.bf16.msra.mxu0 0
        %1224 = vmatprep.subr.bf16.mxu0 0
        %1225 = vmatpush1.bf16.msra.mxu0 0
        %1226 = vmatprep.subr.bf16.mxu0 0
        %1227 = vmatpush1.bf16.msra.mxu0 0
        %1228 = vmatprep.subr.bf16.mxu0 0
        %1229 = vmatpush1.bf16.msra.mxu0 0
        %1230 = vmatprep.mubr.bf16.mxu0 %v1079
        %1231 = vmatmul.mubr.bf16.gmra.mrb[0].mxu0 %v903
        %v1232 = vpop.f32.mrb[0].mxu0
        %v1233 = vadd.f32 0.0, %v1232
        %v1234 = vpop.f32.mrb[0].mxu0
        %v1235 = vpop.f32.mrb[0].mxu0
        %v1236 = vadd.f32 0.0, %v1235
        %v1237 = vpop.f32.mrb[0].mxu0
        %1238 = vmatprep.mubr.bf16.mxu0 %v1082
        %1239 = vmatmul.mubr.bf16.gmra.mrb[0].mxu0 %v905
        %v1240 = vpop.f32.mrb[0].mxu0
        %v1241 = vadd.f32 0.0, %v1240
        %v1242 = vpop.f32.mrb[0].mxu0
        %v1243 = vpop.f32.mrb[0].mxu0
        %v1244 = vadd.f32 0.0, %v1243
        %v1245 = vpop.f32.mrb[0].mxu0
        %1246 = vmatprep.mubr.bf16.mxu0 %v1085
        %1247 = vmatmul.mubr.bf16.gmra.mrb[0].mxu0 %v907
        %v1248 = vpop.f32.mrb[0].mxu0
        %v1249 = vadd.f32 0.0, %v1248
        %v1250 = vpop.f32.mrb[0].mxu0
        %v1251 = vpop.f32.mrb[0].mxu0
        %v1252 = vadd.f32 0.0, %v1251
        %v1253 = vpop.f32.mrb[0].mxu0
        %1254 = vmatprep.mubr.bf16.mxu0 %v1088
        %1255 = vmatmul.mubr.bf16.gmra.mrb[0].mxu0 %v909
        %v1256 = vpop.f32.mrb[0].mxu0
        %v1257 = vadd.f32 0.0, %v1256
        %v1258 = vpop.f32.mrb[0].mxu0
        %v1259 = vpop.f32.mrb[0].mxu0
        %v1260 = vadd.f32 0.0, %v1259
        %v1261 = vpop.f32.mrb[0].mxu0
        %1262 = vmatprep.mubr.bf16.mxu0 %v1091
        %1263 = vmatmul.mubr.bf16.gmra.mrb[0].mxu0 %v911
        %v1264 = vpop.f32.mrb[0].mxu0
        %v1265 = vadd.f32 0.0, %v1264
        %v1266 = vpop.f32.mrb[0].mxu0
        %v1267 = vpop.f32.mrb[0].mxu0
        %v1268 = vadd.f32 0.0, %v1267
        %v1269 = vpop.f32.mrb[0].mxu0
        %1270 = vmatprep.mubr.bf16.mxu0 %v1094
        %1271 = vmatmul.mubr.bf16.gmra.mrb[0].mxu0 %v913
        %v1272 = vpop.f32.mrb[0].mxu0
        %v1273 = vadd.f32 0.0, %v1272
        %v1274 = vpop.f32.mrb[0].mxu0
        %v1275 = vpop.f32.mrb[0].mxu0
        %v1276 = vadd.f32 0.0, %v1275
        %v1277 = vpop.f32.mrb[0].mxu0
        %1278 = vmatprep.mubr.bf16.mxu0 %v1097
        %1279 = vmatmul.mubr.bf16.gmra.mrb[0].mxu0 %v915
        %v1280 = vpop.f32.mrb[0].mxu0
        %v1281 = vadd.f32 0.0, %v1280
        %v1282 = vpop.f32.mrb[0].mxu0
        %v1283 = vpop.f32.mrb[0].mxu0
        %v1284 = vadd.f32 0.0, %v1283
        %v1285 = vpop.f32.mrb[0].mxu0
        %1286 = vmatprep.mubr.bf16.mxu0 %v1100
        %1287 = vmatmul.mubr.bf16.gmra.mrb[0].mxu0 %v917
        %v1288 = vpop.f32.mrb[0].mxu0
        %v1289 = vadd.f32 0.0, %v1288
        %v1290 = vpop.f32.mrb[0].mxu0
        %v1291 = vpop.f32.mrb[0].mxu0
        %v1292 = vadd.f32 0.0, %v1291
        %v1293 = vpop.f32.mrb[0].mxu0
        %1294 = vmatprep.mubr.bf16.mxu0 %v1103
        %1295 = vmatmul.mubr.bf16.gmra.mrb[0].mxu0 %v919
        %v1296 = vpop.f32.mrb[0].mxu0
        %v1297 = vadd.f32 0.0, %v1296
        %v1298 = vpop.f32.mrb[0].mxu0
        %v1299 = vpop.f32.mrb[0].mxu0
        %v1300 = vadd.f32 0.0, %v1299
        %v1301 = vpop.f32.mrb[0].mxu0
        %1302 = vmatprep.mubr.bf16.mxu0 %v1106
        %1303 = vmatmul.mubr.bf16.gmra.mrb[0].mxu0 %v921
        %v1304 = vpop.f32.mrb[0].mxu0
        %v1305 = vadd.f32 0.0, %v1304
        %v1306 = vpop.f32.mrb[0].mxu0
        %v1307 = vpop.f32.mrb[0].mxu0
        %v1308 = vadd.f32 0.0, %v1307
        %v1309 = vpop.f32.mrb[0].mxu0
        %1310 = vmatprep.mubr.bf16.mxu0 %v1109
        %1311 = vmatmul.mubr.bf16.gmra.mrb[0].mxu0 %v923
        %v1312 = vpop.f32.mrb[0].mxu0
        %v1313 = vadd.f32 0.0, %v1312
        %v1314 = vpop.f32.mrb[0].mxu0
        %v1315 = vpop.f32.mrb[0].mxu0
        %v1316 = vadd.f32 0.0, %v1315
        %v1317 = vpop.f32.mrb[0].mxu0
        %1318 = vmatprep.mubr.bf16.mxu0 %v1112
        %1319 = vmatmul.mubr.bf16.gmra.mrb[0].mxu0 %v925
        %v1320 = vpop.f32.mrb[0].mxu0
        %v1321 = vadd.f32 0.0, %v1320
        %v1322 = vpop.f32.mrb[0].mxu0
        %v1323 = vpop.f32.mrb[0].mxu0
        %v1324 = vadd.f32 0.0, %v1323
        %v1325 = vpop.f32.mrb[0].mxu0
        %1326 = vmatprep.mubr.bf16.mxu0 %v1115
        %1327 = vmatmul.mubr.bf16.gmra.mrb[0].mxu0 %v927
        %v1328 = vpop.f32.mrb[0].mxu0
        %v1329 = vadd.f32 0.0, %v1328
        %v1330 = vpop.f32.mrb[0].mxu0
        %v1331 = vpop.f32.mrb[0].mxu0
        %v1332 = vadd.f32 0.0, %v1331
        %v1333 = vpop.f32.mrb[0].mxu0
        %1334 = vmatprep.mubr.bf16.mxu0 %v1118
        %1335 = vmatmul.mubr.bf16.gmra.mrb[0].mxu0 %v929
        %v1336 = vpop.f32.mrb[0].mxu0
        %v1337 = vadd.f32 0.0, %v1336
        %v1338 = vpop.f32.mrb[0].mxu0
        %v1339 = vpop.f32.mrb[0].mxu0
        %v1340 = vadd.f32 0.0, %v1339
        %v1341 = vpop.f32.mrb[0].mxu0
        %1342 = vmatprep.mubr.bf16.mxu0 %v1121
        %1343 = vmatmul.mubr.bf16.gmra.mrb[0].mxu0 %v931
        %v1344 = vpop.f32.mrb[0].mxu0
        %v1345 = vadd.f32 0.0, %v1344
        %v1346 = vpop.f32.mrb[0].mxu0
        %v1347 = vpop.f32.mrb[0].mxu0
        %v1348 = vadd.f32 0.0, %v1347
        %v1349 = vpop.f32.mrb[0].mxu0
        %1350 = vmatprep.mubr.bf16.mxu0 %v1124
        %1351 = vmatmul.mubr.bf16.gmra.mrb[0].mxu0 %v933
        %v1352 = vpop.f32.mrb[0].mxu0
        %v1353 = vadd.f32 0.0, %v1352
        %v1354 = vpop.f32.mrb[0].mxu0
        %v1355 = vpop.f32.mrb[0].mxu0
        %v1356 = vadd.f32 0.0, %v1355
        %v1357 = vpop.f32.mrb[0].mxu0
        %1358 = vmatprep.mubr.bf16.mxu0 %v1127
        %1359 = vmatmul.mubr.bf16.gmra.mrb[0].mxu0 %v935
        %v1360 = vpop.f32.mrb[0].mxu0
        %v1361 = vadd.f32 0.0, %v1360
        %v1362 = vpop.f32.mrb[0].mxu0
        %v1363 = vpop.f32.mrb[0].mxu0
        %v1364 = vadd.f32 0.0, %v1363
        %v1365 = vpop.f32.mrb[0].mxu0
        %1366 = vmatprep.mubr.bf16.mxu0 %v1130
        %1367 = vmatmul.mubr.bf16.gmra.mrb[0].mxu0 %v937
        %v1368 = vpop.f32.mrb[0].mxu0
        %v1369 = vadd.f32 0.0, %v1368
        %v1370 = vpop.f32.mrb[0].mxu0
        %v1371 = vpop.f32.mrb[0].mxu0
        %v1372 = vadd.f32 0.0, %v1371
        %v1373 = vpop.f32.mrb[0].mxu0
        %1374 = vmatprep.mubr.bf16.mxu0 %v1133
        %1375 = vmatmul.mubr.bf16.gmra.mrb[0].mxu0 %v939
        %v1376 = vpop.f32.mrb[0].mxu0
        %v1377 = vadd.f32 0.0, %v1376
        %v1378 = vpop.f32.mrb[0].mxu0
        %v1379 = vpop.f32.mrb[0].mxu0
        %v1380 = vadd.f32 0.0, %v1379
        %v1381 = vpop.f32.mrb[0].mxu0
        %1382 = vmatprep.mubr.bf16.mxu0 %v1136
        %1383 = vmatmul.mubr.bf16.gmra.mrb[0].mxu0 %v941
        %v1384 = vpop.f32.mrb[0].mxu0
        %v1385 = vadd.f32 0.0, %v1384
        %v1386 = vpop.f32.mrb[0].mxu0
        %v1387 = vpop.f32.mrb[0].mxu0
        %v1388 = vadd.f32 0.0, %v1387
        %v1389 = vpop.f32.mrb[0].mxu0
        %1390 = vmatprep.mubr.bf16.mxu0 %v1139
        %1391 = vmatmul.mubr.bf16.gmra.mrb[0].mxu0 %v943
        %v1392 = vpop.f32.mrb[0].mxu0
        %v1393 = vadd.f32 0.0, %v1392
        %v1394 = vpop.f32.mrb[0].mxu0
        %v1395 = vpop.f32.mrb[0].mxu0
        %v1396 = vadd.f32 0.0, %v1395
        %v1397 = vpop.f32.mrb[0].mxu0
        %1398 = vmatprep.mubr.bf16.mxu0 %v1142
        %1399 = vmatmul.mubr.bf16.gmra.mrb[0].mxu0 %v945
        %v1400 = vpop.f32.mrb[0].mxu0
        %v1401 = vadd.f32 0.0, %v1400
        %v1402 = vpop.f32.mrb[0].mxu0
        %v1403 = vpop.f32.mrb[0].mxu0
        %v1404 = vadd.f32 0.0, %v1403
        %v1405 = vpop.f32.mrb[0].mxu0
        %1406 = vmatprep.mubr.bf16.mxu0 %v1145
        %1407 = vmatmul.mubr.bf16.gmra.mrb[0].mxu0 %v947
        %v1408 = vpop.f32.mrb[0].mxu0
        %v1409 = vadd.f32 0.0, %v1408
        %v1410 = vpop.f32.mrb[0].mxu0
        %v1411 = vpop.f32.mrb[0].mxu0
        %v1412 = vadd.f32 0.0, %v1411
        %v1413 = vpop.f32.mrb[0].mxu0
        %1414 = vmatprep.mubr.bf16.mxu0 %v1148
        %1415 = vmatmul.mubr.bf16.gmra.mrb[0].mxu0 %v949
        %v1416 = vpop.f32.mrb[0].mxu0
        %v1417 = vadd.f32 0.0, %v1416
        %v1418 = vpop.f32.mrb[0].mxu0
        %v1419 = vpop.f32.mrb[0].mxu0
        %v1420 = vadd.f32 0.0, %v1419
        %v1421 = vpop.f32.mrb[0].mxu0
        %1422 = vmatprep.mubr.bf16.mxu0 %v1151
        %1423 = vmatmul.mubr.bf16.gmra.mrb[0].mxu0 %v951
        %v1424 = vpop.f32.mrb[0].mxu0
        %v1425 = vadd.f32 0.0, %v1424
        %v1426 = vpop.f32.mrb[0].mxu0
        %v1427 = vpop.f32.mrb[0].mxu0
        %v1428 = vadd.f32 0.0, %v1427
        %v1429 = vpop.f32.mrb[0].mxu0
        %1430 = vmatprep.mubr.bf16.mxu0 %v1154
        %1431 = vmatmul.mubr.bf16.gmra.mrb[0].mxu0 %v953
        %v1432 = vpop.f32.mrb[0].mxu0
        %v1433 = vadd.f32 0.0, %v1432
        %v1434 = vpop.f32.mrb[0].mxu0
        %v1435 = vpop.f32.mrb[0].mxu0
        %v1436 = vadd.f32 0.0, %v1435
        %v1437 = vpop.f32.mrb[0].mxu0
        %1438 = vmatprep.mubr.bf16.mxu0 %v1157
        %1439 = vmatmul.mubr.bf16.gmra.mrb[0].mxu0 %v955
        %v1440 = vpop.f32.mrb[0].mxu0
        %v1441 = vadd.f32 0.0, %v1440
        %v1442 = vpop.f32.mrb[0].mxu0
        %v1443 = vpop.f32.mrb[0].mxu0
        %v1444 = vadd.f32 0.0, %v1443
        %v1445 = vpop.f32.mrb[0].mxu0
        %1446 = vmatprep.mubr.bf16.mxu0 %v1160
        %1447 = vmatmul.mubr.bf16.gmra.mrb[0].mxu0 %v957
        %v1448 = vpop.f32.mrb[0].mxu0
        %v1449 = vadd.f32 0.0, %v1448
        %v1450 = vpop.f32.mrb[0].mxu0
        %v1451 = vpop.f32.mrb[0].mxu0
        %v1452 = vadd.f32 0.0, %v1451
        %v1453 = vpop.f32.mrb[0].mxu0
        %1454 = vmatprep.mubr.bf16.mxu0 %v1163
        %1455 = vmatmul.mubr.bf16.gmra.mrb[0].mxu0 %v959
        %v1456 = vpop.f32.mrb[0].mxu0
        %v1457 = vadd.f32 0.0, %v1456
        %v1458 = vpop.f32.mrb[0].mxu0
        %v1459 = vpop.f32.mrb[0].mxu0
        %v1460 = vadd.f32 0.0, %v1459
        %v1461 = vpop.f32.mrb[0].mxu0
        %1462 = vmatprep.mubr.bf16.mxu0 %v1166
        %1463 = vmatmul.mubr.bf16.gmra.mrb[0].mxu0 %v961
        %v1464 = vpop.f32.mrb[0].mxu0
        %v1465 = vadd.f32 0.0, %v1464
        %v1466 = vpop.f32.mrb[0].mxu0
        %v1467 = vpop.f32.mrb[0].mxu0
        %v1468 = vadd.f32 0.0, %v1467
        %v1469 = vpop.f32.mrb[0].mxu0
        %1470 = vmatprep.mubr.bf16.mxu0 %v1169
        %1471 = vmatmul.mubr.bf16.gmra.mrb[0].mxu0 %v963
        %v1472 = vpop.f32.mrb[0].mxu0
        %v1473 = vadd.f32 0.0, %v1472
        %v1474 = vpop.f32.mrb[0].mxu0
        %v1475 = vpop.f32.mrb[0].mxu0
        %v1476 = vadd.f32 0.0, %v1475
        %v1477 = vpop.f32.mrb[0].mxu0
        %1478 = vmatprep.mubr.bf16.mxu0 %v1172
        %1479 = vmatmul.mubr.bf16.gmra.mrb[0].mxu0 %v965
        %v1480 = vpop.f32.mrb[0].mxu0
        %v1481 = vadd.f32 0.0, %v1480
        %v1482 = vpop.f32.mrb[0].mxu0
        %v1483 = vpop.f32.mrb[0].mxu0
        %v1484 = vadd.f32 0.0, %v1483
        %v1485 = vpop.f32.mrb[0].mxu0
        %1486 = vmatprep.mubr.bf16.mxu0 %v1175
        %1487 = vmatmul.mubr.bf16.gmra.mrb[0].mxu0 %v967
        %v1488 = vpop.f32.mrb[0].mxu0
        %v1489 = vadd.f32 0.0, %v1488
        %v1490 = vpop.f32.mrb[0].mxu0
        %v1491 = vpop.f32.mrb[0].mxu0
        %v1492 = vadd.f32 0.0, %v1491
        %v1493 = vpop.f32.mrb[0].mxu0
        %1494 = vmatprep.mubr.bf16.mxu0 %v1178
        %1495 = vmatmul.mubr.bf16.gmra.mrb[0].mxu0 %v969
        %v1496 = vpop.f32.mrb[0].mxu0
        %v1497 = vadd.f32 0.0, %v1496
        %v1498 = vpop.f32.mrb[0].mxu0
        %v1499 = vpop.f32.mrb[0].mxu0
        %v1500 = vadd.f32 0.0, %v1499
        %v1501 = vpop.f32.mrb[0].mxu0
        %1502 = vmatprep.mubr.bf16.mxu0 %v1181
        %1503 = vmatmul.mubr.bf16.gmra.mrb[0].mxu0 %v971
        %v1504 = vpop.f32.mrb[0].mxu0
        %v1505 = vadd.f32 0.0, %v1504
        %v1506 = vpop.f32.mrb[0].mxu0
        %v1507 = vpop.f32.mrb[0].mxu0
        %v1508 = vadd.f32 0.0, %v1507
        %v1509 = vpop.f32.mrb[0].mxu0
        %1510 = vmatprep.mubr.bf16.mxu0 %v1184
        %1511 = vmatmul.mubr.bf16.gmra.mrb[0].mxu0 %v973
        %v1512 = vpop.f32.mrb[0].mxu0
        %v1513 = vadd.f32 0.0, %v1512
        %v1514 = vpop.f32.mrb[0].mxu0
        %v1515 = vpop.f32.mrb[0].mxu0
        %v1516 = vadd.f32 0.0, %v1515
        %v1517 = vpop.f32.mrb[0].mxu0
        %1518 = vmatprep.mubr.bf16.mxu0 %v1187
        %1519 = vmatmul.mubr.bf16.gmra.mrb[0].mxu0 %v975
        %v1520 = vpop.f32.mrb[0].mxu0
        %v1521 = vadd.f32 0.0, %v1520
        %v1522 = vpop.f32.mrb[0].mxu0
        %v1523 = vpop.f32.mrb[0].mxu0
        %v1524 = vadd.f32 0.0, %v1523
        %v1525 = vpop.f32.mrb[0].mxu0
        %1526 = vmatprep.mubr.bf16.mxu0 %v1190
        %1527 = vmatmul.mubr.bf16.gmra.mrb[0].mxu0 %v977
        %v1528 = vpop.f32.mrb[0].mxu0
        %v1529 = vadd.f32 0.0, %v1528
        %v1530 = vpop.f32.mrb[0].mxu0
        %v1531 = vpop.f32.mrb[0].mxu0
        %v1532 = vadd.f32 0.0, %v1531
        %v1533 = vpop.f32.mrb[0].mxu0
        %1534 = vmatprep.mubr.bf16.mxu0 %v1193
        %1535 = vmatmul.mubr.bf16.gmra.mrb[0].mxu0 %v979
        %v1536 = vpop.f32.mrb[0].mxu0
        %v1537 = vadd.f32 0.0, %v1536
        %v1538 = vpop.f32.mrb[0].mxu0
        %v1539 = vpop.f32.mrb[0].mxu0
        %v1540 = vadd.f32 0.0, %v1539
        %v1541 = vpop.f32.mrb[0].mxu0
        %1542 = vmatprep.mubr.bf16.mxu0 %v1196
        %1543 = vmatmul.mubr.bf16.gmra.mrb[0].mxu0 %v981
        %v1544 = vpop.f32.mrb[0].mxu0
        %v1545 = vadd.f32 0.0, %v1544
        %v1546 = vpop.f32.mrb[0].mxu0
        %v1547 = vpop.f32.mrb[0].mxu0
        %v1548 = vadd.f32 0.0, %v1547
        %v1549 = vpop.f32.mrb[0].mxu0
        %1550 = vdwg.mxu0
        %v1551 = vmax.f32 %v1233, %v1313
        %v1552 = vmax.f32 %v1236, %v1316
        %v1553 = vmax.f32 %v1241, %v1321
        %v1554 = vmax.f32 %v1244, %v1324
        %v1555 = vmax.f32 %v1249, %v1329
        %v1556 = vmax.f32 %v1252, %v1332
        %v1557 = vmax.f32 %v1257, %v1337
        %v1558 = vmax.f32 %v1260, %v1340
        %v1559 = vmax.f32 %v1265, %v1345
        %v1560 = vmax.f32 %v1268, %v1348
        %v1561 = vmax.f32 %v1273, %v1353
        %v1562 = vmax.f32 %v1276, %v1356
        %v1563 = vmax.f32 %v1281, %v1361
        %v1564 = vmax.f32 %v1284, %v1364
        %v1565 = vmax.f32 %v1289, %v1369
        %v1566 = vmax.f32 %v1292, %v1372
        %v1567 = vmax.f32 %v1297, %v1377
        %v1568 = vmax.f32 %v1300, %v1380
        %v1569 = vmax.f32 %v1305, %v1385
        %v1570 = vmax.f32 %v1308, %v1388
        %v1571 = vmax.f32 %v1393, %v1473
        %v1572 = vmax.f32 %v1396, %v1476
        %v1573 = vmax.f32 %v1401, %v1481
        %v1574 = vmax.f32 %v1404, %v1484
        %v1575 = vmax.f32 %v1409, %v1489
        %v1576 = vmax.f32 %v1412, %v1492
        %v1577 = vmax.f32 %v1417, %v1497
        %v1578 = vmax.f32 %v1420, %v1500
        %v1579 = vmax.f32 %v1425, %v1505
        %v1580 = vmax.f32 %v1428, %v1508
        %v1581 = vmax.f32 %v1433, %v1513
        %v1582 = vmax.f32 %v1436, %v1516
        %v1583 = vmax.f32 %v1441, %v1521
        %v1584 = vmax.f32 %v1444, %v1524
        %v1585 = vmax.f32 %v1449, %v1529
        %v1586 = vmax.f32 %v1452, %v1532
        %v1587 = vmax.f32 %v1457, %v1537
        %v1588 = vmax.f32 %v1460, %v1540
        %v1589 = vmax.f32 %v1465, %v1545
        %v1590 = vmax.f32 %v1468, %v1548
        %v1591 = vmax.f32 %v1551, %v1571
        %v1592 = vmax.f32 %v1552, %v1572
        %v1593 = vmax.f32 %v1553, %v1573
        %v1594 = vmax.f32 %v1554, %v1574
        %v1595 = vmax.f32 %v1555, %v1575
        %v1596 = vmax.f32 %v1556, %v1576
        %v1597 = vmax.f32 %v1557, %v1577
        %v1598 = vmax.f32 %v1558, %v1578
        %v1599 = vmax.f32 %v1559, %v1579
        %v1600 = vmax.f32 %v1560, %v1580
        %v1601 = vmax.f32 %v1561, %v1581
        %v1602 = vmax.f32 %v1562, %v1582
        %v1603 = vmax.f32 %v1563, %v1583
        %v1604 = vmax.f32 %v1564, %v1584
        %v1605 = vmax.f32 %v1565, %v1585
        %v1606 = vmax.f32 %v1566, %v1586
        %v1607 = vmax.f32 %v1567, %v1587
        %v1608 = vmax.f32 %v1568, %v1588
        %v1609 = vmax.f32 %v1569, %v1589
        %v1610 = vmax.f32 %v1570, %v1590
        %1612 = vset.pattern.permute.xlu0 0
        %1613 = vperm.xlu0 %1612, %v625
        %v1614 = vpop.permute.xlu0 %1613
        %1617 = vset.pattern.permute.xlu0 0
        %1618 = vperm.xlu0 %1617, %v626
        %v1619 = vpop.permute.xlu0 %1618
        %1622 = vset.pattern.permute.xlu0 0
        %1623 = vperm.xlu0 %1622, %v627
        %v1624 = vpop.permute.xlu0 %1623
        %1627 = vset.pattern.permute.xlu0 0
        %1628 = vperm.xlu0 %1627, %v628
        %v1629 = vpop.permute.xlu0 %1628
        %1632 = vset.pattern.permute.xlu0 0
        %1633 = vperm.xlu0 %1632, %v629
        %v1634 = vpop.permute.xlu0 %1633
        %1637 = vset.pattern.permute.xlu0 0
        %1638 = vperm.xlu0 %1637, %v630
        %v1639 = vpop.permute.xlu0 %1638
        %1642 = vset.pattern.permute.xlu0 0
        %1643 = vperm.xlu0 %1642, %v631
        %v1644 = vpop.permute.xlu0 %1643
        %1647 = vset.pattern.permute.xlu0 0
        %1648 = vperm.xlu0 %1647, %v632
        %v1649 = vpop.permute.xlu0 %1648
        %1652 = vset.pattern.permute.xlu0 0
        %1653 = vperm.xlu0 %1652, %v633
        %v1654 = vpop.permute.xlu0 %1653
        %1657 = vset.pattern.permute.xlu0 0
        %1658 = vperm.xlu0 %1657, %v634
        %v1659 = vpop.permute.xlu0 %1658
        %1662 = vset.pattern.permute.xlu0 0
        %1663 = vperm.xlu0 %1662, %v635
        %v1664 = vpop.permute.xlu0 %1663
        %1667 = vset.pattern.permute.xlu0 0
        %1668 = vperm.xlu0 %1667, %v636
        %v1669 = vpop.permute.xlu0 %1668
        %1672 = vset.pattern.permute.xlu0 0
        %1673 = vperm.xlu0 %1672, %v637
        %v1674 = vpop.permute.xlu0 %1673
        %1677 = vset.pattern.permute.xlu0 0
        %1678 = vperm.xlu0 %1677, %v638
        %v1679 = vpop.permute.xlu0 %1678
        %1682 = vset.pattern.permute.xlu0 0
        %1683 = vperm.xlu0 %1682, %v639
        %v1684 = vpop.permute.xlu0 %1683
        %1687 = vset.pattern.permute.xlu0 0
        %1688 = vperm.xlu0 %1687, %v640
        %v1689 = vpop.permute.xlu0 %1688
        %1692 = vset.pattern.permute.xlu0 0
        %1693 = vperm.xlu0 %1692, %v641
        %v1694 = vpop.permute.xlu0 %1693
        %1697 = vset.pattern.permute.xlu0 0
        %1698 = vperm.xlu0 %1697, %v642
        %v1699 = vpop.permute.xlu0 %1698
        %1702 = vset.pattern.permute.xlu0 0
        %1703 = vperm.xlu0 %1702, %v643
        %v1704 = vpop.permute.xlu0 %1703
        %1707 = vset.pattern.permute.xlu0 0
        %1708 = vperm.xlu0 %1707, %v644
        %v1709 = vpop.permute.xlu0 %1708
        %v1711 = vadd.f32 %v1591, %v1614
        %v1712 = vadd.f32 %v1592, %v1619
        %v1713 = vadd.f32 %v1593, %v1624
        %v1714 = vadd.f32 %v1594, %v1629
        %v1715 = vadd.f32 %v1595, %v1634
        %v1716 = vadd.f32 %v1596, %v1639
        %v1717 = vadd.f32 %v1597, %v1644
        %v1718 = vadd.f32 %v1598, %v1649
        %v1719 = vadd.f32 %v1599, %v1654
        %v1720 = vadd.f32 %v1600, %v1659
        %v1721 = vadd.f32 %v1601, %v1664
        %v1722 = vadd.f32 %v1602, %v1669
        %v1723 = vadd.f32 %v1603, %v1674
        %v1724 = vadd.f32 %v1604, %v1679
        %v1725 = vadd.f32 %v1605, %v1684
        %v1726 = vadd.f32 %v1606, %v1689
        %v1727 = vadd.f32 %v1607, %v1694
        %v1728 = vadd.f32 %v1608, %v1699
        %v1729 = vadd.f32 %v1609, %v1704
        %v1730 = vadd.f32 %v1610, %v1709
        %v1731 = vmax.f32 %v1711, 0.0
        %v1732 = vmax.f32 %v1712, 0.0
        %v1733 = vmax.f32 %v1713, 0.0
        %v1734 = vmax.f32 %v1714, 0.0
        %v1735 = vmax.f32 %v1715, 0.0
        %v1736 = vmax.f32 %v1716, 0.0
        %v1737 = vmax.f32 %v1717, 0.0
        %v1738 = vmax.f32 %v1718, 0.0
        %v1739 = vmax.f32 %v1719, 0.0
        %v1740 = vmax.f32 %v1720, 0.0
        %v1741 = vmax.f32 %v1721, 0.0
        %v1742 = vmax.f32 %v1722, 0.0
        %v1743 = vmax.f32 %v1723, 0.0
        %v1744 = vmax.f32 %v1724, 0.0
        %v1745 = vmax.f32 %v1725, 0.0
        %v1746 = vmax.f32 %v1726, 0.0
        %v1747 = vmax.f32 %v1727, 0.0
        %v1748 = vmax.f32 %v1728, 0.0
        %v1749 = vmax.f32 %v1729, 0.0
        %v1750 = vmax.f32 %v1730, 0.0
        %v1751 = vld [vmem:[%s3] sm:$0xff]
        %v1752 = vld [vmem:[%s3 + $0x8] sm:$0xff]
        %v1753 = vld [vmem:[%s3 + $0x10] sm:$0xff]
        %v1754 = vld [vmem:[%s3 + $0x18] sm:$0xff]
        %v1755 = vld [vmem:[%s520 + $0x18] sm:$0xf]
        %v1756 = vld [vmem:[%s520 + $0x1c] sm:$0xf]
        %v1757 = vld [vmem:[%s520 + $0x20] sm:$0xf]
        %v1758 = vld [vmem:[%s520 + $0x24] sm:$0xf]
        %v1759 = vld [vmem:[%s520 + $0x28] sm:$0xf]
        %v1760 = vld [vmem:[%s520 + $0x2c] sm:$0xf]
        %v1761 = vld [vmem:[%s520 + $0x30] sm:$0xf]
        %v1762 = vld [vmem:[%s520 + $0x34] sm:$0xf]
        %v1763 = vld [vmem:[%s520 + $0x38] sm:$0xf]
        %v1764 = vld [vmem:[%s520 + $0x3c] sm:$0xf]
        %v1765 = vld [vmem:[%s520 + $0x40] sm:$0xf]
        %v1766 = vld [vmem:[%s520 + $0x44] sm:$0xf]
        %v1767 = vld [vmem:[%s520 + $0x48] sm:$0xf]
        %v1768 = vld [vmem:[%s520 + $0x4c] sm:$0xf]
        %v1769 = vld [vmem:[%s520 + $0x50] sm:$0xf]
        %v1770 = vld [vmem:[%s520 + $0x54] sm:$0xf]
        %v1771 = vld [vmem:[%s520 + $0x58] sm:$0xf]
        %v1772 = vld [vmem:[%s520 + $0x5c] sm:$0xf]
        %v1791 = vunpack.c.l.b16 %v1755
        %v1792 = vunpack.c.l.b16 %v1756
        %v1793 = vunpack.c.l.b16 %v1757
        %v1794 = vunpack.c.l.b16 %v1758
        %v1795 = vunpack.c.l.b16 %v1759
        %v1796 = vunpack.c.l.b16 %v1760
        %v1797 = vunpack.c.l.b16 %v1761
        %v1798 = vunpack.c.l.b16 %v1762
        %v1799 = vunpack.c.l.b16 %v1763
        %v1800 = vunpack.c.l.b16 %v1764
        %v1801 = vunpack.c.l.b16 %v1765
        %v1802 = vunpack.c.l.b16 %v1766
        %v1803 = vunpack.c.l.b16 %v1767
        %v1804 = vunpack.c.l.b16 %v1768
        %v1805 = vunpack.c.l.b16 %v1769
        %v1806 = vunpack.c.l.b16 %v1770
        %v1807 = vunpack.c.l.b16 %v1771
        %v1808 = vunpack.c.l.b16 %v1772
        %v1809 = vpack.c.b16 %v1792, %v1791
        %v1810 = vpack.c.b16 %v1794, %v1793
        %v1811 = vpack.c.b16 %v1796, %v1795
        %v1812 = vpack.c.b16 %v1798, %v1797
        %v1813 = vpack.c.b16 %v1800, %v1799
        %v1814 = vpack.c.b16 %v1802, %v1801
        %v1815 = vpack.c.b16 %v1804, %v1803
        %v1816 = vpack.c.b16 %v1806, %v1805
        %v1817 = vpack.c.b16 %v1808, %v1807
        %1827 = vmatprep.subr.bf16.mxu0 0
        %1828 = vmatpush1.bf16.msra.mxu0 %v1809
        %1829 = vmatprep.subr.bf16.mxu0 0
        %1830 = vmatpush1.bf16.msra.mxu0 %v1810
        %1831 = vmatprep.subr.bf16.mxu0 0
        %1832 = vmatpush1.bf16.msra.mxu0 %v1811
        %1833 = vmatprep.subr.bf16.mxu0 0
        %1834 = vmatpush1.bf16.msra.mxu0 %v1812
        %1835 = vmatprep.subr.bf16.mxu0 0
        %1836 = vmatpush1.bf16.msra.mxu0 %v1813
        %1837 = vmatprep.subr.bf16.mxu0 0
        %1838 = vmatpush1.bf16.msra.mxu0 %v1814
        %1839 = vmatprep.subr.bf16.mxu0 0
        %1840 = vmatpush1.bf16.msra.mxu0 %v1815
        %1841 = vmatprep.subr.bf16.mxu0 0
        %1842 = vmatpush1.bf16.msra.mxu0 %v1816
        %1843 = vmatprep.subr.bf16.mxu0 0
        %1844 = vmatpush1.bf16.msra.mxu0 %v1817
        %1845 = vmatprep.subr.bf16.mxu0 0
        %1846 = vmatpush1.bf16.msra.mxu0 0
        %1847 = vmatprep.subr.bf16.mxu0 0
        %1848 = vmatpush1.bf16.msra.mxu0 0
        %1849 = vmatprep.subr.bf16.mxu0 0
        %1850 = vmatpush1.bf16.msra.mxu0 0
        %1851 = vmatprep.subr.bf16.mxu0 0
        %1852 = vmatpush1.bf16.msra.mxu0 0
        %1853 = vmatprep.subr.bf16.mxu0 0
        %1854 = vmatpush1.bf16.msra.mxu0 0
        %1855 = vmatprep.subr.bf16.mxu0 0
        %1856 = vmatpush1.bf16.msra.mxu0 0
        %1857 = vmatprep.subr.bf16.mxu0 0
        %1858 = vmatpush1.bf16.msra.mxu0 0
        %1859 = vmatprep.mubr.bf16.mxu0 %v1079
        %1860 = vmatmul.mubr.bf16.gmra.mrb[0].mxu0 %v903
        %v1861 = vpop.f32.mrb[0].mxu0
        %v1862 = vadd.f32 0.0, %v1861
        %v1863 = vpop.f32.mrb[0].mxu0
        %v1864 = vpop.f32.mrb[0].mxu0
        %v1865 = vadd.f32 0.0, %v1864
        %v1866 = vpop.f32.mrb[0].mxu0
        %1867 = vmatprep.mubr.bf16.mxu0 %v1082
        %1868 = vmatmul.mubr.bf16.gmra.mrb[0].mxu0 %v905
        %v1869 = vpop.f32.mrb[0].mxu0
        %v1870 = vadd.f32 0.0, %v1869
        %v1871 = vpop.f32.mrb[0].mxu0
        %v1872 = vpop.f32.mrb[0].mxu0
        %v1873 = vadd.f32 0.0, %v1872
        %v1874 = vpop.f32.mrb[0].mxu0
        %1875 = vmatprep.mubr.bf16.mxu0 %v1085
        %1876 = vmatmul.mubr.bf16.gmra.mrb[0].mxu0 %v907
        %v1877 = vpop.f32.mrb[0].mxu0
        %v1878 = vadd.f32 0.0, %v1877
        %v1879 = vpop.f32.mrb[0].mxu0
        %v1880 = vpop.f32.mrb[0].mxu0
        %v1881 = vadd.f32 0.0, %v1880
        %v1882 = vpop.f32.mrb[0].mxu0
        %1883 = vmatprep.mubr.bf16.mxu0 %v1088
        %1884 = vmatmul.mubr.bf16.gmra.mrb[0].mxu0 %v909
        %v1885 = vpop.f32.mrb[0].mxu0
        %v1886 = vadd.f32 0.0, %v1885
        %v1887 = vpop.f32.mrb[0].mxu0
        %v1888 = vpop.f32.mrb[0].mxu0
        %v1889 = vadd.f32 0.0, %v1888
        %v1890 = vpop.f32.mrb[0].mxu0
        %1891 = vmatprep.mubr.bf16.mxu0 %v1091
        %1892 = vmatmul.mubr.bf16.gmra.mrb[0].mxu0 %v911
        %v1893 = vpop.f32.mrb[0].mxu0
        %v1894 = vadd.f32 0.0, %v1893
        %v1895 = vpop.f32.mrb[0].mxu0
        %v1896 = vpop.f32.mrb[0].mxu0
        %v1897 = vadd.f32 0.0, %v1896
        %v1898 = vpop.f32.mrb[0].mxu0
        %1899 = vmatprep.mubr.bf16.mxu0 %v1094
        %1900 = vmatmul.mubr.bf16.gmra.mrb[0].mxu0 %v913
        %v1901 = vpop.f32.mrb[0].mxu0
        %v1902 = vadd.f32 0.0, %v1901
        %v1903 = vpop.f32.mrb[0].mxu0
        %v1904 = vpop.f32.mrb[0].mxu0
        %v1905 = vadd.f32 0.0, %v1904
        %v1906 = vpop.f32.mrb[0].mxu0
        %1907 = vmatprep.mubr.bf16.mxu0 %v1097
        %1908 = vmatmul.mubr.bf16.gmra.mrb[0].mxu0 %v915
        %v1909 = vpop.f32.mrb[0].mxu0
        %v1910 = vadd.f32 0.0, %v1909
        %v1911 = vpop.f32.mrb[0].mxu0
        %v1912 = vpop.f32.mrb[0].mxu0
        %v1913 = vadd.f32 0.0, %v1912
        %v1914 = vpop.f32.mrb[0].mxu0
        %1915 = vmatprep.mubr.bf16.mxu0 %v1100
        %1916 = vmatmul.mubr.bf16.gmra.mrb[0].mxu0 %v917
        %v1917 = vpop.f32.mrb[0].mxu0
        %v1918 = vadd.f32 0.0, %v1917
        %v1919 = vpop.f32.mrb[0].mxu0
        %v1920 = vpop.f32.mrb[0].mxu0
        %v1921 = vadd.f32 0.0, %v1920
        %v1922 = vpop.f32.mrb[0].mxu0
        %1923 = vmatprep.mubr.bf16.mxu0 %v1103
        %1924 = vmatmul.mubr.bf16.gmra.mrb[0].mxu0 %v919
        %v1925 = vpop.f32.mrb[0].mxu0
        %v1926 = vadd.f32 0.0, %v1925
        %v1927 = vpop.f32.mrb[0].mxu0
        %v1928 = vpop.f32.mrb[0].mxu0
        %v1929 = vadd.f32 0.0, %v1928
        %v1930 = vpop.f32.mrb[0].mxu0
        %1931 = vmatprep.mubr.bf16.mxu0 %v1106
        %1932 = vmatmul.mubr.bf16.gmra.mrb[0].mxu0 %v921
        %v1933 = vpop.f32.mrb[0].mxu0
        %v1934 = vadd.f32 0.0, %v1933
        %v1935 = vpop.f32.mrb[0].mxu0
        %v1936 = vpop.f32.mrb[0].mxu0
        %v1937 = vadd.f32 0.0, %v1936
        %v1938 = vpop.f32.mrb[0].mxu0
        %1939 = vmatprep.mubr.bf16.mxu0 %v1109
        %1940 = vmatmul.mubr.bf16.gmra.mrb[0].mxu0 %v923
        %v1941 = vpop.f32.mrb[0].mxu0
        %v1942 = vadd.f32 0.0, %v1941
        %v1943 = vpop.f32.mrb[0].mxu0
        %v1944 = vpop.f32.mrb[0].mxu0
        %v1945 = vadd.f32 0.0, %v1944
        %v1946 = vpop.f32.mrb[0].mxu0
        %1947 = vmatprep.mubr.bf16.mxu0 %v1112
        %1948 = vmatmul.mubr.bf16.gmra.mrb[0].mxu0 %v925
        %v1949 = vpop.f32.mrb[0].mxu0
        %v1950 = vadd.f32 0.0, %v1949
        %v1951 = vpop.f32.mrb[0].mxu0
        %v1952 = vpop.f32.mrb[0].mxu0
        %v1953 = vadd.f32 0.0, %v1952
        %v1954 = vpop.f32.mrb[0].mxu0
        %1955 = vmatprep.mubr.bf16.mxu0 %v1115
        %1956 = vmatmul.mubr.bf16.gmra.mrb[0].mxu0 %v927
        %v1957 = vpop.f32.mrb[0].mxu0
        %v1958 = vadd.f32 0.0, %v1957
        %v1959 = vpop.f32.mrb[0].mxu0
        %v1960 = vpop.f32.mrb[0].mxu0
        %v1961 = vadd.f32 0.0, %v1960
        %v1962 = vpop.f32.mrb[0].mxu0
        %1963 = vmatprep.mubr.bf16.mxu0 %v1118
        %1964 = vmatmul.mubr.bf16.gmra.mrb[0].mxu0 %v929
        %v1965 = vpop.f32.mrb[0].mxu0
        %v1966 = vadd.f32 0.0, %v1965
        %v1967 = vpop.f32.mrb[0].mxu0
        %v1968 = vpop.f32.mrb[0].mxu0
        %v1969 = vadd.f32 0.0, %v1968
        %v1970 = vpop.f32.mrb[0].mxu0
        %1971 = vmatprep.mubr.bf16.mxu0 %v1121
        %1972 = vmatmul.mubr.bf16.gmra.mrb[0].mxu0 %v931
        %v1973 = vpop.f32.mrb[0].mxu0
        %v1974 = vadd.f32 0.0, %v1973
        %v1975 = vpop.f32.mrb[0].mxu0
        %v1976 = vpop.f32.mrb[0].mxu0
        %v1977 = vadd.f32 0.0, %v1976
        %v1978 = vpop.f32.mrb[0].mxu0
        %1979 = vmatprep.mubr.bf16.mxu0 %v1124
        %1980 = vmatmul.mubr.bf16.gmra.mrb[0].mxu0 %v933
        %v1981 = vpop.f32.mrb[0].mxu0
        %v1982 = vadd.f32 0.0, %v1981
        %v1983 = vpop.f32.mrb[0].mxu0
        %v1984 = vpop.f32.mrb[0].mxu0
        %v1985 = vadd.f32 0.0, %v1984
        %v1986 = vpop.f32.mrb[0].mxu0
        %1987 = vmatprep.mubr.bf16.mxu0 %v1127
        %1988 = vmatmul.mubr.bf16.gmra.mrb[0].mxu0 %v935
        %v1989 = vpop.f32.mrb[0].mxu0
        %v1990 = vadd.f32 0.0, %v1989
        %v1991 = vpop.f32.mrb[0].mxu0
        %v1992 = vpop.f32.mrb[0].mxu0
        %v1993 = vadd.f32 0.0, %v1992
        %v1994 = vpop.f32.mrb[0].mxu0
        %1995 = vmatprep.mubr.bf16.mxu0 %v1130
        %1996 = vmatmul.mubr.bf16.gmra.mrb[0].mxu0 %v937
        %v1997 = vpop.f32.mrb[0].mxu0
        %v1998 = vadd.f32 0.0, %v1997
        %v1999 = vpop.f32.mrb[0].mxu0
        %v2000 = vpop.f32.mrb[0].mxu0
        %v2001 = vadd.f32 0.0, %v2000
        %v2002 = vpop.f32.mrb[0].mxu0
        %2003 = vmatprep.mubr.bf16.mxu0 %v1133
        %2004 = vmatmul.mubr.bf16.gmra.mrb[0].mxu0 %v939
        %v2005 = vpop.f32.mrb[0].mxu0
        %v2006 = vadd.f32 0.0, %v2005
        %v2007 = vpop.f32.mrb[0].mxu0
        %v2008 = vpop.f32.mrb[0].mxu0
        %v2009 = vadd.f32 0.0, %v2008
        %v2010 = vpop.f32.mrb[0].mxu0
        %2011 = vmatprep.mubr.bf16.mxu0 %v1136
        %2012 = vmatmul.mubr.bf16.gmra.mrb[0].mxu0 %v941
        %v2013 = vpop.f32.mrb[0].mxu0
        %v2014 = vadd.f32 0.0, %v2013
        %v2015 = vpop.f32.mrb[0].mxu0
        %v2016 = vpop.f32.mrb[0].mxu0
        %v2017 = vadd.f32 0.0, %v2016
        %v2018 = vpop.f32.mrb[0].mxu0
        %2019 = vmatprep.mubr.bf16.mxu0 %v1139
        %2020 = vmatmul.mubr.bf16.gmra.mrb[0].mxu0 %v943
        %v2021 = vpop.f32.mrb[0].mxu0
        %v2022 = vadd.f32 0.0, %v2021
        %v2023 = vpop.f32.mrb[0].mxu0
        %v2024 = vpop.f32.mrb[0].mxu0
        %v2025 = vadd.f32 0.0, %v2024
        %v2026 = vpop.f32.mrb[0].mxu0
        %2027 = vmatprep.mubr.bf16.mxu0 %v1142
        %2028 = vmatmul.mubr.bf16.gmra.mrb[0].mxu0 %v945
        %v2029 = vpop.f32.mrb[0].mxu0
        %v2030 = vadd.f32 0.0, %v2029
        %v2031 = vpop.f32.mrb[0].mxu0
        %v2032 = vpop.f32.mrb[0].mxu0
        %v2033 = vadd.f32 0.0, %v2032
        %v2034 = vpop.f32.mrb[0].mxu0
        %2035 = vmatprep.mubr.bf16.mxu0 %v1145
        %2036 = vmatmul.mubr.bf16.gmra.mrb[0].mxu0 %v947
        %v2037 = vpop.f32.mrb[0].mxu0
        %v2038 = vadd.f32 0.0, %v2037
        %v2039 = vpop.f32.mrb[0].mxu0
        %v2040 = vpop.f32.mrb[0].mxu0
        %v2041 = vadd.f32 0.0, %v2040
        %v2042 = vpop.f32.mrb[0].mxu0
        %2043 = vmatprep.mubr.bf16.mxu0 %v1148
        %2044 = vmatmul.mubr.bf16.gmra.mrb[0].mxu0 %v949
        %v2045 = vpop.f32.mrb[0].mxu0
        %v2046 = vadd.f32 0.0, %v2045
        %v2047 = vpop.f32.mrb[0].mxu0
        %v2048 = vpop.f32.mrb[0].mxu0
        %v2049 = vadd.f32 0.0, %v2048
        %v2050 = vpop.f32.mrb[0].mxu0
        %2051 = vmatprep.mubr.bf16.mxu0 %v1151
        %2052 = vmatmul.mubr.bf16.gmra.mrb[0].mxu0 %v951
        %v2053 = vpop.f32.mrb[0].mxu0
        %v2054 = vadd.f32 0.0, %v2053
        %v2055 = vpop.f32.mrb[0].mxu0
        %v2056 = vpop.f32.mrb[0].mxu0
        %v2057 = vadd.f32 0.0, %v2056
        %v2058 = vpop.f32.mrb[0].mxu0
        %2059 = vmatprep.mubr.bf16.mxu0 %v1154
        %2060 = vmatmul.mubr.bf16.gmra.mrb[0].mxu0 %v953
        %v2061 = vpop.f32.mrb[0].mxu0
        %v2062 = vadd.f32 0.0, %v2061
        %v2063 = vpop.f32.mrb[0].mxu0
        %v2064 = vpop.f32.mrb[0].mxu0
        %v2065 = vadd.f32 0.0, %v2064
        %v2066 = vpop.f32.mrb[0].mxu0
        %2067 = vmatprep.mubr.bf16.mxu0 %v1157
        %2068 = vmatmul.mubr.bf16.gmra.mrb[0].mxu0 %v955
        %v2069 = vpop.f32.mrb[0].mxu0
        %v2070 = vadd.f32 0.0, %v2069
        %v2071 = vpop.f32.mrb[0].mxu0
        %v2072 = vpop.f32.mrb[0].mxu0
        %v2073 = vadd.f32 0.0, %v2072
        %v2074 = vpop.f32.mrb[0].mxu0
        %2075 = vmatprep.mubr.bf16.mxu0 %v1160
        %2076 = vmatmul.mubr.bf16.gmra.mrb[0].mxu0 %v957
        %v2077 = vpop.f32.mrb[0].mxu0
        %v2078 = vadd.f32 0.0, %v2077
        %v2079 = vpop.f32.mrb[0].mxu0
        %v2080 = vpop.f32.mrb[0].mxu0
        %v2081 = vadd.f32 0.0, %v2080
        %v2082 = vpop.f32.mrb[0].mxu0
        %2083 = vmatprep.mubr.bf16.mxu0 %v1163
        %2084 = vmatmul.mubr.bf16.gmra.mrb[0].mxu0 %v959
        %v2085 = vpop.f32.mrb[0].mxu0
        %v2086 = vadd.f32 0.0, %v2085
        %v2087 = vpop.f32.mrb[0].mxu0
        %v2088 = vpop.f32.mrb[0].mxu0
        %v2089 = vadd.f32 0.0, %v2088
        %v2090 = vpop.f32.mrb[0].mxu0
        %2091 = vmatprep.mubr.bf16.mxu0 %v1166
        %2092 = vmatmul.mubr.bf16.gmra.mrb[0].mxu0 %v961
        %v2093 = vpop.f32.mrb[0].mxu0
        %v2094 = vadd.f32 0.0, %v2093
        %v2095 = vpop.f32.mrb[0].mxu0
        %v2096 = vpop.f32.mrb[0].mxu0
        %v2097 = vadd.f32 0.0, %v2096
        %v2098 = vpop.f32.mrb[0].mxu0
        %2099 = vmatprep.mubr.bf16.mxu0 %v1169
        %2100 = vmatmul.mubr.bf16.gmra.mrb[0].mxu0 %v963
        %v2101 = vpop.f32.mrb[0].mxu0
        %v2102 = vadd.f32 0.0, %v2101
        %v2103 = vpop.f32.mrb[0].mxu0
        %v2104 = vpop.f32.mrb[0].mxu0
        %v2105 = vadd.f32 0.0, %v2104
        %v2106 = vpop.f32.mrb[0].mxu0
        %2107 = vmatprep.mubr.bf16.mxu0 %v1172
        %2108 = vmatmul.mubr.bf16.gmra.mrb[0].mxu0 %v965
        %v2109 = vpop.f32.mrb[0].mxu0
        %v2110 = vadd.f32 0.0, %v2109
        %v2111 = vpop.f32.mrb[0].mxu0
        %v2112 = vpop.f32.mrb[0].mxu0
        %v2113 = vadd.f32 0.0, %v2112
        %v2114 = vpop.f32.mrb[0].mxu0
        %2115 = vmatprep.mubr.bf16.mxu0 %v1175
        %2116 = vmatmul.mubr.bf16.gmra.mrb[0].mxu0 %v967
        %v2117 = vpop.f32.mrb[0].mxu0
        %v2118 = vadd.f32 0.0, %v2117
        %v2119 = vpop.f32.mrb[0].mxu0
        %v2120 = vpop.f32.mrb[0].mxu0
        %v2121 = vadd.f32 0.0, %v2120
        %v2122 = vpop.f32.mrb[0].mxu0
        %2123 = vmatprep.mubr.bf16.mxu0 %v1178
        %2124 = vmatmul.mubr.bf16.gmra.mrb[0].mxu0 %v969
        %v2125 = vpop.f32.mrb[0].mxu0
        %v2126 = vadd.f32 0.0, %v2125
        %v2127 = vpop.f32.mrb[0].mxu0
        %v2128 = vpop.f32.mrb[0].mxu0
        %v2129 = vadd.f32 0.0, %v2128
        %v2130 = vpop.f32.mrb[0].mxu0
        %2131 = vmatprep.mubr.bf16.mxu0 %v1181
        %2132 = vmatmul.mubr.bf16.gmra.mrb[0].mxu0 %v971
        %v2133 = vpop.f32.mrb[0].mxu0
        %v2134 = vadd.f32 0.0, %v2133
        %v2135 = vpop.f32.mrb[0].mxu0
        %v2136 = vpop.f32.mrb[0].mxu0
        %v2137 = vadd.f32 0.0, %v2136
        %v2138 = vpop.f32.mrb[0].mxu0
        %2139 = vmatprep.mubr.bf16.mxu0 %v1184
        %2140 = vmatmul.mubr.bf16.gmra.mrb[0].mxu0 %v973
        %v2141 = vpop.f32.mrb[0].mxu0
        %v2142 = vadd.f32 0.0, %v2141
        %v2143 = vpop.f32.mrb[0].mxu0
        %v2144 = vpop.f32.mrb[0].mxu0
        %v2145 = vadd.f32 0.0, %v2144
        %v2146 = vpop.f32.mrb[0].mxu0
        %2147 = vmatprep.mubr.bf16.mxu0 %v1187
        %2148 = vmatmul.mubr.bf16.gmra.mrb[0].mxu0 %v975
        %v2149 = vpop.f32.mrb[0].mxu0
        %v2150 = vadd.f32 0.0, %v2149
        %v2151 = vpop.f32.mrb[0].mxu0
        %v2152 = vpop.f32.mrb[0].mxu0
        %v2153 = vadd.f32 0.0, %v2152
        %v2154 = vpop.f32.mrb[0].mxu0
        %2155 = vmatprep.mubr.bf16.mxu0 %v1190
        %2156 = vmatmul.mubr.bf16.gmra.mrb[0].mxu0 %v977
        %v2157 = vpop.f32.mrb[0].mxu0
        %v2158 = vadd.f32 0.0, %v2157
        %v2159 = vpop.f32.mrb[0].mxu0
        %v2160 = vpop.f32.mrb[0].mxu0
        %v2161 = vadd.f32 0.0, %v2160
        %v2162 = vpop.f32.mrb[0].mxu0
        %2163 = vmatprep.mubr.bf16.mxu0 %v1193
        %2164 = vmatmul.mubr.bf16.gmra.mrb[0].mxu0 %v979
        %v2165 = vpop.f32.mrb[0].mxu0
        %v2166 = vadd.f32 0.0, %v2165
        %v2167 = vpop.f32.mrb[0].mxu0
        %v2168 = vpop.f32.mrb[0].mxu0
        %v2169 = vadd.f32 0.0, %v2168
        %v2170 = vpop.f32.mrb[0].mxu0
        %2171 = vmatprep.mubr.bf16.mxu0 %v1196
        %2172 = vmatmul.mubr.bf16.gmra.mrb[0].mxu0 %v981
        %v2173 = vpop.f32.mrb[0].mxu0
        %v2174 = vadd.f32 0.0, %v2173
        %v2175 = vpop.f32.mrb[0].mxu0
        %v2176 = vpop.f32.mrb[0].mxu0
        %v2177 = vadd.f32 0.0, %v2176
        %v2178 = vpop.f32.mrb[0].mxu0
        %2179 = vdwg.mxu0
        %v2180 = vmax.f32 %v1862, %v1942
        %v2181 = vmax.f32 %v1865, %v1945
        %v2182 = vmax.f32 %v1870, %v1950
        %v2183 = vmax.f32 %v1873, %v1953
        %v2184 = vmax.f32 %v1878, %v1958
        %v2185 = vmax.f32 %v1881, %v1961
        %v2186 = vmax.f32 %v1886, %v1966
        %v2187 = vmax.f32 %v1889, %v1969
        %v2188 = vmax.f32 %v1894, %v1974
        %v2189 = vmax.f32 %v1897, %v1977
        %v2190 = vmax.f32 %v1902, %v1982
        %v2191 = vmax.f32 %v1905, %v1985
        %v2192 = vmax.f32 %v1910, %v1990
        %v2193 = vmax.f32 %v1913, %v1993
        %v2194 = vmax.f32 %v1918, %v1998
        %v2195 = vmax.f32 %v1921, %v2001
        %v2196 = vmax.f32 %v1926, %v2006
        %v2197 = vmax.f32 %v1929, %v2009
        %v2198 = vmax.f32 %v1934, %v2014
        %v2199 = vmax.f32 %v1937, %v2017
        %v2200 = vmax.f32 %v2022, %v2102
        %v2201 = vmax.f32 %v2025, %v2105
        %v2202 = vmax.f32 %v2030, %v2110
        %v2203 = vmax.f32 %v2033, %v2113
        %v2204 = vmax.f32 %v2038, %v2118
        %v2205 = vmax.f32 %v2041, %v2121
        %v2206 = vmax.f32 %v2046, %v2126
        %v2207 = vmax.f32 %v2049, %v2129
        %v2208 = vmax.f32 %v2054, %v2134
        %v2209 = vmax.f32 %v2057, %v2137
        %v2210 = vmax.f32 %v2062, %v2142
        %v2211 = vmax.f32 %v2065, %v2145
        %v2212 = vmax.f32 %v2070, %v2150
        %v2213 = vmax.f32 %v2073, %v2153
        %v2214 = vmax.f32 %v2078, %v2158
        %v2215 = vmax.f32 %v2081, %v2161
        %v2216 = vmax.f32 %v2086, %v2166
        %v2217 = vmax.f32 %v2089, %v2169
        %v2218 = vmax.f32 %v2094, %v2174
        %v2219 = vmax.f32 %v2097, %v2177
        %v2220 = vmax.f32 %v2180, %v2200
        %v2221 = vmax.f32 %v2181, %v2201
        %v2222 = vmax.f32 %v2182, %v2202
        %v2223 = vmax.f32 %v2183, %v2203
        %v2224 = vmax.f32 %v2184, %v2204
        %v2225 = vmax.f32 %v2185, %v2205
        %v2226 = vmax.f32 %v2186, %v2206
        %v2227 = vmax.f32 %v2187, %v2207
        %v2228 = vmax.f32 %v2188, %v2208
        %v2229 = vmax.f32 %v2189, %v2209
        %v2230 = vmax.f32 %v2190, %v2210
        %v2231 = vmax.f32 %v2191, %v2211
        %v2232 = vmax.f32 %v2192, %v2212
        %v2233 = vmax.f32 %v2193, %v2213
        %v2234 = vmax.f32 %v2194, %v2214
        %v2235 = vmax.f32 %v2195, %v2215
        %v2236 = vmax.f32 %v2196, %v2216
        %v2237 = vmax.f32 %v2197, %v2217
        %v2238 = vmax.f32 %v2198, %v2218
        %v2239 = vmax.f32 %v2199, %v2219
        %v2240 = vadd.f32 %v2220, %v1614
        %v2241 = vadd.f32 %v2221, %v1619
        %v2242 = vadd.f32 %v2222, %v1624
        %v2243 = vadd.f32 %v2223, %v1629
        %v2244 = vadd.f32 %v2224, %v1634
        %v2245 = vadd.f32 %v2225, %v1639
        %v2246 = vadd.f32 %v2226, %v1644
        %v2247 = vadd.f32 %v2227, %v1649
        %v2248 = vadd.f32 %v2228, %v1654
        %v2249 = vadd.f32 %v2229, %v1659
        %v2250 = vadd.f32 %v2230, %v1664
        %v2251 = vadd.f32 %v2231, %v1669
        %v2252 = vadd.f32 %v2232, %v1674
        %v2253 = vadd.f32 %v2233, %v1679
        %v2254 = vadd.f32 %v2234, %v1684
        %v2255 = vadd.f32 %v2235, %v1689
        %v2256 = vadd.f32 %v2236, %v1694
        %v2257 = vadd.f32 %v2237, %v1699
        %v2258 = vadd.f32 %v2238, %v1704
        %v2259 = vadd.f32 %v2239, %v1709
        %v2260 = vmax.f32 %v2240, 0.0
        %v2261 = vmax.f32 %v2241, 0.0
        %v2262 = vmax.f32 %v2242, 0.0
        %v2263 = vmax.f32 %v2243, 0.0
        %v2264 = vmax.f32 %v2244, 0.0
        %v2265 = vmax.f32 %v2245, 0.0
        %v2266 = vmax.f32 %v2246, 0.0
        %v2267 = vmax.f32 %v2247, 0.0
        %v2268 = vmax.f32 %v2248, 0.0
        %v2269 = vmax.f32 %v2249, 0.0
        %v2270 = vmax.f32 %v2250, 0.0
        %v2271 = vmax.f32 %v2251, 0.0
        %v2272 = vmax.f32 %v2252, 0.0
        %v2273 = vmax.f32 %v2253, 0.0
        %v2274 = vmax.f32 %v2254, 0.0
        %v2275 = vmax.f32 %v2255, 0.0
        %v2276 = vmax.f32 %v2256, 0.0
        %v2277 = vmax.f32 %v2257, 0.0
        %v2278 = vmax.f32 %v2258, 0.0
        %v2279 = vmax.f32 %v2259, 0.0
        %s2280 = scalar_lea.vmem %s3, 32
        %v2281 = vld [vmem:[%s2280] sm:$0xff]
        %v2282 = vld [vmem:[%s2280 + $0x8] sm:$0xff]
        %v2283 = vld [vmem:[%s2280 + $0x10] sm:$0xff]
        %v2284 = vld [vmem:[%s2280 + $0x18] sm:$0xff]
        %vm2285 = vcmask 261120
        %v2287 = vsel %vm2285, %v2282, 0
        %v2290 = vsel %vm2285, %v2284, 0
        %2292 = vmatprep.subr.mxu0 0.0
        %2293 = vmatpush1.msra.mxu0 %v2260
        %2294 = vmatprep.subr.mxu0 0.0
        %2295 = vmatpush1.msra.mxu0 %v2261
        %2296 = vmatprep.subr.mxu0 0.0
        %2297 = vmatpush1.msra.mxu0 %v2262
        %2298 = vmatprep.subr.mxu0 0.0
        %2299 = vmatpush1.msra.mxu0 %v2263
        %2300 = vmatprep.subr.mxu0 0.0
        %2301 = vmatpush1.msra.mxu0 %v2264
        %2302 = vmatprep.subr.mxu0 0.0
        %2303 = vmatpush1.msra.mxu0 %v2265
        %2304 = vmatprep.subr.mxu0 0.0
        %2305 = vmatpush1.msra.mxu0 %v2266
        %2306 = vmatprep.subr.mxu0 0.0
        %2307 = vmatpush1.msra.mxu0 %v2267
        %2308 = vmatprep.subr.mxu0 0.0
        %2309 = vmatpush1.msra.mxu0 %v2268
        %2310 = vmatprep.subr.mxu0 0.0
        %2311 = vmatpush1.msra.mxu0 %v2269
        %2312 = vmatprep.subr.mxu0 0.0
        %2313 = vmatpush1.msra.mxu0 %v2270
        %2314 = vmatprep.subr.mxu0 0.0
        %2315 = vmatpush1.msra.mxu0 %v2271
        %2316 = vmatprep.subr.mxu0 0.0
        %2317 = vmatpush1.msra.mxu0 %v2272
        %2318 = vmatprep.subr.mxu0 0.0
        %2319 = vmatpush1.msra.mxu0 %v2273
        %2320 = vmatprep.subr.mxu0 0.0
        %2321 = vmatpush1.msra.mxu0 %v2274
        %2322 = vmatprep.subr.mxu0 0.0
        %2323 = vmatpush1.msra.mxu0 %v2275
        %2324 = vmatprep.subr.mxu0 0.0
        %2325 = vmatpush1.msra.mxu0 %v2276
        %2326 = vmatprep.subr.mxu0 0.0
        %2327 = vmatpush1.msra.mxu0 %v2277
        %2328 = vmatprep.subr.mxu0 0.0
        %2329 = vmatpush1.msra.mxu0 %v2278
        %2330 = vmatprep.subr.mxu0 0.0
        %2331 = vmatpush1.msra.mxu0 %v2279
        %2332 = vmatprep.subr.mxu0 0.0
        %2333 = vmatpush1.msra.mxu0 0.0
        %2334 = vmatprep.subr.mxu0 0.0
        %2335 = vmatpush1.msra.mxu0 0.0
        %2336 = vmatprep.subr.mxu0 0.0
        %2337 = vmatpush1.msra.mxu0 0.0
        %2338 = vmatprep.subr.mxu0 0.0
        %2339 = vmatpush1.msra.mxu0 0.0
        %2340 = vmatprep.subr.mxu0 0.0
        %2341 = vmatpush1.msra.mxu0 0.0
        %2342 = vmatprep.subr.mxu0 0.0
        %2343 = vmatpush1.msra.mxu0 0.0
        %2344 = vmatprep.subr.mxu0 0.0
        %2345 = vmatpush1.msra.mxu0 0.0
        %2346 = vmatprep.subr.mxu0 0.0
        %2347 = vmatpush1.msra.mxu0 0.0
        %2348 = vmatprep.subr.mxu0 0.0
        %2349 = vmatpush1.msra.mxu0 0.0
        %2350 = vmatprep.subr.mxu0 0.0
        %2351 = vmatpush1.msra.mxu0 0.0
        %2352 = vmatprep.subr.mxu0 0.0
        %2353 = vmatpush1.msra.mxu0 0.0
        %2354 = vmatprep.subr.mxu0 0.0
        %2355 = vmatpush1.msra.mxu0 0.0
        %2356 = vmatprep.mubr.f32.mxu0 %v2287
        %2357 = vmatmul.mubr.f32.gmra.mrb[0].mxu0 %v2281
        %v2358 = vpop.f32.mrb[0].mxu0
        %v2359 = vadd.f32 0.0, %v2358
        %v2360 = vpop.f32.mrb[0].mxu0
        %2361 = vmatprep.mubr.f32.mxu0 %v2290
        %2362 = vmatmul.mubr.f32.gmra.mrb[0].mxu0 %v2283
        %v2363 = vpop.f32.mrb[0].mxu0
        %v2364 = vadd.f32 0.0, %v2363
        %v2365 = vpop.f32.mrb[0].mxu0
        %2366 = vdwg.mxu0
        %v2368 = vsel %vm2285, %v1752, 0
        %v2371 = vsel %vm2285, %v1754, 0
        %2373 = vmatprep.subr.mxu0 0.0
        %2374 = vmatpush1.msra.mxu0 %v1731
        %2375 = vmatprep.subr.mxu0 0.0
        %2376 = vmatpush1.msra.mxu0 %v1732
        %2377 = vmatprep.subr.mxu0 0.0
        %2378 = vmatpush1.msra.mxu0 %v1733
        %2379 = vmatprep.subr.mxu0 0.0
        %2380 = vmatpush1.msra.mxu0 %v1734
        %2381 = vmatprep.subr.mxu0 0.0
        %2382 = vmatpush1.msra.mxu0 %v1735
        %2383 = vmatprep.subr.mxu0 0.0
        %2384 = vmatpush1.msra.mxu0 %v1736
        %2385 = vmatprep.subr.mxu0 0.0
        %2386 = vmatpush1.msra.mxu0 %v1737
        %2387 = vmatprep.subr.mxu0 0.0
        %2388 = vmatpush1.msra.mxu0 %v1738
        %2389 = vmatprep.subr.mxu0 0.0
        %2390 = vmatpush1.msra.mxu0 %v1739
        %2391 = vmatprep.subr.mxu0 0.0
        %2392 = vmatpush1.msra.mxu0 %v1740
        %2393 = vmatprep.subr.mxu0 0.0
        %2394 = vmatpush1.msra.mxu0 %v1741
        %2395 = vmatprep.subr.mxu0 0.0
        %2396 = vmatpush1.msra.mxu0 %v1742
        %2397 = vmatprep.subr.mxu0 0.0
        %2398 = vmatpush1.msra.mxu0 %v1743
        %2399 = vmatprep.subr.mxu0 0.0
        %2400 = vmatpush1.msra.mxu0 %v1744
        %2401 = vmatprep.subr.mxu0 0.0
        %2402 = vmatpush1.msra.mxu0 %v1745
        %2403 = vmatprep.subr.mxu0 0.0
        %2404 = vmatpush1.msra.mxu0 %v1746
        %2405 = vmatprep.subr.mxu0 0.0
        %2406 = vmatpush1.msra.mxu0 %v1747
        %2407 = vmatprep.subr.mxu0 0.0
        %2408 = vmatpush1.msra.mxu0 %v1748
        %2409 = vmatprep.subr.mxu0 0.0
        %2410 = vmatpush1.msra.mxu0 %v1749
        %2411 = vmatprep.subr.mxu0 0.0
        %2412 = vmatpush1.msra.mxu0 %v1750
        %2413 = vmatprep.subr.mxu0 0.0
        %2414 = vmatpush1.msra.mxu0 0.0
        %2415 = vmatprep.subr.mxu0 0.0
        %2416 = vmatpush1.msra.mxu0 0.0
        %2417 = vmatprep.subr.mxu0 0.0
        %2418 = vmatpush1.msra.mxu0 0.0
        %2419 = vmatprep.subr.mxu0 0.0
        %2420 = vmatpush1.msra.mxu0 0.0
        %2421 = vmatprep.subr.mxu0 0.0
        %2422 = vmatpush1.msra.mxu0 0.0
        %2423 = vmatprep.subr.mxu0 0.0
        %2424 = vmatpush1.msra.mxu0 0.0
        %2425 = vmatprep.subr.mxu0 0.0
        %2426 = vmatpush1.msra.mxu0 0.0
        %2427 = vmatprep.subr.mxu0 0.0
        %2428 = vmatpush1.msra.mxu0 0.0
        %2429 = vmatprep.subr.mxu0 0.0
        %2430 = vmatpush1.msra.mxu0 0.0
        %2431 = vmatprep.subr.mxu0 0.0
        %2432 = vmatpush1.msra.mxu0 0.0
        %2433 = vmatprep.subr.mxu0 0.0
        %2434 = vmatpush1.msra.mxu0 0.0
        %2435 = vmatprep.subr.mxu0 0.0
        %2436 = vmatpush1.msra.mxu0 0.0
        %2437 = vmatprep.mubr.f32.mxu0 %v2368
        %2438 = vmatmul.mubr.f32.gmra.mrb[0].mxu0 %v1751
        %v2439 = vpop.f32.mrb[0].mxu0
        %v2440 = vadd.f32 %v2359, %v2439
        %v2441 = vpop.f32.mrb[0].mxu0
        %2442 = vmatprep.mubr.f32.mxu0 %v2371
        %2443 = vmatmul.mubr.f32.gmra.mrb[0].mxu0 %v1753
        %v2444 = vpop.f32.mrb[0].mxu0
        %v2445 = vadd.f32 %v2364, %v2444
        %v2446 = vpop.f32.mrb[0].mxu0
        %2447 = vdwg.mxu0
        %v2448 = vld [vmem:[%s520 + $0x30] sm:$0xf]
        %v2449 = vld [vmem:[%s520 + $0x34] sm:$0xf]
        %v2450 = vld [vmem:[%s520 + $0x38] sm:$0xf]
        %v2451 = vld [vmem:[%s520 + $0x3c] sm:$0xf]
        %v2452 = vld [vmem:[%s520 + $0x40] sm:$0xf]
        %v2453 = vld [vmem:[%s520 + $0x44] sm:$0xf]
        %v2454 = vld [vmem:[%s520 + $0x48] sm:$0xf]
        %v2455 = vld [vmem:[%s520 + $0x4c] sm:$0xf]
        %v2456 = vld [vmem:[%s520 + $0x50] sm:$0xf]
        %v2457 = vld [vmem:[%s520 + $0x54] sm:$0xf]
        %v2458 = vld [vmem:[%s520 + $0x58] sm:$0xf]
        %v2459 = vld [vmem:[%s520 + $0x5c] sm:$0xf]
        %v2460 = vld [vmem:[%s520 + $0x60] sm:$0xf]
        %v2461 = vld [vmem:[%s520 + $0x64] sm:$0xf]
        %v2462 = vld [vmem:[%s520 + $0x68] sm:$0xf]
        %v2463 = vld [vmem:[%s520 + $0x6c] sm:$0xf]
        %v2464 = vld [vmem:[%s520 + $0x70] sm:$0xf]
        %v2465 = vld [vmem:[%s520 + $0x74] sm:$0xf]
        %v2484 = vunpack.c.l.b16 %v2448
        %v2485 = vunpack.c.l.b16 %v2449
        %v2486 = vunpack.c.l.b16 %v2450
        %v2487 = vunpack.c.l.b16 %v2451
        %v2488 = vunpack.c.l.b16 %v2452
        %v2489 = vunpack.c.l.b16 %v2453
        %v2490 = vunpack.c.l.b16 %v2454
        %v2491 = vunpack.c.l.b16 %v2455
        %v2492 = vunpack.c.l.b16 %v2456
        %v2493 = vunpack.c.l.b16 %v2457
        %v2494 = vunpack.c.l.b16 %v2458
        %v2495 = vunpack.c.l.b16 %v2459
        %v2496 = vunpack.c.l.b16 %v2460
        %v2497 = vunpack.c.l.b16 %v2461
        %v2498 = vunpack.c.l.b16 %v2462
        %v2499 = vunpack.c.l.b16 %v2463
        %v2500 = vunpack.c.l.b16 %v2464
        %v2501 = vunpack.c.l.b16 %v2465
        %v2502 = vpack.c.b16 %v2485, %v2484
        %v2503 = vpack.c.b16 %v2487, %v2486
        %v2504 = vpack.c.b16 %v2489, %v2488
        %v2505 = vpack.c.b16 %v2491, %v2490
        %v2506 = vpack.c.b16 %v2493, %v2492
        %v2507 = vpack.c.b16 %v2495, %v2494
        %v2508 = vpack.c.b16 %v2497, %v2496
        %v2509 = vpack.c.b16 %v2499, %v2498
        %v2510 = vpack.c.b16 %v2501, %v2500
        %2520 = vmatprep.subr.bf16.mxu0 0
        %2521 = vmatpush1.bf16.msra.mxu0 %v2502
        %2522 = vmatprep.subr.bf16.mxu0 0
        %2523 = vmatpush1.bf16.msra.mxu0 %v2503
        %2524 = vmatprep.subr.bf16.mxu0 0
        %2525 = vmatpush1.bf16.msra.mxu0 %v2504
        %2526 = vmatprep.subr.bf16.mxu0 0
        %2527 = vmatpush1.bf16.msra.mxu0 %v2505
        %2528 = vmatprep.subr.bf16.mxu0 0
        %2529 = vmatpush1.bf16.msra.mxu0 %v2506
        %2530 = vmatprep.subr.bf16.mxu0 0
        %2531 = vmatpush1.bf16.msra.mxu0 %v2507
        %2532 = vmatprep.subr.bf16.mxu0 0
        %2533 = vmatpush1.bf16.msra.mxu0 %v2508
        %2534 = vmatprep.subr.bf16.mxu0 0
        %2535 = vmatpush1.bf16.msra.mxu0 %v2509
        %2536 = vmatprep.subr.bf16.mxu0 0
        %2537 = vmatpush1.bf16.msra.mxu0 %v2510
        %2538 = vmatprep.subr.bf16.mxu0 0
        %2539 = vmatpush1.bf16.msra.mxu0 0
        %2540 = vmatprep.subr.bf16.mxu0 0
        %2541 = vmatpush1.bf16.msra.mxu0 0
        %2542 = vmatprep.subr.bf16.mxu0 0
        %2543 = vmatpush1.bf16.msra.mxu0 0
        %2544 = vmatprep.subr.bf16.mxu0 0
        %2545 = vmatpush1.bf16.msra.mxu0 0
        %2546 = vmatprep.subr.bf16.mxu0 0
        %2547 = vmatpush1.bf16.msra.mxu0 0
        %2548 = vmatprep.subr.bf16.mxu0 0
        %2549 = vmatpush1.bf16.msra.mxu0 0
        %2550 = vmatprep.subr.bf16.mxu0 0
        %2551 = vmatpush1.bf16.msra.mxu0 0
        %2552 = vmatprep.mubr.bf16.mxu0 %v1079
        %2553 = vmatmul.mubr.bf16.gmra.mrb[0].mxu0 %v903
        %v2554 = vpop.f32.mrb[0].mxu0
        %v2555 = vadd.f32 0.0, %v2554
        %v2556 = vpop.f32.mrb[0].mxu0
        %v2557 = vpop.f32.mrb[0].mxu0
        %v2558 = vadd.f32 0.0, %v2557
        %v2559 = vpop.f32.mrb[0].mxu0
        %2560 = vmatprep.mubr.bf16.mxu0 %v1082
        %2561 = vmatmul.mubr.bf16.gmra.mrb[0].mxu0 %v905
        %v2562 = vpop.f32.mrb[0].mxu0
        %v2563 = vadd.f32 0.0, %v2562
        %v2564 = vpop.f32.mrb[0].mxu0
        %v2565 = vpop.f32.mrb[0].mxu0
        %v2566 = vadd.f32 0.0, %v2565
        %v2567 = vpop.f32.mrb[0].mxu0
        %2568 = vmatprep.mubr.bf16.mxu0 %v1085
        %2569 = vmatmul.mubr.bf16.gmra.mrb[0].mxu0 %v907
        %v2570 = vpop.f32.mrb[0].mxu0
        %v2571 = vadd.f32 0.0, %v2570
        %v2572 = vpop.f32.mrb[0].mxu0
        %v2573 = vpop.f32.mrb[0].mxu0
        %v2574 = vadd.f32 0.0, %v2573
        %v2575 = vpop.f32.mrb[0].mxu0
        %2576 = vmatprep.mubr.bf16.mxu0 %v1088
        %2577 = vmatmul.mubr.bf16.gmra.mrb[0].mxu0 %v909
        %v2578 = vpop.f32.mrb[0].mxu0
        %v2579 = vadd.f32 0.0, %v2578
        %v2580 = vpop.f32.mrb[0].mxu0
        %v2581 = vpop.f32.mrb[0].mxu0
        %v2582 = vadd.f32 0.0, %v2581
        %v2583 = vpop.f32.mrb[0].mxu0
        %2584 = vmatprep.mubr.bf16.mxu0 %v1091
        %2585 = vmatmul.mubr.bf16.gmra.mrb[0].mxu0 %v911
        %v2586 = vpop.f32.mrb[0].mxu0
        %v2587 = vadd.f32 0.0, %v2586
        %v2588 = vpop.f32.mrb[0].mxu0
        %v2589 = vpop.f32.mrb[0].mxu0
        %v2590 = vadd.f32 0.0, %v2589
        %v2591 = vpop.f32.mrb[0].mxu0
        %2592 = vmatprep.mubr.bf16.mxu0 %v1094
        %2593 = vmatmul.mubr.bf16.gmra.mrb[0].mxu0 %v913
        %v2594 = vpop.f32.mrb[0].mxu0
        %v2595 = vadd.f32 0.0, %v2594
        %v2596 = vpop.f32.mrb[0].mxu0
        %v2597 = vpop.f32.mrb[0].mxu0
        %v2598 = vadd.f32 0.0, %v2597
        %v2599 = vpop.f32.mrb[0].mxu0
        %2600 = vmatprep.mubr.bf16.mxu0 %v1097
        %2601 = vmatmul.mubr.bf16.gmra.mrb[0].mxu0 %v915
        %v2602 = vpop.f32.mrb[0].mxu0
        %v2603 = vadd.f32 0.0, %v2602
        %v2604 = vpop.f32.mrb[0].mxu0
        %v2605 = vpop.f32.mrb[0].mxu0
        %v2606 = vadd.f32 0.0, %v2605
        %v2607 = vpop.f32.mrb[0].mxu0
        %2608 = vmatprep.mubr.bf16.mxu0 %v1100
        %2609 = vmatmul.mubr.bf16.gmra.mrb[0].mxu0 %v917
        %v2610 = vpop.f32.mrb[0].mxu0
        %v2611 = vadd.f32 0.0, %v2610
        %v2612 = vpop.f32.mrb[0].mxu0
        %v2613 = vpop.f32.mrb[0].mxu0
        %v2614 = vadd.f32 0.0, %v2613
        %v2615 = vpop.f32.mrb[0].mxu0
        %2616 = vmatprep.mubr.bf16.mxu0 %v1103
        %2617 = vmatmul.mubr.bf16.gmra.mrb[0].mxu0 %v919
        %v2618 = vpop.f32.mrb[0].mxu0
        %v2619 = vadd.f32 0.0, %v2618
        %v2620 = vpop.f32.mrb[0].mxu0
        %v2621 = vpop.f32.mrb[0].mxu0
        %v2622 = vadd.f32 0.0, %v2621
        %v2623 = vpop.f32.mrb[0].mxu0
        %2624 = vmatprep.mubr.bf16.mxu0 %v1106
        %2625 = vmatmul.mubr.bf16.gmra.mrb[0].mxu0 %v921
        %v2626 = vpop.f32.mrb[0].mxu0
        %v2627 = vadd.f32 0.0, %v2626
        %v2628 = vpop.f32.mrb[0].mxu0
        %v2629 = vpop.f32.mrb[0].mxu0
        %v2630 = vadd.f32 0.0, %v2629
        %v2631 = vpop.f32.mrb[0].mxu0
        %2632 = vmatprep.mubr.bf16.mxu0 %v1109
        %2633 = vmatmul.mubr.bf16.gmra.mrb[0].mxu0 %v923
        %v2634 = vpop.f32.mrb[0].mxu0
        %v2635 = vadd.f32 0.0, %v2634
        %v2636 = vpop.f32.mrb[0].mxu0
        %v2637 = vpop.f32.mrb[0].mxu0
        %v2638 = vadd.f32 0.0, %v2637
        %v2639 = vpop.f32.mrb[0].mxu0
        %2640 = vmatprep.mubr.bf16.mxu0 %v1112
        %2641 = vmatmul.mubr.bf16.gmra.mrb[0].mxu0 %v925
        %v2642 = vpop.f32.mrb[0].mxu0
        %v2643 = vadd.f32 0.0, %v2642
        %v2644 = vpop.f32.mrb[0].mxu0
        %v2645 = vpop.f32.mrb[0].mxu0
        %v2646 = vadd.f32 0.0, %v2645
        %v2647 = vpop.f32.mrb[0].mxu0
        %2648 = vmatprep.mubr.bf16.mxu0 %v1115
        %2649 = vmatmul.mubr.bf16.gmra.mrb[0].mxu0 %v927
        %v2650 = vpop.f32.mrb[0].mxu0
        %v2651 = vadd.f32 0.0, %v2650
        %v2652 = vpop.f32.mrb[0].mxu0
        %v2653 = vpop.f32.mrb[0].mxu0
        %v2654 = vadd.f32 0.0, %v2653
        %v2655 = vpop.f32.mrb[0].mxu0
        %2656 = vmatprep.mubr.bf16.mxu0 %v1118
        %2657 = vmatmul.mubr.bf16.gmra.mrb[0].mxu0 %v929
        %v2658 = vpop.f32.mrb[0].mxu0
        %v2659 = vadd.f32 0.0, %v2658
        %v2660 = vpop.f32.mrb[0].mxu0
        %v2661 = vpop.f32.mrb[0].mxu0
        %v2662 = vadd.f32 0.0, %v2661
        %v2663 = vpop.f32.mrb[0].mxu0
        %2664 = vmatprep.mubr.bf16.mxu0 %v1121
        %2665 = vmatmul.mubr.bf16.gmra.mrb[0].mxu0 %v931
        %v2666 = vpop.f32.mrb[0].mxu0
        %v2667 = vadd.f32 0.0, %v2666
        %v2668 = vpop.f32.mrb[0].mxu0
        %v2669 = vpop.f32.mrb[0].mxu0
        %v2670 = vadd.f32 0.0, %v2669
        %v2671 = vpop.f32.mrb[0].mxu0
        %2672 = vmatprep.mubr.bf16.mxu0 %v1124
        %2673 = vmatmul.mubr.bf16.gmra.mrb[0].mxu0 %v933
        %v2674 = vpop.f32.mrb[0].mxu0
        %v2675 = vadd.f32 0.0, %v2674
        %v2676 = vpop.f32.mrb[0].mxu0
        %v2677 = vpop.f32.mrb[0].mxu0
        %v2678 = vadd.f32 0.0, %v2677
        %v2679 = vpop.f32.mrb[0].mxu0
        %2680 = vmatprep.mubr.bf16.mxu0 %v1127
        %2681 = vmatmul.mubr.bf16.gmra.mrb[0].mxu0 %v935
        %v2682 = vpop.f32.mrb[0].mxu0
        %v2683 = vadd.f32 0.0, %v2682
        %v2684 = vpop.f32.mrb[0].mxu0
        %v2685 = vpop.f32.mrb[0].mxu0
        %v2686 = vadd.f32 0.0, %v2685
        %v2687 = vpop.f32.mrb[0].mxu0
        %2688 = vmatprep.mubr.bf16.mxu0 %v1130
        %2689 = vmatmul.mubr.bf16.gmra.mrb[0].mxu0 %v937
        %v2690 = vpop.f32.mrb[0].mxu0
        %v2691 = vadd.f32 0.0, %v2690
        %v2692 = vpop.f32.mrb[0].mxu0
        %v2693 = vpop.f32.mrb[0].mxu0
        %v2694 = vadd.f32 0.0, %v2693
        %v2695 = vpop.f32.mrb[0].mxu0
        %2696 = vmatprep.mubr.bf16.mxu0 %v1133
        %2697 = vmatmul.mubr.bf16.gmra.mrb[0].mxu0 %v939
        %v2698 = vpop.f32.mrb[0].mxu0
        %v2699 = vadd.f32 0.0, %v2698
        %v2700 = vpop.f32.mrb[0].mxu0
        %v2701 = vpop.f32.mrb[0].mxu0
        %v2702 = vadd.f32 0.0, %v2701
        %v2703 = vpop.f32.mrb[0].mxu0
        %2704 = vmatprep.mubr.bf16.mxu0 %v1136
        %2705 = vmatmul.mubr.bf16.gmra.mrb[0].mxu0 %v941
        %v2706 = vpop.f32.mrb[0].mxu0
        %v2707 = vadd.f32 0.0, %v2706
        %v2708 = vpop.f32.mrb[0].mxu0
        %v2709 = vpop.f32.mrb[0].mxu0
        %v2710 = vadd.f32 0.0, %v2709
        %v2711 = vpop.f32.mrb[0].mxu0
        %2712 = vmatprep.mubr.bf16.mxu0 %v1139
        %2713 = vmatmul.mubr.bf16.gmra.mrb[0].mxu0 %v943
        %v2714 = vpop.f32.mrb[0].mxu0
        %v2715 = vadd.f32 0.0, %v2714
        %v2716 = vpop.f32.mrb[0].mxu0
        %v2717 = vpop.f32.mrb[0].mxu0
        %v2718 = vadd.f32 0.0, %v2717
        %v2719 = vpop.f32.mrb[0].mxu0
        %2720 = vmatprep.mubr.bf16.mxu0 %v1142
        %2721 = vmatmul.mubr.bf16.gmra.mrb[0].mxu0 %v945
        %v2722 = vpop.f32.mrb[0].mxu0
        %v2723 = vadd.f32 0.0, %v2722
        %v2724 = vpop.f32.mrb[0].mxu0
        %v2725 = vpop.f32.mrb[0].mxu0
        %v2726 = vadd.f32 0.0, %v2725
        %v2727 = vpop.f32.mrb[0].mxu0
        %2728 = vmatprep.mubr.bf16.mxu0 %v1145
        %2729 = vmatmul.mubr.bf16.gmra.mrb[0].mxu0 %v947
        %v2730 = vpop.f32.mrb[0].mxu0
        %v2731 = vadd.f32 0.0, %v2730
        %v2732 = vpop.f32.mrb[0].mxu0
        %v2733 = vpop.f32.mrb[0].mxu0
        %v2734 = vadd.f32 0.0, %v2733
        %v2735 = vpop.f32.mrb[0].mxu0
        %2736 = vmatprep.mubr.bf16.mxu0 %v1148
        %2737 = vmatmul.mubr.bf16.gmra.mrb[0].mxu0 %v949
        %v2738 = vpop.f32.mrb[0].mxu0
        %v2739 = vadd.f32 0.0, %v2738
        %v2740 = vpop.f32.mrb[0].mxu0
        %v2741 = vpop.f32.mrb[0].mxu0
        %v2742 = vadd.f32 0.0, %v2741
        %v2743 = vpop.f32.mrb[0].mxu0
        %2744 = vmatprep.mubr.bf16.mxu0 %v1151
        %2745 = vmatmul.mubr.bf16.gmra.mrb[0].mxu0 %v951
        %v2746 = vpop.f32.mrb[0].mxu0
        %v2747 = vadd.f32 0.0, %v2746
        %v2748 = vpop.f32.mrb[0].mxu0
        %v2749 = vpop.f32.mrb[0].mxu0
        %v2750 = vadd.f32 0.0, %v2749
        %v2751 = vpop.f32.mrb[0].mxu0
        %2752 = vmatprep.mubr.bf16.mxu0 %v1154
        %2753 = vmatmul.mubr.bf16.gmra.mrb[0].mxu0 %v953
        %v2754 = vpop.f32.mrb[0].mxu0
        %v2755 = vadd.f32 0.0, %v2754
        %v2756 = vpop.f32.mrb[0].mxu0
        %v2757 = vpop.f32.mrb[0].mxu0
        %v2758 = vadd.f32 0.0, %v2757
        %v2759 = vpop.f32.mrb[0].mxu0
        %2760 = vmatprep.mubr.bf16.mxu0 %v1157
        %2761 = vmatmul.mubr.bf16.gmra.mrb[0].mxu0 %v955
        %v2762 = vpop.f32.mrb[0].mxu0
        %v2763 = vadd.f32 0.0, %v2762
        %v2764 = vpop.f32.mrb[0].mxu0
        %v2765 = vpop.f32.mrb[0].mxu0
        %v2766 = vadd.f32 0.0, %v2765
        %v2767 = vpop.f32.mrb[0].mxu0
        %2768 = vmatprep.mubr.bf16.mxu0 %v1160
        %2769 = vmatmul.mubr.bf16.gmra.mrb[0].mxu0 %v957
        %v2770 = vpop.f32.mrb[0].mxu0
        %v2771 = vadd.f32 0.0, %v2770
        %v2772 = vpop.f32.mrb[0].mxu0
        %v2773 = vpop.f32.mrb[0].mxu0
        %v2774 = vadd.f32 0.0, %v2773
        %v2775 = vpop.f32.mrb[0].mxu0
        %2776 = vmatprep.mubr.bf16.mxu0 %v1163
        %2777 = vmatmul.mubr.bf16.gmra.mrb[0].mxu0 %v959
        %v2778 = vpop.f32.mrb[0].mxu0
        %v2779 = vadd.f32 0.0, %v2778
        %v2780 = vpop.f32.mrb[0].mxu0
        %v2781 = vpop.f32.mrb[0].mxu0
        %v2782 = vadd.f32 0.0, %v2781
        %v2783 = vpop.f32.mrb[0].mxu0
        %2784 = vmatprep.mubr.bf16.mxu0 %v1166
        %2785 = vmatmul.mubr.bf16.gmra.mrb[0].mxu0 %v961
        %v2786 = vpop.f32.mrb[0].mxu0
        %v2787 = vadd.f32 0.0, %v2786
        %v2788 = vpop.f32.mrb[0].mxu0
        %v2789 = vpop.f32.mrb[0].mxu0
        %v2790 = vadd.f32 0.0, %v2789
        %v2791 = vpop.f32.mrb[0].mxu0
        %2792 = vmatprep.mubr.bf16.mxu0 %v1169
        %2793 = vmatmul.mubr.bf16.gmra.mrb[0].mxu0 %v963
        %v2794 = vpop.f32.mrb[0].mxu0
        %v2795 = vadd.f32 0.0, %v2794
        %v2796 = vpop.f32.mrb[0].mxu0
        %v2797 = vpop.f32.mrb[0].mxu0
        %v2798 = vadd.f32 0.0, %v2797
        %v2799 = vpop.f32.mrb[0].mxu0
        %2800 = vmatprep.mubr.bf16.mxu0 %v1172
        %2801 = vmatmul.mubr.bf16.gmra.mrb[0].mxu0 %v965
        %v2802 = vpop.f32.mrb[0].mxu0
        %v2803 = vadd.f32 0.0, %v2802
        %v2804 = vpop.f32.mrb[0].mxu0
        %v2805 = vpop.f32.mrb[0].mxu0
        %v2806 = vadd.f32 0.0, %v2805
        %v2807 = vpop.f32.mrb[0].mxu0
        %2808 = vmatprep.mubr.bf16.mxu0 %v1175
        %2809 = vmatmul.mubr.bf16.gmra.mrb[0].mxu0 %v967
        %v2810 = vpop.f32.mrb[0].mxu0
        %v2811 = vadd.f32 0.0, %v2810
        %v2812 = vpop.f32.mrb[0].mxu0
        %v2813 = vpop.f32.mrb[0].mxu0
        %v2814 = vadd.f32 0.0, %v2813
        %v2815 = vpop.f32.mrb[0].mxu0
        %2816 = vmatprep.mubr.bf16.mxu0 %v1178
        %2817 = vmatmul.mubr.bf16.gmra.mrb[0].mxu0 %v969
        %v2818 = vpop.f32.mrb[0].mxu0
        %v2819 = vadd.f32 0.0, %v2818
        %v2820 = vpop.f32.mrb[0].mxu0
        %v2821 = vpop.f32.mrb[0].mxu0
        %v2822 = vadd.f32 0.0, %v2821
        %v2823 = vpop.f32.mrb[0].mxu0
        %2824 = vmatprep.mubr.bf16.mxu0 %v1181
        %2825 = vmatmul.mubr.bf16.gmra.mrb[0].mxu0 %v971
        %v2826 = vpop.f32.mrb[0].mxu0
        %v2827 = vadd.f32 0.0, %v2826
        %v2828 = vpop.f32.mrb[0].mxu0
        %v2829 = vpop.f32.mrb[0].mxu0
        %v2830 = vadd.f32 0.0, %v2829
        %v2831 = vpop.f32.mrb[0].mxu0
        %2832 = vmatprep.mubr.bf16.mxu0 %v1184
        %2833 = vmatmul.mubr.bf16.gmra.mrb[0].mxu0 %v973
        %v2834 = vpop.f32.mrb[0].mxu0
        %v2835 = vadd.f32 0.0, %v2834
        %v2836 = vpop.f32.mrb[0].mxu0
        %v2837 = vpop.f32.mrb[0].mxu0
        %v2838 = vadd.f32 0.0, %v2837
        %v2839 = vpop.f32.mrb[0].mxu0
        %2840 = vmatprep.mubr.bf16.mxu0 %v1187
        %2841 = vmatmul.mubr.bf16.gmra.mrb[0].mxu0 %v975
        %v2842 = vpop.f32.mrb[0].mxu0
        %v2843 = vadd.f32 0.0, %v2842
        %v2844 = vpop.f32.mrb[0].mxu0
        %v2845 = vpop.f32.mrb[0].mxu0
        %v2846 = vadd.f32 0.0, %v2845
        %v2847 = vpop.f32.mrb[0].mxu0
        %2848 = vmatprep.mubr.bf16.mxu0 %v1190
        %2849 = vmatmul.mubr.bf16.gmra.mrb[0].mxu0 %v977
        %v2850 = vpop.f32.mrb[0].mxu0
        %v2851 = vadd.f32 0.0, %v2850
        %v2852 = vpop.f32.mrb[0].mxu0
        %v2853 = vpop.f32.mrb[0].mxu0
        %v2854 = vadd.f32 0.0, %v2853
        %v2855 = vpop.f32.mrb[0].mxu0
        %2856 = vmatprep.mubr.bf16.mxu0 %v1193
        %2857 = vmatmul.mubr.bf16.gmra.mrb[0].mxu0 %v979
        %v2858 = vpop.f32.mrb[0].mxu0
        %v2859 = vadd.f32 0.0, %v2858
        %v2860 = vpop.f32.mrb[0].mxu0
        %v2861 = vpop.f32.mrb[0].mxu0
        %v2862 = vadd.f32 0.0, %v2861
        %v2863 = vpop.f32.mrb[0].mxu0
        %2864 = vmatprep.mubr.bf16.mxu0 %v1196
        %2865 = vmatmul.mubr.bf16.gmra.mrb[0].mxu0 %v981
        %v2866 = vpop.f32.mrb[0].mxu0
        %v2867 = vadd.f32 0.0, %v2866
        %v2868 = vpop.f32.mrb[0].mxu0
        %v2869 = vpop.f32.mrb[0].mxu0
        %v2870 = vadd.f32 0.0, %v2869
        %v2871 = vpop.f32.mrb[0].mxu0
        %2872 = vdwg.mxu0
        %v2873 = vmax.f32 %v2555, %v2635
        %v2874 = vmax.f32 %v2558, %v2638
        %v2875 = vmax.f32 %v2563, %v2643
        %v2876 = vmax.f32 %v2566, %v2646
        %v2877 = vmax.f32 %v2571, %v2651
        %v2878 = vmax.f32 %v2574, %v2654
        %v2879 = vmax.f32 %v2579, %v2659
        %v2880 = vmax.f32 %v2582, %v2662
        %v2881 = vmax.f32 %v2587, %v2667
        %v2882 = vmax.f32 %v2590, %v2670
        %v2883 = vmax.f32 %v2595, %v2675
        %v2884 = vmax.f32 %v2598, %v2678
        %v2885 = vmax.f32 %v2603, %v2683
        %v2886 = vmax.f32 %v2606, %v2686
        %v2887 = vmax.f32 %v2611, %v2691
        %v2888 = vmax.f32 %v2614, %v2694
        %v2889 = vmax.f32 %v2619, %v2699
        %v2890 = vmax.f32 %v2622, %v2702
        %v2891 = vmax.f32 %v2627, %v2707
        %v2892 = vmax.f32 %v2630, %v2710
        %v2893 = vmax.f32 %v2715, %v2795
        %v2894 = vmax.f32 %v2718, %v2798
        %v2895 = vmax.f32 %v2723, %v2803
        %v2896 = vmax.f32 %v2726, %v2806
        %v2897 = vmax.f32 %v2731, %v2811
        %v2898 = vmax.f32 %v2734, %v2814
        %v2899 = vmax.f32 %v2739, %v2819
        %v2900 = vmax.f32 %v2742, %v2822
        %v2901 = vmax.f32 %v2747, %v2827
        %v2902 = vmax.f32 %v2750, %v2830
        %v2903 = vmax.f32 %v2755, %v2835
        %v2904 = vmax.f32 %v2758, %v2838
        %v2905 = vmax.f32 %v2763, %v2843
        %v2906 = vmax.f32 %v2766, %v2846
        %v2907 = vmax.f32 %v2771, %v2851
        %v2908 = vmax.f32 %v2774, %v2854
        %v2909 = vmax.f32 %v2779, %v2859
        %v2910 = vmax.f32 %v2782, %v2862
        %v2911 = vmax.f32 %v2787, %v2867
        %v2912 = vmax.f32 %v2790, %v2870
        %v2913 = vmax.f32 %v2873, %v2893
        %v2914 = vmax.f32 %v2874, %v2894
        %v2915 = vmax.f32 %v2875, %v2895
        %v2916 = vmax.f32 %v2876, %v2896
        %v2917 = vmax.f32 %v2877, %v2897
        %v2918 = vmax.f32 %v2878, %v2898
        %v2919 = vmax.f32 %v2879, %v2899
        %v2920 = vmax.f32 %v2880, %v2900
        %v2921 = vmax.f32 %v2881, %v2901
        %v2922 = vmax.f32 %v2882, %v2902
        %v2923 = vmax.f32 %v2883, %v2903
        %v2924 = vmax.f32 %v2884, %v2904
        %v2925 = vmax.f32 %v2885, %v2905
        %v2926 = vmax.f32 %v2886, %v2906
        %v2927 = vmax.f32 %v2887, %v2907
        %v2928 = vmax.f32 %v2888, %v2908
        %v2929 = vmax.f32 %v2889, %v2909
        %v2930 = vmax.f32 %v2890, %v2910
        %v2931 = vmax.f32 %v2891, %v2911
        %v2932 = vmax.f32 %v2892, %v2912
        %v2933 = vadd.f32 %v2913, %v1614
        %v2934 = vadd.f32 %v2914, %v1619
        %v2935 = vadd.f32 %v2915, %v1624
        %v2936 = vadd.f32 %v2916, %v1629
        %v2937 = vadd.f32 %v2917, %v1634
        %v2938 = vadd.f32 %v2918, %v1639
        %v2939 = vadd.f32 %v2919, %v1644
        %v2940 = vadd.f32 %v2920, %v1649
        %v2941 = vadd.f32 %v2921, %v1654
        %v2942 = vadd.f32 %v2922, %v1659
        %v2943 = vadd.f32 %v2923, %v1664
        %v2944 = vadd.f32 %v2924, %v1669
        %v2945 = vadd.f32 %v2925, %v1674
        %v2946 = vadd.f32 %v2926, %v1679
        %v2947 = vadd.f32 %v2927, %v1684
        %v2948 = vadd.f32 %v2928, %v1689
        %v2949 = vadd.f32 %v2929, %v1694
        %v2950 = vadd.f32 %v2930, %v1699
        %v2951 = vadd.f32 %v2931, %v1704
        %v2952 = vadd.f32 %v2932, %v1709
        %v2953 = vmax.f32 %v2933, 0.0
        %v2954 = vmax.f32 %v2934, 0.0
        %v2955 = vmax.f32 %v2935, 0.0
        %v2956 = vmax.f32 %v2936, 0.0
        %v2957 = vmax.f32 %v2937, 0.0
        %v2958 = vmax.f32 %v2938, 0.0
        %v2959 = vmax.f32 %v2939, 0.0
        %v2960 = vmax.f32 %v2940, 0.0
        %v2961 = vmax.f32 %v2941, 0.0
        %v2962 = vmax.f32 %v2942, 0.0
        %v2963 = vmax.f32 %v2943, 0.0
        %v2964 = vmax.f32 %v2944, 0.0
        %v2965 = vmax.f32 %v2945, 0.0
        %v2966 = vmax.f32 %v2946, 0.0
        %v2967 = vmax.f32 %v2947, 0.0
        %v2968 = vmax.f32 %v2948, 0.0
        %v2969 = vmax.f32 %v2949, 0.0
        %v2970 = vmax.f32 %v2950, 0.0
        %v2971 = vmax.f32 %v2951, 0.0
        %v2972 = vmax.f32 %v2952, 0.0
        %s2973 = scalar_lea.vmem %s3, 64
        %v2974 = vld [vmem:[%s2973] sm:$0xff]
        %v2975 = vld [vmem:[%s2973 + $0x8] sm:$0xff]
        %v2976 = vld [vmem:[%s2973 + $0x10] sm:$0xff]
        %v2977 = vld [vmem:[%s2973 + $0x18] sm:$0xff]
        %v2979 = vsel %vm2285, %v2975, 0
        %v2982 = vsel %vm2285, %v2977, 0
        %2984 = vmatprep.subr.mxu0 0.0
        %2985 = vmatpush1.msra.mxu0 %v2953
        %2986 = vmatprep.subr.mxu0 0.0
        %2987 = vmatpush1.msra.mxu0 %v2954
        %2988 = vmatprep.subr.mxu0 0.0
        %2989 = vmatpush1.msra.mxu0 %v2955
        %2990 = vmatprep.subr.mxu0 0.0
        %2991 = vmatpush1.msra.mxu0 %v2956
        %2992 = vmatprep.subr.mxu0 0.0
        %2993 = vmatpush1.msra.mxu0 %v2957
        %2994 = vmatprep.subr.mxu0 0.0
        %2995 = vmatpush1.msra.mxu0 %v2958
        %2996 = vmatprep.subr.mxu0 0.0
        %2997 = vmatpush1.msra.mxu0 %v2959
        %2998 = vmatprep.subr.mxu0 0.0
        %2999 = vmatpush1.msra.mxu0 %v2960
        %3000 = vmatprep.subr.mxu0 0.0
        %3001 = vmatpush1.msra.mxu0 %v2961
        %3002 = vmatprep.subr.mxu0 0.0
        %3003 = vmatpush1.msra.mxu0 %v2962
        %3004 = vmatprep.subr.mxu0 0.0
        %3005 = vmatpush1.msra.mxu0 %v2963
        %3006 = vmatprep.subr.mxu0 0.0
        %3007 = vmatpush1.msra.mxu0 %v2964
        %3008 = vmatprep.subr.mxu0 0.0
        %3009 = vmatpush1.msra.mxu0 %v2965
        %3010 = vmatprep.subr.mxu0 0.0
        %3011 = vmatpush1.msra.mxu0 %v2966
        %3012 = vmatprep.subr.mxu0 0.0
        %3013 = vmatpush1.msra.mxu0 %v2967
        %3014 = vmatprep.subr.mxu0 0.0
        %3015 = vmatpush1.msra.mxu0 %v2968
        %3016 = vmatprep.subr.mxu0 0.0
        %3017 = vmatpush1.msra.mxu0 %v2969
        %3018 = vmatprep.subr.mxu0 0.0
        %3019 = vmatpush1.msra.mxu0 %v2970
        %3020 = vmatprep.subr.mxu0 0.0
        %3021 = vmatpush1.msra.mxu0 %v2971
        %3022 = vmatprep.subr.mxu0 0.0
        %3023 = vmatpush1.msra.mxu0 %v2972
        %3024 = vmatprep.subr.mxu0 0.0
        %3025 = vmatpush1.msra.mxu0 0.0
        %3026 = vmatprep.subr.mxu0 0.0
        %3027 = vmatpush1.msra.mxu0 0.0
        %3028 = vmatprep.subr.mxu0 0.0
        %3029 = vmatpush1.msra.mxu0 0.0
        %3030 = vmatprep.subr.mxu0 0.0
        %3031 = vmatpush1.msra.mxu0 0.0
        %3032 = vmatprep.subr.mxu0 0.0
        %3033 = vmatpush1.msra.mxu0 0.0
        %3034 = vmatprep.subr.mxu0 0.0
        %3035 = vmatpush1.msra.mxu0 0.0
        %3036 = vmatprep.subr.mxu0 0.0
        %3037 = vmatpush1.msra.mxu0 0.0
        %3038 = vmatprep.subr.mxu0 0.0
        %3039 = vmatpush1.msra.mxu0 0.0
        %3040 = vmatprep.subr.mxu0 0.0
        %3041 = vmatpush1.msra.mxu0 0.0
        %3042 = vmatprep.subr.mxu0 0.0
        %3043 = vmatpush1.msra.mxu0 0.0
        %3044 = vmatprep.subr.mxu0 0.0
        %3045 = vmatpush1.msra.mxu0 0.0
        %3046 = vmatprep.subr.mxu0 0.0
        %3047 = vmatpush1.msra.mxu0 0.0
        %3048 = vmatprep.mubr.f32.mxu0 %v2979
        %3049 = vmatmul.mubr.f32.gmra.mrb[0].mxu0 %v2974
        %v3050 = vpop.f32.mrb[0].mxu0
        %v3051 = vadd.f32 0.0, %v3050
        %v3052 = vpop.f32.mrb[0].mxu0
        %3053 = vmatprep.mubr.f32.mxu0 %v2982
        %3054 = vmatmul.mubr.f32.gmra.mrb[0].mxu0 %v2976
        %v3055 = vpop.f32.mrb[0].mxu0
        %v3056 = vadd.f32 0.0, %v3055
        %v3057 = vpop.f32.mrb[0].mxu0
        %3058 = vdwg.mxu0
        %v3059 = vadd.f32 %v2440, %v3051
        %v3060 = vadd.f32 %v2445, %v3056
        %v3061 = vld [vmem:[%s520 + $0x48] sm:$0xf]
        %v3062 = vld [vmem:[%s520 + $0x4c] sm:$0xf]
        %v3063 = vld [vmem:[%s520 + $0x50] sm:$0xf]
        %v3064 = vld [vmem:[%s520 + $0x54] sm:$0xf]
        %v3065 = vld [vmem:[%s520 + $0x58] sm:$0xf]
        %v3066 = vld [vmem:[%s520 + $0x5c] sm:$0xf]
        %v3067 = vld [vmem:[%s520 + $0x60] sm:$0xf]
        %v3068 = vld [vmem:[%s520 + $0x64] sm:$0xf]
        %v3069 = vld [vmem:[%s520 + $0x68] sm:$0xf]
        %v3070 = vld [vmem:[%s520 + $0x6c] sm:$0xf]
        %v3071 = vld [vmem:[%s520 + $0x70] sm:$0xf]
        %v3072 = vld [vmem:[%s520 + $0x74] sm:$0xf]
        %v3073 = vld [vmem:[%s520 + $0x78] sm:$0xf]
        %v3074 = vld [vmem:[%s520 + $0x7c] sm:$0xf]
        %v3075 = vld [vmem:[%s520 + $0x80] sm:$0xf]
        %v3076 = vld [vmem:[%s520 + $0x84] sm:$0xf]
        %v3077 = vld [vmem:[%s520 + $0x88] sm:$0xf]
        %v3078 = vld [vmem:[%s520 + $0x8c] sm:$0xf]
        %v3097 = vunpack.c.l.b16 %v3061
        %v3098 = vunpack.c.l.b16 %v3062
        %v3099 = vunpack.c.l.b16 %v3063
        %v3100 = vunpack.c.l.b16 %v3064
        %v3101 = vunpack.c.l.b16 %v3065
        %v3102 = vunpack.c.l.b16 %v3066
        %v3103 = vunpack.c.l.b16 %v3067
        %v3104 = vunpack.c.l.b16 %v3068
        %v3105 = vunpack.c.l.b16 %v3069
        %v3106 = vunpack.c.l.b16 %v3070
        %v3107 = vunpack.c.l.b16 %v3071
        %v3108 = vunpack.c.l.b16 %v3072
        %v3109 = vunpack.c.l.b16 %v3073
        %v3110 = vunpack.c.l.b16 %v3074
        %v3111 = vunpack.c.l.b16 %v3075
        %v3112 = vunpack.c.l.b16 %v3076
        %v3113 = vunpack.c.l.b16 %v3077
        %v3114 = vunpack.c.l.b16 %v3078
        %v3115 = vpack.c.b16 %v3098, %v3097
        %v3116 = vpack.c.b16 %v3100, %v3099
        %v3117 = vpack.c.b16 %v3102, %v3101
        %v3118 = vpack.c.b16 %v3104, %v3103
        %v3119 = vpack.c.b16 %v3106, %v3105
        %v3120 = vpack.c.b16 %v3108, %v3107
        %v3121 = vpack.c.b16 %v3110, %v3109
        %v3122 = vpack.c.b16 %v3112, %v3111
        %v3123 = vpack.c.b16 %v3114, %v3113
        %3133 = vmatprep.subr.bf16.mxu0 0
        %3134 = vmatpush1.bf16.msra.mxu0 %v3115
        %3135 = vmatprep.subr.bf16.mxu0 0
        %3136 = vmatpush1.bf16.msra.mxu0 %v3116
        %3137 = vmatprep.subr.bf16.mxu0 0
        %3138 = vmatpush1.bf16.msra.mxu0 %v3117
        %3139 = vmatprep.subr.bf16.mxu0 0
        %3140 = vmatpush1.bf16.msra.mxu0 %v3118
        %3141 = vmatprep.subr.bf16.mxu0 0
        %3142 = vmatpush1.bf16.msra.mxu0 %v3119
        %3143 = vmatprep.subr.bf16.mxu0 0
        %3144 = vmatpush1.bf16.msra.mxu0 %v3120
        %3145 = vmatprep.subr.bf16.mxu0 0
        %3146 = vmatpush1.bf16.msra.mxu0 %v3121
        %3147 = vmatprep.subr.bf16.mxu0 0
        %3148 = vmatpush1.bf16.msra.mxu0 %v3122
        %3149 = vmatprep.subr.bf16.mxu0 0
        %3150 = vmatpush1.bf16.msra.mxu0 %v3123
        %3151 = vmatprep.subr.bf16.mxu0 0
        %3152 = vmatpush1.bf16.msra.mxu0 0
        %3153 = vmatprep.subr.bf16.mxu0 0
        %3154 = vmatpush1.bf16.msra.mxu0 0
        %3155 = vmatprep.subr.bf16.mxu0 0
        %3156 = vmatpush1.bf16.msra.mxu0 0
        %3157 = vmatprep.subr.bf16.mxu0 0
        %3158 = vmatpush1.bf16.msra.mxu0 0
        %3159 = vmatprep.subr.bf16.mxu0 0
        %3160 = vmatpush1.bf16.msra.mxu0 0
        %3161 = vmatprep.subr.bf16.mxu0 0
        %3162 = vmatpush1.bf16.msra.mxu0 0
        %3163 = vmatprep.subr.bf16.mxu0 0
        %3164 = vmatpush1.bf16.msra.mxu0 0
        %3165 = vmatprep.mubr.bf16.mxu0 %v1079
        %3166 = vmatmul.mubr.bf16.gmra.mrb[0].mxu0 %v903
        %v3167 = vpop.f32.mrb[0].mxu0
        %v3168 = vadd.f32 0.0, %v3167
        %v3169 = vpop.f32.mrb[0].mxu0
        %v3170 = vpop.f32.mrb[0].mxu0
        %v3171 = vadd.f32 0.0, %v3170
        %v3172 = vpop.f32.mrb[0].mxu0
        %3173 = vmatprep.mubr.bf16.mxu0 %v1082
        %3174 = vmatmul.mubr.bf16.gmra.mrb[0].mxu0 %v905
        %v3175 = vpop.f32.mrb[0].mxu0
        %v3176 = vadd.f32 0.0, %v3175
        %v3177 = vpop.f32.mrb[0].mxu0
        %v3178 = vpop.f32.mrb[0].mxu0
        %v3179 = vadd.f32 0.0, %v3178
        %v3180 = vpop.f32.mrb[0].mxu0
        %3181 = vmatprep.mubr.bf16.mxu0 %v1085
        %3182 = vmatmul.mubr.bf16.gmra.mrb[0].mxu0 %v907
        %v3183 = vpop.f32.mrb[0].mxu0
        %v3184 = vadd.f32 0.0, %v3183
        %v3185 = vpop.f32.mrb[0].mxu0
        %v3186 = vpop.f32.mrb[0].mxu0
        %v3187 = vadd.f32 0.0, %v3186
        %v3188 = vpop.f32.mrb[0].mxu0
        %3189 = vmatprep.mubr.bf16.mxu0 %v1088
        %3190 = vmatmul.mubr.bf16.gmra.mrb[0].mxu0 %v909
        %v3191 = vpop.f32.mrb[0].mxu0
        %v3192 = vadd.f32 0.0, %v3191
        %v3193 = vpop.f32.mrb[0].mxu0
        %v3194 = vpop.f32.mrb[0].mxu0
        %v3195 = vadd.f32 0.0, %v3194
        %v3196 = vpop.f32.mrb[0].mxu0
        %3197 = vmatprep.mubr.bf16.mxu0 %v1091
        %3198 = vmatmul.mubr.bf16.gmra.mrb[0].mxu0 %v911
        %v3199 = vpop.f32.mrb[0].mxu0
        %v3200 = vadd.f32 0.0, %v3199
        %v3201 = vpop.f32.mrb[0].mxu0
        %v3202 = vpop.f32.mrb[0].mxu0
        %v3203 = vadd.f32 0.0, %v3202
        %v3204 = vpop.f32.mrb[0].mxu0
        %3205 = vmatprep.mubr.bf16.mxu0 %v1094
        %3206 = vmatmul.mubr.bf16.gmra.mrb[0].mxu0 %v913
        %v3207 = vpop.f32.mrb[0].mxu0
        %v3208 = vadd.f32 0.0, %v3207
        %v3209 = vpop.f32.mrb[0].mxu0
        %v3210 = vpop.f32.mrb[0].mxu0
        %v3211 = vadd.f32 0.0, %v3210
        %v3212 = vpop.f32.mrb[0].mxu0
        %3213 = vmatprep.mubr.bf16.mxu0 %v1097
        %3214 = vmatmul.mubr.bf16.gmra.mrb[0].mxu0 %v915
        %v3215 = vpop.f32.mrb[0].mxu0
        %v3216 = vadd.f32 0.0, %v3215
        %v3217 = vpop.f32.mrb[0].mxu0
        %v3218 = vpop.f32.mrb[0].mxu0
        %v3219 = vadd.f32 0.0, %v3218
        %v3220 = vpop.f32.mrb[0].mxu0
        %3221 = vmatprep.mubr.bf16.mxu0 %v1100
        %3222 = vmatmul.mubr.bf16.gmra.mrb[0].mxu0 %v917
        %v3223 = vpop.f32.mrb[0].mxu0
        %v3224 = vadd.f32 0.0, %v3223
        %v3225 = vpop.f32.mrb[0].mxu0
        %v3226 = vpop.f32.mrb[0].mxu0
        %v3227 = vadd.f32 0.0, %v3226
        %v3228 = vpop.f32.mrb[0].mxu0
        %3229 = vmatprep.mubr.bf16.mxu0 %v1103
        %3230 = vmatmul.mubr.bf16.gmra.mrb[0].mxu0 %v919
        %v3231 = vpop.f32.mrb[0].mxu0
        %v3232 = vadd.f32 0.0, %v3231
        %v3233 = vpop.f32.mrb[0].mxu0
        %v3234 = vpop.f32.mrb[0].mxu0
        %v3235 = vadd.f32 0.0, %v3234
        %v3236 = vpop.f32.mrb[0].mxu0
        %3237 = vmatprep.mubr.bf16.mxu0 %v1106
        %3238 = vmatmul.mubr.bf16.gmra.mrb[0].mxu0 %v921
        %v3239 = vpop.f32.mrb[0].mxu0
        %v3240 = vadd.f32 0.0, %v3239
        %v3241 = vpop.f32.mrb[0].mxu0
        %v3242 = vpop.f32.mrb[0].mxu0
        %v3243 = vadd.f32 0.0, %v3242
        %v3244 = vpop.f32.mrb[0].mxu0
        %3245 = vmatprep.mubr.bf16.mxu0 %v1109
        %3246 = vmatmul.mubr.bf16.gmra.mrb[0].mxu0 %v923
        %v3247 = vpop.f32.mrb[0].mxu0
        %v3248 = vadd.f32 0.0, %v3247
        %v3249 = vpop.f32.mrb[0].mxu0
        %v3250 = vpop.f32.mrb[0].mxu0
        %v3251 = vadd.f32 0.0, %v3250
        %v3252 = vpop.f32.mrb[0].mxu0
        %3253 = vmatprep.mubr.bf16.mxu0 %v1112
        %3254 = vmatmul.mubr.bf16.gmra.mrb[0].mxu0 %v925
        %v3255 = vpop.f32.mrb[0].mxu0
        %v3256 = vadd.f32 0.0, %v3255
        %v3257 = vpop.f32.mrb[0].mxu0
        %v3258 = vpop.f32.mrb[0].mxu0
        %v3259 = vadd.f32 0.0, %v3258
        %v3260 = vpop.f32.mrb[0].mxu0
        %3261 = vmatprep.mubr.bf16.mxu0 %v1115
        %3262 = vmatmul.mubr.bf16.gmra.mrb[0].mxu0 %v927
        %v3263 = vpop.f32.mrb[0].mxu0
        %v3264 = vadd.f32 0.0, %v3263
        %v3265 = vpop.f32.mrb[0].mxu0
        %v3266 = vpop.f32.mrb[0].mxu0
        %v3267 = vadd.f32 0.0, %v3266
        %v3268 = vpop.f32.mrb[0].mxu0
        %3269 = vmatprep.mubr.bf16.mxu0 %v1118
        %3270 = vmatmul.mubr.bf16.gmra.mrb[0].mxu0 %v929
        %v3271 = vpop.f32.mrb[0].mxu0
        %v3272 = vadd.f32 0.0, %v3271
        %v3273 = vpop.f32.mrb[0].mxu0
        %v3274 = vpop.f32.mrb[0].mxu0
        %v3275 = vadd.f32 0.0, %v3274
        %v3276 = vpop.f32.mrb[0].mxu0
        %3277 = vmatprep.mubr.bf16.mxu0 %v1121
        %3278 = vmatmul.mubr.bf16.gmra.mrb[0].mxu0 %v931
        %v3279 = vpop.f32.mrb[0].mxu0
        %v3280 = vadd.f32 0.0, %v3279
        %v3281 = vpop.f32.mrb[0].mxu0
        %v3282 = vpop.f32.mrb[0].mxu0
        %v3283 = vadd.f32 0.0, %v3282
        %v3284 = vpop.f32.mrb[0].mxu0
        %3285 = vmatprep.mubr.bf16.mxu0 %v1124
        %3286 = vmatmul.mubr.bf16.gmra.mrb[0].mxu0 %v933
        %v3287 = vpop.f32.mrb[0].mxu0
        %v3288 = vadd.f32 0.0, %v3287
        %v3289 = vpop.f32.mrb[0].mxu0
        %v3290 = vpop.f32.mrb[0].mxu0
        %v3291 = vadd.f32 0.0, %v3290
        %v3292 = vpop.f32.mrb[0].mxu0
        %3293 = vmatprep.mubr.bf16.mxu0 %v1127
        %3294 = vmatmul.mubr.bf16.gmra.mrb[0].mxu0 %v935
        %v3295 = vpop.f32.mrb[0].mxu0
        %v3296 = vadd.f32 0.0, %v3295
        %v3297 = vpop.f32.mrb[0].mxu0
        %v3298 = vpop.f32.mrb[0].mxu0
        %v3299 = vadd.f32 0.0, %v3298
        %v3300 = vpop.f32.mrb[0].mxu0
        %3301 = vmatprep.mubr.bf16.mxu0 %v1130
        %3302 = vmatmul.mubr.bf16.gmra.mrb[0].mxu0 %v937
        %v3303 = vpop.f32.mrb[0].mxu0
        %v3304 = vadd.f32 0.0, %v3303
        %v3305 = vpop.f32.mrb[0].mxu0
        %v3306 = vpop.f32.mrb[0].mxu0
        %v3307 = vadd.f32 0.0, %v3306
        %v3308 = vpop.f32.mrb[0].mxu0
        %3309 = vmatprep.mubr.bf16.mxu0 %v1133
        %3310 = vmatmul.mubr.bf16.gmra.mrb[0].mxu0 %v939
        %v3311 = vpop.f32.mrb[0].mxu0
        %v3312 = vadd.f32 0.0, %v3311
        %v3313 = vpop.f32.mrb[0].mxu0
        %v3314 = vpop.f32.mrb[0].mxu0
        %v3315 = vadd.f32 0.0, %v3314
        %v3316 = vpop.f32.mrb[0].mxu0
        %3317 = vmatprep.mubr.bf16.mxu0 %v1136
        %3318 = vmatmul.mubr.bf16.gmra.mrb[0].mxu0 %v941
        %v3319 = vpop.f32.mrb[0].mxu0
        %v3320 = vadd.f32 0.0, %v3319
        %v3321 = vpop.f32.mrb[0].mxu0
        %v3322 = vpop.f32.mrb[0].mxu0
        %v3323 = vadd.f32 0.0, %v3322
        %v3324 = vpop.f32.mrb[0].mxu0
        %3325 = vmatprep.mubr.bf16.mxu0 %v1139
        %3326 = vmatmul.mubr.bf16.gmra.mrb[0].mxu0 %v943
        %v3327 = vpop.f32.mrb[0].mxu0
        %v3328 = vadd.f32 0.0, %v3327
        %v3329 = vpop.f32.mrb[0].mxu0
        %v3330 = vpop.f32.mrb[0].mxu0
        %v3331 = vadd.f32 0.0, %v3330
        %v3332 = vpop.f32.mrb[0].mxu0
        %3333 = vmatprep.mubr.bf16.mxu0 %v1142
        %3334 = vmatmul.mubr.bf16.gmra.mrb[0].mxu0 %v945
        %v3335 = vpop.f32.mrb[0].mxu0
        %v3336 = vadd.f32 0.0, %v3335
        %v3337 = vpop.f32.mrb[0].mxu0
        %v3338 = vpop.f32.mrb[0].mxu0
        %v3339 = vadd.f32 0.0, %v3338
        %v3340 = vpop.f32.mrb[0].mxu0
        %3341 = vmatprep.mubr.bf16.mxu0 %v1145
        %3342 = vmatmul.mubr.bf16.gmra.mrb[0].mxu0 %v947
        %v3343 = vpop.f32.mrb[0].mxu0
        %v3344 = vadd.f32 0.0, %v3343
        %v3345 = vpop.f32.mrb[0].mxu0
        %v3346 = vpop.f32.mrb[0].mxu0
        %v3347 = vadd.f32 0.0, %v3346
        %v3348 = vpop.f32.mrb[0].mxu0
        %3349 = vmatprep.mubr.bf16.mxu0 %v1148
        %3350 = vmatmul.mubr.bf16.gmra.mrb[0].mxu0 %v949
        %v3351 = vpop.f32.mrb[0].mxu0
        %v3352 = vadd.f32 0.0, %v3351
        %v3353 = vpop.f32.mrb[0].mxu0
        %v3354 = vpop.f32.mrb[0].mxu0
        %v3355 = vadd.f32 0.0, %v3354
        %v3356 = vpop.f32.mrb[0].mxu0
        %3357 = vmatprep.mubr.bf16.mxu0 %v1151
        %3358 = vmatmul.mubr.bf16.gmra.mrb[0].mxu0 %v951
        %v3359 = vpop.f32.mrb[0].mxu0
        %v3360 = vadd.f32 0.0, %v3359
        %v3361 = vpop.f32.mrb[0].mxu0
        %v3362 = vpop.f32.mrb[0].mxu0
        %v3363 = vadd.f32 0.0, %v3362
        %v3364 = vpop.f32.mrb[0].mxu0
        %3365 = vmatprep.mubr.bf16.mxu0 %v1154
        %3366 = vmatmul.mubr.bf16.gmra.mrb[0].mxu0 %v953
        %v3367 = vpop.f32.mrb[0].mxu0
        %v3368 = vadd.f32 0.0, %v3367
        %v3369 = vpop.f32.mrb[0].mxu0
        %v3370 = vpop.f32.mrb[0].mxu0
        %v3371 = vadd.f32 0.0, %v3370
        %v3372 = vpop.f32.mrb[0].mxu0
        %3373 = vmatprep.mubr.bf16.mxu0 %v1157
        %3374 = vmatmul.mubr.bf16.gmra.mrb[0].mxu0 %v955
        %v3375 = vpop.f32.mrb[0].mxu0
        %v3376 = vadd.f32 0.0, %v3375
        %v3377 = vpop.f32.mrb[0].mxu0
        %v3378 = vpop.f32.mrb[0].mxu0
        %v3379 = vadd.f32 0.0, %v3378
        %v3380 = vpop.f32.mrb[0].mxu0
        %3381 = vmatprep.mubr.bf16.mxu0 %v1160
        %3382 = vmatmul.mubr.bf16.gmra.mrb[0].mxu0 %v957
        %v3383 = vpop.f32.mrb[0].mxu0
        %v3384 = vadd.f32 0.0, %v3383
        %v3385 = vpop.f32.mrb[0].mxu0
        %v3386 = vpop.f32.mrb[0].mxu0
        %v3387 = vadd.f32 0.0, %v3386
        %v3388 = vpop.f32.mrb[0].mxu0
        %3389 = vmatprep.mubr.bf16.mxu0 %v1163
        %3390 = vmatmul.mubr.bf16.gmra.mrb[0].mxu0 %v959
        %v3391 = vpop.f32.mrb[0].mxu0
        %v3392 = vadd.f32 0.0, %v3391
        %v3393 = vpop.f32.mrb[0].mxu0
        %v3394 = vpop.f32.mrb[0].mxu0
        %v3395 = vadd.f32 0.0, %v3394
        %v3396 = vpop.f32.mrb[0].mxu0
        %3397 = vmatprep.mubr.bf16.mxu0 %v1166
        %3398 = vmatmul.mubr.bf16.gmra.mrb[0].mxu0 %v961
        %v3399 = vpop.f32.mrb[0].mxu0
        %v3400 = vadd.f32 0.0, %v3399
        %v3401 = vpop.f32.mrb[0].mxu0
        %v3402 = vpop.f32.mrb[0].mxu0
        %v3403 = vadd.f32 0.0, %v3402
        %v3404 = vpop.f32.mrb[0].mxu0
        %3405 = vmatprep.mubr.bf16.mxu0 %v1169
        %3406 = vmatmul.mubr.bf16.gmra.mrb[0].mxu0 %v963
        %v3407 = vpop.f32.mrb[0].mxu0
        %v3408 = vadd.f32 0.0, %v3407
        %v3409 = vpop.f32.mrb[0].mxu0
        %v3410 = vpop.f32.mrb[0].mxu0
        %v3411 = vadd.f32 0.0, %v3410
        %v3412 = vpop.f32.mrb[0].mxu0
        %3413 = vmatprep.mubr.bf16.mxu0 %v1172
        %3414 = vmatmul.mubr.bf16.gmra.mrb[0].mxu0 %v965
        %v3415 = vpop.f32.mrb[0].mxu0
        %v3416 = vadd.f32 0.0, %v3415
        %v3417 = vpop.f32.mrb[0].mxu0
        %v3418 = vpop.f32.mrb[0].mxu0
        %v3419 = vadd.f32 0.0, %v3418
        %v3420 = vpop.f32.mrb[0].mxu0
        %3421 = vmatprep.mubr.bf16.mxu0 %v1175
        %3422 = vmatmul.mubr.bf16.gmra.mrb[0].mxu0 %v967
        %v3423 = vpop.f32.mrb[0].mxu0
        %v3424 = vadd.f32 0.0, %v3423
        %v3425 = vpop.f32.mrb[0].mxu0
        %v3426 = vpop.f32.mrb[0].mxu0
        %v3427 = vadd.f32 0.0, %v3426
        %v3428 = vpop.f32.mrb[0].mxu0
        %3429 = vmatprep.mubr.bf16.mxu0 %v1178
        %3430 = vmatmul.mubr.bf16.gmra.mrb[0].mxu0 %v969
        %v3431 = vpop.f32.mrb[0].mxu0
        %v3432 = vadd.f32 0.0, %v3431
        %v3433 = vpop.f32.mrb[0].mxu0
        %v3434 = vpop.f32.mrb[0].mxu0
        %v3435 = vadd.f32 0.0, %v3434
        %v3436 = vpop.f32.mrb[0].mxu0
        %3437 = vmatprep.mubr.bf16.mxu0 %v1181
        %3438 = vmatmul.mubr.bf16.gmra.mrb[0].mxu0 %v971
        %v3439 = vpop.f32.mrb[0].mxu0
        %v3440 = vadd.f32 0.0, %v3439
        %v3441 = vpop.f32.mrb[0].mxu0
        %v3442 = vpop.f32.mrb[0].mxu0
        %v3443 = vadd.f32 0.0, %v3442
        %v3444 = vpop.f32.mrb[0].mxu0
        %3445 = vmatprep.mubr.bf16.mxu0 %v1184
        %3446 = vmatmul.mubr.bf16.gmra.mrb[0].mxu0 %v973
        %v3447 = vpop.f32.mrb[0].mxu0
        %v3448 = vadd.f32 0.0, %v3447
        %v3449 = vpop.f32.mrb[0].mxu0
        %v3450 = vpop.f32.mrb[0].mxu0
        %v3451 = vadd.f32 0.0, %v3450
        %v3452 = vpop.f32.mrb[0].mxu0
        %3453 = vmatprep.mubr.bf16.mxu0 %v1187
        %3454 = vmatmul.mubr.bf16.gmra.mrb[0].mxu0 %v975
        %v3455 = vpop.f32.mrb[0].mxu0
        %v3456 = vadd.f32 0.0, %v3455
        %v3457 = vpop.f32.mrb[0].mxu0
        %v3458 = vpop.f32.mrb[0].mxu0
        %v3459 = vadd.f32 0.0, %v3458
        %v3460 = vpop.f32.mrb[0].mxu0
        %3461 = vmatprep.mubr.bf16.mxu0 %v1190
        %3462 = vmatmul.mubr.bf16.gmra.mrb[0].mxu0 %v977
        %v3463 = vpop.f32.mrb[0].mxu0
        %v3464 = vadd.f32 0.0, %v3463
        %v3465 = vpop.f32.mrb[0].mxu0
        %v3466 = vpop.f32.mrb[0].mxu0
        %v3467 = vadd.f32 0.0, %v3466
        %v3468 = vpop.f32.mrb[0].mxu0
        %3469 = vmatprep.mubr.bf16.mxu0 %v1193
        %3470 = vmatmul.mubr.bf16.gmra.mrb[0].mxu0 %v979
        %v3471 = vpop.f32.mrb[0].mxu0
        %v3472 = vadd.f32 0.0, %v3471
        %v3473 = vpop.f32.mrb[0].mxu0
        %v3474 = vpop.f32.mrb[0].mxu0
        %v3475 = vadd.f32 0.0, %v3474
        %v3476 = vpop.f32.mrb[0].mxu0
        %3477 = vmatprep.mubr.bf16.mxu0 %v1196
        %3478 = vmatmul.mubr.bf16.gmra.mrb[0].mxu0 %v981
        %v3479 = vpop.f32.mrb[0].mxu0
        %v3480 = vadd.f32 0.0, %v3479
        %v3481 = vpop.f32.mrb[0].mxu0
        %v3482 = vpop.f32.mrb[0].mxu0
        %v3483 = vadd.f32 0.0, %v3482
        %v3484 = vpop.f32.mrb[0].mxu0
        %3485 = vdwg.mxu0
        %v3486 = vmax.f32 %v3168, %v3248
        %v3487 = vmax.f32 %v3171, %v3251
        %v3488 = vmax.f32 %v3176, %v3256
        %v3489 = vmax.f32 %v3179, %v3259
        %v3490 = vmax.f32 %v3184, %v3264
        %v3491 = vmax.f32 %v3187, %v3267
        %v3492 = vmax.f32 %v3192, %v3272
        %v3493 = vmax.f32 %v3195, %v3275
        %v3494 = vmax.f32 %v3200, %v3280
        %v3495 = vmax.f32 %v3203, %v3283
        %v3496 = vmax.f32 %v3208, %v3288
        %v3497 = vmax.f32 %v3211, %v3291
        %v3498 = vmax.f32 %v3216, %v3296
        %v3499 = vmax.f32 %v3219, %v3299
        %v3500 = vmax.f32 %v3224, %v3304
        %v3501 = vmax.f32 %v3227, %v3307
        %v3502 = vmax.f32 %v3232, %v3312
        %v3503 = vmax.f32 %v3235, %v3315
        %v3504 = vmax.f32 %v3240, %v3320
        %v3505 = vmax.f32 %v3243, %v3323
        %v3506 = vmax.f32 %v3328, %v3408
        %v3507 = vmax.f32 %v3331, %v3411
        %v3508 = vmax.f32 %v3336, %v3416
        %v3509 = vmax.f32 %v3339, %v3419
        %v3510 = vmax.f32 %v3344, %v3424
        %v3511 = vmax.f32 %v3347, %v3427
        %v3512 = vmax.f32 %v3352, %v3432
        %v3513 = vmax.f32 %v3355, %v3435
        %v3514 = vmax.f32 %v3360, %v3440
        %v3515 = vmax.f32 %v3363, %v3443
        %v3516 = vmax.f32 %v3368, %v3448
        %v3517 = vmax.f32 %v3371, %v3451
        %v3518 = vmax.f32 %v3376, %v3456
        %v3519 = vmax.f32 %v3379, %v3459
        %v3520 = vmax.f32 %v3384, %v3464
        %v3521 = vmax.f32 %v3387, %v3467
        %v3522 = vmax.f32 %v3392, %v3472
        %v3523 = vmax.f32 %v3395, %v3475
        %v3524 = vmax.f32 %v3400, %v3480
        %v3525 = vmax.f32 %v3403, %v3483
        %v3526 = vmax.f32 %v3486, %v3506
        %v3527 = vmax.f32 %v3487, %v3507
        %v3528 = vmax.f32 %v3488, %v3508
        %v3529 = vmax.f32 %v3489, %v3509
        %v3530 = vmax.f32 %v3490, %v3510
        %v3531 = vmax.f32 %v3491, %v3511
        %v3532 = vmax.f32 %v3492, %v3512
        %v3533 = vmax.f32 %v3493, %v3513
        %v3534 = vmax.f32 %v3494, %v3514
        %v3535 = vmax.f32 %v3495, %v3515
        %v3536 = vmax.f32 %v3496, %v3516
        %v3537 = vmax.f32 %v3497, %v3517
        %v3538 = vmax.f32 %v3498, %v3518
        %v3539 = vmax.f32 %v3499, %v3519
        %v3540 = vmax.f32 %v3500, %v3520
        %v3541 = vmax.f32 %v3501, %v3521
        %v3542 = vmax.f32 %v3502, %v3522
        %v3543 = vmax.f32 %v3503, %v3523
        %v3544 = vmax.f32 %v3504, %v3524
        %v3545 = vmax.f32 %v3505, %v3525
        %v3546 = vadd.f32 %v3526, %v1614
        %v3547 = vadd.f32 %v3527, %v1619
        %v3548 = vadd.f32 %v3528, %v1624
        %v3549 = vadd.f32 %v3529, %v1629
        %v3550 = vadd.f32 %v3530, %v1634
        %v3551 = vadd.f32 %v3531, %v1639
        %v3552 = vadd.f32 %v3532, %v1644
        %v3553 = vadd.f32 %v3533, %v1649
        %v3554 = vadd.f32 %v3534, %v1654
        %v3555 = vadd.f32 %v3535, %v1659
        %v3556 = vadd.f32 %v3536, %v1664
        %v3557 = vadd.f32 %v3537, %v1669
        %v3558 = vadd.f32 %v3538, %v1674
        %v3559 = vadd.f32 %v3539, %v1679
        %v3560 = vadd.f32 %v3540, %v1684
        %v3561 = vadd.f32 %v3541, %v1689
        %v3562 = vadd.f32 %v3542, %v1694
        %v3563 = vadd.f32 %v3543, %v1699
        %v3564 = vadd.f32 %v3544, %v1704
        %v3565 = vadd.f32 %v3545, %v1709
        %v3566 = vmax.f32 %v3546, 0.0
        %v3567 = vmax.f32 %v3547, 0.0
        %v3568 = vmax.f32 %v3548, 0.0
        %v3569 = vmax.f32 %v3549, 0.0
        %v3570 = vmax.f32 %v3550, 0.0
        %v3571 = vmax.f32 %v3551, 0.0
        %v3572 = vmax.f32 %v3552, 0.0
        %v3573 = vmax.f32 %v3553, 0.0
        %v3574 = vmax.f32 %v3554, 0.0
        %v3575 = vmax.f32 %v3555, 0.0
        %v3576 = vmax.f32 %v3556, 0.0
        %v3577 = vmax.f32 %v3557, 0.0
        %v3578 = vmax.f32 %v3558, 0.0
        %v3579 = vmax.f32 %v3559, 0.0
        %v3580 = vmax.f32 %v3560, 0.0
        %v3581 = vmax.f32 %v3561, 0.0
        %v3582 = vmax.f32 %v3562, 0.0
        %v3583 = vmax.f32 %v3563, 0.0
        %v3584 = vmax.f32 %v3564, 0.0
        %v3585 = vmax.f32 %v3565, 0.0
        %s3586 = scalar_lea.vmem %s3, 96
        %v3587 = vld [vmem:[%s3586] sm:$0xff]
        %v3588 = vld [vmem:[%s3586 + $0x8] sm:$0xff]
        %v3589 = vld [vmem:[%s3586 + $0x10] sm:$0xff]
        %v3590 = vld [vmem:[%s3586 + $0x18] sm:$0xff]
        %v3592 = vsel %vm2285, %v3588, 0
        %v3595 = vsel %vm2285, %v3590, 0
        %3597 = vmatprep.subr.mxu0 0.0
        %3598 = vmatpush1.msra.mxu0 %v3566
        %3599 = vmatprep.subr.mxu0 0.0
        %3600 = vmatpush1.msra.mxu0 %v3567
        %3601 = vmatprep.subr.mxu0 0.0
        %3602 = vmatpush1.msra.mxu0 %v3568
        %3603 = vmatprep.subr.mxu0 0.0
        %3604 = vmatpush1.msra.mxu0 %v3569
        %3605 = vmatprep.subr.mxu0 0.0
        %3606 = vmatpush1.msra.mxu0 %v3570
        %3607 = vmatprep.subr.mxu0 0.0
        %3608 = vmatpush1.msra.mxu0 %v3571
        %3609 = vmatprep.subr.mxu0 0.0
        %3610 = vmatpush1.msra.mxu0 %v3572
        %3611 = vmatprep.subr.mxu0 0.0
        %3612 = vmatpush1.msra.mxu0 %v3573
        %3613 = vmatprep.subr.mxu0 0.0
        %3614 = vmatpush1.msra.mxu0 %v3574
        %3615 = vmatprep.subr.mxu0 0.0
        %3616 = vmatpush1.msra.mxu0 %v3575
        %3617 = vmatprep.subr.mxu0 0.0
        %3618 = vmatpush1.msra.mxu0 %v3576
        %3619 = vmatprep.subr.mxu0 0.0
        %3620 = vmatpush1.msra.mxu0 %v3577
        %3621 = vmatprep.subr.mxu0 0.0
        %3622 = vmatpush1.msra.mxu0 %v3578
        %3623 = vmatprep.subr.mxu0 0.0
        %3624 = vmatpush1.msra.mxu0 %v3579
        %3625 = vmatprep.subr.mxu0 0.0
        %3626 = vmatpush1.msra.mxu0 %v3580
        %3627 = vmatprep.subr.mxu0 0.0
        %3628 = vmatpush1.msra.mxu0 %v3581
        %3629 = vmatprep.subr.mxu0 0.0
        %3630 = vmatpush1.msra.mxu0 %v3582
        %3631 = vmatprep.subr.mxu0 0.0
        %3632 = vmatpush1.msra.mxu0 %v3583
        %3633 = vmatprep.subr.mxu0 0.0
        %3634 = vmatpush1.msra.mxu0 %v3584
        %3635 = vmatprep.subr.mxu0 0.0
        %3636 = vmatpush1.msra.mxu0 %v3585
        %3637 = vmatprep.subr.mxu0 0.0
        %3638 = vmatpush1.msra.mxu0 0.0
        %3639 = vmatprep.subr.mxu0 0.0
        %3640 = vmatpush1.msra.mxu0 0.0
        %3641 = vmatprep.subr.mxu0 0.0
        %3642 = vmatpush1.msra.mxu0 0.0
        %3643 = vmatprep.subr.mxu0 0.0
        %3644 = vmatpush1.msra.mxu0 0.0
        %3645 = vmatprep.subr.mxu0 0.0
        %3646 = vmatpush1.msra.mxu0 0.0
        %3647 = vmatprep.subr.mxu0 0.0
        %3648 = vmatpush1.msra.mxu0 0.0
        %3649 = vmatprep.subr.mxu0 0.0
        %3650 = vmatpush1.msra.mxu0 0.0
        %3651 = vmatprep.subr.mxu0 0.0
        %3652 = vmatpush1.msra.mxu0 0.0
        %3653 = vmatprep.subr.mxu0 0.0
        %3654 = vmatpush1.msra.mxu0 0.0
        %3655 = vmatprep.subr.mxu0 0.0
        %3656 = vmatpush1.msra.mxu0 0.0
        %3657 = vmatprep.subr.mxu0 0.0
        %3658 = vmatpush1.msra.mxu0 0.0
        %3659 = vmatprep.subr.mxu0 0.0
        %3660 = vmatpush1.msra.mxu0 0.0
        %3661 = vmatprep.mubr.f32.mxu0 %v3592
        %3662 = vmatmul.mubr.f32.gmra.mrb[0].mxu0 %v3587
        %v3663 = vpop.f32.mrb[0].mxu0
        %v3664 = vadd.f32 0.0, %v3663
        %v3665 = vpop.f32.mrb[0].mxu0
        %3666 = vmatprep.mubr.f32.mxu0 %v3595
        %3667 = vmatmul.mubr.f32.gmra.mrb[0].mxu0 %v3589
        %v3668 = vpop.f32.mrb[0].mxu0
        %v3669 = vadd.f32 0.0, %v3668
        %v3670 = vpop.f32.mrb[0].mxu0
        %3671 = vdwg.mxu0
        %v3672 = vadd.f32 %v3059, %v3664
        %v3673 = vadd.f32 %v3060, %v3669
        %v3674 = vld [vmem:[%s520 + $0x60] sm:$0xf]
        %v3675 = vld [vmem:[%s520 + $0x64] sm:$0xf]
        %v3676 = vld [vmem:[%s520 + $0x68] sm:$0xf]
        %v3677 = vld [vmem:[%s520 + $0x6c] sm:$0xf]
        %v3678 = vld [vmem:[%s520 + $0x70] sm:$0xf]
        %v3679 = vld [vmem:[%s520 + $0x74] sm:$0xf]
        %v3680 = vld [vmem:[%s520 + $0x78] sm:$0xf]
        %v3681 = vld [vmem:[%s520 + $0x7c] sm:$0xf]
        %v3682 = vld [vmem:[%s520 + $0x80] sm:$0xf]
        %v3683 = vld [vmem:[%s520 + $0x84] sm:$0xf]
        %v3684 = vld [vmem:[%s520 + $0x88] sm:$0xf]
        %v3685 = vld [vmem:[%s520 + $0x8c] sm:$0xf]
        %v3686 = vld [vmem:[%s520 + $0x90] sm:$0xf]
        %v3687 = vld [vmem:[%s520 + $0x94] sm:$0xf]
        %v3688 = vld [vmem:[%s520 + $0x98] sm:$0xf]
        %v3689 = vld [vmem:[%s520 + $0x9c] sm:$0xf]
        %v3690 = vld [vmem:[%s520 + $0xa0] sm:$0xf]
        %v3691 = vld [vmem:[%s520 + $0xa4] sm:$0xf]
        %v3710 = vunpack.c.l.b16 %v3674
        %v3711 = vunpack.c.l.b16 %v3675
        %v3712 = vunpack.c.l.b16 %v3676
        %v3713 = vunpack.c.l.b16 %v3677
        %v3714 = vunpack.c.l.b16 %v3678
        %v3715 = vunpack.c.l.b16 %v3679
        %v3716 = vunpack.c.l.b16 %v3680
        %v3717 = vunpack.c.l.b16 %v3681
        %v3718 = vunpack.c.l.b16 %v3682
        %v3719 = vunpack.c.l.b16 %v3683
        %v3720 = vunpack.c.l.b16 %v3684
        %v3721 = vunpack.c.l.b16 %v3685
        %v3722 = vunpack.c.l.b16 %v3686
        %v3723 = vunpack.c.l.b16 %v3687
        %v3724 = vunpack.c.l.b16 %v3688
        %v3725 = vunpack.c.l.b16 %v3689
        %v3726 = vunpack.c.l.b16 %v3690
        %v3727 = vunpack.c.l.b16 %v3691
        %v3728 = vpack.c.b16 %v3711, %v3710
        %v3729 = vpack.c.b16 %v3713, %v3712
        %v3730 = vpack.c.b16 %v3715, %v3714
        %v3731 = vpack.c.b16 %v3717, %v3716
        %v3732 = vpack.c.b16 %v3719, %v3718
        %v3733 = vpack.c.b16 %v3721, %v3720
        %v3734 = vpack.c.b16 %v3723, %v3722
        %v3735 = vpack.c.b16 %v3725, %v3724
        %v3736 = vpack.c.b16 %v3727, %v3726
        %3746 = vmatprep.subr.bf16.mxu0 0
        %3747 = vmatpush1.bf16.msra.mxu0 %v3728
        %3748 = vmatprep.subr.bf16.mxu0 0
        %3749 = vmatpush1.bf16.msra.mxu0 %v3729
        %3750 = vmatprep.subr.bf16.mxu0 0
        %3751 = vmatpush1.bf16.msra.mxu0 %v3730
        %3752 = vmatprep.subr.bf16.mxu0 0
        %3753 = vmatpush1.bf16.msra.mxu0 %v3731
        %3754 = vmatprep.subr.bf16.mxu0 0
        %3755 = vmatpush1.bf16.msra.mxu0 %v3732
        %3756 = vmatprep.subr.bf16.mxu0 0
        %3757 = vmatpush1.bf16.msra.mxu0 %v3733
        %3758 = vmatprep.subr.bf16.mxu0 0
        %3759 = vmatpush1.bf16.msra.mxu0 %v3734
        %3760 = vmatprep.subr.bf16.mxu0 0
        %3761 = vmatpush1.bf16.msra.mxu0 %v3735
        %3762 = vmatprep.subr.bf16.mxu0 0
        %3763 = vmatpush1.bf16.msra.mxu0 %v3736
        %3764 = vmatprep.subr.bf16.mxu0 0
        %3765 = vmatpush1.bf16.msra.mxu0 0
        %3766 = vmatprep.subr.bf16.mxu0 0
        %3767 = vmatpush1.bf16.msra.mxu0 0
        %3768 = vmatprep.subr.bf16.mxu0 0
        %3769 = vmatpush1.bf16.msra.mxu0 0
        %3770 = vmatprep.subr.bf16.mxu0 0
        %3771 = vmatpush1.bf16.msra.mxu0 0
        %3772 = vmatprep.subr.bf16.mxu0 0
        %3773 = vmatpush1.bf16.msra.mxu0 0
        %3774 = vmatprep.subr.bf16.mxu0 0
        %3775 = vmatpush1.bf16.msra.mxu0 0
        %3776 = vmatprep.subr.bf16.mxu0 0
        %3777 = vmatpush1.bf16.msra.mxu0 0
        %3778 = vmatprep.mubr.bf16.mxu0 %v1079
        %3779 = vmatmul.mubr.bf16.gmra.mrb[0].mxu0 %v903
        %v3780 = vpop.f32.mrb[0].mxu0
        %v3781 = vadd.f32 0.0, %v3780
        %v3782 = vpop.f32.mrb[0].mxu0
        %v3783 = vpop.f32.mrb[0].mxu0
        %v3784 = vadd.f32 0.0, %v3783
        %v3785 = vpop.f32.mrb[0].mxu0
        %3786 = vmatprep.mubr.bf16.mxu0 %v1082
        %3787 = vmatmul.mubr.bf16.gmra.mrb[0].mxu0 %v905
        %v3788 = vpop.f32.mrb[0].mxu0
        %v3789 = vadd.f32 0.0, %v3788
        %v3790 = vpop.f32.mrb[0].mxu0
        %v3791 = vpop.f32.mrb[0].mxu0
        %v3792 = vadd.f32 0.0, %v3791
        %v3793 = vpop.f32.mrb[0].mxu0
        %3794 = vmatprep.mubr.bf16.mxu0 %v1085
        %3795 = vmatmul.mubr.bf16.gmra.mrb[0].mxu0 %v907
        %v3796 = vpop.f32.mrb[0].mxu0
        %v3797 = vadd.f32 0.0, %v3796
        %v3798 = vpop.f32.mrb[0].mxu0
        %v3799 = vpop.f32.mrb[0].mxu0
        %v3800 = vadd.f32 0.0, %v3799
        %v3801 = vpop.f32.mrb[0].mxu0
        %3802 = vmatprep.mubr.bf16.mxu0 %v1088
        %3803 = vmatmul.mubr.bf16.gmra.mrb[0].mxu0 %v909
        %v3804 = vpop.f32.mrb[0].mxu0
        %v3805 = vadd.f32 0.0, %v3804
        %v3806 = vpop.f32.mrb[0].mxu0
        %v3807 = vpop.f32.mrb[0].mxu0
        %v3808 = vadd.f32 0.0, %v3807
        %v3809 = vpop.f32.mrb[0].mxu0
        %3810 = vmatprep.mubr.bf16.mxu0 %v1091
        %3811 = vmatmul.mubr.bf16.gmra.mrb[0].mxu0 %v911
        %v3812 = vpop.f32.mrb[0].mxu0
        %v3813 = vadd.f32 0.0, %v3812
        %v3814 = vpop.f32.mrb[0].mxu0
        %v3815 = vpop.f32.mrb[0].mxu0
        %v3816 = vadd.f32 0.0, %v3815
        %v3817 = vpop.f32.mrb[0].mxu0
        %3818 = vmatprep.mubr.bf16.mxu0 %v1094
        %3819 = vmatmul.mubr.bf16.gmra.mrb[0].mxu0 %v913
        %v3820 = vpop.f32.mrb[0].mxu0
        %v3821 = vadd.f32 0.0, %v3820
        %v3822 = vpop.f32.mrb[0].mxu0
        %v3823 = vpop.f32.mrb[0].mxu0
        %v3824 = vadd.f32 0.0, %v3823
        %v3825 = vpop.f32.mrb[0].mxu0
        %3826 = vmatprep.mubr.bf16.mxu0 %v1097
        %3827 = vmatmul.mubr.bf16.gmra.mrb[0].mxu0 %v915
        %v3828 = vpop.f32.mrb[0].mxu0
        %v3829 = vadd.f32 0.0, %v3828
        %v3830 = vpop.f32.mrb[0].mxu0
        %v3831 = vpop.f32.mrb[0].mxu0
        %v3832 = vadd.f32 0.0, %v3831
        %v3833 = vpop.f32.mrb[0].mxu0
        %3834 = vmatprep.mubr.bf16.mxu0 %v1100
        %3835 = vmatmul.mubr.bf16.gmra.mrb[0].mxu0 %v917
        %v3836 = vpop.f32.mrb[0].mxu0
        %v3837 = vadd.f32 0.0, %v3836
        %v3838 = vpop.f32.mrb[0].mxu0
        %v3839 = vpop.f32.mrb[0].mxu0
        %v3840 = vadd.f32 0.0, %v3839
        %v3841 = vpop.f32.mrb[0].mxu0
        %3842 = vmatprep.mubr.bf16.mxu0 %v1103
        %3843 = vmatmul.mubr.bf16.gmra.mrb[0].mxu0 %v919
        %v3844 = vpop.f32.mrb[0].mxu0
        %v3845 = vadd.f32 0.0, %v3844
        %v3846 = vpop.f32.mrb[0].mxu0
        %v3847 = vpop.f32.mrb[0].mxu0
        %v3848 = vadd.f32 0.0, %v3847
        %v3849 = vpop.f32.mrb[0].mxu0
        %3850 = vmatprep.mubr.bf16.mxu0 %v1106
        %3851 = vmatmul.mubr.bf16.gmra.mrb[0].mxu0 %v921
        %v3852 = vpop.f32.mrb[0].mxu0
        %v3853 = vadd.f32 0.0, %v3852
        %v3854 = vpop.f32.mrb[0].mxu0
        %v3855 = vpop.f32.mrb[0].mxu0
        %v3856 = vadd.f32 0.0, %v3855
        %v3857 = vpop.f32.mrb[0].mxu0
        %3858 = vmatprep.mubr.bf16.mxu0 %v1109
        %3859 = vmatmul.mubr.bf16.gmra.mrb[0].mxu0 %v923
        %v3860 = vpop.f32.mrb[0].mxu0
        %v3861 = vadd.f32 0.0, %v3860
        %v3862 = vpop.f32.mrb[0].mxu0
        %v3863 = vpop.f32.mrb[0].mxu0
        %v3864 = vadd.f32 0.0, %v3863
        %v3865 = vpop.f32.mrb[0].mxu0
        %3866 = vmatprep.mubr.bf16.mxu0 %v1112
        %3867 = vmatmul.mubr.bf16.gmra.mrb[0].mxu0 %v925
        %v3868 = vpop.f32.mrb[0].mxu0
        %v3869 = vadd.f32 0.0, %v3868
        %v3870 = vpop.f32.mrb[0].mxu0
        %v3871 = vpop.f32.mrb[0].mxu0
        %v3872 = vadd.f32 0.0, %v3871
        %v3873 = vpop.f32.mrb[0].mxu0
        %3874 = vmatprep.mubr.bf16.mxu0 %v1115
        %3875 = vmatmul.mubr.bf16.gmra.mrb[0].mxu0 %v927
        %v3876 = vpop.f32.mrb[0].mxu0
        %v3877 = vadd.f32 0.0, %v3876
        %v3878 = vpop.f32.mrb[0].mxu0
        %v3879 = vpop.f32.mrb[0].mxu0
        %v3880 = vadd.f32 0.0, %v3879
        %v3881 = vpop.f32.mrb[0].mxu0
        %3882 = vmatprep.mubr.bf16.mxu0 %v1118
        %3883 = vmatmul.mubr.bf16.gmra.mrb[0].mxu0 %v929
        %v3884 = vpop.f32.mrb[0].mxu0
        %v3885 = vadd.f32 0.0, %v3884
        %v3886 = vpop.f32.mrb[0].mxu0
        %v3887 = vpop.f32.mrb[0].mxu0
        %v3888 = vadd.f32 0.0, %v3887
        %v3889 = vpop.f32.mrb[0].mxu0
        %3890 = vmatprep.mubr.bf16.mxu0 %v1121
        %3891 = vmatmul.mubr.bf16.gmra.mrb[0].mxu0 %v931
        %v3892 = vpop.f32.mrb[0].mxu0
        %v3893 = vadd.f32 0.0, %v3892
        %v3894 = vpop.f32.mrb[0].mxu0
        %v3895 = vpop.f32.mrb[0].mxu0
        %v3896 = vadd.f32 0.0, %v3895
        %v3897 = vpop.f32.mrb[0].mxu0
        %3898 = vmatprep.mubr.bf16.mxu0 %v1124
        %3899 = vmatmul.mubr.bf16.gmra.mrb[0].mxu0 %v933
        %v3900 = vpop.f32.mrb[0].mxu0
        %v3901 = vadd.f32 0.0, %v3900
        %v3902 = vpop.f32.mrb[0].mxu0
        %v3903 = vpop.f32.mrb[0].mxu0
        %v3904 = vadd.f32 0.0, %v3903
        %v3905 = vpop.f32.mrb[0].mxu0
        %3906 = vmatprep.mubr.bf16.mxu0 %v1127
        %3907 = vmatmul.mubr.bf16.gmra.mrb[0].mxu0 %v935
        %v3908 = vpop.f32.mrb[0].mxu0
        %v3909 = vadd.f32 0.0, %v3908
        %v3910 = vpop.f32.mrb[0].mxu0
        %v3911 = vpop.f32.mrb[0].mxu0
        %v3912 = vadd.f32 0.0, %v3911
        %v3913 = vpop.f32.mrb[0].mxu0
        %3914 = vmatprep.mubr.bf16.mxu0 %v1130
        %3915 = vmatmul.mubr.bf16.gmra.mrb[0].mxu0 %v937
        %v3916 = vpop.f32.mrb[0].mxu0
        %v3917 = vadd.f32 0.0, %v3916
        %v3918 = vpop.f32.mrb[0].mxu0
        %v3919 = vpop.f32.mrb[0].mxu0
        %v3920 = vadd.f32 0.0, %v3919
        %v3921 = vpop.f32.mrb[0].mxu0
        %3922 = vmatprep.mubr.bf16.mxu0 %v1133
        %3923 = vmatmul.mubr.bf16.gmra.mrb[0].mxu0 %v939
        %v3924 = vpop.f32.mrb[0].mxu0
        %v3925 = vadd.f32 0.0, %v3924
        %v3926 = vpop.f32.mrb[0].mxu0
        %v3927 = vpop.f32.mrb[0].mxu0
        %v3928 = vadd.f32 0.0, %v3927
        %v3929 = vpop.f32.mrb[0].mxu0
        %3930 = vmatprep.mubr.bf16.mxu0 %v1136
        %3931 = vmatmul.mubr.bf16.gmra.mrb[0].mxu0 %v941
        %v3932 = vpop.f32.mrb[0].mxu0
        %v3933 = vadd.f32 0.0, %v3932
        %v3934 = vpop.f32.mrb[0].mxu0
        %v3935 = vpop.f32.mrb[0].mxu0
        %v3936 = vadd.f32 0.0, %v3935
        %v3937 = vpop.f32.mrb[0].mxu0
        %3938 = vmatprep.mubr.bf16.mxu0 %v1139
        %3939 = vmatmul.mubr.bf16.gmra.mrb[0].mxu0 %v943
        %v3940 = vpop.f32.mrb[0].mxu0
        %v3941 = vadd.f32 0.0, %v3940
        %v3942 = vpop.f32.mrb[0].mxu0
        %v3943 = vpop.f32.mrb[0].mxu0
        %v3944 = vadd.f32 0.0, %v3943
        %v3945 = vpop.f32.mrb[0].mxu0
        %3946 = vmatprep.mubr.bf16.mxu0 %v1142
        %3947 = vmatmul.mubr.bf16.gmra.mrb[0].mxu0 %v945
        %v3948 = vpop.f32.mrb[0].mxu0
        %v3949 = vadd.f32 0.0, %v3948
        %v3950 = vpop.f32.mrb[0].mxu0
        %v3951 = vpop.f32.mrb[0].mxu0
        %v3952 = vadd.f32 0.0, %v3951
        %v3953 = vpop.f32.mrb[0].mxu0
        %3954 = vmatprep.mubr.bf16.mxu0 %v1145
        %3955 = vmatmul.mubr.bf16.gmra.mrb[0].mxu0 %v947
        %v3956 = vpop.f32.mrb[0].mxu0
        %v3957 = vadd.f32 0.0, %v3956
        %v3958 = vpop.f32.mrb[0].mxu0
        %v3959 = vpop.f32.mrb[0].mxu0
        %v3960 = vadd.f32 0.0, %v3959
        %v3961 = vpop.f32.mrb[0].mxu0
        %3962 = vmatprep.mubr.bf16.mxu0 %v1148
        %3963 = vmatmul.mubr.bf16.gmra.mrb[0].mxu0 %v949
        %v3964 = vpop.f32.mrb[0].mxu0
        %v3965 = vadd.f32 0.0, %v3964
        %v3966 = vpop.f32.mrb[0].mxu0
        %v3967 = vpop.f32.mrb[0].mxu0
        %v3968 = vadd.f32 0.0, %v3967
        %v3969 = vpop.f32.mrb[0].mxu0
        %3970 = vmatprep.mubr.bf16.mxu0 %v1151
        %3971 = vmatmul.mubr.bf16.gmra.mrb[0].mxu0 %v951
        %v3972 = vpop.f32.mrb[0].mxu0
        %v3973 = vadd.f32 0.0, %v3972
        %v3974 = vpop.f32.mrb[0].mxu0
        %v3975 = vpop.f32.mrb[0].mxu0
        %v3976 = vadd.f32 0.0, %v3975
        %v3977 = vpop.f32.mrb[0].mxu0
        %3978 = vmatprep.mubr.bf16.mxu0 %v1154
        %3979 = vmatmul.mubr.bf16.gmra.mrb[0].mxu0 %v953
        %v3980 = vpop.f32.mrb[0].mxu0
        %v3981 = vadd.f32 0.0, %v3980
        %v3982 = vpop.f32.mrb[0].mxu0
        %v3983 = vpop.f32.mrb[0].mxu0
        %v3984 = vadd.f32 0.0, %v3983
        %v3985 = vpop.f32.mrb[0].mxu0
        %3986 = vmatprep.mubr.bf16.mxu0 %v1157
        %3987 = vmatmul.mubr.bf16.gmra.mrb[0].mxu0 %v955
        %v3988 = vpop.f32.mrb[0].mxu0
        %v3989 = vadd.f32 0.0, %v3988
        %v3990 = vpop.f32.mrb[0].mxu0
        %v3991 = vpop.f32.mrb[0].mxu0
        %v3992 = vadd.f32 0.0, %v3991
        %v3993 = vpop.f32.mrb[0].mxu0
        %3994 = vmatprep.mubr.bf16.mxu0 %v1160
        %3995 = vmatmul.mubr.bf16.gmra.mrb[0].mxu0 %v957
        %v3996 = vpop.f32.mrb[0].mxu0
        %v3997 = vadd.f32 0.0, %v3996
        %v3998 = vpop.f32.mrb[0].mxu0
        %v3999 = vpop.f32.mrb[0].mxu0
        %v4000 = vadd.f32 0.0, %v3999
        %v4001 = vpop.f32.mrb[0].mxu0
        %4002 = vmatprep.mubr.bf16.mxu0 %v1163
        %4003 = vmatmul.mubr.bf16.gmra.mrb[0].mxu0 %v959
        %v4004 = vpop.f32.mrb[0].mxu0
        %v4005 = vadd.f32 0.0, %v4004
        %v4006 = vpop.f32.mrb[0].mxu0
        %v4007 = vpop.f32.mrb[0].mxu0
        %v4008 = vadd.f32 0.0, %v4007
        %v4009 = vpop.f32.mrb[0].mxu0
        %4010 = vmatprep.mubr.bf16.mxu0 %v1166
        %4011 = vmatmul.mubr.bf16.gmra.mrb[0].mxu0 %v961
        %v4012 = vpop.f32.mrb[0].mxu0
        %v4013 = vadd.f32 0.0, %v4012
        %v4014 = vpop.f32.mrb[0].mxu0
        %v4015 = vpop.f32.mrb[0].mxu0
        %v4016 = vadd.f32 0.0, %v4015
        %v4017 = vpop.f32.mrb[0].mxu0
        %4018 = vmatprep.mubr.bf16.mxu0 %v1169
        %4019 = vmatmul.mubr.bf16.gmra.mrb[0].mxu0 %v963
        %v4020 = vpop.f32.mrb[0].mxu0
        %v4021 = vadd.f32 0.0, %v4020
        %v4022 = vpop.f32.mrb[0].mxu0
        %v4023 = vpop.f32.mrb[0].mxu0
        %v4024 = vadd.f32 0.0, %v4023
        %v4025 = vpop.f32.mrb[0].mxu0
        %4026 = vmatprep.mubr.bf16.mxu0 %v1172
        %4027 = vmatmul.mubr.bf16.gmra.mrb[0].mxu0 %v965
        %v4028 = vpop.f32.mrb[0].mxu0
        %v4029 = vadd.f32 0.0, %v4028
        %v4030 = vpop.f32.mrb[0].mxu0
        %v4031 = vpop.f32.mrb[0].mxu0
        %v4032 = vadd.f32 0.0, %v4031
        %v4033 = vpop.f32.mrb[0].mxu0
        %4034 = vmatprep.mubr.bf16.mxu0 %v1175
        %4035 = vmatmul.mubr.bf16.gmra.mrb[0].mxu0 %v967
        %v4036 = vpop.f32.mrb[0].mxu0
        %v4037 = vadd.f32 0.0, %v4036
        %v4038 = vpop.f32.mrb[0].mxu0
        %v4039 = vpop.f32.mrb[0].mxu0
        %v4040 = vadd.f32 0.0, %v4039
        %v4041 = vpop.f32.mrb[0].mxu0
        %4042 = vmatprep.mubr.bf16.mxu0 %v1178
        %4043 = vmatmul.mubr.bf16.gmra.mrb[0].mxu0 %v969
        %v4044 = vpop.f32.mrb[0].mxu0
        %v4045 = vadd.f32 0.0, %v4044
        %v4046 = vpop.f32.mrb[0].mxu0
        %v4047 = vpop.f32.mrb[0].mxu0
        %v4048 = vadd.f32 0.0, %v4047
        %v4049 = vpop.f32.mrb[0].mxu0
        %4050 = vmatprep.mubr.bf16.mxu0 %v1181
        %4051 = vmatmul.mubr.bf16.gmra.mrb[0].mxu0 %v971
        %v4052 = vpop.f32.mrb[0].mxu0
        %v4053 = vadd.f32 0.0, %v4052
        %v4054 = vpop.f32.mrb[0].mxu0
        %v4055 = vpop.f32.mrb[0].mxu0
        %v4056 = vadd.f32 0.0, %v4055
        %v4057 = vpop.f32.mrb[0].mxu0
        %4058 = vmatprep.mubr.bf16.mxu0 %v1184
        %4059 = vmatmul.mubr.bf16.gmra.mrb[0].mxu0 %v973
        %v4060 = vpop.f32.mrb[0].mxu0
        %v4061 = vadd.f32 0.0, %v4060
        %v4062 = vpop.f32.mrb[0].mxu0
        %v4063 = vpop.f32.mrb[0].mxu0
        %v4064 = vadd.f32 0.0, %v4063
        %v4065 = vpop.f32.mrb[0].mxu0
        %4066 = vmatprep.mubr.bf16.mxu0 %v1187
        %4067 = vmatmul.mubr.bf16.gmra.mrb[0].mxu0 %v975
        %v4068 = vpop.f32.mrb[0].mxu0
        %v4069 = vadd.f32 0.0, %v4068
        %v4070 = vpop.f32.mrb[0].mxu0
        %v4071 = vpop.f32.mrb[0].mxu0
        %v4072 = vadd.f32 0.0, %v4071
        %v4073 = vpop.f32.mrb[0].mxu0
        %4074 = vmatprep.mubr.bf16.mxu0 %v1190
        %4075 = vmatmul.mubr.bf16.gmra.mrb[0].mxu0 %v977
        %v4076 = vpop.f32.mrb[0].mxu0
        %v4077 = vadd.f32 0.0, %v4076
        %v4078 = vpop.f32.mrb[0].mxu0
        %v4079 = vpop.f32.mrb[0].mxu0
        %v4080 = vadd.f32 0.0, %v4079
        %v4081 = vpop.f32.mrb[0].mxu0
        %4082 = vmatprep.mubr.bf16.mxu0 %v1193
        %4083 = vmatmul.mubr.bf16.gmra.mrb[0].mxu0 %v979
        %v4084 = vpop.f32.mrb[0].mxu0
        %v4085 = vadd.f32 0.0, %v4084
        %v4086 = vpop.f32.mrb[0].mxu0
        %v4087 = vpop.f32.mrb[0].mxu0
        %v4088 = vadd.f32 0.0, %v4087
        %v4089 = vpop.f32.mrb[0].mxu0
        %4090 = vmatprep.mubr.bf16.mxu0 %v1196
        %4091 = vmatmul.mubr.bf16.gmra.mrb[0].mxu0 %v981
        %v4092 = vpop.f32.mrb[0].mxu0
        %v4093 = vadd.f32 0.0, %v4092
        %v4094 = vpop.f32.mrb[0].mxu0
        %v4095 = vpop.f32.mrb[0].mxu0
        %v4096 = vadd.f32 0.0, %v4095
        %v4097 = vpop.f32.mrb[0].mxu0
        %4098 = vdwg.mxu0
        %v4099 = vmax.f32 %v3781, %v3861
        %v4100 = vmax.f32 %v3784, %v3864
        %v4101 = vmax.f32 %v3789, %v3869
        %v4102 = vmax.f32 %v3792, %v3872
        %v4103 = vmax.f32 %v3797, %v3877
        %v4104 = vmax.f32 %v3800, %v3880
        %v4105 = vmax.f32 %v3805, %v3885
        %v4106 = vmax.f32 %v3808, %v3888
        %v4107 = vmax.f32 %v3813, %v3893
        %v4108 = vmax.f32 %v3816, %v3896
        %v4109 = vmax.f32 %v3821, %v3901
        %v4110 = vmax.f32 %v3824, %v3904
        %v4111 = vmax.f32 %v3829, %v3909
        %v4112 = vmax.f32 %v3832, %v3912
        %v4113 = vmax.f32 %v3837, %v3917
        %v4114 = vmax.f32 %v3840, %v3920
        %v4115 = vmax.f32 %v3845, %v3925
        %v4116 = vmax.f32 %v3848, %v3928
        %v4117 = vmax.f32 %v3853, %v3933
        %v4118 = vmax.f32 %v3856, %v3936
        %v4119 = vmax.f32 %v3941, %v4021
        %v4120 = vmax.f32 %v3944, %v4024
        %v4121 = vmax.f32 %v3949, %v4029
        %v4122 = vmax.f32 %v3952, %v4032
        %v4123 = vmax.f32 %v3957, %v4037
        %v4124 = vmax.f32 %v3960, %v4040
        %v4125 = vmax.f32 %v3965, %v4045
        %v4126 = vmax.f32 %v3968, %v4048
        %v4127 = vmax.f32 %v3973, %v4053
        %v4128 = vmax.f32 %v3976, %v4056
        %v4129 = vmax.f32 %v3981, %v4061
        %v4130 = vmax.f32 %v3984, %v4064
        %v4131 = vmax.f32 %v3989, %v4069
        %v4132 = vmax.f32 %v3992, %v4072
        %v4133 = vmax.f32 %v3997, %v4077
        %v4134 = vmax.f32 %v4000, %v4080
        %v4135 = vmax.f32 %v4005, %v4085
        %v4136 = vmax.f32 %v4008, %v4088
        %v4137 = vmax.f32 %v4013, %v4093
        %v4138 = vmax.f32 %v4016, %v4096
        %v4139 = vmax.f32 %v4099, %v4119
        %v4140 = vmax.f32 %v4100, %v4120
        %v4141 = vmax.f32 %v4101, %v4121
        %v4142 = vmax.f32 %v4102, %v4122
        %v4143 = vmax.f32 %v4103, %v4123
        %v4144 = vmax.f32 %v4104, %v4124
        %v4145 = vmax.f32 %v4105, %v4125
        %v4146 = vmax.f32 %v4106, %v4126
        %v4147 = vmax.f32 %v4107, %v4127
        %v4148 = vmax.f32 %v4108, %v4128
        %v4149 = vmax.f32 %v4109, %v4129
        %v4150 = vmax.f32 %v4110, %v4130
        %v4151 = vmax.f32 %v4111, %v4131
        %v4152 = vmax.f32 %v4112, %v4132
        %v4153 = vmax.f32 %v4113, %v4133
        %v4154 = vmax.f32 %v4114, %v4134
        %v4155 = vmax.f32 %v4115, %v4135
        %v4156 = vmax.f32 %v4116, %v4136
        %v4157 = vmax.f32 %v4117, %v4137
        %v4158 = vmax.f32 %v4118, %v4138
        %v4159 = vadd.f32 %v4139, %v1614
        %v4160 = vadd.f32 %v4140, %v1619
        %v4161 = vadd.f32 %v4141, %v1624
        %v4162 = vadd.f32 %v4142, %v1629
        %v4163 = vadd.f32 %v4143, %v1634
        %v4164 = vadd.f32 %v4144, %v1639
        %v4165 = vadd.f32 %v4145, %v1644
        %v4166 = vadd.f32 %v4146, %v1649
        %v4167 = vadd.f32 %v4147, %v1654
        %v4168 = vadd.f32 %v4148, %v1659
        %v4169 = vadd.f32 %v4149, %v1664
        %v4170 = vadd.f32 %v4150, %v1669
        %v4171 = vadd.f32 %v4151, %v1674
        %v4172 = vadd.f32 %v4152, %v1679
        %v4173 = vadd.f32 %v4153, %v1684
        %v4174 = vadd.f32 %v4154, %v1689
        %v4175 = vadd.f32 %v4155, %v1694
        %v4176 = vadd.f32 %v4156, %v1699
        %v4177 = vadd.f32 %v4157, %v1704
        %v4178 = vadd.f32 %v4158, %v1709
        %v4179 = vmax.f32 %v4159, 0.0
        %v4180 = vmax.f32 %v4160, 0.0
        %v4181 = vmax.f32 %v4161, 0.0
        %v4182 = vmax.f32 %v4162, 0.0
        %v4183 = vmax.f32 %v4163, 0.0
        %v4184 = vmax.f32 %v4164, 0.0
        %v4185 = vmax.f32 %v4165, 0.0
        %v4186 = vmax.f32 %v4166, 0.0
        %v4187 = vmax.f32 %v4167, 0.0
        %v4188 = vmax.f32 %v4168, 0.0
        %v4189 = vmax.f32 %v4169, 0.0
        %v4190 = vmax.f32 %v4170, 0.0
        %v4191 = vmax.f32 %v4171, 0.0
        %v4192 = vmax.f32 %v4172, 0.0
        %v4193 = vmax.f32 %v4173, 0.0
        %v4194 = vmax.f32 %v4174, 0.0
        %v4195 = vmax.f32 %v4175, 0.0
        %v4196 = vmax.f32 %v4176, 0.0
        %v4197 = vmax.f32 %v4177, 0.0
        %v4198 = vmax.f32 %v4178, 0.0
        %s4199 = scalar_lea.vmem %s3, 128
        %v4200 = vld [vmem:[%s4199] sm:$0xff]
        %v4201 = vld [vmem:[%s4199 + $0x8] sm:$0xff]
        %v4202 = vld [vmem:[%s4199 + $0x10] sm:$0xff]
        %v4203 = vld [vmem:[%s4199 + $0x18] sm:$0xff]
        %v4205 = vsel %vm2285, %v4201, 0
        %v4208 = vsel %vm2285, %v4203, 0
        %4210 = vmatprep.subr.mxu0 0.0
        %4211 = vmatpush1.msra.mxu0 %v4179
        %4212 = vmatprep.subr.mxu0 0.0
        %4213 = vmatpush1.msra.mxu0 %v4180
        %4214 = vmatprep.subr.mxu0 0.0
        %4215 = vmatpush1.msra.mxu0 %v4181
        %4216 = vmatprep.subr.mxu0 0.0
        %4217 = vmatpush1.msra.mxu0 %v4182
        %4218 = vmatprep.subr.mxu0 0.0
        %4219 = vmatpush1.msra.mxu0 %v4183
        %4220 = vmatprep.subr.mxu0 0.0
        %4221 = vmatpush1.msra.mxu0 %v4184
        %4222 = vmatprep.subr.mxu0 0.0
        %4223 = vmatpush1.msra.mxu0 %v4185
        %4224 = vmatprep.subr.mxu0 0.0
        %4225 = vmatpush1.msra.mxu0 %v4186
        %4226 = vmatprep.subr.mxu0 0.0
        %4227 = vmatpush1.msra.mxu0 %v4187
        %4228 = vmatprep.subr.mxu0 0.0
        %4229 = vmatpush1.msra.mxu0 %v4188
        %4230 = vmatprep.subr.mxu0 0.0
        %4231 = vmatpush1.msra.mxu0 %v4189
        %4232 = vmatprep.subr.mxu0 0.0
        %4233 = vmatpush1.msra.mxu0 %v4190
        %4234 = vmatprep.subr.mxu0 0.0
        %4235 = vmatpush1.msra.mxu0 %v4191
        %4236 = vmatprep.subr.mxu0 0.0
        %4237 = vmatpush1.msra.mxu0 %v4192
        %4238 = vmatprep.subr.mxu0 0.0
        %4239 = vmatpush1.msra.mxu0 %v4193
        %4240 = vmatprep.subr.mxu0 0.0
        %4241 = vmatpush1.msra.mxu0 %v4194
        %4242 = vmatprep.subr.mxu0 0.0
        %4243 = vmatpush1.msra.mxu0 %v4195
        %4244 = vmatprep.subr.mxu0 0.0
        %4245 = vmatpush1.msra.mxu0 %v4196
        %4246 = vmatprep.subr.mxu0 0.0
        %4247 = vmatpush1.msra.mxu0 %v4197
        %4248 = vmatprep.subr.mxu0 0.0
        %4249 = vmatpush1.msra.mxu0 %v4198
        %4250 = vmatprep.subr.mxu0 0.0
        %4251 = vmatpush1.msra.mxu0 0.0
        %4252 = vmatprep.subr.mxu0 0.0
        %4253 = vmatpush1.msra.mxu0 0.0
        %4254 = vmatprep.subr.mxu0 0.0
        %4255 = vmatpush1.msra.mxu0 0.0
        %4256 = vmatprep.subr.mxu0 0.0
        %4257 = vmatpush1.msra.mxu0 0.0
        %4258 = vmatprep.subr.mxu0 0.0
        %4259 = vmatpush1.msra.mxu0 0.0
        %4260 = vmatprep.subr.mxu0 0.0
        %4261 = vmatpush1.msra.mxu0 0.0
        %4262 = vmatprep.subr.mxu0 0.0
        %4263 = vmatpush1.msra.mxu0 0.0
        %4264 = vmatprep.subr.mxu0 0.0
        %4265 = vmatpush1.msra.mxu0 0.0
        %4266 = vmatprep.subr.mxu0 0.0
        %4267 = vmatpush1.msra.mxu0 0.0
        %4268 = vmatprep.subr.mxu0 0.0
        %4269 = vmatpush1.msra.mxu0 0.0
        %4270 = vmatprep.subr.mxu0 0.0
        %4271 = vmatpush1.msra.mxu0 0.0
        %4272 = vmatprep.subr.mxu0 0.0
        %4273 = vmatpush1.msra.mxu0 0.0
        %4274 = vmatprep.mubr.f32.mxu0 %v4205
        %4275 = vmatmul.mubr.f32.gmra.mrb[0].mxu0 %v4200
        %v4276 = vpop.f32.mrb[0].mxu0
        %v4277 = vadd.f32 0.0, %v4276
        %v4278 = vpop.f32.mrb[0].mxu0
        %4279 = vmatprep.mubr.f32.mxu0 %v4208
        %4280 = vmatmul.mubr.f32.gmra.mrb[0].mxu0 %v4202
        %v4281 = vpop.f32.mrb[0].mxu0
        %v4282 = vadd.f32 0.0, %v4281
        %v4283 = vpop.f32.mrb[0].mxu0
        %4284 = vdwg.mxu0
        %v4285 = vadd.f32 %v3672, %v4277
        %v4286 = vadd.f32 %v3673, %v4282
        %v4287 = vld [vmem:[%s520 + $0x78] sm:$0xf]
        %v4288 = vld [vmem:[%s520 + $0x7c] sm:$0xf]
        %v4289 = vld [vmem:[%s520 + $0x80] sm:$0xf]
        %v4290 = vld [vmem:[%s520 + $0x84] sm:$0xf]
        %v4291 = vld [vmem:[%s520 + $0x88] sm:$0xf]
        %v4292 = vld [vmem:[%s520 + $0x8c] sm:$0xf]
        %v4293 = vld [vmem:[%s520 + $0x90] sm:$0xf]
        %v4294 = vld [vmem:[%s520 + $0x94] sm:$0xf]
        %v4295 = vld [vmem:[%s520 + $0x98] sm:$0xf]
        %v4296 = vld [vmem:[%s520 + $0x9c] sm:$0xf]
        %v4297 = vld [vmem:[%s520 + $0xa0] sm:$0xf]
        %v4298 = vld [vmem:[%s520 + $0xa4] sm:$0xf]
        %v4299 = vld [vmem:[%s520 + $0xa8] sm:$0xf]
        %v4300 = vld [vmem:[%s520 + $0xac] sm:$0xf]
        %v4301 = vld [vmem:[%s520 + $0xb0] sm:$0xf]
        %v4302 = vld [vmem:[%s520 + $0xb4] sm:$0xf]
        %v4303 = vld [vmem:[%s520 + $0xb8] sm:$0xf]
        %v4304 = vld [vmem:[%s520 + $0xbc] sm:$0xf]
        %v4323 = vunpack.c.l.b16 %v4287
        %v4324 = vunpack.c.l.b16 %v4288
        %v4325 = vunpack.c.l.b16 %v4289
        %v4326 = vunpack.c.l.b16 %v4290
        %v4327 = vunpack.c.l.b16 %v4291
        %v4328 = vunpack.c.l.b16 %v4292
        %v4329 = vunpack.c.l.b16 %v4293
        %v4330 = vunpack.c.l.b16 %v4294
        %v4331 = vunpack.c.l.b16 %v4295
        %v4332 = vunpack.c.l.b16 %v4296
        %v4333 = vunpack.c.l.b16 %v4297
        %v4334 = vunpack.c.l.b16 %v4298
        %v4335 = vunpack.c.l.b16 %v4299
        %v4336 = vunpack.c.l.b16 %v4300
        %v4337 = vunpack.c.l.b16 %v4301
        %v4338 = vunpack.c.l.b16 %v4302
        %v4339 = vunpack.c.l.b16 %v4303
        %v4340 = vunpack.c.l.b16 %v4304
        %v4341 = vpack.c.b16 %v4324, %v4323
        %v4342 = vpack.c.b16 %v4326, %v4325
        %v4343 = vpack.c.b16 %v4328, %v4327
        %v4344 = vpack.c.b16 %v4330, %v4329
        %v4345 = vpack.c.b16 %v4332, %v4331
        %v4346 = vpack.c.b16 %v4334, %v4333
        %v4347 = vpack.c.b16 %v4336, %v4335
        %v4348 = vpack.c.b16 %v4338, %v4337
        %v4349 = vpack.c.b16 %v4340, %v4339
        %4359 = vmatprep.subr.bf16.mxu0 0
        %4360 = vmatpush1.bf16.msra.mxu0 %v4341
        %4361 = vmatprep.subr.bf16.mxu0 0
        %4362 = vmatpush1.bf16.msra.mxu0 %v4342
        %4363 = vmatprep.subr.bf16.mxu0 0
        %4364 = vmatpush1.bf16.msra.mxu0 %v4343
        %4365 = vmatprep.subr.bf16.mxu0 0
        %4366 = vmatpush1.bf16.msra.mxu0 %v4344
        %4367 = vmatprep.subr.bf16.mxu0 0
        %4368 = vmatpush1.bf16.msra.mxu0 %v4345
        %4369 = vmatprep.subr.bf16.mxu0 0
        %4370 = vmatpush1.bf16.msra.mxu0 %v4346
        %4371 = vmatprep.subr.bf16.mxu0 0
        %4372 = vmatpush1.bf16.msra.mxu0 %v4347
        %4373 = vmatprep.subr.bf16.mxu0 0
        %4374 = vmatpush1.bf16.msra.mxu0 %v4348
        %4375 = vmatprep.subr.bf16.mxu0 0
        %4376 = vmatpush1.bf16.msra.mxu0 %v4349
        %4377 = vmatprep.subr.bf16.mxu0 0
        %4378 = vmatpush1.bf16.msra.mxu0 0
        %4379 = vmatprep.subr.bf16.mxu0 0
        %4380 = vmatpush1.bf16.msra.mxu0 0
        %4381 = vmatprep.subr.bf16.mxu0 0
        %4382 = vmatpush1.bf16.msra.mxu0 0
        %4383 = vmatprep.subr.bf16.mxu0 0
        %4384 = vmatpush1.bf16.msra.mxu0 0
        %4385 = vmatprep.subr.bf16.mxu0 0
        %4386 = vmatpush1.bf16.msra.mxu0 0
        %4387 = vmatprep.subr.bf16.mxu0 0
        %4388 = vmatpush1.bf16.msra.mxu0 0
        %4389 = vmatprep.subr.bf16.mxu0 0
        %4390 = vmatpush1.bf16.msra.mxu0 0
        %4391 = vmatprep.mubr.bf16.mxu0 %v1079
        %4392 = vmatmul.mubr.bf16.gmra.mrb[0].mxu0 %v903
        %v4393 = vpop.f32.mrb[0].mxu0
        %v4394 = vadd.f32 0.0, %v4393
        %v4395 = vpop.f32.mrb[0].mxu0
        %v4396 = vpop.f32.mrb[0].mxu0
        %v4397 = vadd.f32 0.0, %v4396
        %v4398 = vpop.f32.mrb[0].mxu0
        %4399 = vmatprep.mubr.bf16.mxu0 %v1082
        %4400 = vmatmul.mubr.bf16.gmra.mrb[0].mxu0 %v905
        %v4401 = vpop.f32.mrb[0].mxu0
        %v4402 = vadd.f32 0.0, %v4401
        %v4403 = vpop.f32.mrb[0].mxu0
        %v4404 = vpop.f32.mrb[0].mxu0
        %v4405 = vadd.f32 0.0, %v4404
        %v4406 = vpop.f32.mrb[0].mxu0
        %4407 = vmatprep.mubr.bf16.mxu0 %v1085
        %4408 = vmatmul.mubr.bf16.gmra.mrb[0].mxu0 %v907
        %v4409 = vpop.f32.mrb[0].mxu0
        %v4410 = vadd.f32 0.0, %v4409
        %v4411 = vpop.f32.mrb[0].mxu0
        %v4412 = vpop.f32.mrb[0].mxu0
        %v4413 = vadd.f32 0.0, %v4412
        %v4414 = vpop.f32.mrb[0].mxu0
        %4415 = vmatprep.mubr.bf16.mxu0 %v1088
        %4416 = vmatmul.mubr.bf16.gmra.mrb[0].mxu0 %v909
        %v4417 = vpop.f32.mrb[0].mxu0
        %v4418 = vadd.f32 0.0, %v4417
        %v4419 = vpop.f32.mrb[0].mxu0
        %v4420 = vpop.f32.mrb[0].mxu0
        %v4421 = vadd.f32 0.0, %v4420
        %v4422 = vpop.f32.mrb[0].mxu0
        %4423 = vmatprep.mubr.bf16.mxu0 %v1091
        %4424 = vmatmul.mubr.bf16.gmra.mrb[0].mxu0 %v911
        %v4425 = vpop.f32.mrb[0].mxu0
        %v4426 = vadd.f32 0.0, %v4425
        %v4427 = vpop.f32.mrb[0].mxu0
        %v4428 = vpop.f32.mrb[0].mxu0
        %v4429 = vadd.f32 0.0, %v4428
        %v4430 = vpop.f32.mrb[0].mxu0
        %4431 = vmatprep.mubr.bf16.mxu0 %v1094
        %4432 = vmatmul.mubr.bf16.gmra.mrb[0].mxu0 %v913
        %v4433 = vpop.f32.mrb[0].mxu0
        %v4434 = vadd.f32 0.0, %v4433
        %v4435 = vpop.f32.mrb[0].mxu0
        %v4436 = vpop.f32.mrb[0].mxu0
        %v4437 = vadd.f32 0.0, %v4436
        %v4438 = vpop.f32.mrb[0].mxu0
        %4439 = vmatprep.mubr.bf16.mxu0 %v1097
        %4440 = vmatmul.mubr.bf16.gmra.mrb[0].mxu0 %v915
        %v4441 = vpop.f32.mrb[0].mxu0
        %v4442 = vadd.f32 0.0, %v4441
        %v4443 = vpop.f32.mrb[0].mxu0
        %v4444 = vpop.f32.mrb[0].mxu0
        %v4445 = vadd.f32 0.0, %v4444
        %v4446 = vpop.f32.mrb[0].mxu0
        %4447 = vmatprep.mubr.bf16.mxu0 %v1100
        %4448 = vmatmul.mubr.bf16.gmra.mrb[0].mxu0 %v917
        %v4449 = vpop.f32.mrb[0].mxu0
        %v4450 = vadd.f32 0.0, %v4449
        %v4451 = vpop.f32.mrb[0].mxu0
        %v4452 = vpop.f32.mrb[0].mxu0
        %v4453 = vadd.f32 0.0, %v4452
        %v4454 = vpop.f32.mrb[0].mxu0
        %4455 = vmatprep.mubr.bf16.mxu0 %v1103
        %4456 = vmatmul.mubr.bf16.gmra.mrb[0].mxu0 %v919
        %v4457 = vpop.f32.mrb[0].mxu0
        %v4458 = vadd.f32 0.0, %v4457
        %v4459 = vpop.f32.mrb[0].mxu0
        %v4460 = vpop.f32.mrb[0].mxu0
        %v4461 = vadd.f32 0.0, %v4460
        %v4462 = vpop.f32.mrb[0].mxu0
        %4463 = vmatprep.mubr.bf16.mxu0 %v1106
        %4464 = vmatmul.mubr.bf16.gmra.mrb[0].mxu0 %v921
        %v4465 = vpop.f32.mrb[0].mxu0
        %v4466 = vadd.f32 0.0, %v4465
        %v4467 = vpop.f32.mrb[0].mxu0
        %v4468 = vpop.f32.mrb[0].mxu0
        %v4469 = vadd.f32 0.0, %v4468
        %v4470 = vpop.f32.mrb[0].mxu0
        %4471 = vmatprep.mubr.bf16.mxu0 %v1109
        %4472 = vmatmul.mubr.bf16.gmra.mrb[0].mxu0 %v923
        %v4473 = vpop.f32.mrb[0].mxu0
        %v4474 = vadd.f32 0.0, %v4473
        %v4475 = vpop.f32.mrb[0].mxu0
        %v4476 = vpop.f32.mrb[0].mxu0
        %v4477 = vadd.f32 0.0, %v4476
        %v4478 = vpop.f32.mrb[0].mxu0
        %4479 = vmatprep.mubr.bf16.mxu0 %v1112
        %4480 = vmatmul.mubr.bf16.gmra.mrb[0].mxu0 %v925
        %v4481 = vpop.f32.mrb[0].mxu0
        %v4482 = vadd.f32 0.0, %v4481
        %v4483 = vpop.f32.mrb[0].mxu0
        %v4484 = vpop.f32.mrb[0].mxu0
        %v4485 = vadd.f32 0.0, %v4484
        %v4486 = vpop.f32.mrb[0].mxu0
        %4487 = vmatprep.mubr.bf16.mxu0 %v1115
        %4488 = vmatmul.mubr.bf16.gmra.mrb[0].mxu0 %v927
        %v4489 = vpop.f32.mrb[0].mxu0
        %v4490 = vadd.f32 0.0, %v4489
        %v4491 = vpop.f32.mrb[0].mxu0
        %v4492 = vpop.f32.mrb[0].mxu0
        %v4493 = vadd.f32 0.0, %v4492
        %v4494 = vpop.f32.mrb[0].mxu0
        %4495 = vmatprep.mubr.bf16.mxu0 %v1118
        %4496 = vmatmul.mubr.bf16.gmra.mrb[0].mxu0 %v929
        %v4497 = vpop.f32.mrb[0].mxu0
        %v4498 = vadd.f32 0.0, %v4497
        %v4499 = vpop.f32.mrb[0].mxu0
        %v4500 = vpop.f32.mrb[0].mxu0
        %v4501 = vadd.f32 0.0, %v4500
        %v4502 = vpop.f32.mrb[0].mxu0
        %4503 = vmatprep.mubr.bf16.mxu0 %v1121
        %4504 = vmatmul.mubr.bf16.gmra.mrb[0].mxu0 %v931
        %v4505 = vpop.f32.mrb[0].mxu0
        %v4506 = vadd.f32 0.0, %v4505
        %v4507 = vpop.f32.mrb[0].mxu0
        %v4508 = vpop.f32.mrb[0].mxu0
        %v4509 = vadd.f32 0.0, %v4508
        %v4510 = vpop.f32.mrb[0].mxu0
        %4511 = vmatprep.mubr.bf16.mxu0 %v1124
        %4512 = vmatmul.mubr.bf16.gmra.mrb[0].mxu0 %v933
        %v4513 = vpop.f32.mrb[0].mxu0
        %v4514 = vadd.f32 0.0, %v4513
        %v4515 = vpop.f32.mrb[0].mxu0
        %v4516 = vpop.f32.mrb[0].mxu0
        %v4517 = vadd.f32 0.0, %v4516
        %v4518 = vpop.f32.mrb[0].mxu0
        %4519 = vmatprep.mubr.bf16.mxu0 %v1127
        %4520 = vmatmul.mubr.bf16.gmra.mrb[0].mxu0 %v935
        %v4521 = vpop.f32.mrb[0].mxu0
        %v4522 = vadd.f32 0.0, %v4521
        %v4523 = vpop.f32.mrb[0].mxu0
        %v4524 = vpop.f32.mrb[0].mxu0
        %v4525 = vadd.f32 0.0, %v4524
        %v4526 = vpop.f32.mrb[0].mxu0
        %4527 = vmatprep.mubr.bf16.mxu0 %v1130
        %4528 = vmatmul.mubr.bf16.gmra.mrb[0].mxu0 %v937
        %v4529 = vpop.f32.mrb[0].mxu0
        %v4530 = vadd.f32 0.0, %v4529
        %v4531 = vpop.f32.mrb[0].mxu0
        %v4532 = vpop.f32.mrb[0].mxu0
        %v4533 = vadd.f32 0.0, %v4532
        %v4534 = vpop.f32.mrb[0].mxu0
        %4535 = vmatprep.mubr.bf16.mxu0 %v1133
        %4536 = vmatmul.mubr.bf16.gmra.mrb[0].mxu0 %v939
        %v4537 = vpop.f32.mrb[0].mxu0
        %v4538 = vadd.f32 0.0, %v4537
        %v4539 = vpop.f32.mrb[0].mxu0
        %v4540 = vpop.f32.mrb[0].mxu0
        %v4541 = vadd.f32 0.0, %v4540
        %v4542 = vpop.f32.mrb[0].mxu0
        %4543 = vmatprep.mubr.bf16.mxu0 %v1136
        %4544 = vmatmul.mubr.bf16.gmra.mrb[0].mxu0 %v941
        %v4545 = vpop.f32.mrb[0].mxu0
        %v4546 = vadd.f32 0.0, %v4545
        %v4547 = vpop.f32.mrb[0].mxu0
        %v4548 = vpop.f32.mrb[0].mxu0
        %v4549 = vadd.f32 0.0, %v4548
        %v4550 = vpop.f32.mrb[0].mxu0
        %4551 = vmatprep.mubr.bf16.mxu0 %v1139
        %4552 = vmatmul.mubr.bf16.gmra.mrb[0].mxu0 %v943
        %v4553 = vpop.f32.mrb[0].mxu0
        %v4554 = vadd.f32 0.0, %v4553
        %v4555 = vpop.f32.mrb[0].mxu0
        %v4556 = vpop.f32.mrb[0].mxu0
        %v4557 = vadd.f32 0.0, %v4556
        %v4558 = vpop.f32.mrb[0].mxu0
        %4559 = vmatprep.mubr.bf16.mxu0 %v1142
        %4560 = vmatmul.mubr.bf16.gmra.mrb[0].mxu0 %v945
        %v4561 = vpop.f32.mrb[0].mxu0
        %v4562 = vadd.f32 0.0, %v4561
        %v4563 = vpop.f32.mrb[0].mxu0
        %v4564 = vpop.f32.mrb[0].mxu0
        %v4565 = vadd.f32 0.0, %v4564
        %v4566 = vpop.f32.mrb[0].mxu0
        %4567 = vmatprep.mubr.bf16.mxu0 %v1145
        %4568 = vmatmul.mubr.bf16.gmra.mrb[0].mxu0 %v947
        %v4569 = vpop.f32.mrb[0].mxu0
        %v4570 = vadd.f32 0.0, %v4569
        %v4571 = vpop.f32.mrb[0].mxu0
        %v4572 = vpop.f32.mrb[0].mxu0
        %v4573 = vadd.f32 0.0, %v4572
        %v4574 = vpop.f32.mrb[0].mxu0
        %4575 = vmatprep.mubr.bf16.mxu0 %v1148
        %4576 = vmatmul.mubr.bf16.gmra.mrb[0].mxu0 %v949
        %v4577 = vpop.f32.mrb[0].mxu0
        %v4578 = vadd.f32 0.0, %v4577
        %v4579 = vpop.f32.mrb[0].mxu0
        %v4580 = vpop.f32.mrb[0].mxu0
        %v4581 = vadd.f32 0.0, %v4580
        %v4582 = vpop.f32.mrb[0].mxu0
        %4583 = vmatprep.mubr.bf16.mxu0 %v1151
        %4584 = vmatmul.mubr.bf16.gmra.mrb[0].mxu0 %v951
        %v4585 = vpop.f32.mrb[0].mxu0
        %v4586 = vadd.f32 0.0, %v4585
        %v4587 = vpop.f32.mrb[0].mxu0
        %v4588 = vpop.f32.mrb[0].mxu0
        %v4589 = vadd.f32 0.0, %v4588
        %v4590 = vpop.f32.mrb[0].mxu0
        %4591 = vmatprep.mubr.bf16.mxu0 %v1154
        %4592 = vmatmul.mubr.bf16.gmra.mrb[0].mxu0 %v953
        %v4593 = vpop.f32.mrb[0].mxu0
        %v4594 = vadd.f32 0.0, %v4593
        %v4595 = vpop.f32.mrb[0].mxu0
        %v4596 = vpop.f32.mrb[0].mxu0
        %v4597 = vadd.f32 0.0, %v4596
        %v4598 = vpop.f32.mrb[0].mxu0
        %4599 = vmatprep.mubr.bf16.mxu0 %v1157
        %4600 = vmatmul.mubr.bf16.gmra.mrb[0].mxu0 %v955
        %v4601 = vpop.f32.mrb[0].mxu0
        %v4602 = vadd.f32 0.0, %v4601
        %v4603 = vpop.f32.mrb[0].mxu0
        %v4604 = vpop.f32.mrb[0].mxu0
        %v4605 = vadd.f32 0.0, %v4604
        %v4606 = vpop.f32.mrb[0].mxu0
        %4607 = vmatprep.mubr.bf16.mxu0 %v1160
        %4608 = vmatmul.mubr.bf16.gmra.mrb[0].mxu0 %v957
        %v4609 = vpop.f32.mrb[0].mxu0
        %v4610 = vadd.f32 0.0, %v4609
        %v4611 = vpop.f32.mrb[0].mxu0
        %v4612 = vpop.f32.mrb[0].mxu0
        %v4613 = vadd.f32 0.0, %v4612
        %v4614 = vpop.f32.mrb[0].mxu0
        %4615 = vmatprep.mubr.bf16.mxu0 %v1163
        %4616 = vmatmul.mubr.bf16.gmra.mrb[0].mxu0 %v959
        %v4617 = vpop.f32.mrb[0].mxu0
        %v4618 = vadd.f32 0.0, %v4617
        %v4619 = vpop.f32.mrb[0].mxu0
        %v4620 = vpop.f32.mrb[0].mxu0
        %v4621 = vadd.f32 0.0, %v4620
        %v4622 = vpop.f32.mrb[0].mxu0
        %4623 = vmatprep.mubr.bf16.mxu0 %v1166
        %4624 = vmatmul.mubr.bf16.gmra.mrb[0].mxu0 %v961
        %v4625 = vpop.f32.mrb[0].mxu0
        %v4626 = vadd.f32 0.0, %v4625
        %v4627 = vpop.f32.mrb[0].mxu0
        %v4628 = vpop.f32.mrb[0].mxu0
        %v4629 = vadd.f32 0.0, %v4628
        %v4630 = vpop.f32.mrb[0].mxu0
        %4631 = vmatprep.mubr.bf16.mxu0 %v1169
        %4632 = vmatmul.mubr.bf16.gmra.mrb[0].mxu0 %v963
        %v4633 = vpop.f32.mrb[0].mxu0
        %v4634 = vadd.f32 0.0, %v4633
        %v4635 = vpop.f32.mrb[0].mxu0
        %v4636 = vpop.f32.mrb[0].mxu0
        %v4637 = vadd.f32 0.0, %v4636
        %v4638 = vpop.f32.mrb[0].mxu0
        %4639 = vmatprep.mubr.bf16.mxu0 %v1172
        %4640 = vmatmul.mubr.bf16.gmra.mrb[0].mxu0 %v965
        %v4641 = vpop.f32.mrb[0].mxu0
        %v4642 = vadd.f32 0.0, %v4641
        %v4643 = vpop.f32.mrb[0].mxu0
        %v4644 = vpop.f32.mrb[0].mxu0
        %v4645 = vadd.f32 0.0, %v4644
        %v4646 = vpop.f32.mrb[0].mxu0
        %4647 = vmatprep.mubr.bf16.mxu0 %v1175
        %4648 = vmatmul.mubr.bf16.gmra.mrb[0].mxu0 %v967
        %v4649 = vpop.f32.mrb[0].mxu0
        %v4650 = vadd.f32 0.0, %v4649
        %v4651 = vpop.f32.mrb[0].mxu0
        %v4652 = vpop.f32.mrb[0].mxu0
        %v4653 = vadd.f32 0.0, %v4652
        %v4654 = vpop.f32.mrb[0].mxu0
        %4655 = vmatprep.mubr.bf16.mxu0 %v1178
        %4656 = vmatmul.mubr.bf16.gmra.mrb[0].mxu0 %v969
        %v4657 = vpop.f32.mrb[0].mxu0
        %v4658 = vadd.f32 0.0, %v4657
        %v4659 = vpop.f32.mrb[0].mxu0
        %v4660 = vpop.f32.mrb[0].mxu0
        %v4661 = vadd.f32 0.0, %v4660
        %v4662 = vpop.f32.mrb[0].mxu0
        %4663 = vmatprep.mubr.bf16.mxu0 %v1181
        %4664 = vmatmul.mubr.bf16.gmra.mrb[0].mxu0 %v971
        %v4665 = vpop.f32.mrb[0].mxu0
        %v4666 = vadd.f32 0.0, %v4665
        %v4667 = vpop.f32.mrb[0].mxu0
        %v4668 = vpop.f32.mrb[0].mxu0
        %v4669 = vadd.f32 0.0, %v4668
        %v4670 = vpop.f32.mrb[0].mxu0
        %4671 = vmatprep.mubr.bf16.mxu0 %v1184
        %4672 = vmatmul.mubr.bf16.gmra.mrb[0].mxu0 %v973
        %v4673 = vpop.f32.mrb[0].mxu0
        %v4674 = vadd.f32 0.0, %v4673
        %v4675 = vpop.f32.mrb[0].mxu0
        %v4676 = vpop.f32.mrb[0].mxu0
        %v4677 = vadd.f32 0.0, %v4676
        %v4678 = vpop.f32.mrb[0].mxu0
        %4679 = vmatprep.mubr.bf16.mxu0 %v1187
        %4680 = vmatmul.mubr.bf16.gmra.mrb[0].mxu0 %v975
        %v4681 = vpop.f32.mrb[0].mxu0
        %v4682 = vadd.f32 0.0, %v4681
        %v4683 = vpop.f32.mrb[0].mxu0
        %v4684 = vpop.f32.mrb[0].mxu0
        %v4685 = vadd.f32 0.0, %v4684
        %v4686 = vpop.f32.mrb[0].mxu0
        %4687 = vmatprep.mubr.bf16.mxu0 %v1190
        %4688 = vmatmul.mubr.bf16.gmra.mrb[0].mxu0 %v977
        %v4689 = vpop.f32.mrb[0].mxu0
        %v4690 = vadd.f32 0.0, %v4689
        %v4691 = vpop.f32.mrb[0].mxu0
        %v4692 = vpop.f32.mrb[0].mxu0
        %v4693 = vadd.f32 0.0, %v4692
        %v4694 = vpop.f32.mrb[0].mxu0
        %4695 = vmatprep.mubr.bf16.mxu0 %v1193
        %4696 = vmatmul.mubr.bf16.gmra.mrb[0].mxu0 %v979
        %v4697 = vpop.f32.mrb[0].mxu0
        %v4698 = vadd.f32 0.0, %v4697
        %v4699 = vpop.f32.mrb[0].mxu0
        %v4700 = vpop.f32.mrb[0].mxu0
        %v4701 = vadd.f32 0.0, %v4700
        %v4702 = vpop.f32.mrb[0].mxu0
        %4703 = vmatprep.mubr.bf16.mxu0 %v1196
        %4704 = vmatmul.mubr.bf16.gmra.mrb[0].mxu0 %v981
        %v4705 = vpop.f32.mrb[0].mxu0
        %v4706 = vadd.f32 0.0, %v4705
        %v4707 = vpop.f32.mrb[0].mxu0
        %v4708 = vpop.f32.mrb[0].mxu0
        %v4709 = vadd.f32 0.0, %v4708
        %v4710 = vpop.f32.mrb[0].mxu0
        %4711 = vdwg.mxu0
        %v4712 = vmax.f32 %v4394, %v4474
        %v4713 = vmax.f32 %v4397, %v4477
        %v4714 = vmax.f32 %v4402, %v4482
        %v4715 = vmax.f32 %v4405, %v4485
        %v4716 = vmax.f32 %v4410, %v4490
        %v4717 = vmax.f32 %v4413, %v4493
        %v4718 = vmax.f32 %v4418, %v4498
        %v4719 = vmax.f32 %v4421, %v4501
        %v4720 = vmax.f32 %v4426, %v4506
        %v4721 = vmax.f32 %v4429, %v4509
        %v4722 = vmax.f32 %v4434, %v4514
        %v4723 = vmax.f32 %v4437, %v4517
        %v4724 = vmax.f32 %v4442, %v4522
        %v4725 = vmax.f32 %v4445, %v4525
        %v4726 = vmax.f32 %v4450, %v4530
        %v4727 = vmax.f32 %v4453, %v4533
        %v4728 = vmax.f32 %v4458, %v4538
        %v4729 = vmax.f32 %v4461, %v4541
        %v4730 = vmax.f32 %v4466, %v4546
        %v4731 = vmax.f32 %v4469, %v4549
        %v4732 = vmax.f32 %v4554, %v4634
        %v4733 = vmax.f32 %v4557, %v4637
        %v4734 = vmax.f32 %v4562, %v4642
        %v4735 = vmax.f32 %v4565, %v4645
        %v4736 = vmax.f32 %v4570, %v4650
        %v4737 = vmax.f32 %v4573, %v4653
        %v4738 = vmax.f32 %v4578, %v4658
        %v4739 = vmax.f32 %v4581, %v4661
        %v4740 = vmax.f32 %v4586, %v4666
        %v4741 = vmax.f32 %v4589, %v4669
        %v4742 = vmax.f32 %v4594, %v4674
        %v4743 = vmax.f32 %v4597, %v4677
        %v4744 = vmax.f32 %v4602, %v4682
        %v4745 = vmax.f32 %v4605, %v4685
        %v4746 = vmax.f32 %v4610, %v4690
        %v4747 = vmax.f32 %v4613, %v4693
        %v4748 = vmax.f32 %v4618, %v4698
        %v4749 = vmax.f32 %v4621, %v4701
        %v4750 = vmax.f32 %v4626, %v4706
        %v4751 = vmax.f32 %v4629, %v4709
        %v4752 = vmax.f32 %v4712, %v4732
        %v4753 = vmax.f32 %v4713, %v4733
        %v4754 = vmax.f32 %v4714, %v4734
        %v4755 = vmax.f32 %v4715, %v4735
        %v4756 = vmax.f32 %v4716, %v4736
        %v4757 = vmax.f32 %v4717, %v4737
        %v4758 = vmax.f32 %v4718, %v4738
        %v4759 = vmax.f32 %v4719, %v4739
        %v4760 = vmax.f32 %v4720, %v4740
        %v4761 = vmax.f32 %v4721, %v4741
        %v4762 = vmax.f32 %v4722, %v4742
        %v4763 = vmax.f32 %v4723, %v4743
        %v4764 = vmax.f32 %v4724, %v4744
        %v4765 = vmax.f32 %v4725, %v4745
        %v4766 = vmax.f32 %v4726, %v4746
        %v4767 = vmax.f32 %v4727, %v4747
        %v4768 = vmax.f32 %v4728, %v4748
        %v4769 = vmax.f32 %v4729, %v4749
        %v4770 = vmax.f32 %v4730, %v4750
        %v4771 = vmax.f32 %v4731, %v4751
        %v4772 = vadd.f32 %v4752, %v1614
        %v4773 = vadd.f32 %v4753, %v1619
        %v4774 = vadd.f32 %v4754, %v1624
        %v4775 = vadd.f32 %v4755, %v1629
        %v4776 = vadd.f32 %v4756, %v1634
        %v4777 = vadd.f32 %v4757, %v1639
        %v4778 = vadd.f32 %v4758, %v1644
        %v4779 = vadd.f32 %v4759, %v1649
        %v4780 = vadd.f32 %v4760, %v1654
        %v4781 = vadd.f32 %v4761, %v1659
        %v4782 = vadd.f32 %v4762, %v1664
        %v4783 = vadd.f32 %v4763, %v1669
        %v4784 = vadd.f32 %v4764, %v1674
        %v4785 = vadd.f32 %v4765, %v1679
        %v4786 = vadd.f32 %v4766, %v1684
        %v4787 = vadd.f32 %v4767, %v1689
        %v4788 = vadd.f32 %v4768, %v1694
        %v4789 = vadd.f32 %v4769, %v1699
        %v4790 = vadd.f32 %v4770, %v1704
        %v4791 = vadd.f32 %v4771, %v1709
        %v4792 = vmax.f32 %v4772, 0.0
        %v4793 = vmax.f32 %v4773, 0.0
        %v4794 = vmax.f32 %v4774, 0.0
        %v4795 = vmax.f32 %v4775, 0.0
        %v4796 = vmax.f32 %v4776, 0.0
        %v4797 = vmax.f32 %v4777, 0.0
        %v4798 = vmax.f32 %v4778, 0.0
        %v4799 = vmax.f32 %v4779, 0.0
        %v4800 = vmax.f32 %v4780, 0.0
        %v4801 = vmax.f32 %v4781, 0.0
        %v4802 = vmax.f32 %v4782, 0.0
        %v4803 = vmax.f32 %v4783, 0.0
        %v4804 = vmax.f32 %v4784, 0.0
        %v4805 = vmax.f32 %v4785, 0.0
        %v4806 = vmax.f32 %v4786, 0.0
        %v4807 = vmax.f32 %v4787, 0.0
        %v4808 = vmax.f32 %v4788, 0.0
        %v4809 = vmax.f32 %v4789, 0.0
        %v4810 = vmax.f32 %v4790, 0.0
        %v4811 = vmax.f32 %v4791, 0.0
        %s4812 = scalar_lea.vmem %s3, 160
        %v4813 = vld [vmem:[%s4812] sm:$0xff]
        %v4814 = vld [vmem:[%s4812 + $0x8] sm:$0xff]
        %v4815 = vld [vmem:[%s4812 + $0x10] sm:$0xff]
        %v4816 = vld [vmem:[%s4812 + $0x18] sm:$0xff]
        %v4818 = vsel %vm2285, %v4814, 0
        %v4821 = vsel %vm2285, %v4816, 0
        %4823 = vmatprep.subr.mxu0 0.0
        %4824 = vmatpush1.msra.mxu0 %v4792
        %4825 = vmatprep.subr.mxu0 0.0
        %4826 = vmatpush1.msra.mxu0 %v4793
        %4827 = vmatprep.subr.mxu0 0.0
        %4828 = vmatpush1.msra.mxu0 %v4794
        %4829 = vmatprep.subr.mxu0 0.0
        %4830 = vmatpush1.msra.mxu0 %v4795
        %4831 = vmatprep.subr.mxu0 0.0
        %4832 = vmatpush1.msra.mxu0 %v4796
        %4833 = vmatprep.subr.mxu0 0.0
        %4834 = vmatpush1.msra.mxu0 %v4797
        %4835 = vmatprep.subr.mxu0 0.0
        %4836 = vmatpush1.msra.mxu0 %v4798
        %4837 = vmatprep.subr.mxu0 0.0
        %4838 = vmatpush1.msra.mxu0 %v4799
        %4839 = vmatprep.subr.mxu0 0.0
        %4840 = vmatpush1.msra.mxu0 %v4800
        %4841 = vmatprep.subr.mxu0 0.0
        %4842 = vmatpush1.msra.mxu0 %v4801
        %4843 = vmatprep.subr.mxu0 0.0
        %4844 = vmatpush1.msra.mxu0 %v4802
        %4845 = vmatprep.subr.mxu0 0.0
        %4846 = vmatpush1.msra.mxu0 %v4803
        %4847 = vmatprep.subr.mxu0 0.0
        %4848 = vmatpush1.msra.mxu0 %v4804
        %4849 = vmatprep.subr.mxu0 0.0
        %4850 = vmatpush1.msra.mxu0 %v4805
        %4851 = vmatprep.subr.mxu0 0.0
        %4852 = vmatpush1.msra.mxu0 %v4806
        %4853 = vmatprep.subr.mxu0 0.0
        %4854 = vmatpush1.msra.mxu0 %v4807
        %4855 = vmatprep.subr.mxu0 0.0
        %4856 = vmatpush1.msra.mxu0 %v4808
        %4857 = vmatprep.subr.mxu0 0.0
        %4858 = vmatpush1.msra.mxu0 %v4809
        %4859 = vmatprep.subr.mxu0 0.0
        %4860 = vmatpush1.msra.mxu0 %v4810
        %4861 = vmatprep.subr.mxu0 0.0
        %4862 = vmatpush1.msra.mxu0 %v4811
        %4863 = vmatprep.subr.mxu0 0.0
        %4864 = vmatpush1.msra.mxu0 0.0
        %4865 = vmatprep.subr.mxu0 0.0
        %4866 = vmatpush1.msra.mxu0 0.0
        %4867 = vmatprep.subr.mxu0 0.0
        %4868 = vmatpush1.msra.mxu0 0.0
        %4869 = vmatprep.subr.mxu0 0.0
        %4870 = vmatpush1.msra.mxu0 0.0
        %4871 = vmatprep.subr.mxu0 0.0
        %4872 = vmatpush1.msra.mxu0 0.0
        %4873 = vmatprep.subr.mxu0 0.0
        %4874 = vmatpush1.msra.mxu0 0.0
        %4875 = vmatprep.subr.mxu0 0.0
        %4876 = vmatpush1.msra.mxu0 0.0
        %4877 = vmatprep.subr.mxu0 0.0
        %4878 = vmatpush1.msra.mxu0 0.0
        %4879 = vmatprep.subr.mxu0 0.0
        %4880 = vmatpush1.msra.mxu0 0.0
        %4881 = vmatprep.subr.mxu0 0.0
        %4882 = vmatpush1.msra.mxu0 0.0
        %4883 = vmatprep.subr.mxu0 0.0
        %4884 = vmatpush1.msra.mxu0 0.0
        %4885 = vmatprep.subr.mxu0 0.0
        %4886 = vmatpush1.msra.mxu0 0.0
        %4887 = vmatprep.mubr.f32.mxu0 %v4818
        %4888 = vmatmul.mubr.f32.gmra.mrb[0].mxu0 %v4813
        %v4889 = vpop.f32.mrb[0].mxu0
        %v4890 = vadd.f32 0.0, %v4889
        %v4891 = vpop.f32.mrb[0].mxu0
        %4892 = vmatprep.mubr.f32.mxu0 %v4821
        %4893 = vmatmul.mubr.f32.gmra.mrb[0].mxu0 %v4815
        %v4894 = vpop.f32.mrb[0].mxu0
        %v4895 = vadd.f32 0.0, %v4894
        %v4896 = vpop.f32.mrb[0].mxu0
        %4897 = vdwg.mxu0
        %v4898 = vadd.f32 %v4285, %v4890
        %v4899 = vadd.f32 %v4286, %v4895
        %v4900 = vld [vmem:[%s520 + $0x90] sm:$0xf]
        %v4901 = vld [vmem:[%s520 + $0x94] sm:$0xf]
        %v4902 = vld [vmem:[%s520 + $0x98] sm:$0xf]
        %v4903 = vld [vmem:[%s520 + $0x9c] sm:$0xf]
        %v4904 = vld [vmem:[%s520 + $0xa0] sm:$0xf]
        %v4905 = vld [vmem:[%s520 + $0xa4] sm:$0xf]
        %v4906 = vld [vmem:[%s520 + $0xa8] sm:$0xf]
        %v4907 = vld [vmem:[%s520 + $0xac] sm:$0xf]
        %v4908 = vld [vmem:[%s520 + $0xb0] sm:$0xf]
        %v4909 = vld [vmem:[%s520 + $0xb4] sm:$0xf]
        %v4910 = vld [vmem:[%s520 + $0xb8] sm:$0xf]
        %v4911 = vld [vmem:[%s520 + $0xbc] sm:$0xf]
        %v4912 = vld [vmem:[%s520 + $0xc0] sm:$0xf]
        %v4913 = vld [vmem:[%s520 + $0xc4] sm:$0xf]
        %v4914 = vld [vmem:[%s520 + $0xc8] sm:$0xf]
        %v4915 = vld [vmem:[%s520 + $0xcc] sm:$0xf]
        %v4916 = vld [vmem:[%s520 + $0xd0] sm:$0xf]
        %v4917 = vld [vmem:[%s520 + $0xd4] sm:$0xf]
        %v4936 = vunpack.c.l.b16 %v4900
        %v4937 = vunpack.c.l.b16 %v4901
        %v4938 = vunpack.c.l.b16 %v4902
        %v4939 = vunpack.c.l.b16 %v4903
        %v4940 = vunpack.c.l.b16 %v4904
        %v4941 = vunpack.c.l.b16 %v4905
        %v4942 = vunpack.c.l.b16 %v4906
        %v4943 = vunpack.c.l.b16 %v4907
        %v4944 = vunpack.c.l.b16 %v4908
        %v4945 = vunpack.c.l.b16 %v4909
        %v4946 = vunpack.c.l.b16 %v4910
        %v4947 = vunpack.c.l.b16 %v4911
        %v4948 = vunpack.c.l.b16 %v4912
        %v4949 = vunpack.c.l.b16 %v4913
        %v4950 = vunpack.c.l.b16 %v4914
        %v4951 = vunpack.c.l.b16 %v4915
        %v4952 = vunpack.c.l.b16 %v4916
        %v4953 = vunpack.c.l.b16 %v4917
        %v4954 = vpack.c.b16 %v4937, %v4936
        %v4955 = vpack.c.b16 %v4939, %v4938
        %v4956 = vpack.c.b16 %v4941, %v4940
        %v4957 = vpack.c.b16 %v4943, %v4942
        %v4958 = vpack.c.b16 %v4945, %v4944
        %v4959 = vpack.c.b16 %v4947, %v4946
        %v4960 = vpack.c.b16 %v4949, %v4948
        %v4961 = vpack.c.b16 %v4951, %v4950
        %v4962 = vpack.c.b16 %v4953, %v4952
        %4972 = vmatprep.subr.bf16.mxu0 0
        %4973 = vmatpush1.bf16.msra.mxu0 %v4954
        %4974 = vmatprep.subr.bf16.mxu0 0
        %4975 = vmatpush1.bf16.msra.mxu0 %v4955
        %4976 = vmatprep.subr.bf16.mxu0 0
        %4977 = vmatpush1.bf16.msra.mxu0 %v4956
        %4978 = vmatprep.subr.bf16.mxu0 0
        %4979 = vmatpush1.bf16.msra.mxu0 %v4957
        %4980 = vmatprep.subr.bf16.mxu0 0
        %4981 = vmatpush1.bf16.msra.mxu0 %v4958
        %4982 = vmatprep.subr.bf16.mxu0 0
        %4983 = vmatpush1.bf16.msra.mxu0 %v4959
        %4984 = vmatprep.subr.bf16.mxu0 0
        %4985 = vmatpush1.bf16.msra.mxu0 %v4960
        %4986 = vmatprep.subr.bf16.mxu0 0
        %4987 = vmatpush1.bf16.msra.mxu0 %v4961
        %4988 = vmatprep.subr.bf16.mxu0 0
        %4989 = vmatpush1.bf16.msra.mxu0 %v4962
        %4990 = vmatprep.subr.bf16.mxu0 0
        %4991 = vmatpush1.bf16.msra.mxu0 0
        %4992 = vmatprep.subr.bf16.mxu0 0
        %4993 = vmatpush1.bf16.msra.mxu0 0
        %4994 = vmatprep.subr.bf16.mxu0 0
        %4995 = vmatpush1.bf16.msra.mxu0 0
        %4996 = vmatprep.subr.bf16.mxu0 0
        %4997 = vmatpush1.bf16.msra.mxu0 0
        %4998 = vmatprep.subr.bf16.mxu0 0
        %4999 = vmatpush1.bf16.msra.mxu0 0
        %5000 = vmatprep.subr.bf16.mxu0 0
        %5001 = vmatpush1.bf16.msra.mxu0 0
        %5002 = vmatprep.subr.bf16.mxu0 0
        %5003 = vmatpush1.bf16.msra.mxu0 0
        %5004 = vmatprep.mubr.bf16.mxu0 %v1079
        %5005 = vmatmul.mubr.bf16.gmra.mrb[0].mxu0 %v903
        %v5006 = vpop.f32.mrb[0].mxu0
        %v5007 = vadd.f32 0.0, %v5006
        %v5008 = vpop.f32.mrb[0].mxu0
        %v5009 = vpop.f32.mrb[0].mxu0
        %v5010 = vadd.f32 0.0, %v5009
        %v5011 = vpop.f32.mrb[0].mxu0
        %5012 = vmatprep.mubr.bf16.mxu0 %v1082
        %5013 = vmatmul.mubr.bf16.gmra.mrb[0].mxu0 %v905
        %v5014 = vpop.f32.mrb[0].mxu0
        %v5015 = vadd.f32 0.0, %v5014
        %v5016 = vpop.f32.mrb[0].mxu0
        %v5017 = vpop.f32.mrb[0].mxu0
        %v5018 = vadd.f32 0.0, %v5017
        %v5019 = vpop.f32.mrb[0].mxu0
        %5020 = vmatprep.mubr.bf16.mxu0 %v1085
        %5021 = vmatmul.mubr.bf16.gmra.mrb[0].mxu0 %v907
        %v5022 = vpop.f32.mrb[0].mxu0
        %v5023 = vadd.f32 0.0, %v5022
        %v5024 = vpop.f32.mrb[0].mxu0
        %v5025 = vpop.f32.mrb[0].mxu0
        %v5026 = vadd.f32 0.0, %v5025
        %v5027 = vpop.f32.mrb[0].mxu0
        %5028 = vmatprep.mubr.bf16.mxu0 %v1088
        %5029 = vmatmul.mubr.bf16.gmra.mrb[0].mxu0 %v909
        %v5030 = vpop.f32.mrb[0].mxu0
        %v5031 = vadd.f32 0.0, %v5030
        %v5032 = vpop.f32.mrb[0].mxu0
        %v5033 = vpop.f32.mrb[0].mxu0
        %v5034 = vadd.f32 0.0, %v5033
        %v5035 = vpop.f32.mrb[0].mxu0
        %5036 = vmatprep.mubr.bf16.mxu0 %v1091
        %5037 = vmatmul.mubr.bf16.gmra.mrb[0].mxu0 %v911
        %v5038 = vpop.f32.mrb[0].mxu0
        %v5039 = vadd.f32 0.0, %v5038
        %v5040 = vpop.f32.mrb[0].mxu0
        %v5041 = vpop.f32.mrb[0].mxu0
        %v5042 = vadd.f32 0.0, %v5041
        %v5043 = vpop.f32.mrb[0].mxu0
        %5044 = vmatprep.mubr.bf16.mxu0 %v1094
        %5045 = vmatmul.mubr.bf16.gmra.mrb[0].mxu0 %v913
        %v5046 = vpop.f32.mrb[0].mxu0
        %v5047 = vadd.f32 0.0, %v5046
        %v5048 = vpop.f32.mrb[0].mxu0
        %v5049 = vpop.f32.mrb[0].mxu0
        %v5050 = vadd.f32 0.0, %v5049
        %v5051 = vpop.f32.mrb[0].mxu0
        %5052 = vmatprep.mubr.bf16.mxu0 %v1097
        %5053 = vmatmul.mubr.bf16.gmra.mrb[0].mxu0 %v915
        %v5054 = vpop.f32.mrb[0].mxu0
        %v5055 = vadd.f32 0.0, %v5054
        %v5056 = vpop.f32.mrb[0].mxu0
        %v5057 = vpop.f32.mrb[0].mxu0
        %v5058 = vadd.f32 0.0, %v5057
        %v5059 = vpop.f32.mrb[0].mxu0
        %5060 = vmatprep.mubr.bf16.mxu0 %v1100
        %5061 = vmatmul.mubr.bf16.gmra.mrb[0].mxu0 %v917
        %v5062 = vpop.f32.mrb[0].mxu0
        %v5063 = vadd.f32 0.0, %v5062
        %v5064 = vpop.f32.mrb[0].mxu0
        %v5065 = vpop.f32.mrb[0].mxu0
        %v5066 = vadd.f32 0.0, %v5065
        %v5067 = vpop.f32.mrb[0].mxu0
        %5068 = vmatprep.mubr.bf16.mxu0 %v1103
        %5069 = vmatmul.mubr.bf16.gmra.mrb[0].mxu0 %v919
        %v5070 = vpop.f32.mrb[0].mxu0
        %v5071 = vadd.f32 0.0, %v5070
        %v5072 = vpop.f32.mrb[0].mxu0
        %v5073 = vpop.f32.mrb[0].mxu0
        %v5074 = vadd.f32 0.0, %v5073
        %v5075 = vpop.f32.mrb[0].mxu0
        %5076 = vmatprep.mubr.bf16.mxu0 %v1106
        %5077 = vmatmul.mubr.bf16.gmra.mrb[0].mxu0 %v921
        %v5078 = vpop.f32.mrb[0].mxu0
        %v5079 = vadd.f32 0.0, %v5078
        %v5080 = vpop.f32.mrb[0].mxu0
        %v5081 = vpop.f32.mrb[0].mxu0
        %v5082 = vadd.f32 0.0, %v5081
        %v5083 = vpop.f32.mrb[0].mxu0
        %5084 = vmatprep.mubr.bf16.mxu0 %v1109
        %5085 = vmatmul.mubr.bf16.gmra.mrb[0].mxu0 %v923
        %v5086 = vpop.f32.mrb[0].mxu0
        %v5087 = vadd.f32 0.0, %v5086
        %v5088 = vpop.f32.mrb[0].mxu0
        %v5089 = vpop.f32.mrb[0].mxu0
        %v5090 = vadd.f32 0.0, %v5089
        %v5091 = vpop.f32.mrb[0].mxu0
        %5092 = vmatprep.mubr.bf16.mxu0 %v1112
        %5093 = vmatmul.mubr.bf16.gmra.mrb[0].mxu0 %v925
        %v5094 = vpop.f32.mrb[0].mxu0
        %v5095 = vadd.f32 0.0, %v5094
        %v5096 = vpop.f32.mrb[0].mxu0
        %v5097 = vpop.f32.mrb[0].mxu0
        %v5098 = vadd.f32 0.0, %v5097
        %v5099 = vpop.f32.mrb[0].mxu0
        %5100 = vmatprep.mubr.bf16.mxu0 %v1115
        %5101 = vmatmul.mubr.bf16.gmra.mrb[0].mxu0 %v927
        %v5102 = vpop.f32.mrb[0].mxu0
        %v5103 = vadd.f32 0.0, %v5102
        %v5104 = vpop.f32.mrb[0].mxu0
        %v5105 = vpop.f32.mrb[0].mxu0
        %v5106 = vadd.f32 0.0, %v5105
        %v5107 = vpop.f32.mrb[0].mxu0
        %5108 = vmatprep.mubr.bf16.mxu0 %v1118
        %5109 = vmatmul.mubr.bf16.gmra.mrb[0].mxu0 %v929
        %v5110 = vpop.f32.mrb[0].mxu0
        %v5111 = vadd.f32 0.0, %v5110
        %v5112 = vpop.f32.mrb[0].mxu0
        %v5113 = vpop.f32.mrb[0].mxu0
        %v5114 = vadd.f32 0.0, %v5113
        %v5115 = vpop.f32.mrb[0].mxu0
        %5116 = vmatprep.mubr.bf16.mxu0 %v1121
        %5117 = vmatmul.mubr.bf16.gmra.mrb[0].mxu0 %v931
        %v5118 = vpop.f32.mrb[0].mxu0
        %v5119 = vadd.f32 0.0, %v5118
        %v5120 = vpop.f32.mrb[0].mxu0
        %v5121 = vpop.f32.mrb[0].mxu0
        %v5122 = vadd.f32 0.0, %v5121
        %v5123 = vpop.f32.mrb[0].mxu0
        %5124 = vmatprep.mubr.bf16.mxu0 %v1124
        %5125 = vmatmul.mubr.bf16.gmra.mrb[0].mxu0 %v933
        %v5126 = vpop.f32.mrb[0].mxu0
        %v5127 = vadd.f32 0.0, %v5126
        %v5128 = vpop.f32.mrb[0].mxu0
        %v5129 = vpop.f32.mrb[0].mxu0
        %v5130 = vadd.f32 0.0, %v5129
        %v5131 = vpop.f32.mrb[0].mxu0
        %5132 = vmatprep.mubr.bf16.mxu0 %v1127
        %5133 = vmatmul.mubr.bf16.gmra.mrb[0].mxu0 %v935
        %v5134 = vpop.f32.mrb[0].mxu0
        %v5135 = vadd.f32 0.0, %v5134
        %v5136 = vpop.f32.mrb[0].mxu0
        %v5137 = vpop.f32.mrb[0].mxu0
        %v5138 = vadd.f32 0.0, %v5137
        %v5139 = vpop.f32.mrb[0].mxu0
        %5140 = vmatprep.mubr.bf16.mxu0 %v1130
        %5141 = vmatmul.mubr.bf16.gmra.mrb[0].mxu0 %v937
        %v5142 = vpop.f32.mrb[0].mxu0
        %v5143 = vadd.f32 0.0, %v5142
        %v5144 = vpop.f32.mrb[0].mxu0
        %v5145 = vpop.f32.mrb[0].mxu0
        %v5146 = vadd.f32 0.0, %v5145
        %v5147 = vpop.f32.mrb[0].mxu0
        %5148 = vmatprep.mubr.bf16.mxu0 %v1133
        %5149 = vmatmul.mubr.bf16.gmra.mrb[0].mxu0 %v939
        %v5150 = vpop.f32.mrb[0].mxu0
        %v5151 = vadd.f32 0.0, %v5150
        %v5152 = vpop.f32.mrb[0].mxu0
        %v5153 = vpop.f32.mrb[0].mxu0
        %v5154 = vadd.f32 0.0, %v5153
        %v5155 = vpop.f32.mrb[0].mxu0
        %5156 = vmatprep.mubr.bf16.mxu0 %v1136
        %5157 = vmatmul.mubr.bf16.gmra.mrb[0].mxu0 %v941
        %v5158 = vpop.f32.mrb[0].mxu0
        %v5159 = vadd.f32 0.0, %v5158
        %v5160 = vpop.f32.mrb[0].mxu0
        %v5161 = vpop.f32.mrb[0].mxu0
        %v5162 = vadd.f32 0.0, %v5161
        %v5163 = vpop.f32.mrb[0].mxu0
        %5164 = vmatprep.mubr.bf16.mxu0 %v1139
        %5165 = vmatmul.mubr.bf16.gmra.mrb[0].mxu0 %v943
        %v5166 = vpop.f32.mrb[0].mxu0
        %v5167 = vadd.f32 0.0, %v5166
        %v5168 = vpop.f32.mrb[0].mxu0
        %v5169 = vpop.f32.mrb[0].mxu0
        %v5170 = vadd.f32 0.0, %v5169
        %v5171 = vpop.f32.mrb[0].mxu0
        %5172 = vmatprep.mubr.bf16.mxu0 %v1142
        %5173 = vmatmul.mubr.bf16.gmra.mrb[0].mxu0 %v945
        %v5174 = vpop.f32.mrb[0].mxu0
        %v5175 = vadd.f32 0.0, %v5174
        %v5176 = vpop.f32.mrb[0].mxu0
        %v5177 = vpop.f32.mrb[0].mxu0
        %v5178 = vadd.f32 0.0, %v5177
        %v5179 = vpop.f32.mrb[0].mxu0
        %5180 = vmatprep.mubr.bf16.mxu0 %v1145
        %5181 = vmatmul.mubr.bf16.gmra.mrb[0].mxu0 %v947
        %v5182 = vpop.f32.mrb[0].mxu0
        %v5183 = vadd.f32 0.0, %v5182
        %v5184 = vpop.f32.mrb[0].mxu0
        %v5185 = vpop.f32.mrb[0].mxu0
        %v5186 = vadd.f32 0.0, %v5185
        %v5187 = vpop.f32.mrb[0].mxu0
        %5188 = vmatprep.mubr.bf16.mxu0 %v1148
        %5189 = vmatmul.mubr.bf16.gmra.mrb[0].mxu0 %v949
        %v5190 = vpop.f32.mrb[0].mxu0
        %v5191 = vadd.f32 0.0, %v5190
        %v5192 = vpop.f32.mrb[0].mxu0
        %v5193 = vpop.f32.mrb[0].mxu0
        %v5194 = vadd.f32 0.0, %v5193
        %v5195 = vpop.f32.mrb[0].mxu0
        %5196 = vmatprep.mubr.bf16.mxu0 %v1151
        %5197 = vmatmul.mubr.bf16.gmra.mrb[0].mxu0 %v951
        %v5198 = vpop.f32.mrb[0].mxu0
        %v5199 = vadd.f32 0.0, %v5198
        %v5200 = vpop.f32.mrb[0].mxu0
        %v5201 = vpop.f32.mrb[0].mxu0
        %v5202 = vadd.f32 0.0, %v5201
        %v5203 = vpop.f32.mrb[0].mxu0
        %5204 = vmatprep.mubr.bf16.mxu0 %v1154
        %5205 = vmatmul.mubr.bf16.gmra.mrb[0].mxu0 %v953
        %v5206 = vpop.f32.mrb[0].mxu0
        %v5207 = vadd.f32 0.0, %v5206
        %v5208 = vpop.f32.mrb[0].mxu0
        %v5209 = vpop.f32.mrb[0].mxu0
        %v5210 = vadd.f32 0.0, %v5209
        %v5211 = vpop.f32.mrb[0].mxu0
        %5212 = vmatprep.mubr.bf16.mxu0 %v1157
        %5213 = vmatmul.mubr.bf16.gmra.mrb[0].mxu0 %v955
        %v5214 = vpop.f32.mrb[0].mxu0
        %v5215 = vadd.f32 0.0, %v5214
        %v5216 = vpop.f32.mrb[0].mxu0
        %v5217 = vpop.f32.mrb[0].mxu0
        %v5218 = vadd.f32 0.0, %v5217
        %v5219 = vpop.f32.mrb[0].mxu0
        %5220 = vmatprep.mubr.bf16.mxu0 %v1160
        %5221 = vmatmul.mubr.bf16.gmra.mrb[0].mxu0 %v957
        %v5222 = vpop.f32.mrb[0].mxu0
        %v5223 = vadd.f32 0.0, %v5222
        %v5224 = vpop.f32.mrb[0].mxu0
        %v5225 = vpop.f32.mrb[0].mxu0
        %v5226 = vadd.f32 0.0, %v5225
        %v5227 = vpop.f32.mrb[0].mxu0
        %5228 = vmatprep.mubr.bf16.mxu0 %v1163
        %5229 = vmatmul.mubr.bf16.gmra.mrb[0].mxu0 %v959
        %v5230 = vpop.f32.mrb[0].mxu0
        %v5231 = vadd.f32 0.0, %v5230
        %v5232 = vpop.f32.mrb[0].mxu0
        %v5233 = vpop.f32.mrb[0].mxu0
        %v5234 = vadd.f32 0.0, %v5233
        %v5235 = vpop.f32.mrb[0].mxu0
        %5236 = vmatprep.mubr.bf16.mxu0 %v1166
        %5237 = vmatmul.mubr.bf16.gmra.mrb[0].mxu0 %v961
        %v5238 = vpop.f32.mrb[0].mxu0
        %v5239 = vadd.f32 0.0, %v5238
        %v5240 = vpop.f32.mrb[0].mxu0
        %v5241 = vpop.f32.mrb[0].mxu0
        %v5242 = vadd.f32 0.0, %v5241
        %v5243 = vpop.f32.mrb[0].mxu0
        %5244 = vmatprep.mubr.bf16.mxu0 %v1169
        %5245 = vmatmul.mubr.bf16.gmra.mrb[0].mxu0 %v963
        %v5246 = vpop.f32.mrb[0].mxu0
        %v5247 = vadd.f32 0.0, %v5246
        %v5248 = vpop.f32.mrb[0].mxu0
        %v5249 = vpop.f32.mrb[0].mxu0
        %v5250 = vadd.f32 0.0, %v5249
        %v5251 = vpop.f32.mrb[0].mxu0
        %5252 = vmatprep.mubr.bf16.mxu0 %v1172
        %5253 = vmatmul.mubr.bf16.gmra.mrb[0].mxu0 %v965
        %v5254 = vpop.f32.mrb[0].mxu0
        %v5255 = vadd.f32 0.0, %v5254
        %v5256 = vpop.f32.mrb[0].mxu0
        %v5257 = vpop.f32.mrb[0].mxu0
        %v5258 = vadd.f32 0.0, %v5257
        %v5259 = vpop.f32.mrb[0].mxu0
        %5260 = vmatprep.mubr.bf16.mxu0 %v1175
        %5261 = vmatmul.mubr.bf16.gmra.mrb[0].mxu0 %v967
        %v5262 = vpop.f32.mrb[0].mxu0
        %v5263 = vadd.f32 0.0, %v5262
        %v5264 = vpop.f32.mrb[0].mxu0
        %v5265 = vpop.f32.mrb[0].mxu0
        %v5266 = vadd.f32 0.0, %v5265
        %v5267 = vpop.f32.mrb[0].mxu0
        %5268 = vmatprep.mubr.bf16.mxu0 %v1178
        %5269 = vmatmul.mubr.bf16.gmra.mrb[0].mxu0 %v969
        %v5270 = vpop.f32.mrb[0].mxu0
        %v5271 = vadd.f32 0.0, %v5270
        %v5272 = vpop.f32.mrb[0].mxu0
        %v5273 = vpop.f32.mrb[0].mxu0
        %v5274 = vadd.f32 0.0, %v5273
        %v5275 = vpop.f32.mrb[0].mxu0
        %5276 = vmatprep.mubr.bf16.mxu0 %v1181
        %5277 = vmatmul.mubr.bf16.gmra.mrb[0].mxu0 %v971
        %v5278 = vpop.f32.mrb[0].mxu0
        %v5279 = vadd.f32 0.0, %v5278
        %v5280 = vpop.f32.mrb[0].mxu0
        %v5281 = vpop.f32.mrb[0].mxu0
        %v5282 = vadd.f32 0.0, %v5281
        %v5283 = vpop.f32.mrb[0].mxu0
        %5284 = vmatprep.mubr.bf16.mxu0 %v1184
        %5285 = vmatmul.mubr.bf16.gmra.mrb[0].mxu0 %v973
        %v5286 = vpop.f32.mrb[0].mxu0
        %v5287 = vadd.f32 0.0, %v5286
        %v5288 = vpop.f32.mrb[0].mxu0
        %v5289 = vpop.f32.mrb[0].mxu0
        %v5290 = vadd.f32 0.0, %v5289
        %v5291 = vpop.f32.mrb[0].mxu0
        %5292 = vmatprep.mubr.bf16.mxu0 %v1187
        %5293 = vmatmul.mubr.bf16.gmra.mrb[0].mxu0 %v975
        %v5294 = vpop.f32.mrb[0].mxu0
        %v5295 = vadd.f32 0.0, %v5294
        %v5296 = vpop.f32.mrb[0].mxu0
        %v5297 = vpop.f32.mrb[0].mxu0
        %v5298 = vadd.f32 0.0, %v5297
        %v5299 = vpop.f32.mrb[0].mxu0
        %5300 = vmatprep.mubr.bf16.mxu0 %v1190
        %5301 = vmatmul.mubr.bf16.gmra.mrb[0].mxu0 %v977
        %v5302 = vpop.f32.mrb[0].mxu0
        %v5303 = vadd.f32 0.0, %v5302
        %v5304 = vpop.f32.mrb[0].mxu0
        %v5305 = vpop.f32.mrb[0].mxu0
        %v5306 = vadd.f32 0.0, %v5305
        %v5307 = vpop.f32.mrb[0].mxu0
        %5308 = vmatprep.mubr.bf16.mxu0 %v1193
        %5309 = vmatmul.mubr.bf16.gmra.mrb[0].mxu0 %v979
        %v5310 = vpop.f32.mrb[0].mxu0
        %v5311 = vadd.f32 0.0, %v5310
        %v5312 = vpop.f32.mrb[0].mxu0
        %v5313 = vpop.f32.mrb[0].mxu0
        %v5314 = vadd.f32 0.0, %v5313
        %v5315 = vpop.f32.mrb[0].mxu0
        %5316 = vmatprep.mubr.bf16.mxu0 %v1196
        %5317 = vmatmul.mubr.bf16.gmra.mrb[0].mxu0 %v981
        %v5318 = vpop.f32.mrb[0].mxu0
        %v5319 = vadd.f32 0.0, %v5318
        %v5320 = vpop.f32.mrb[0].mxu0
        %v5321 = vpop.f32.mrb[0].mxu0
        %v5322 = vadd.f32 0.0, %v5321
        %v5323 = vpop.f32.mrb[0].mxu0
        %5324 = vdwg.mxu0
        %v5325 = vmax.f32 %v5007, %v5087
        %v5326 = vmax.f32 %v5010, %v5090
        %v5327 = vmax.f32 %v5015, %v5095
        %v5328 = vmax.f32 %v5018, %v5098
        %v5329 = vmax.f32 %v5023, %v5103
        %v5330 = vmax.f32 %v5026, %v5106
        %v5331 = vmax.f32 %v5031, %v5111
        %v5332 = vmax.f32 %v5034, %v5114
        %v5333 = vmax.f32 %v5039, %v5119
        %v5334 = vmax.f32 %v5042, %v5122
        %v5335 = vmax.f32 %v5047, %v5127
        %v5336 = vmax.f32 %v5050, %v5130
        %v5337 = vmax.f32 %v5055, %v5135
        %v5338 = vmax.f32 %v5058, %v5138
        %v5339 = vmax.f32 %v5063, %v5143
        %v5340 = vmax.f32 %v5066, %v5146
        %v5341 = vmax.f32 %v5071, %v5151
        %v5342 = vmax.f32 %v5074, %v5154
        %v5343 = vmax.f32 %v5079, %v5159
        %v5344 = vmax.f32 %v5082, %v5162
        %v5345 = vmax.f32 %v5167, %v5247
        %v5346 = vmax.f32 %v5170, %v5250
        %v5347 = vmax.f32 %v5175, %v5255
        %v5348 = vmax.f32 %v5178, %v5258
        %v5349 = vmax.f32 %v5183, %v5263
        %v5350 = vmax.f32 %v5186, %v5266
        %v5351 = vmax.f32 %v5191, %v5271
        %v5352 = vmax.f32 %v5194, %v5274
        %v5353 = vmax.f32 %v5199, %v5279
        %v5354 = vmax.f32 %v5202, %v5282
        %v5355 = vmax.f32 %v5207, %v5287
        %v5356 = vmax.f32 %v5210, %v5290
        %v5357 = vmax.f32 %v5215, %v5295
        %v5358 = vmax.f32 %v5218, %v5298
        %v5359 = vmax.f32 %v5223, %v5303
        %v5360 = vmax.f32 %v5226, %v5306
        %v5361 = vmax.f32 %v5231, %v5311
        %v5362 = vmax.f32 %v5234, %v5314
        %v5363 = vmax.f32 %v5239, %v5319
        %v5364 = vmax.f32 %v5242, %v5322
        %v5365 = vmax.f32 %v5325, %v5345
        %v5366 = vmax.f32 %v5326, %v5346
        %v5367 = vmax.f32 %v5327, %v5347
        %v5368 = vmax.f32 %v5328, %v5348
        %v5369 = vmax.f32 %v5329, %v5349
        %v5370 = vmax.f32 %v5330, %v5350
        %v5371 = vmax.f32 %v5331, %v5351
        %v5372 = vmax.f32 %v5332, %v5352
        %v5373 = vmax.f32 %v5333, %v5353
        %v5374 = vmax.f32 %v5334, %v5354
        %v5375 = vmax.f32 %v5335, %v5355
        %v5376 = vmax.f32 %v5336, %v5356
        %v5377 = vmax.f32 %v5337, %v5357
        %v5378 = vmax.f32 %v5338, %v5358
        %v5379 = vmax.f32 %v5339, %v5359
        %v5380 = vmax.f32 %v5340, %v5360
        %v5381 = vmax.f32 %v5341, %v5361
        %v5382 = vmax.f32 %v5342, %v5362
        %v5383 = vmax.f32 %v5343, %v5363
        %v5384 = vmax.f32 %v5344, %v5364
        %v5385 = vadd.f32 %v5365, %v1614
        %v5386 = vadd.f32 %v5366, %v1619
        %v5387 = vadd.f32 %v5367, %v1624
        %v5388 = vadd.f32 %v5368, %v1629
        %v5389 = vadd.f32 %v5369, %v1634
        %v5390 = vadd.f32 %v5370, %v1639
        %v5391 = vadd.f32 %v5371, %v1644
        %v5392 = vadd.f32 %v5372, %v1649
        %v5393 = vadd.f32 %v5373, %v1654
        %v5394 = vadd.f32 %v5374, %v1659
        %v5395 = vadd.f32 %v5375, %v1664
        %v5396 = vadd.f32 %v5376, %v1669
        %v5397 = vadd.f32 %v5377, %v1674
        %v5398 = vadd.f32 %v5378, %v1679
        %v5399 = vadd.f32 %v5379, %v1684
        %v5400 = vadd.f32 %v5380, %v1689
        %v5401 = vadd.f32 %v5381, %v1694
        %v5402 = vadd.f32 %v5382, %v1699
        %v5403 = vadd.f32 %v5383, %v1704
        %v5404 = vadd.f32 %v5384, %v1709
        %v5405 = vmax.f32 %v5385, 0.0
        %v5406 = vmax.f32 %v5386, 0.0
        %v5407 = vmax.f32 %v5387, 0.0
        %v5408 = vmax.f32 %v5388, 0.0
        %v5409 = vmax.f32 %v5389, 0.0
        %v5410 = vmax.f32 %v5390, 0.0
        %v5411 = vmax.f32 %v5391, 0.0
        %v5412 = vmax.f32 %v5392, 0.0
        %v5413 = vmax.f32 %v5393, 0.0
        %v5414 = vmax.f32 %v5394, 0.0
        %v5415 = vmax.f32 %v5395, 0.0
        %v5416 = vmax.f32 %v5396, 0.0
        %v5417 = vmax.f32 %v5397, 0.0
        %v5418 = vmax.f32 %v5398, 0.0
        %v5419 = vmax.f32 %v5399, 0.0
        %v5420 = vmax.f32 %v5400, 0.0
        %v5421 = vmax.f32 %v5401, 0.0
        %v5422 = vmax.f32 %v5402, 0.0
        %v5423 = vmax.f32 %v5403, 0.0
        %v5424 = vmax.f32 %v5404, 0.0
        %s5425 = scalar_lea.vmem %s3, 192
        %v5426 = vld [vmem:[%s5425] sm:$0xff]
        %v5427 = vld [vmem:[%s5425 + $0x8] sm:$0xff]
        %v5428 = vld [vmem:[%s5425 + $0x10] sm:$0xff]
        %v5429 = vld [vmem:[%s5425 + $0x18] sm:$0xff]
        %v5431 = vsel %vm2285, %v5427, 0
        %v5434 = vsel %vm2285, %v5429, 0
        %5436 = vmatprep.subr.mxu0 0.0
        %5437 = vmatpush1.msra.mxu0 %v5405
        %5438 = vmatprep.subr.mxu0 0.0
        %5439 = vmatpush1.msra.mxu0 %v5406
        %5440 = vmatprep.subr.mxu0 0.0
        %5441 = vmatpush1.msra.mxu0 %v5407
        %5442 = vmatprep.subr.mxu0 0.0
        %5443 = vmatpush1.msra.mxu0 %v5408
        %5444 = vmatprep.subr.mxu0 0.0
        %5445 = vmatpush1.msra.mxu0 %v5409
        %5446 = vmatprep.subr.mxu0 0.0
        %5447 = vmatpush1.msra.mxu0 %v5410
        %5448 = vmatprep.subr.mxu0 0.0
        %5449 = vmatpush1.msra.mxu0 %v5411
        %5450 = vmatprep.subr.mxu0 0.0
        %5451 = vmatpush1.msra.mxu0 %v5412
        %5452 = vmatprep.subr.mxu0 0.0
        %5453 = vmatpush1.msra.mxu0 %v5413
        %5454 = vmatprep.subr.mxu0 0.0
        %5455 = vmatpush1.msra.mxu0 %v5414
        %5456 = vmatprep.subr.mxu0 0.0
        %5457 = vmatpush1.msra.mxu0 %v5415
        %5458 = vmatprep.subr.mxu0 0.0
        %5459 = vmatpush1.msra.mxu0 %v5416
        %5460 = vmatprep.subr.mxu0 0.0
        %5461 = vmatpush1.msra.mxu0 %v5417
        %5462 = vmatprep.subr.mxu0 0.0
        %5463 = vmatpush1.msra.mxu0 %v5418
        %5464 = vmatprep.subr.mxu0 0.0
        %5465 = vmatpush1.msra.mxu0 %v5419
        %5466 = vmatprep.subr.mxu0 0.0
        %5467 = vmatpush1.msra.mxu0 %v5420
        %5468 = vmatprep.subr.mxu0 0.0
        %5469 = vmatpush1.msra.mxu0 %v5421
        %5470 = vmatprep.subr.mxu0 0.0
        %5471 = vmatpush1.msra.mxu0 %v5422
        %5472 = vmatprep.subr.mxu0 0.0
        %5473 = vmatpush1.msra.mxu0 %v5423
        %5474 = vmatprep.subr.mxu0 0.0
        %5475 = vmatpush1.msra.mxu0 %v5424
        %5476 = vmatprep.subr.mxu0 0.0
        %5477 = vmatpush1.msra.mxu0 0.0
        %5478 = vmatprep.subr.mxu0 0.0
        %5479 = vmatpush1.msra.mxu0 0.0
        %5480 = vmatprep.subr.mxu0 0.0
        %5481 = vmatpush1.msra.mxu0 0.0
        %5482 = vmatprep.subr.mxu0 0.0
        %5483 = vmatpush1.msra.mxu0 0.0
        %5484 = vmatprep.subr.mxu0 0.0
        %5485 = vmatpush1.msra.mxu0 0.0
        %5486 = vmatprep.subr.mxu0 0.0
        %5487 = vmatpush1.msra.mxu0 0.0
        %5488 = vmatprep.subr.mxu0 0.0
        %5489 = vmatpush1.msra.mxu0 0.0
        %5490 = vmatprep.subr.mxu0 0.0
        %5491 = vmatpush1.msra.mxu0 0.0
        %5492 = vmatprep.subr.mxu0 0.0
        %5493 = vmatpush1.msra.mxu0 0.0
        %5494 = vmatprep.subr.mxu0 0.0
        %5495 = vmatpush1.msra.mxu0 0.0
        %5496 = vmatprep.subr.mxu0 0.0
        %5497 = vmatpush1.msra.mxu0 0.0
        %5498 = vmatprep.subr.mxu0 0.0
        %5499 = vmatpush1.msra.mxu0 0.0
        %5500 = vmatprep.mubr.f32.mxu0 %v5431
        %5501 = vmatmul.mubr.f32.gmra.mrb[0].mxu0 %v5426
        %v5502 = vpop.f32.mrb[0].mxu0
        %v5503 = vadd.f32 0.0, %v5502
        %v5504 = vpop.f32.mrb[0].mxu0
        %5505 = vmatprep.mubr.f32.mxu0 %v5434
        %5506 = vmatmul.mubr.f32.gmra.mrb[0].mxu0 %v5428
        %v5507 = vpop.f32.mrb[0].mxu0
        %v5508 = vadd.f32 0.0, %v5507
        %v5509 = vpop.f32.mrb[0].mxu0
        %5510 = vdwg.mxu0
        %v5511 = vadd.f32 %v4898, %v5503
        %v5512 = vadd.f32 %v4899, %v5508
        %v5513 = vld [vmem:[%s520 + $0xa8] sm:$0xf]
        %v5514 = vld [vmem:[%s520 + $0xac] sm:$0xf]
        %v5515 = vld [vmem:[%s520 + $0xb0] sm:$0xf]
        %v5516 = vld [vmem:[%s520 + $0xb4] sm:$0xf]
        %v5517 = vld [vmem:[%s520 + $0xb8] sm:$0xf]
        %v5518 = vld [vmem:[%s520 + $0xbc] sm:$0xf]
        %v5519 = vld [vmem:[%s520 + $0xc0] sm:$0xf]
        %v5520 = vld [vmem:[%s520 + $0xc4] sm:$0xf]
        %v5521 = vld [vmem:[%s520 + $0xc8] sm:$0xf]
        %v5522 = vld [vmem:[%s520 + $0xcc] sm:$0xf]
        %v5523 = vld [vmem:[%s520 + $0xd0] sm:$0xf]
        %v5524 = vld [vmem:[%s520 + $0xd4] sm:$0xf]
        %v5525 = vld [vmem:[%s520 + $0xd8] sm:$0xf]
        %v5526 = vld [vmem:[%s520 + $0xdc] sm:$0xf]
        %v5527 = vld [vmem:[%s520 + $0xe0] sm:$0xf]
        %v5528 = vld [vmem:[%s520 + $0xe4] sm:$0xf]
        %v5529 = vld [vmem:[%s520 + $0xe8] sm:$0xf]
        %v5530 = vld [vmem:[%s520 + $0xec] sm:$0xf]
        %v5549 = vunpack.c.l.b16 %v5513
        %v5550 = vunpack.c.l.b16 %v5514
        %v5551 = vunpack.c.l.b16 %v5515
        %v5552 = vunpack.c.l.b16 %v5516
        %v5553 = vunpack.c.l.b16 %v5517
        %v5554 = vunpack.c.l.b16 %v5518
        %v5555 = vunpack.c.l.b16 %v5519
        %v5556 = vunpack.c.l.b16 %v5520
        %v5557 = vunpack.c.l.b16 %v5521
        %v5558 = vunpack.c.l.b16 %v5522
        %v5559 = vunpack.c.l.b16 %v5523
        %v5560 = vunpack.c.l.b16 %v5524
        %v5561 = vunpack.c.l.b16 %v5525
        %v5562 = vunpack.c.l.b16 %v5526
        %v5563 = vunpack.c.l.b16 %v5527
        %v5564 = vunpack.c.l.b16 %v5528
        %v5565 = vunpack.c.l.b16 %v5529
        %v5566 = vunpack.c.l.b16 %v5530
        %v5567 = vpack.c.b16 %v5550, %v5549
        %v5568 = vpack.c.b16 %v5552, %v5551
        %v5569 = vpack.c.b16 %v5554, %v5553
        %v5570 = vpack.c.b16 %v5556, %v5555
        %v5571 = vpack.c.b16 %v5558, %v5557
        %v5572 = vpack.c.b16 %v5560, %v5559
        %v5573 = vpack.c.b16 %v5562, %v5561
        %v5574 = vpack.c.b16 %v5564, %v5563
        %v5575 = vpack.c.b16 %v5566, %v5565
        %5585 = vmatprep.subr.bf16.mxu0 0
        %5586 = vmatpush1.bf16.msra.mxu0 %v5567
        %5587 = vmatprep.subr.bf16.mxu0 0
        %5588 = vmatpush1.bf16.msra.mxu0 %v5568
        %5589 = vmatprep.subr.bf16.mxu0 0
        %5590 = vmatpush1.bf16.msra.mxu0 %v5569
        %5591 = vmatprep.subr.bf16.mxu0 0
        %5592 = vmatpush1.bf16.msra.mxu0 %v5570
        %5593 = vmatprep.subr.bf16.mxu0 0
        %5594 = vmatpush1.bf16.msra.mxu0 %v5571
        %5595 = vmatprep.subr.bf16.mxu0 0
        %5596 = vmatpush1.bf16.msra.mxu0 %v5572
        %5597 = vmatprep.subr.bf16.mxu0 0
        %5598 = vmatpush1.bf16.msra.mxu0 %v5573
        %5599 = vmatprep.subr.bf16.mxu0 0
        %5600 = vmatpush1.bf16.msra.mxu0 %v5574
        %5601 = vmatprep.subr.bf16.mxu0 0
        %5602 = vmatpush1.bf16.msra.mxu0 %v5575
        %5603 = vmatprep.subr.bf16.mxu0 0
        %5604 = vmatpush1.bf16.msra.mxu0 0
        %5605 = vmatprep.subr.bf16.mxu0 0
        %5606 = vmatpush1.bf16.msra.mxu0 0
        %5607 = vmatprep.subr.bf16.mxu0 0
        %5608 = vmatpush1.bf16.msra.mxu0 0
        %5609 = vmatprep.subr.bf16.mxu0 0
        %5610 = vmatpush1.bf16.msra.mxu0 0
        %5611 = vmatprep.subr.bf16.mxu0 0
        %5612 = vmatpush1.bf16.msra.mxu0 0
        %5613 = vmatprep.subr.bf16.mxu0 0
        %5614 = vmatpush1.bf16.msra.mxu0 0
        %5615 = vmatprep.subr.bf16.mxu0 0
        %5616 = vmatpush1.bf16.msra.mxu0 0
        %5617 = vmatprep.mubr.bf16.mxu0 %v1079
        %5618 = vmatmul.mubr.bf16.gmra.mrb[0].mxu0 %v903
        %v5619 = vpop.f32.mrb[0].mxu0
        %v5620 = vadd.f32 0.0, %v5619
        %v5621 = vpop.f32.mrb[0].mxu0
        %v5622 = vpop.f32.mrb[0].mxu0
        %v5623 = vadd.f32 0.0, %v5622
        %v5624 = vpop.f32.mrb[0].mxu0
        %5625 = vmatprep.mubr.bf16.mxu0 %v1082
        %5626 = vmatmul.mubr.bf16.gmra.mrb[0].mxu0 %v905
        %v5627 = vpop.f32.mrb[0].mxu0
        %v5628 = vadd.f32 0.0, %v5627
        %v5629 = vpop.f32.mrb[0].mxu0
        %v5630 = vpop.f32.mrb[0].mxu0
        %v5631 = vadd.f32 0.0, %v5630
        %v5632 = vpop.f32.mrb[0].mxu0
        %5633 = vmatprep.mubr.bf16.mxu0 %v1085
        %5634 = vmatmul.mubr.bf16.gmra.mrb[0].mxu0 %v907
        %v5635 = vpop.f32.mrb[0].mxu0
        %v5636 = vadd.f32 0.0, %v5635
        %v5637 = vpop.f32.mrb[0].mxu0
        %v5638 = vpop.f32.mrb[0].mxu0
        %v5639 = vadd.f32 0.0, %v5638
        %v5640 = vpop.f32.mrb[0].mxu0
        %5641 = vmatprep.mubr.bf16.mxu0 %v1088
        %5642 = vmatmul.mubr.bf16.gmra.mrb[0].mxu0 %v909
        %v5643 = vpop.f32.mrb[0].mxu0
        %v5644 = vadd.f32 0.0, %v5643
        %v5645 = vpop.f32.mrb[0].mxu0
        %v5646 = vpop.f32.mrb[0].mxu0
        %v5647 = vadd.f32 0.0, %v5646
        %v5648 = vpop.f32.mrb[0].mxu0
        %5649 = vmatprep.mubr.bf16.mxu0 %v1091
        %5650 = vmatmul.mubr.bf16.gmra.mrb[0].mxu0 %v911
        %v5651 = vpop.f32.mrb[0].mxu0
        %v5652 = vadd.f32 0.0, %v5651
        %v5653 = vpop.f32.mrb[0].mxu0
        %v5654 = vpop.f32.mrb[0].mxu0
        %v5655 = vadd.f32 0.0, %v5654
        %v5656 = vpop.f32.mrb[0].mxu0
        %5657 = vmatprep.mubr.bf16.mxu0 %v1094
        %5658 = vmatmul.mubr.bf16.gmra.mrb[0].mxu0 %v913
        %v5659 = vpop.f32.mrb[0].mxu0
        %v5660 = vadd.f32 0.0, %v5659
        %v5661 = vpop.f32.mrb[0].mxu0
        %v5662 = vpop.f32.mrb[0].mxu0
        %v5663 = vadd.f32 0.0, %v5662
        %v5664 = vpop.f32.mrb[0].mxu0
        %5665 = vmatprep.mubr.bf16.mxu0 %v1097
        %5666 = vmatmul.mubr.bf16.gmra.mrb[0].mxu0 %v915
        %v5667 = vpop.f32.mrb[0].mxu0
        %v5668 = vadd.f32 0.0, %v5667
        %v5669 = vpop.f32.mrb[0].mxu0
        %v5670 = vpop.f32.mrb[0].mxu0
        %v5671 = vadd.f32 0.0, %v5670
        %v5672 = vpop.f32.mrb[0].mxu0
        %5673 = vmatprep.mubr.bf16.mxu0 %v1100
        %5674 = vmatmul.mubr.bf16.gmra.mrb[0].mxu0 %v917
        %v5675 = vpop.f32.mrb[0].mxu0
        %v5676 = vadd.f32 0.0, %v5675
        %v5677 = vpop.f32.mrb[0].mxu0
        %v5678 = vpop.f32.mrb[0].mxu0
        %v5679 = vadd.f32 0.0, %v5678
        %v5680 = vpop.f32.mrb[0].mxu0
        %5681 = vmatprep.mubr.bf16.mxu0 %v1103
        %5682 = vmatmul.mubr.bf16.gmra.mrb[0].mxu0 %v919
        %v5683 = vpop.f32.mrb[0].mxu0
        %v5684 = vadd.f32 0.0, %v5683
        %v5685 = vpop.f32.mrb[0].mxu0
        %v5686 = vpop.f32.mrb[0].mxu0
        %v5687 = vadd.f32 0.0, %v5686
        %v5688 = vpop.f32.mrb[0].mxu0
        %5689 = vmatprep.mubr.bf16.mxu0 %v1106
        %5690 = vmatmul.mubr.bf16.gmra.mrb[0].mxu0 %v921
        %v5691 = vpop.f32.mrb[0].mxu0
        %v5692 = vadd.f32 0.0, %v5691
        %v5693 = vpop.f32.mrb[0].mxu0
        %v5694 = vpop.f32.mrb[0].mxu0
        %v5695 = vadd.f32 0.0, %v5694
        %v5696 = vpop.f32.mrb[0].mxu0
        %5697 = vmatprep.mubr.bf16.mxu0 %v1109
        %5698 = vmatmul.mubr.bf16.gmra.mrb[0].mxu0 %v923
        %v5699 = vpop.f32.mrb[0].mxu0
        %v5700 = vadd.f32 0.0, %v5699
        %v5701 = vpop.f32.mrb[0].mxu0
        %v5702 = vpop.f32.mrb[0].mxu0
        %v5703 = vadd.f32 0.0, %v5702
        %v5704 = vpop.f32.mrb[0].mxu0
        %5705 = vmatprep.mubr.bf16.mxu0 %v1112
        %5706 = vmatmul.mubr.bf16.gmra.mrb[0].mxu0 %v925
        %v5707 = vpop.f32.mrb[0].mxu0
        %v5708 = vadd.f32 0.0, %v5707
        %v5709 = vpop.f32.mrb[0].mxu0
        %v5710 = vpop.f32.mrb[0].mxu0
        %v5711 = vadd.f32 0.0, %v5710
        %v5712 = vpop.f32.mrb[0].mxu0
        %5713 = vmatprep.mubr.bf16.mxu0 %v1115
        %5714 = vmatmul.mubr.bf16.gmra.mrb[0].mxu0 %v927
        %v5715 = vpop.f32.mrb[0].mxu0
        %v5716 = vadd.f32 0.0, %v5715
        %v5717 = vpop.f32.mrb[0].mxu0
        %v5718 = vpop.f32.mrb[0].mxu0
        %v5719 = vadd.f32 0.0, %v5718
        %v5720 = vpop.f32.mrb[0].mxu0
        %5721 = vmatprep.mubr.bf16.mxu0 %v1118
        %5722 = vmatmul.mubr.bf16.gmra.mrb[0].mxu0 %v929
        %v5723 = vpop.f32.mrb[0].mxu0
        %v5724 = vadd.f32 0.0, %v5723
        %v5725 = vpop.f32.mrb[0].mxu0
        %v5726 = vpop.f32.mrb[0].mxu0
        %v5727 = vadd.f32 0.0, %v5726
        %v5728 = vpop.f32.mrb[0].mxu0
        %5729 = vmatprep.mubr.bf16.mxu0 %v1121
        %5730 = vmatmul.mubr.bf16.gmra.mrb[0].mxu0 %v931
        %v5731 = vpop.f32.mrb[0].mxu0
        %v5732 = vadd.f32 0.0, %v5731
        %v5733 = vpop.f32.mrb[0].mxu0
        %v5734 = vpop.f32.mrb[0].mxu0
        %v5735 = vadd.f32 0.0, %v5734
        %v5736 = vpop.f32.mrb[0].mxu0
        %5737 = vmatprep.mubr.bf16.mxu0 %v1124
        %5738 = vmatmul.mubr.bf16.gmra.mrb[0].mxu0 %v933
        %v5739 = vpop.f32.mrb[0].mxu0
        %v5740 = vadd.f32 0.0, %v5739
        %v5741 = vpop.f32.mrb[0].mxu0
        %v5742 = vpop.f32.mrb[0].mxu0
        %v5743 = vadd.f32 0.0, %v5742
        %v5744 = vpop.f32.mrb[0].mxu0
        %5745 = vmatprep.mubr.bf16.mxu0 %v1127
        %5746 = vmatmul.mubr.bf16.gmra.mrb[0].mxu0 %v935
        %v5747 = vpop.f32.mrb[0].mxu0
        %v5748 = vadd.f32 0.0, %v5747
        %v5749 = vpop.f32.mrb[0].mxu0
        %v5750 = vpop.f32.mrb[0].mxu0
        %v5751 = vadd.f32 0.0, %v5750
        %v5752 = vpop.f32.mrb[0].mxu0
        %5753 = vmatprep.mubr.bf16.mxu0 %v1130
        %5754 = vmatmul.mubr.bf16.gmra.mrb[0].mxu0 %v937
        %v5755 = vpop.f32.mrb[0].mxu0
        %v5756 = vadd.f32 0.0, %v5755
        %v5757 = vpop.f32.mrb[0].mxu0
        %v5758 = vpop.f32.mrb[0].mxu0
        %v5759 = vadd.f32 0.0, %v5758
        %v5760 = vpop.f32.mrb[0].mxu0
        %5761 = vmatprep.mubr.bf16.mxu0 %v1133
        %5762 = vmatmul.mubr.bf16.gmra.mrb[0].mxu0 %v939
        %v5763 = vpop.f32.mrb[0].mxu0
        %v5764 = vadd.f32 0.0, %v5763
        %v5765 = vpop.f32.mrb[0].mxu0
        %v5766 = vpop.f32.mrb[0].mxu0
        %v5767 = vadd.f32 0.0, %v5766
        %v5768 = vpop.f32.mrb[0].mxu0
        %5769 = vmatprep.mubr.bf16.mxu0 %v1136
        %5770 = vmatmul.mubr.bf16.gmra.mrb[0].mxu0 %v941
        %v5771 = vpop.f32.mrb[0].mxu0
        %v5772 = vadd.f32 0.0, %v5771
        %v5773 = vpop.f32.mrb[0].mxu0
        %v5774 = vpop.f32.mrb[0].mxu0
        %v5775 = vadd.f32 0.0, %v5774
        %v5776 = vpop.f32.mrb[0].mxu0
        %5777 = vmatprep.mubr.bf16.mxu0 %v1139
        %5778 = vmatmul.mubr.bf16.gmra.mrb[0].mxu0 %v943
        %v5779 = vpop.f32.mrb[0].mxu0
        %v5780 = vadd.f32 0.0, %v5779
        %v5781 = vpop.f32.mrb[0].mxu0
        %v5782 = vpop.f32.mrb[0].mxu0
        %v5783 = vadd.f32 0.0, %v5782
        %v5784 = vpop.f32.mrb[0].mxu0
        %5785 = vmatprep.mubr.bf16.mxu0 %v1142
        %5786 = vmatmul.mubr.bf16.gmra.mrb[0].mxu0 %v945
        %v5787 = vpop.f32.mrb[0].mxu0
        %v5788 = vadd.f32 0.0, %v5787
        %v5789 = vpop.f32.mrb[0].mxu0
        %v5790 = vpop.f32.mrb[0].mxu0
        %v5791 = vadd.f32 0.0, %v5790
        %v5792 = vpop.f32.mrb[0].mxu0
        %5793 = vmatprep.mubr.bf16.mxu0 %v1145
        %5794 = vmatmul.mubr.bf16.gmra.mrb[0].mxu0 %v947
        %v5795 = vpop.f32.mrb[0].mxu0
        %v5796 = vadd.f32 0.0, %v5795
        %v5797 = vpop.f32.mrb[0].mxu0
        %v5798 = vpop.f32.mrb[0].mxu0
        %v5799 = vadd.f32 0.0, %v5798
        %v5800 = vpop.f32.mrb[0].mxu0
        %5801 = vmatprep.mubr.bf16.mxu0 %v1148
        %5802 = vmatmul.mubr.bf16.gmra.mrb[0].mxu0 %v949
        %v5803 = vpop.f32.mrb[0].mxu0
        %v5804 = vadd.f32 0.0, %v5803
        %v5805 = vpop.f32.mrb[0].mxu0
        %v5806 = vpop.f32.mrb[0].mxu0
        %v5807 = vadd.f32 0.0, %v5806
        %v5808 = vpop.f32.mrb[0].mxu0
        %5809 = vmatprep.mubr.bf16.mxu0 %v1151
        %5810 = vmatmul.mubr.bf16.gmra.mrb[0].mxu0 %v951
        %v5811 = vpop.f32.mrb[0].mxu0
        %v5812 = vadd.f32 0.0, %v5811
        %v5813 = vpop.f32.mrb[0].mxu0
        %v5814 = vpop.f32.mrb[0].mxu0
        %v5815 = vadd.f32 0.0, %v5814
        %v5816 = vpop.f32.mrb[0].mxu0
        %5817 = vmatprep.mubr.bf16.mxu0 %v1154
        %5818 = vmatmul.mubr.bf16.gmra.mrb[0].mxu0 %v953
        %v5819 = vpop.f32.mrb[0].mxu0
        %v5820 = vadd.f32 0.0, %v5819
        %v5821 = vpop.f32.mrb[0].mxu0
        %v5822 = vpop.f32.mrb[0].mxu0
        %v5823 = vadd.f32 0.0, %v5822
        %v5824 = vpop.f32.mrb[0].mxu0
        %5825 = vmatprep.mubr.bf16.mxu0 %v1157
        %5826 = vmatmul.mubr.bf16.gmra.mrb[0].mxu0 %v955
        %v5827 = vpop.f32.mrb[0].mxu0
        %v5828 = vadd.f32 0.0, %v5827
        %v5829 = vpop.f32.mrb[0].mxu0
        %v5830 = vpop.f32.mrb[0].mxu0
        %v5831 = vadd.f32 0.0, %v5830
        %v5832 = vpop.f32.mrb[0].mxu0
        %5833 = vmatprep.mubr.bf16.mxu0 %v1160
        %5834 = vmatmul.mubr.bf16.gmra.mrb[0].mxu0 %v957
        %v5835 = vpop.f32.mrb[0].mxu0
        %v5836 = vadd.f32 0.0, %v5835
        %v5837 = vpop.f32.mrb[0].mxu0
        %v5838 = vpop.f32.mrb[0].mxu0
        %v5839 = vadd.f32 0.0, %v5838
        %v5840 = vpop.f32.mrb[0].mxu0
        %5841 = vmatprep.mubr.bf16.mxu0 %v1163
        %5842 = vmatmul.mubr.bf16.gmra.mrb[0].mxu0 %v959
        %v5843 = vpop.f32.mrb[0].mxu0
        %v5844 = vadd.f32 0.0, %v5843
        %v5845 = vpop.f32.mrb[0].mxu0
        %v5846 = vpop.f32.mrb[0].mxu0
        %v5847 = vadd.f32 0.0, %v5846
        %v5848 = vpop.f32.mrb[0].mxu0
        %5849 = vmatprep.mubr.bf16.mxu0 %v1166
        %5850 = vmatmul.mubr.bf16.gmra.mrb[0].mxu0 %v961
        %v5851 = vpop.f32.mrb[0].mxu0
        %v5852 = vadd.f32 0.0, %v5851
        %v5853 = vpop.f32.mrb[0].mxu0
        %v5854 = vpop.f32.mrb[0].mxu0
        %v5855 = vadd.f32 0.0, %v5854
        %v5856 = vpop.f32.mrb[0].mxu0
        %5857 = vmatprep.mubr.bf16.mxu0 %v1169
        %5858 = vmatmul.mubr.bf16.gmra.mrb[0].mxu0 %v963
        %v5859 = vpop.f32.mrb[0].mxu0
        %v5860 = vadd.f32 0.0, %v5859
        %v5861 = vpop.f32.mrb[0].mxu0
        %v5862 = vpop.f32.mrb[0].mxu0
        %v5863 = vadd.f32 0.0, %v5862
        %v5864 = vpop.f32.mrb[0].mxu0
        %5865 = vmatprep.mubr.bf16.mxu0 %v1172
        %5866 = vmatmul.mubr.bf16.gmra.mrb[0].mxu0 %v965
        %v5867 = vpop.f32.mrb[0].mxu0
        %v5868 = vadd.f32 0.0, %v5867
        %v5869 = vpop.f32.mrb[0].mxu0
        %v5870 = vpop.f32.mrb[0].mxu0
        %v5871 = vadd.f32 0.0, %v5870
        %v5872 = vpop.f32.mrb[0].mxu0
        %5873 = vmatprep.mubr.bf16.mxu0 %v1175
        %5874 = vmatmul.mubr.bf16.gmra.mrb[0].mxu0 %v967
        %v5875 = vpop.f32.mrb[0].mxu0
        %v5876 = vadd.f32 0.0, %v5875
        %v5877 = vpop.f32.mrb[0].mxu0
        %v5878 = vpop.f32.mrb[0].mxu0
        %v5879 = vadd.f32 0.0, %v5878
        %v5880 = vpop.f32.mrb[0].mxu0
        %5881 = vmatprep.mubr.bf16.mxu0 %v1178
        %5882 = vmatmul.mubr.bf16.gmra.mrb[0].mxu0 %v969
        %v5883 = vpop.f32.mrb[0].mxu0
        %v5884 = vadd.f32 0.0, %v5883
        %v5885 = vpop.f32.mrb[0].mxu0
        %v5886 = vpop.f32.mrb[0].mxu0
        %v5887 = vadd.f32 0.0, %v5886
        %v5888 = vpop.f32.mrb[0].mxu0
        %5889 = vmatprep.mubr.bf16.mxu0 %v1181
        %5890 = vmatmul.mubr.bf16.gmra.mrb[0].mxu0 %v971
        %v5891 = vpop.f32.mrb[0].mxu0
        %v5892 = vadd.f32 0.0, %v5891
        %v5893 = vpop.f32.mrb[0].mxu0
        %v5894 = vpop.f32.mrb[0].mxu0
        %v5895 = vadd.f32 0.0, %v5894
        %v5896 = vpop.f32.mrb[0].mxu0
        %5897 = vmatprep.mubr.bf16.mxu0 %v1184
        %5898 = vmatmul.mubr.bf16.gmra.mrb[0].mxu0 %v973
        %v5899 = vpop.f32.mrb[0].mxu0
        %v5900 = vadd.f32 0.0, %v5899
        %v5901 = vpop.f32.mrb[0].mxu0
        %v5902 = vpop.f32.mrb[0].mxu0
        %v5903 = vadd.f32 0.0, %v5902
        %v5904 = vpop.f32.mrb[0].mxu0
        %5905 = vmatprep.mubr.bf16.mxu0 %v1187
        %5906 = vmatmul.mubr.bf16.gmra.mrb[0].mxu0 %v975
        %v5907 = vpop.f32.mrb[0].mxu0
        %v5908 = vadd.f32 0.0, %v5907
        %v5909 = vpop.f32.mrb[0].mxu0
        %v5910 = vpop.f32.mrb[0].mxu0
        %v5911 = vadd.f32 0.0, %v5910
        %v5912 = vpop.f32.mrb[0].mxu0
        %5913 = vmatprep.mubr.bf16.mxu0 %v1190
        %5914 = vmatmul.mubr.bf16.gmra.mrb[0].mxu0 %v977
        %v5915 = vpop.f32.mrb[0].mxu0
        %v5916 = vadd.f32 0.0, %v5915
        %v5917 = vpop.f32.mrb[0].mxu0
        %v5918 = vpop.f32.mrb[0].mxu0
        %v5919 = vadd.f32 0.0, %v5918
        %v5920 = vpop.f32.mrb[0].mxu0
        %5921 = vmatprep.mubr.bf16.mxu0 %v1193
        %5922 = vmatmul.mubr.bf16.gmra.mrb[0].mxu0 %v979
        %v5923 = vpop.f32.mrb[0].mxu0
        %v5924 = vadd.f32 0.0, %v5923
        %v5925 = vpop.f32.mrb[0].mxu0
        %v5926 = vpop.f32.mrb[0].mxu0
        %v5927 = vadd.f32 0.0, %v5926
        %v5928 = vpop.f32.mrb[0].mxu0
        %5929 = vmatprep.mubr.bf16.mxu0 %v1196
        %5930 = vmatmul.mubr.bf16.gmra.mrb[0].mxu0 %v981
        %v5931 = vpop.f32.mrb[0].mxu0
        %v5932 = vadd.f32 0.0, %v5931
        %v5933 = vpop.f32.mrb[0].mxu0
        %v5934 = vpop.f32.mrb[0].mxu0
        %v5935 = vadd.f32 0.0, %v5934
        %v5936 = vpop.f32.mrb[0].mxu0
        %5937 = vdwg.mxu0
        %v5938 = vmax.f32 %v5620, %v5700
        %v5939 = vmax.f32 %v5623, %v5703
        %v5940 = vmax.f32 %v5628, %v5708
        %v5941 = vmax.f32 %v5631, %v5711
        %v5942 = vmax.f32 %v5636, %v5716
        %v5943 = vmax.f32 %v5639, %v5719
        %v5944 = vmax.f32 %v5644, %v5724
        %v5945 = vmax.f32 %v5647, %v5727
        %v5946 = vmax.f32 %v5652, %v5732
        %v5947 = vmax.f32 %v5655, %v5735
        %v5948 = vmax.f32 %v5660, %v5740
        %v5949 = vmax.f32 %v5663, %v5743
        %v5950 = vmax.f32 %v5668, %v5748
        %v5951 = vmax.f32 %v5671, %v5751
        %v5952 = vmax.f32 %v5676, %v5756
        %v5953 = vmax.f32 %v5679, %v5759
        %v5954 = vmax.f32 %v5684, %v5764
        %v5955 = vmax.f32 %v5687, %v5767
        %v5956 = vmax.f32 %v5692, %v5772
        %v5957 = vmax.f32 %v5695, %v5775
        %v5958 = vmax.f32 %v5780, %v5860
        %v5959 = vmax.f32 %v5783, %v5863
        %v5960 = vmax.f32 %v5788, %v5868
        %v5961 = vmax.f32 %v5791, %v5871
        %v5962 = vmax.f32 %v5796, %v5876
        %v5963 = vmax.f32 %v5799, %v5879
        %v5964 = vmax.f32 %v5804, %v5884
        %v5965 = vmax.f32 %v5807, %v5887
        %v5966 = vmax.f32 %v5812, %v5892
        %v5967 = vmax.f32 %v5815, %v5895
        %v5968 = vmax.f32 %v5820, %v5900
        %v5969 = vmax.f32 %v5823, %v5903
        %v5970 = vmax.f32 %v5828, %v5908
        %v5971 = vmax.f32 %v5831, %v5911
        %v5972 = vmax.f32 %v5836, %v5916
        %v5973 = vmax.f32 %v5839, %v5919
        %v5974 = vmax.f32 %v5844, %v5924
        %v5975 = vmax.f32 %v5847, %v5927
        %v5976 = vmax.f32 %v5852, %v5932
        %v5977 = vmax.f32 %v5855, %v5935
        %v5978 = vmax.f32 %v5938, %v5958
        %v5979 = vmax.f32 %v5939, %v5959
        %v5980 = vmax.f32 %v5940, %v5960
        %v5981 = vmax.f32 %v5941, %v5961
        %v5982 = vmax.f32 %v5942, %v5962
        %v5983 = vmax.f32 %v5943, %v5963
        %v5984 = vmax.f32 %v5944, %v5964
        %v5985 = vmax.f32 %v5945, %v5965
        %v5986 = vmax.f32 %v5946, %v5966
        %v5987 = vmax.f32 %v5947, %v5967
        %v5988 = vmax.f32 %v5948, %v5968
        %v5989 = vmax.f32 %v5949, %v5969
        %v5990 = vmax.f32 %v5950, %v5970
        %v5991 = vmax.f32 %v5951, %v5971
        %v5992 = vmax.f32 %v5952, %v5972
        %v5993 = vmax.f32 %v5953, %v5973
        %v5994 = vmax.f32 %v5954, %v5974
        %v5995 = vmax.f32 %v5955, %v5975
        %v5996 = vmax.f32 %v5956, %v5976
        %v5997 = vmax.f32 %v5957, %v5977
        %v5998 = vadd.f32 %v5978, %v1614
        %v5999 = vadd.f32 %v5979, %v1619
        %v6000 = vadd.f32 %v5980, %v1624
        %v6001 = vadd.f32 %v5981, %v1629
        %v6002 = vadd.f32 %v5982, %v1634
        %v6003 = vadd.f32 %v5983, %v1639
        %v6004 = vadd.f32 %v5984, %v1644
        %v6005 = vadd.f32 %v5985, %v1649
        %v6006 = vadd.f32 %v5986, %v1654
        %v6007 = vadd.f32 %v5987, %v1659
        %v6008 = vadd.f32 %v5988, %v1664
        %v6009 = vadd.f32 %v5989, %v1669
        %v6010 = vadd.f32 %v5990, %v1674
        %v6011 = vadd.f32 %v5991, %v1679
        %v6012 = vadd.f32 %v5992, %v1684
        %v6013 = vadd.f32 %v5993, %v1689
        %v6014 = vadd.f32 %v5994, %v1694
        %v6015 = vadd.f32 %v5995, %v1699
        %v6016 = vadd.f32 %v5996, %v1704
        %v6017 = vadd.f32 %v5997, %v1709
        %v6018 = vmax.f32 %v5998, 0.0
        %v6019 = vmax.f32 %v5999, 0.0
        %v6020 = vmax.f32 %v6000, 0.0
        %v6021 = vmax.f32 %v6001, 0.0
        %v6022 = vmax.f32 %v6002, 0.0
        %v6023 = vmax.f32 %v6003, 0.0
        %v6024 = vmax.f32 %v6004, 0.0
        %v6025 = vmax.f32 %v6005, 0.0
        %v6026 = vmax.f32 %v6006, 0.0
        %v6027 = vmax.f32 %v6007, 0.0
        %v6028 = vmax.f32 %v6008, 0.0
        %v6029 = vmax.f32 %v6009, 0.0
        %v6030 = vmax.f32 %v6010, 0.0
        %v6031 = vmax.f32 %v6011, 0.0
        %v6032 = vmax.f32 %v6012, 0.0
        %v6033 = vmax.f32 %v6013, 0.0
        %v6034 = vmax.f32 %v6014, 0.0
        %v6035 = vmax.f32 %v6015, 0.0
        %v6036 = vmax.f32 %v6016, 0.0
        %v6037 = vmax.f32 %v6017, 0.0
        %s6038 = scalar_lea.vmem %s3, 224
        %v6039 = vld [vmem:[%s6038] sm:$0xff]
        %v6040 = vld [vmem:[%s6038 + $0x8] sm:$0xff]
        %v6041 = vld [vmem:[%s6038 + $0x10] sm:$0xff]
        %v6042 = vld [vmem:[%s6038 + $0x18] sm:$0xff]
        %v6044 = vsel %vm2285, %v6040, 0
        %v6047 = vsel %vm2285, %v6042, 0
        %6049 = vmatprep.subr.mxu0 0.0
        %6050 = vmatpush1.msra.mxu0 %v6018
        %6051 = vmatprep.subr.mxu0 0.0
        %6052 = vmatpush1.msra.mxu0 %v6019
        %6053 = vmatprep.subr.mxu0 0.0
        %6054 = vmatpush1.msra.mxu0 %v6020
        %6055 = vmatprep.subr.mxu0 0.0
        %6056 = vmatpush1.msra.mxu0 %v6021
        %6057 = vmatprep.subr.mxu0 0.0
        %6058 = vmatpush1.msra.mxu0 %v6022
        %6059 = vmatprep.subr.mxu0 0.0
        %6060 = vmatpush1.msra.mxu0 %v6023
        %6061 = vmatprep.subr.mxu0 0.0
        %6062 = vmatpush1.msra.mxu0 %v6024
        %6063 = vmatprep.subr.mxu0 0.0
        %6064 = vmatpush1.msra.mxu0 %v6025
        %6065 = vmatprep.subr.mxu0 0.0
        %6066 = vmatpush1.msra.mxu0 %v6026
        %6067 = vmatprep.subr.mxu0 0.0
        %6068 = vmatpush1.msra.mxu0 %v6027
        %6069 = vmatprep.subr.mxu0 0.0
        %6070 = vmatpush1.msra.mxu0 %v6028
        %6071 = vmatprep.subr.mxu0 0.0
        %6072 = vmatpush1.msra.mxu0 %v6029
        %6073 = vmatprep.subr.mxu0 0.0
        %6074 = vmatpush1.msra.mxu0 %v6030
        %6075 = vmatprep.subr.mxu0 0.0
        %6076 = vmatpush1.msra.mxu0 %v6031
        %6077 = vmatprep.subr.mxu0 0.0
        %6078 = vmatpush1.msra.mxu0 %v6032
        %6079 = vmatprep.subr.mxu0 0.0
        %6080 = vmatpush1.msra.mxu0 %v6033
        %6081 = vmatprep.subr.mxu0 0.0
        %6082 = vmatpush1.msra.mxu0 %v6034
        %6083 = vmatprep.subr.mxu0 0.0
        %6084 = vmatpush1.msra.mxu0 %v6035
        %6085 = vmatprep.subr.mxu0 0.0
        %6086 = vmatpush1.msra.mxu0 %v6036
        %6087 = vmatprep.subr.mxu0 0.0
        %6088 = vmatpush1.msra.mxu0 %v6037
        %6089 = vmatprep.subr.mxu0 0.0
        %6090 = vmatpush1.msra.mxu0 0.0
        %6091 = vmatprep.subr.mxu0 0.0
        %6092 = vmatpush1.msra.mxu0 0.0
        %6093 = vmatprep.subr.mxu0 0.0
        %6094 = vmatpush1.msra.mxu0 0.0
        %6095 = vmatprep.subr.mxu0 0.0
        %6096 = vmatpush1.msra.mxu0 0.0
        %6097 = vmatprep.subr.mxu0 0.0
        %6098 = vmatpush1.msra.mxu0 0.0
        %6099 = vmatprep.subr.mxu0 0.0
        %6100 = vmatpush1.msra.mxu0 0.0
        %6101 = vmatprep.subr.mxu0 0.0
        %6102 = vmatpush1.msra.mxu0 0.0
        %6103 = vmatprep.subr.mxu0 0.0
        %6104 = vmatpush1.msra.mxu0 0.0
        %6105 = vmatprep.subr.mxu0 0.0
        %6106 = vmatpush1.msra.mxu0 0.0
        %6107 = vmatprep.subr.mxu0 0.0
        %6108 = vmatpush1.msra.mxu0 0.0
        %6109 = vmatprep.subr.mxu0 0.0
        %6110 = vmatpush1.msra.mxu0 0.0
        %6111 = vmatprep.subr.mxu0 0.0
        %6112 = vmatpush1.msra.mxu0 0.0
        %6113 = vmatprep.mubr.f32.mxu0 %v6044
        %6114 = vmatmul.mubr.f32.gmra.mrb[0].mxu0 %v6039
        %v6115 = vpop.f32.mrb[0].mxu0
        %v6116 = vadd.f32 0.0, %v6115
        %v6117 = vpop.f32.mrb[0].mxu0
        %6118 = vmatprep.mubr.f32.mxu0 %v6047
        %6119 = vmatmul.mubr.f32.gmra.mrb[0].mxu0 %v6041
        %v6120 = vpop.f32.mrb[0].mxu0
        %v6121 = vadd.f32 0.0, %v6120
        %v6122 = vpop.f32.mrb[0].mxu0
        %6123 = vdwg.mxu0
        %v6124 = vadd.f32 %v5511, %v6116
        %v6125 = vadd.f32 %v5512, %v6121
        %v6126 = vld [vmem:[%s520 + $0xc0] sm:$0xf]
        %v6127 = vld [vmem:[%s520 + $0xc4] sm:$0xf]
        %v6128 = vld [vmem:[%s520 + $0xc8] sm:$0xf]
        %v6129 = vld [vmem:[%s520 + $0xcc] sm:$0xf]
        %v6130 = vld [vmem:[%s520 + $0xd0] sm:$0xf]
        %v6131 = vld [vmem:[%s520 + $0xd4] sm:$0xf]
        %v6132 = vld [vmem:[%s520 + $0xd8] sm:$0xf]
        %v6133 = vld [vmem:[%s520 + $0xdc] sm:$0xf]
        %v6134 = vld [vmem:[%s520 + $0xe0] sm:$0xf]
        %v6135 = vld [vmem:[%s520 + $0xe4] sm:$0xf]
        %v6136 = vld [vmem:[%s520 + $0xe8] sm:$0xf]
        %v6137 = vld [vmem:[%s520 + $0xec] sm:$0xf]
        %v6138 = vld [vmem:[%s520 + $0xf0] sm:$0xf]
        %v6139 = vld [vmem:[%s520 + $0xf4] sm:$0xf]
        %v6140 = vld [vmem:[%s520 + $0xf8] sm:$0xf]
        %v6141 = vld [vmem:[%s520 + $0xfc] sm:$0xf]
        %v6142 = vld [vmem:[%s520 + $0x100] sm:$0xf]
        %v6143 = vld [vmem:[%s520 + $0x104] sm:$0xf]
        %v6162 = vunpack.c.l.b16 %v6126
        %v6163 = vunpack.c.l.b16 %v6127
        %v6164 = vunpack.c.l.b16 %v6128
        %v6165 = vunpack.c.l.b16 %v6129
        %v6166 = vunpack.c.l.b16 %v6130
        %v6167 = vunpack.c.l.b16 %v6131
        %v6168 = vunpack.c.l.b16 %v6132
        %v6169 = vunpack.c.l.b16 %v6133
        %v6170 = vunpack.c.l.b16 %v6134
        %v6171 = vunpack.c.l.b16 %v6135
        %v6172 = vunpack.c.l.b16 %v6136
        %v6173 = vunpack.c.l.b16 %v6137
        %v6174 = vunpack.c.l.b16 %v6138
        %v6175 = vunpack.c.l.b16 %v6139
        %v6176 = vunpack.c.l.b16 %v6140
        %v6177 = vunpack.c.l.b16 %v6141
        %v6178 = vunpack.c.l.b16 %v6142
        %v6179 = vunpack.c.l.b16 %v6143
        %v6180 = vpack.c.b16 %v6163, %v6162
        %v6181 = vpack.c.b16 %v6165, %v6164
        %v6182 = vpack.c.b16 %v6167, %v6166
        %v6183 = vpack.c.b16 %v6169, %v6168
        %v6184 = vpack.c.b16 %v6171, %v6170
        %v6185 = vpack.c.b16 %v6173, %v6172
        %v6186 = vpack.c.b16 %v6175, %v6174
        %v6187 = vpack.c.b16 %v6177, %v6176
        %v6188 = vpack.c.b16 %v6179, %v6178
        %6198 = vmatprep.subr.bf16.mxu0 0
        %6199 = vmatpush1.bf16.msra.mxu0 %v6180
        %6200 = vmatprep.subr.bf16.mxu0 0
        %6201 = vmatpush1.bf16.msra.mxu0 %v6181
        %6202 = vmatprep.subr.bf16.mxu0 0
        %6203 = vmatpush1.bf16.msra.mxu0 %v6182
        %6204 = vmatprep.subr.bf16.mxu0 0
        %6205 = vmatpush1.bf16.msra.mxu0 %v6183
        %6206 = vmatprep.subr.bf16.mxu0 0
        %6207 = vmatpush1.bf16.msra.mxu0 %v6184
        %6208 = vmatprep.subr.bf16.mxu0 0
        %6209 = vmatpush1.bf16.msra.mxu0 %v6185
        %6210 = vmatprep.subr.bf16.mxu0 0
        %6211 = vmatpush1.bf16.msra.mxu0 %v6186
        %6212 = vmatprep.subr.bf16.mxu0 0
        %6213 = vmatpush1.bf16.msra.mxu0 %v6187
        %6214 = vmatprep.subr.bf16.mxu0 0
        %6215 = vmatpush1.bf16.msra.mxu0 %v6188
        %6216 = vmatprep.subr.bf16.mxu0 0
        %6217 = vmatpush1.bf16.msra.mxu0 0
        %6218 = vmatprep.subr.bf16.mxu0 0
        %6219 = vmatpush1.bf16.msra.mxu0 0
        %6220 = vmatprep.subr.bf16.mxu0 0
        %6221 = vmatpush1.bf16.msra.mxu0 0
        %6222 = vmatprep.subr.bf16.mxu0 0
        %6223 = vmatpush1.bf16.msra.mxu0 0
        %6224 = vmatprep.subr.bf16.mxu0 0
        %6225 = vmatpush1.bf16.msra.mxu0 0
        %6226 = vmatprep.subr.bf16.mxu0 0
        %6227 = vmatpush1.bf16.msra.mxu0 0
        %6228 = vmatprep.subr.bf16.mxu0 0
        %6229 = vmatpush1.bf16.msra.mxu0 0
        %6230 = vmatprep.mubr.bf16.mxu0 %v1079
        %6231 = vmatmul.mubr.bf16.gmra.mrb[0].mxu0 %v903
        %v6232 = vpop.f32.mrb[0].mxu0
        %v6233 = vadd.f32 0.0, %v6232
        %v6234 = vpop.f32.mrb[0].mxu0
        %v6235 = vpop.f32.mrb[0].mxu0
        %v6236 = vadd.f32 0.0, %v6235
        %v6237 = vpop.f32.mrb[0].mxu0
        %6238 = vmatprep.mubr.bf16.mxu0 %v1082
        %6239 = vmatmul.mubr.bf16.gmra.mrb[0].mxu0 %v905
        %v6240 = vpop.f32.mrb[0].mxu0
        %v6241 = vadd.f32 0.0, %v6240
        %v6242 = vpop.f32.mrb[0].mxu0
        %v6243 = vpop.f32.mrb[0].mxu0
        %v6244 = vadd.f32 0.0, %v6243
        %v6245 = vpop.f32.mrb[0].mxu0
        %6246 = vmatprep.mubr.bf16.mxu0 %v1085
        %6247 = vmatmul.mubr.bf16.gmra.mrb[0].mxu0 %v907
        %v6248 = vpop.f32.mrb[0].mxu0
        %v6249 = vadd.f32 0.0, %v6248
        %v6250 = vpop.f32.mrb[0].mxu0
        %v6251 = vpop.f32.mrb[0].mxu0
        %v6252 = vadd.f32 0.0, %v6251
        %v6253 = vpop.f32.mrb[0].mxu0
        %6254 = vmatprep.mubr.bf16.mxu0 %v1088
        %6255 = vmatmul.mubr.bf16.gmra.mrb[0].mxu0 %v909
        %v6256 = vpop.f32.mrb[0].mxu0
        %v6257 = vadd.f32 0.0, %v6256
        %v6258 = vpop.f32.mrb[0].mxu0
        %v6259 = vpop.f32.mrb[0].mxu0
        %v6260 = vadd.f32 0.0, %v6259
        %v6261 = vpop.f32.mrb[0].mxu0
        %6262 = vmatprep.mubr.bf16.mxu0 %v1091
        %6263 = vmatmul.mubr.bf16.gmra.mrb[0].mxu0 %v911
        %v6264 = vpop.f32.mrb[0].mxu0
        %v6265 = vadd.f32 0.0, %v6264
        %v6266 = vpop.f32.mrb[0].mxu0
        %v6267 = vpop.f32.mrb[0].mxu0
        %v6268 = vadd.f32 0.0, %v6267
        %v6269 = vpop.f32.mrb[0].mxu0
        %6270 = vmatprep.mubr.bf16.mxu0 %v1094
        %6271 = vmatmul.mubr.bf16.gmra.mrb[0].mxu0 %v913
        %v6272 = vpop.f32.mrb[0].mxu0
        %v6273 = vadd.f32 0.0, %v6272
        %v6274 = vpop.f32.mrb[0].mxu0
        %v6275 = vpop.f32.mrb[0].mxu0
        %v6276 = vadd.f32 0.0, %v6275
        %v6277 = vpop.f32.mrb[0].mxu0
        %6278 = vmatprep.mubr.bf16.mxu0 %v1097
        %6279 = vmatmul.mubr.bf16.gmra.mrb[0].mxu0 %v915
        %v6280 = vpop.f32.mrb[0].mxu0
        %v6281 = vadd.f32 0.0, %v6280
        %v6282 = vpop.f32.mrb[0].mxu0
        %v6283 = vpop.f32.mrb[0].mxu0
        %v6284 = vadd.f32 0.0, %v6283
        %v6285 = vpop.f32.mrb[0].mxu0
        %6286 = vmatprep.mubr.bf16.mxu0 %v1100
        %6287 = vmatmul.mubr.bf16.gmra.mrb[0].mxu0 %v917
        %v6288 = vpop.f32.mrb[0].mxu0
        %v6289 = vadd.f32 0.0, %v6288
        %v6290 = vpop.f32.mrb[0].mxu0
        %v6291 = vpop.f32.mrb[0].mxu0
        %v6292 = vadd.f32 0.0, %v6291
        %v6293 = vpop.f32.mrb[0].mxu0
        %6294 = vmatprep.mubr.bf16.mxu0 %v1103
        %6295 = vmatmul.mubr.bf16.gmra.mrb[0].mxu0 %v919
        %v6296 = vpop.f32.mrb[0].mxu0
        %v6297 = vadd.f32 0.0, %v6296
        %v6298 = vpop.f32.mrb[0].mxu0
        %v6299 = vpop.f32.mrb[0].mxu0
        %v6300 = vadd.f32 0.0, %v6299
        %v6301 = vpop.f32.mrb[0].mxu0
        %6302 = vmatprep.mubr.bf16.mxu0 %v1106
        %6303 = vmatmul.mubr.bf16.gmra.mrb[0].mxu0 %v921
        %v6304 = vpop.f32.mrb[0].mxu0
        %v6305 = vadd.f32 0.0, %v6304
        %v6306 = vpop.f32.mrb[0].mxu0
        %v6307 = vpop.f32.mrb[0].mxu0
        %v6308 = vadd.f32 0.0, %v6307
        %v6309 = vpop.f32.mrb[0].mxu0
        %6310 = vmatprep.mubr.bf16.mxu0 %v1109
        %6311 = vmatmul.mubr.bf16.gmra.mrb[0].mxu0 %v923
        %v6312 = vpop.f32.mrb[0].mxu0
        %v6313 = vadd.f32 0.0, %v6312
        %v6314 = vpop.f32.mrb[0].mxu0
        %v6315 = vpop.f32.mrb[0].mxu0
        %v6316 = vadd.f32 0.0, %v6315
        %v6317 = vpop.f32.mrb[0].mxu0
        %6318 = vmatprep.mubr.bf16.mxu0 %v1112
        %6319 = vmatmul.mubr.bf16.gmra.mrb[0].mxu0 %v925
        %v6320 = vpop.f32.mrb[0].mxu0
        %v6321 = vadd.f32 0.0, %v6320
        %v6322 = vpop.f32.mrb[0].mxu0
        %v6323 = vpop.f32.mrb[0].mxu0
        %v6324 = vadd.f32 0.0, %v6323
        %v6325 = vpop.f32.mrb[0].mxu0
        %6326 = vmatprep.mubr.bf16.mxu0 %v1115
        %6327 = vmatmul.mubr.bf16.gmra.mrb[0].mxu0 %v927
        %v6328 = vpop.f32.mrb[0].mxu0
        %v6329 = vadd.f32 0.0, %v6328
        %v6330 = vpop.f32.mrb[0].mxu0
        %v6331 = vpop.f32.mrb[0].mxu0
        %v6332 = vadd.f32 0.0, %v6331
        %v6333 = vpop.f32.mrb[0].mxu0
        %6334 = vmatprep.mubr.bf16.mxu0 %v1118
        %6335 = vmatmul.mubr.bf16.gmra.mrb[0].mxu0 %v929
        %v6336 = vpop.f32.mrb[0].mxu0
        %v6337 = vadd.f32 0.0, %v6336
        %v6338 = vpop.f32.mrb[0].mxu0
        %v6339 = vpop.f32.mrb[0].mxu0
        %v6340 = vadd.f32 0.0, %v6339
        %v6341 = vpop.f32.mrb[0].mxu0
        %6342 = vmatprep.mubr.bf16.mxu0 %v1121
        %6343 = vmatmul.mubr.bf16.gmra.mrb[0].mxu0 %v931
        %v6344 = vpop.f32.mrb[0].mxu0
        %v6345 = vadd.f32 0.0, %v6344
        %v6346 = vpop.f32.mrb[0].mxu0
        %v6347 = vpop.f32.mrb[0].mxu0
        %v6348 = vadd.f32 0.0, %v6347
        %v6349 = vpop.f32.mrb[0].mxu0
        %6350 = vmatprep.mubr.bf16.mxu0 %v1124
        %6351 = vmatmul.mubr.bf16.gmra.mrb[0].mxu0 %v933
        %v6352 = vpop.f32.mrb[0].mxu0
        %v6353 = vadd.f32 0.0, %v6352
        %v6354 = vpop.f32.mrb[0].mxu0
        %v6355 = vpop.f32.mrb[0].mxu0
        %v6356 = vadd.f32 0.0, %v6355
        %v6357 = vpop.f32.mrb[0].mxu0
        %6358 = vmatprep.mubr.bf16.mxu0 %v1127
        %6359 = vmatmul.mubr.bf16.gmra.mrb[0].mxu0 %v935
        %v6360 = vpop.f32.mrb[0].mxu0
        %v6361 = vadd.f32 0.0, %v6360
        %v6362 = vpop.f32.mrb[0].mxu0
        %v6363 = vpop.f32.mrb[0].mxu0
        %v6364 = vadd.f32 0.0, %v6363
        %v6365 = vpop.f32.mrb[0].mxu0
        %6366 = vmatprep.mubr.bf16.mxu0 %v1130
        %6367 = vmatmul.mubr.bf16.gmra.mrb[0].mxu0 %v937
        %v6368 = vpop.f32.mrb[0].mxu0
        %v6369 = vadd.f32 0.0, %v6368
        %v6370 = vpop.f32.mrb[0].mxu0
        %v6371 = vpop.f32.mrb[0].mxu0
        %v6372 = vadd.f32 0.0, %v6371
        %v6373 = vpop.f32.mrb[0].mxu0
        %6374 = vmatprep.mubr.bf16.mxu0 %v1133
        %6375 = vmatmul.mubr.bf16.gmra.mrb[0].mxu0 %v939
        %v6376 = vpop.f32.mrb[0].mxu0
        %v6377 = vadd.f32 0.0, %v6376
        %v6378 = vpop.f32.mrb[0].mxu0
        %v6379 = vpop.f32.mrb[0].mxu0
        %v6380 = vadd.f32 0.0, %v6379
        %v6381 = vpop.f32.mrb[0].mxu0
        %6382 = vmatprep.mubr.bf16.mxu0 %v1136
        %6383 = vmatmul.mubr.bf16.gmra.mrb[0].mxu0 %v941
        %v6384 = vpop.f32.mrb[0].mxu0
        %v6385 = vadd.f32 0.0, %v6384
        %v6386 = vpop.f32.mrb[0].mxu0
        %v6387 = vpop.f32.mrb[0].mxu0
        %v6388 = vadd.f32 0.0, %v6387
        %v6389 = vpop.f32.mrb[0].mxu0
        %6390 = vmatprep.mubr.bf16.mxu0 %v1139
        %6391 = vmatmul.mubr.bf16.gmra.mrb[0].mxu0 %v943
        %v6392 = vpop.f32.mrb[0].mxu0
        %v6393 = vadd.f32 0.0, %v6392
        %v6394 = vpop.f32.mrb[0].mxu0
        %v6395 = vpop.f32.mrb[0].mxu0
        %v6396 = vadd.f32 0.0, %v6395
        %v6397 = vpop.f32.mrb[0].mxu0
        %6398 = vmatprep.mubr.bf16.mxu0 %v1142
        %6399 = vmatmul.mubr.bf16.gmra.mrb[0].mxu0 %v945
        %v6400 = vpop.f32.mrb[0].mxu0
        %v6401 = vadd.f32 0.0, %v6400
        %v6402 = vpop.f32.mrb[0].mxu0
        %v6403 = vpop.f32.mrb[0].mxu0
        %v6404 = vadd.f32 0.0, %v6403
        %v6405 = vpop.f32.mrb[0].mxu0
        %6406 = vmatprep.mubr.bf16.mxu0 %v1145
        %6407 = vmatmul.mubr.bf16.gmra.mrb[0].mxu0 %v947
        %v6408 = vpop.f32.mrb[0].mxu0
        %v6409 = vadd.f32 0.0, %v6408
        %v6410 = vpop.f32.mrb[0].mxu0
        %v6411 = vpop.f32.mrb[0].mxu0
        %v6412 = vadd.f32 0.0, %v6411
        %v6413 = vpop.f32.mrb[0].mxu0
        %6414 = vmatprep.mubr.bf16.mxu0 %v1148
        %6415 = vmatmul.mubr.bf16.gmra.mrb[0].mxu0 %v949
        %v6416 = vpop.f32.mrb[0].mxu0
        %v6417 = vadd.f32 0.0, %v6416
        %v6418 = vpop.f32.mrb[0].mxu0
        %v6419 = vpop.f32.mrb[0].mxu0
        %v6420 = vadd.f32 0.0, %v6419
        %v6421 = vpop.f32.mrb[0].mxu0
        %6422 = vmatprep.mubr.bf16.mxu0 %v1151
        %6423 = vmatmul.mubr.bf16.gmra.mrb[0].mxu0 %v951
        %v6424 = vpop.f32.mrb[0].mxu0
        %v6425 = vadd.f32 0.0, %v6424
        %v6426 = vpop.f32.mrb[0].mxu0
        %v6427 = vpop.f32.mrb[0].mxu0
        %v6428 = vadd.f32 0.0, %v6427
        %v6429 = vpop.f32.mrb[0].mxu0
        %6430 = vmatprep.mubr.bf16.mxu0 %v1154
        %6431 = vmatmul.mubr.bf16.gmra.mrb[0].mxu0 %v953
        %v6432 = vpop.f32.mrb[0].mxu0
        %v6433 = vadd.f32 0.0, %v6432
        %v6434 = vpop.f32.mrb[0].mxu0
        %v6435 = vpop.f32.mrb[0].mxu0
        %v6436 = vadd.f32 0.0, %v6435
        %v6437 = vpop.f32.mrb[0].mxu0
        %6438 = vmatprep.mubr.bf16.mxu0 %v1157
        %6439 = vmatmul.mubr.bf16.gmra.mrb[0].mxu0 %v955
        %v6440 = vpop.f32.mrb[0].mxu0
        %v6441 = vadd.f32 0.0, %v6440
        %v6442 = vpop.f32.mrb[0].mxu0
        %v6443 = vpop.f32.mrb[0].mxu0
        %v6444 = vadd.f32 0.0, %v6443
        %v6445 = vpop.f32.mrb[0].mxu0
        %6446 = vmatprep.mubr.bf16.mxu0 %v1160
        %6447 = vmatmul.mubr.bf16.gmra.mrb[0].mxu0 %v957
        %v6448 = vpop.f32.mrb[0].mxu0
        %v6449 = vadd.f32 0.0, %v6448
        %v6450 = vpop.f32.mrb[0].mxu0
        %v6451 = vpop.f32.mrb[0].mxu0
        %v6452 = vadd.f32 0.0, %v6451
        %v6453 = vpop.f32.mrb[0].mxu0
        %6454 = vmatprep.mubr.bf16.mxu0 %v1163
        %6455 = vmatmul.mubr.bf16.gmra.mrb[0].mxu0 %v959
        %v6456 = vpop.f32.mrb[0].mxu0
        %v6457 = vadd.f32 0.0, %v6456
        %v6458 = vpop.f32.mrb[0].mxu0
        %v6459 = vpop.f32.mrb[0].mxu0
        %v6460 = vadd.f32 0.0, %v6459
        %v6461 = vpop.f32.mrb[0].mxu0
        %6462 = vmatprep.mubr.bf16.mxu0 %v1166
        %6463 = vmatmul.mubr.bf16.gmra.mrb[0].mxu0 %v961
        %v6464 = vpop.f32.mrb[0].mxu0
        %v6465 = vadd.f32 0.0, %v6464
        %v6466 = vpop.f32.mrb[0].mxu0
        %v6467 = vpop.f32.mrb[0].mxu0
        %v6468 = vadd.f32 0.0, %v6467
        %v6469 = vpop.f32.mrb[0].mxu0
        %6470 = vmatprep.mubr.bf16.mxu0 %v1169
        %6471 = vmatmul.mubr.bf16.gmra.mrb[0].mxu0 %v963
        %v6472 = vpop.f32.mrb[0].mxu0
        %v6473 = vadd.f32 0.0, %v6472
        %v6474 = vpop.f32.mrb[0].mxu0
        %v6475 = vpop.f32.mrb[0].mxu0
        %v6476 = vadd.f32 0.0, %v6475
        %v6477 = vpop.f32.mrb[0].mxu0
        %6478 = vmatprep.mubr.bf16.mxu0 %v1172
        %6479 = vmatmul.mubr.bf16.gmra.mrb[0].mxu0 %v965
        %v6480 = vpop.f32.mrb[0].mxu0
        %v6481 = vadd.f32 0.0, %v6480
        %v6482 = vpop.f32.mrb[0].mxu0
        %v6483 = vpop.f32.mrb[0].mxu0
        %v6484 = vadd.f32 0.0, %v6483
        %v6485 = vpop.f32.mrb[0].mxu0
        %6486 = vmatprep.mubr.bf16.mxu0 %v1175
        %6487 = vmatmul.mubr.bf16.gmra.mrb[0].mxu0 %v967
        %v6488 = vpop.f32.mrb[0].mxu0
        %v6489 = vadd.f32 0.0, %v6488
        %v6490 = vpop.f32.mrb[0].mxu0
        %v6491 = vpop.f32.mrb[0].mxu0
        %v6492 = vadd.f32 0.0, %v6491
        %v6493 = vpop.f32.mrb[0].mxu0
        %6494 = vmatprep.mubr.bf16.mxu0 %v1178
        %6495 = vmatmul.mubr.bf16.gmra.mrb[0].mxu0 %v969
        %v6496 = vpop.f32.mrb[0].mxu0
        %v6497 = vadd.f32 0.0, %v6496
        %v6498 = vpop.f32.mrb[0].mxu0
        %v6499 = vpop.f32.mrb[0].mxu0
        %v6500 = vadd.f32 0.0, %v6499
        %v6501 = vpop.f32.mrb[0].mxu0
        %6502 = vmatprep.mubr.bf16.mxu0 %v1181
        %6503 = vmatmul.mubr.bf16.gmra.mrb[0].mxu0 %v971
        %v6504 = vpop.f32.mrb[0].mxu0
        %v6505 = vadd.f32 0.0, %v6504
        %v6506 = vpop.f32.mrb[0].mxu0
        %v6507 = vpop.f32.mrb[0].mxu0
        %v6508 = vadd.f32 0.0, %v6507
        %v6509 = vpop.f32.mrb[0].mxu0
        %6510 = vmatprep.mubr.bf16.mxu0 %v1184
        %6511 = vmatmul.mubr.bf16.gmra.mrb[0].mxu0 %v973
        %v6512 = vpop.f32.mrb[0].mxu0
        %v6513 = vadd.f32 0.0, %v6512
        %v6514 = vpop.f32.mrb[0].mxu0
        %v6515 = vpop.f32.mrb[0].mxu0
        %v6516 = vadd.f32 0.0, %v6515
        %v6517 = vpop.f32.mrb[0].mxu0
        %6518 = vmatprep.mubr.bf16.mxu0 %v1187
        %6519 = vmatmul.mubr.bf16.gmra.mrb[0].mxu0 %v975
        %v6520 = vpop.f32.mrb[0].mxu0
        %v6521 = vadd.f32 0.0, %v6520
        %v6522 = vpop.f32.mrb[0].mxu0
        %v6523 = vpop.f32.mrb[0].mxu0
        %v6524 = vadd.f32 0.0, %v6523
        %v6525 = vpop.f32.mrb[0].mxu0
        %6526 = vmatprep.mubr.bf16.mxu0 %v1190
        %6527 = vmatmul.mubr.bf16.gmra.mrb[0].mxu0 %v977
        %v6528 = vpop.f32.mrb[0].mxu0
        %v6529 = vadd.f32 0.0, %v6528
        %v6530 = vpop.f32.mrb[0].mxu0
        %v6531 = vpop.f32.mrb[0].mxu0
        %v6532 = vadd.f32 0.0, %v6531
        %v6533 = vpop.f32.mrb[0].mxu0
        %6534 = vmatprep.mubr.bf16.mxu0 %v1193
        %6535 = vmatmul.mubr.bf16.gmra.mrb[0].mxu0 %v979
        %v6536 = vpop.f32.mrb[0].mxu0
        %v6537 = vadd.f32 0.0, %v6536
        %v6538 = vpop.f32.mrb[0].mxu0
        %v6539 = vpop.f32.mrb[0].mxu0
        %v6540 = vadd.f32 0.0, %v6539
        %v6541 = vpop.f32.mrb[0].mxu0
        %6542 = vmatprep.mubr.bf16.mxu0 %v1196
        %6543 = vmatmul.mubr.bf16.gmra.mrb[0].mxu0 %v981
        %v6544 = vpop.f32.mrb[0].mxu0
        %v6545 = vadd.f32 0.0, %v6544
        %v6546 = vpop.f32.mrb[0].mxu0
        %v6547 = vpop.f32.mrb[0].mxu0
        %v6548 = vadd.f32 0.0, %v6547
        %v6549 = vpop.f32.mrb[0].mxu0
        %6550 = vdwg.mxu0
        %v6551 = vmax.f32 %v6233, %v6313
        %v6552 = vmax.f32 %v6236, %v6316
        %v6553 = vmax.f32 %v6241, %v6321
        %v6554 = vmax.f32 %v6244, %v6324
        %v6555 = vmax.f32 %v6249, %v6329
        %v6556 = vmax.f32 %v6252, %v6332
        %v6557 = vmax.f32 %v6257, %v6337
        %v6558 = vmax.f32 %v6260, %v6340
        %v6559 = vmax.f32 %v6265, %v6345
        %v6560 = vmax.f32 %v6268, %v6348
        %v6561 = vmax.f32 %v6273, %v6353
        %v6562 = vmax.f32 %v6276, %v6356
        %v6563 = vmax.f32 %v6281, %v6361
        %v6564 = vmax.f32 %v6284, %v6364
        %v6565 = vmax.f32 %v6289, %v6369
        %v6566 = vmax.f32 %v6292, %v6372
        %v6567 = vmax.f32 %v6297, %v6377
        %v6568 = vmax.f32 %v6300, %v6380
        %v6569 = vmax.f32 %v6305, %v6385
        %v6570 = vmax.f32 %v6308, %v6388
        %v6571 = vmax.f32 %v6393, %v6473
        %v6572 = vmax.f32 %v6396, %v6476
        %v6573 = vmax.f32 %v6401, %v6481
        %v6574 = vmax.f32 %v6404, %v6484
        %v6575 = vmax.f32 %v6409, %v6489
        %v6576 = vmax.f32 %v6412, %v6492
        %v6577 = vmax.f32 %v6417, %v6497
        %v6578 = vmax.f32 %v6420, %v6500
        %v6579 = vmax.f32 %v6425, %v6505
        %v6580 = vmax.f32 %v6428, %v6508
        %v6581 = vmax.f32 %v6433, %v6513
        %v6582 = vmax.f32 %v6436, %v6516
        %v6583 = vmax.f32 %v6441, %v6521
        %v6584 = vmax.f32 %v6444, %v6524
        %v6585 = vmax.f32 %v6449, %v6529
        %v6586 = vmax.f32 %v6452, %v6532
        %v6587 = vmax.f32 %v6457, %v6537
        %v6588 = vmax.f32 %v6460, %v6540
        %v6589 = vmax.f32 %v6465, %v6545
        %v6590 = vmax.f32 %v6468, %v6548
        %v6591 = vmax.f32 %v6551, %v6571
        %v6592 = vmax.f32 %v6552, %v6572
        %v6593 = vmax.f32 %v6553, %v6573
        %v6594 = vmax.f32 %v6554, %v6574
        %v6595 = vmax.f32 %v6555, %v6575
        %v6596 = vmax.f32 %v6556, %v6576
        %v6597 = vmax.f32 %v6557, %v6577
        %v6598 = vmax.f32 %v6558, %v6578
        %v6599 = vmax.f32 %v6559, %v6579
        %v6600 = vmax.f32 %v6560, %v6580
        %v6601 = vmax.f32 %v6561, %v6581
        %v6602 = vmax.f32 %v6562, %v6582
        %v6603 = vmax.f32 %v6563, %v6583
        %v6604 = vmax.f32 %v6564, %v6584
        %v6605 = vmax.f32 %v6565, %v6585
        %v6606 = vmax.f32 %v6566, %v6586
        %v6607 = vmax.f32 %v6567, %v6587
        %v6608 = vmax.f32 %v6568, %v6588
        %v6609 = vmax.f32 %v6569, %v6589
        %v6610 = vmax.f32 %v6570, %v6590
        %v6611 = vadd.f32 %v6591, %v1614
        %v6612 = vadd.f32 %v6592, %v1619
        %v6613 = vadd.f32 %v6593, %v1624
        %v6614 = vadd.f32 %v6594, %v1629
        %v6615 = vadd.f32 %v6595, %v1634
        %v6616 = vadd.f32 %v6596, %v1639
        %v6617 = vadd.f32 %v6597, %v1644
        %v6618 = vadd.f32 %v6598, %v1649
        %v6619 = vadd.f32 %v6599, %v1654
        %v6620 = vadd.f32 %v6600, %v1659
        %v6621 = vadd.f32 %v6601, %v1664
        %v6622 = vadd.f32 %v6602, %v1669
        %v6623 = vadd.f32 %v6603, %v1674
        %v6624 = vadd.f32 %v6604, %v1679
        %v6625 = vadd.f32 %v6605, %v1684
        %v6626 = vadd.f32 %v6606, %v1689
        %v6627 = vadd.f32 %v6607, %v1694
        %v6628 = vadd.f32 %v6608, %v1699
        %v6629 = vadd.f32 %v6609, %v1704
        %v6630 = vadd.f32 %v6610, %v1709
        %v6631 = vmax.f32 %v6611, 0.0
        %v6632 = vmax.f32 %v6612, 0.0
        %v6633 = vmax.f32 %v6613, 0.0
        %v6634 = vmax.f32 %v6614, 0.0
        %v6635 = vmax.f32 %v6615, 0.0
        %v6636 = vmax.f32 %v6616, 0.0
        %v6637 = vmax.f32 %v6617, 0.0
        %v6638 = vmax.f32 %v6618, 0.0
        %v6639 = vmax.f32 %v6619, 0.0
        %v6640 = vmax.f32 %v6620, 0.0
        %v6641 = vmax.f32 %v6621, 0.0
        %v6642 = vmax.f32 %v6622, 0.0
        %v6643 = vmax.f32 %v6623, 0.0
        %v6644 = vmax.f32 %v6624, 0.0
        %v6645 = vmax.f32 %v6625, 0.0
        %v6646 = vmax.f32 %v6626, 0.0
        %v6647 = vmax.f32 %v6627, 0.0
        %v6648 = vmax.f32 %v6628, 0.0
        %v6649 = vmax.f32 %v6629, 0.0
        %v6650 = vmax.f32 %v6630, 0.0
        %s6651 = scalar_lea.vmem %s3, 256
        %v6652 = vld [vmem:[%s6651] sm:$0xff]
        %v6653 = vld [vmem:[%s6651 + $0x8] sm:$0xff]
        %v6654 = vld [vmem:[%s6651 + $0x10] sm:$0xff]
        %v6655 = vld [vmem:[%s6651 + $0x18] sm:$0xff]
        %v6657 = vsel %vm2285, %v6653, 0
        %v6660 = vsel %vm2285, %v6655, 0
        %6662 = vmatprep.subr.mxu0 0.0
        %6663 = vmatpush1.msra.mxu0 %v6631
        %6664 = vmatprep.subr.mxu0 0.0
        %6665 = vmatpush1.msra.mxu0 %v6632
        %6666 = vmatprep.subr.mxu0 0.0
        %6667 = vmatpush1.msra.mxu0 %v6633
        %6668 = vmatprep.subr.mxu0 0.0
        %6669 = vmatpush1.msra.mxu0 %v6634
        %6670 = vmatprep.subr.mxu0 0.0
        %6671 = vmatpush1.msra.mxu0 %v6635
        %6672 = vmatprep.subr.mxu0 0.0
        %6673 = vmatpush1.msra.mxu0 %v6636
        %6674 = vmatprep.subr.mxu0 0.0
        %6675 = vmatpush1.msra.mxu0 %v6637
        %6676 = vmatprep.subr.mxu0 0.0
        %6677 = vmatpush1.msra.mxu0 %v6638
        %6678 = vmatprep.subr.mxu0 0.0
        %6679 = vmatpush1.msra.mxu0 %v6639
        %6680 = vmatprep.subr.mxu0 0.0
        %6681 = vmatpush1.msra.mxu0 %v6640
        %6682 = vmatprep.subr.mxu0 0.0
        %6683 = vmatpush1.msra.mxu0 %v6641
        %6684 = vmatprep.subr.mxu0 0.0
        %6685 = vmatpush1.msra.mxu0 %v6642
        %6686 = vmatprep.subr.mxu0 0.0
        %6687 = vmatpush1.msra.mxu0 %v6643
        %6688 = vmatprep.subr.mxu0 0.0
        %6689 = vmatpush1.msra.mxu0 %v6644
        %6690 = vmatprep.subr.mxu0 0.0
        %6691 = vmatpush1.msra.mxu0 %v6645
        %6692 = vmatprep.subr.mxu0 0.0
        %6693 = vmatpush1.msra.mxu0 %v6646
        %6694 = vmatprep.subr.mxu0 0.0
        %6695 = vmatpush1.msra.mxu0 %v6647
        %6696 = vmatprep.subr.mxu0 0.0
        %6697 = vmatpush1.msra.mxu0 %v6648
        %6698 = vmatprep.subr.mxu0 0.0
        %6699 = vmatpush1.msra.mxu0 %v6649
        %6700 = vmatprep.subr.mxu0 0.0
        %6701 = vmatpush1.msra.mxu0 %v6650
        %6702 = vmatprep.subr.mxu0 0.0
        %6703 = vmatpush1.msra.mxu0 0.0
        %6704 = vmatprep.subr.mxu0 0.0
        %6705 = vmatpush1.msra.mxu0 0.0
        %6706 = vmatprep.subr.mxu0 0.0
        %6707 = vmatpush1.msra.mxu0 0.0
        %6708 = vmatprep.subr.mxu0 0.0
        %6709 = vmatpush1.msra.mxu0 0.0
        %6710 = vmatprep.subr.mxu0 0.0
        %6711 = vmatpush1.msra.mxu0 0.0
        %6712 = vmatprep.subr.mxu0 0.0
        %6713 = vmatpush1.msra.mxu0 0.0
        %6714 = vmatprep.subr.mxu0 0.0
        %6715 = vmatpush1.msra.mxu0 0.0
        %6716 = vmatprep.subr.mxu0 0.0
        %6717 = vmatpush1.msra.mxu0 0.0
        %6718 = vmatprep.subr.mxu0 0.0
        %6719 = vmatpush1.msra.mxu0 0.0
        %6720 = vmatprep.subr.mxu0 0.0
        %6721 = vmatpush1.msra.mxu0 0.0
        %6722 = vmatprep.subr.mxu0 0.0
        %6723 = vmatpush1.msra.mxu0 0.0
        %6724 = vmatprep.subr.mxu0 0.0
        %6725 = vmatpush1.msra.mxu0 0.0
        %6726 = vmatprep.mubr.f32.mxu0 %v6657
        %6727 = vmatmul.mubr.f32.gmra.mrb[0].mxu0 %v6652
        %v6728 = vpop.f32.mrb[0].mxu0
        %v6729 = vadd.f32 0.0, %v6728
        %v6730 = vpop.f32.mrb[0].mxu0
        %6731 = vmatprep.mubr.f32.mxu0 %v6660
        %6732 = vmatmul.mubr.f32.gmra.mrb[0].mxu0 %v6654
        %v6733 = vpop.f32.mrb[0].mxu0
        %v6734 = vadd.f32 0.0, %v6733
        %v6735 = vpop.f32.mrb[0].mxu0
        %6736 = vdwg.mxu0
        %v6737 = vadd.f32 %v6124, %v6729
        %v6738 = vadd.f32 %v6125, %v6734
        %v6739 = vld [vmem:[%s520 + $0xd8] sm:$0xf]
        %v6740 = vld [vmem:[%s520 + $0xdc] sm:$0xf]
        %v6741 = vld [vmem:[%s520 + $0xe0] sm:$0xf]
        %v6742 = vld [vmem:[%s520 + $0xe4] sm:$0xf]
        %v6743 = vld [vmem:[%s520 + $0xe8] sm:$0xf]
        %v6744 = vld [vmem:[%s520 + $0xec] sm:$0xf]
        %v6745 = vld [vmem:[%s520 + $0xf0] sm:$0xf]
        %v6746 = vld [vmem:[%s520 + $0xf4] sm:$0xf]
        %v6747 = vld [vmem:[%s520 + $0xf8] sm:$0xf]
        %v6748 = vld [vmem:[%s520 + $0xfc] sm:$0xf]
        %v6749 = vld [vmem:[%s520 + $0x100] sm:$0xf]
        %v6750 = vld [vmem:[%s520 + $0x104] sm:$0xf]
        %v6751 = vld [vmem:[%s520 + $0x108] sm:$0xf]
        %v6752 = vld [vmem:[%s520 + $0x10c] sm:$0xf]
        %v6753 = vld [vmem:[%s520 + $0x110] sm:$0xf]
        %v6754 = vld [vmem:[%s520 + $0x114] sm:$0xf]
        %v6755 = vld [vmem:[%s520 + $0x118] sm:$0xf]
        %v6756 = vld [vmem:[%s520 + $0x11c] sm:$0xf]
        %v6775 = vunpack.c.l.b16 %v6739
        %v6776 = vunpack.c.l.b16 %v6740
        %v6777 = vunpack.c.l.b16 %v6741
        %v6778 = vunpack.c.l.b16 %v6742
        %v6779 = vunpack.c.l.b16 %v6743
        %v6780 = vunpack.c.l.b16 %v6744
        %v6781 = vunpack.c.l.b16 %v6745
        %v6782 = vunpack.c.l.b16 %v6746
        %v6783 = vunpack.c.l.b16 %v6747
        %v6784 = vunpack.c.l.b16 %v6748
        %v6785 = vunpack.c.l.b16 %v6749
        %v6786 = vunpack.c.l.b16 %v6750
        %v6787 = vunpack.c.l.b16 %v6751
        %v6788 = vunpack.c.l.b16 %v6752
        %v6789 = vunpack.c.l.b16 %v6753
        %v6790 = vunpack.c.l.b16 %v6754
        %v6791 = vunpack.c.l.b16 %v6755
        %v6792 = vunpack.c.l.b16 %v6756
        %v6793 = vpack.c.b16 %v6776, %v6775
        %v6794 = vpack.c.b16 %v6778, %v6777
        %v6795 = vpack.c.b16 %v6780, %v6779
        %v6796 = vpack.c.b16 %v6782, %v6781
        %v6797 = vpack.c.b16 %v6784, %v6783
        %v6798 = vpack.c.b16 %v6786, %v6785
        %v6799 = vpack.c.b16 %v6788, %v6787
        %v6800 = vpack.c.b16 %v6790, %v6789
        %v6801 = vpack.c.b16 %v6792, %v6791
        %6811 = vmatprep.subr.bf16.mxu0 0
        %6812 = vmatpush1.bf16.msra.mxu0 %v6793
        %6813 = vmatprep.subr.bf16.mxu0 0
        %6814 = vmatpush1.bf16.msra.mxu0 %v6794
        %6815 = vmatprep.subr.bf16.mxu0 0
        %6816 = vmatpush1.bf16.msra.mxu0 %v6795
        %6817 = vmatprep.subr.bf16.mxu0 0
        %6818 = vmatpush1.bf16.msra.mxu0 %v6796
        %6819 = vmatprep.subr.bf16.mxu0 0
        %6820 = vmatpush1.bf16.msra.mxu0 %v6797
        %6821 = vmatprep.subr.bf16.mxu0 0
        %6822 = vmatpush1.bf16.msra.mxu0 %v6798
        %6823 = vmatprep.subr.bf16.mxu0 0
        %6824 = vmatpush1.bf16.msra.mxu0 %v6799
        %6825 = vmatprep.subr.bf16.mxu0 0
        %6826 = vmatpush1.bf16.msra.mxu0 %v6800
        %6827 = vmatprep.subr.bf16.mxu0 0
        %6828 = vmatpush1.bf16.msra.mxu0 %v6801
        %6829 = vmatprep.subr.bf16.mxu0 0
        %6830 = vmatpush1.bf16.msra.mxu0 0
        %6831 = vmatprep.subr.bf16.mxu0 0
        %6832 = vmatpush1.bf16.msra.mxu0 0
        %6833 = vmatprep.subr.bf16.mxu0 0
        %6834 = vmatpush1.bf16.msra.mxu0 0
        %6835 = vmatprep.subr.bf16.mxu0 0
        %6836 = vmatpush1.bf16.msra.mxu0 0
        %6837 = vmatprep.subr.bf16.mxu0 0
        %6838 = vmatpush1.bf16.msra.mxu0 0
        %6839 = vmatprep.subr.bf16.mxu0 0
        %6840 = vmatpush1.bf16.msra.mxu0 0
        %6841 = vmatprep.subr.bf16.mxu0 0
        %6842 = vmatpush1.bf16.msra.mxu0 0
        %6843 = vmatprep.mubr.bf16.mxu0 %v1079
        %6844 = vmatmul.mubr.bf16.gmra.mrb[0].mxu0 %v903
        %v6845 = vpop.f32.mrb[0].mxu0
        %v6846 = vadd.f32 0.0, %v6845
        %v6847 = vpop.f32.mrb[0].mxu0
        %v6848 = vpop.f32.mrb[0].mxu0
        %v6849 = vadd.f32 0.0, %v6848
        %v6850 = vpop.f32.mrb[0].mxu0
        %6851 = vmatprep.mubr.bf16.mxu0 %v1082
        %6852 = vmatmul.mubr.bf16.gmra.mrb[0].mxu0 %v905
        %v6853 = vpop.f32.mrb[0].mxu0
        %v6854 = vadd.f32 0.0, %v6853
        %v6855 = vpop.f32.mrb[0].mxu0
        %v6856 = vpop.f32.mrb[0].mxu0
        %v6857 = vadd.f32 0.0, %v6856
        %v6858 = vpop.f32.mrb[0].mxu0
        %6859 = vmatprep.mubr.bf16.mxu0 %v1085
        %6860 = vmatmul.mubr.bf16.gmra.mrb[0].mxu0 %v907
        %v6861 = vpop.f32.mrb[0].mxu0
        %v6862 = vadd.f32 0.0, %v6861
        %v6863 = vpop.f32.mrb[0].mxu0
        %v6864 = vpop.f32.mrb[0].mxu0
        %v6865 = vadd.f32 0.0, %v6864
        %v6866 = vpop.f32.mrb[0].mxu0
        %6867 = vmatprep.mubr.bf16.mxu0 %v1088
        %6868 = vmatmul.mubr.bf16.gmra.mrb[0].mxu0 %v909
        %v6869 = vpop.f32.mrb[0].mxu0
        %v6870 = vadd.f32 0.0, %v6869
        %v6871 = vpop.f32.mrb[0].mxu0
        %v6872 = vpop.f32.mrb[0].mxu0
        %v6873 = vadd.f32 0.0, %v6872
        %v6874 = vpop.f32.mrb[0].mxu0
        %6875 = vmatprep.mubr.bf16.mxu0 %v1091
        %6876 = vmatmul.mubr.bf16.gmra.mrb[0].mxu0 %v911
        %v6877 = vpop.f32.mrb[0].mxu0
        %v6878 = vadd.f32 0.0, %v6877
        %v6879 = vpop.f32.mrb[0].mxu0
        %v6880 = vpop.f32.mrb[0].mxu0
        %v6881 = vadd.f32 0.0, %v6880
        %v6882 = vpop.f32.mrb[0].mxu0
        %6883 = vmatprep.mubr.bf16.mxu0 %v1094
        %6884 = vmatmul.mubr.bf16.gmra.mrb[0].mxu0 %v913
        %v6885 = vpop.f32.mrb[0].mxu0
        %v6886 = vadd.f32 0.0, %v6885
        %v6887 = vpop.f32.mrb[0].mxu0
        %v6888 = vpop.f32.mrb[0].mxu0
        %v6889 = vadd.f32 0.0, %v6888
        %v6890 = vpop.f32.mrb[0].mxu0
        %6891 = vmatprep.mubr.bf16.mxu0 %v1097
        %6892 = vmatmul.mubr.bf16.gmra.mrb[0].mxu0 %v915
        %v6893 = vpop.f32.mrb[0].mxu0
        %v6894 = vadd.f32 0.0, %v6893
        %v6895 = vpop.f32.mrb[0].mxu0
        %v6896 = vpop.f32.mrb[0].mxu0
        %v6897 = vadd.f32 0.0, %v6896
        %v6898 = vpop.f32.mrb[0].mxu0
        %6899 = vmatprep.mubr.bf16.mxu0 %v1100
        %6900 = vmatmul.mubr.bf16.gmra.mrb[0].mxu0 %v917
        %v6901 = vpop.f32.mrb[0].mxu0
        %v6902 = vadd.f32 0.0, %v6901
        %v6903 = vpop.f32.mrb[0].mxu0
        %v6904 = vpop.f32.mrb[0].mxu0
        %v6905 = vadd.f32 0.0, %v6904
        %v6906 = vpop.f32.mrb[0].mxu0
        %6907 = vmatprep.mubr.bf16.mxu0 %v1103
        %6908 = vmatmul.mubr.bf16.gmra.mrb[0].mxu0 %v919
        %v6909 = vpop.f32.mrb[0].mxu0
        %v6910 = vadd.f32 0.0, %v6909
        %v6911 = vpop.f32.mrb[0].mxu0
        %v6912 = vpop.f32.mrb[0].mxu0
        %v6913 = vadd.f32 0.0, %v6912
        %v6914 = vpop.f32.mrb[0].mxu0
        %6915 = vmatprep.mubr.bf16.mxu0 %v1106
        %6916 = vmatmul.mubr.bf16.gmra.mrb[0].mxu0 %v921
        %v6917 = vpop.f32.mrb[0].mxu0
        %v6918 = vadd.f32 0.0, %v6917
        %v6919 = vpop.f32.mrb[0].mxu0
        %v6920 = vpop.f32.mrb[0].mxu0
        %v6921 = vadd.f32 0.0, %v6920
        %v6922 = vpop.f32.mrb[0].mxu0
        %6923 = vmatprep.mubr.bf16.mxu0 %v1109
        %6924 = vmatmul.mubr.bf16.gmra.mrb[0].mxu0 %v923
        %v6925 = vpop.f32.mrb[0].mxu0
        %v6926 = vadd.f32 0.0, %v6925
        %v6927 = vpop.f32.mrb[0].mxu0
        %v6928 = vpop.f32.mrb[0].mxu0
        %v6929 = vadd.f32 0.0, %v6928
        %v6930 = vpop.f32.mrb[0].mxu0
        %6931 = vmatprep.mubr.bf16.mxu0 %v1112
        %6932 = vmatmul.mubr.bf16.gmra.mrb[0].mxu0 %v925
        %v6933 = vpop.f32.mrb[0].mxu0
        %v6934 = vadd.f32 0.0, %v6933
        %v6935 = vpop.f32.mrb[0].mxu0
        %v6936 = vpop.f32.mrb[0].mxu0
        %v6937 = vadd.f32 0.0, %v6936
        %v6938 = vpop.f32.mrb[0].mxu0
        %6939 = vmatprep.mubr.bf16.mxu0 %v1115
        %6940 = vmatmul.mubr.bf16.gmra.mrb[0].mxu0 %v927
        %v6941 = vpop.f32.mrb[0].mxu0
        %v6942 = vadd.f32 0.0, %v6941
        %v6943 = vpop.f32.mrb[0].mxu0
        %v6944 = vpop.f32.mrb[0].mxu0
        %v6945 = vadd.f32 0.0, %v6944
        %v6946 = vpop.f32.mrb[0].mxu0
        %6947 = vmatprep.mubr.bf16.mxu0 %v1118
        %6948 = vmatmul.mubr.bf16.gmra.mrb[0].mxu0 %v929
        %v6949 = vpop.f32.mrb[0].mxu0
        %v6950 = vadd.f32 0.0, %v6949
        %v6951 = vpop.f32.mrb[0].mxu0
        %v6952 = vpop.f32.mrb[0].mxu0
        %v6953 = vadd.f32 0.0, %v6952
        %v6954 = vpop.f32.mrb[0].mxu0
        %6955 = vmatprep.mubr.bf16.mxu0 %v1121
        %6956 = vmatmul.mubr.bf16.gmra.mrb[0].mxu0 %v931
        %v6957 = vpop.f32.mrb[0].mxu0
        %v6958 = vadd.f32 0.0, %v6957
        %v6959 = vpop.f32.mrb[0].mxu0
        %v6960 = vpop.f32.mrb[0].mxu0
        %v6961 = vadd.f32 0.0, %v6960
        %v6962 = vpop.f32.mrb[0].mxu0
        %6963 = vmatprep.mubr.bf16.mxu0 %v1124
        %6964 = vmatmul.mubr.bf16.gmra.mrb[0].mxu0 %v933
        %v6965 = vpop.f32.mrb[0].mxu0
        %v6966 = vadd.f32 0.0, %v6965
        %v6967 = vpop.f32.mrb[0].mxu0
        %v6968 = vpop.f32.mrb[0].mxu0
        %v6969 = vadd.f32 0.0, %v6968
        %v6970 = vpop.f32.mrb[0].mxu0
        %6971 = vmatprep.mubr.bf16.mxu0 %v1127
        %6972 = vmatmul.mubr.bf16.gmra.mrb[0].mxu0 %v935
        %v6973 = vpop.f32.mrb[0].mxu0
        %v6974 = vadd.f32 0.0, %v6973
        %v6975 = vpop.f32.mrb[0].mxu0
        %v6976 = vpop.f32.mrb[0].mxu0
        %v6977 = vadd.f32 0.0, %v6976
        %v6978 = vpop.f32.mrb[0].mxu0
        %6979 = vmatprep.mubr.bf16.mxu0 %v1130
        %6980 = vmatmul.mubr.bf16.gmra.mrb[0].mxu0 %v937
        %v6981 = vpop.f32.mrb[0].mxu0
        %v6982 = vadd.f32 0.0, %v6981
        %v6983 = vpop.f32.mrb[0].mxu0
        %v6984 = vpop.f32.mrb[0].mxu0
        %v6985 = vadd.f32 0.0, %v6984
        %v6986 = vpop.f32.mrb[0].mxu0
        %6987 = vmatprep.mubr.bf16.mxu0 %v1133
        %6988 = vmatmul.mubr.bf16.gmra.mrb[0].mxu0 %v939
        %v6989 = vpop.f32.mrb[0].mxu0
        %v6990 = vadd.f32 0.0, %v6989
        %v6991 = vpop.f32.mrb[0].mxu0
        %v6992 = vpop.f32.mrb[0].mxu0
        %v6993 = vadd.f32 0.0, %v6992
        %v6994 = vpop.f32.mrb[0].mxu0
        %6995 = vmatprep.mubr.bf16.mxu0 %v1136
        %6996 = vmatmul.mubr.bf16.gmra.mrb[0].mxu0 %v941
        %v6997 = vpop.f32.mrb[0].mxu0
        %v6998 = vadd.f32 0.0, %v6997
        %v6999 = vpop.f32.mrb[0].mxu0
        %v7000 = vpop.f32.mrb[0].mxu0
        %v7001 = vadd.f32 0.0, %v7000
        %v7002 = vpop.f32.mrb[0].mxu0
        %7003 = vmatprep.mubr.bf16.mxu0 %v1139
        %7004 = vmatmul.mubr.bf16.gmra.mrb[0].mxu0 %v943
        %v7005 = vpop.f32.mrb[0].mxu0
        %v7006 = vadd.f32 0.0, %v7005
        %v7007 = vpop.f32.mrb[0].mxu0
        %v7008 = vpop.f32.mrb[0].mxu0
        %v7009 = vadd.f32 0.0, %v7008
        %v7010 = vpop.f32.mrb[0].mxu0
        %7011 = vmatprep.mubr.bf16.mxu0 %v1142
        %7012 = vmatmul.mubr.bf16.gmra.mrb[0].mxu0 %v945
        %v7013 = vpop.f32.mrb[0].mxu0
        %v7014 = vadd.f32 0.0, %v7013
        %v7015 = vpop.f32.mrb[0].mxu0
        %v7016 = vpop.f32.mrb[0].mxu0
        %v7017 = vadd.f32 0.0, %v7016
        %v7018 = vpop.f32.mrb[0].mxu0
        %7019 = vmatprep.mubr.bf16.mxu0 %v1145
        %7020 = vmatmul.mubr.bf16.gmra.mrb[0].mxu0 %v947
        %v7021 = vpop.f32.mrb[0].mxu0
        %v7022 = vadd.f32 0.0, %v7021
        %v7023 = vpop.f32.mrb[0].mxu0
        %v7024 = vpop.f32.mrb[0].mxu0
        %v7025 = vadd.f32 0.0, %v7024
        %v7026 = vpop.f32.mrb[0].mxu0
        %7027 = vmatprep.mubr.bf16.mxu0 %v1148
        %7028 = vmatmul.mubr.bf16.gmra.mrb[0].mxu0 %v949
        %v7029 = vpop.f32.mrb[0].mxu0
        %v7030 = vadd.f32 0.0, %v7029
        %v7031 = vpop.f32.mrb[0].mxu0
        %v7032 = vpop.f32.mrb[0].mxu0
        %v7033 = vadd.f32 0.0, %v7032
        %v7034 = vpop.f32.mrb[0].mxu0
        %7035 = vmatprep.mubr.bf16.mxu0 %v1151
        %7036 = vmatmul.mubr.bf16.gmra.mrb[0].mxu0 %v951
        %v7037 = vpop.f32.mrb[0].mxu0
        %v7038 = vadd.f32 0.0, %v7037
        %v7039 = vpop.f32.mrb[0].mxu0
        %v7040 = vpop.f32.mrb[0].mxu0
        %v7041 = vadd.f32 0.0, %v7040
        %v7042 = vpop.f32.mrb[0].mxu0
        %7043 = vmatprep.mubr.bf16.mxu0 %v1154
        %7044 = vmatmul.mubr.bf16.gmra.mrb[0].mxu0 %v953
        %v7045 = vpop.f32.mrb[0].mxu0
        %v7046 = vadd.f32 0.0, %v7045
        %v7047 = vpop.f32.mrb[0].mxu0
        %v7048 = vpop.f32.mrb[0].mxu0
        %v7049 = vadd.f32 0.0, %v7048
        %v7050 = vpop.f32.mrb[0].mxu0
        %7051 = vmatprep.mubr.bf16.mxu0 %v1157
        %7052 = vmatmul.mubr.bf16.gmra.mrb[0].mxu0 %v955
        %v7053 = vpop.f32.mrb[0].mxu0
        %v7054 = vadd.f32 0.0, %v7053
        %v7055 = vpop.f32.mrb[0].mxu0
        %v7056 = vpop.f32.mrb[0].mxu0
        %v7057 = vadd.f32 0.0, %v7056
        %v7058 = vpop.f32.mrb[0].mxu0
        %7059 = vmatprep.mubr.bf16.mxu0 %v1160
        %7060 = vmatmul.mubr.bf16.gmra.mrb[0].mxu0 %v957
        %v7061 = vpop.f32.mrb[0].mxu0
        %v7062 = vadd.f32 0.0, %v7061
        %v7063 = vpop.f32.mrb[0].mxu0
        %v7064 = vpop.f32.mrb[0].mxu0
        %v7065 = vadd.f32 0.0, %v7064
        %v7066 = vpop.f32.mrb[0].mxu0
        %7067 = vmatprep.mubr.bf16.mxu0 %v1163
        %7068 = vmatmul.mubr.bf16.gmra.mrb[0].mxu0 %v959
        %v7069 = vpop.f32.mrb[0].mxu0
        %v7070 = vadd.f32 0.0, %v7069
        %v7071 = vpop.f32.mrb[0].mxu0
        %v7072 = vpop.f32.mrb[0].mxu0
        %v7073 = vadd.f32 0.0, %v7072
        %v7074 = vpop.f32.mrb[0].mxu0
        %7075 = vmatprep.mubr.bf16.mxu0 %v1166
        %7076 = vmatmul.mubr.bf16.gmra.mrb[0].mxu0 %v961
        %v7077 = vpop.f32.mrb[0].mxu0
        %v7078 = vadd.f32 0.0, %v7077
        %v7079 = vpop.f32.mrb[0].mxu0
        %v7080 = vpop.f32.mrb[0].mxu0
        %v7081 = vadd.f32 0.0, %v7080
        %v7082 = vpop.f32.mrb[0].mxu0
        %7083 = vmatprep.mubr.bf16.mxu0 %v1169
        %7084 = vmatmul.mubr.bf16.gmra.mrb[0].mxu0 %v963
        %v7085 = vpop.f32.mrb[0].mxu0
        %v7086 = vadd.f32 0.0, %v7085
        %v7087 = vpop.f32.mrb[0].mxu0
        %v7088 = vpop.f32.mrb[0].mxu0
        %v7089 = vadd.f32 0.0, %v7088
        %v7090 = vpop.f32.mrb[0].mxu0
        %7091 = vmatprep.mubr.bf16.mxu0 %v1172
        %7092 = vmatmul.mubr.bf16.gmra.mrb[0].mxu0 %v965
        %v7093 = vpop.f32.mrb[0].mxu0
        %v7094 = vadd.f32 0.0, %v7093
        %v7095 = vpop.f32.mrb[0].mxu0
        %v7096 = vpop.f32.mrb[0].mxu0
        %v7097 = vadd.f32 0.0, %v7096
        %v7098 = vpop.f32.mrb[0].mxu0
        %7099 = vmatprep.mubr.bf16.mxu0 %v1175
        %7100 = vmatmul.mubr.bf16.gmra.mrb[0].mxu0 %v967
        %v7101 = vpop.f32.mrb[0].mxu0
        %v7102 = vadd.f32 0.0, %v7101
        %v7103 = vpop.f32.mrb[0].mxu0
        %v7104 = vpop.f32.mrb[0].mxu0
        %v7105 = vadd.f32 0.0, %v7104
        %v7106 = vpop.f32.mrb[0].mxu0
        %7107 = vmatprep.mubr.bf16.mxu0 %v1178
        %7108 = vmatmul.mubr.bf16.gmra.mrb[0].mxu0 %v969
        %v7109 = vpop.f32.mrb[0].mxu0
        %v7110 = vadd.f32 0.0, %v7109
        %v7111 = vpop.f32.mrb[0].mxu0
        %v7112 = vpop.f32.mrb[0].mxu0
        %v7113 = vadd.f32 0.0, %v7112
        %v7114 = vpop.f32.mrb[0].mxu0
        %7115 = vmatprep.mubr.bf16.mxu0 %v1181
        %7116 = vmatmul.mubr.bf16.gmra.mrb[0].mxu0 %v971
        %v7117 = vpop.f32.mrb[0].mxu0
        %v7118 = vadd.f32 0.0, %v7117
        %v7119 = vpop.f32.mrb[0].mxu0
        %v7120 = vpop.f32.mrb[0].mxu0
        %v7121 = vadd.f32 0.0, %v7120
        %v7122 = vpop.f32.mrb[0].mxu0
        %7123 = vmatprep.mubr.bf16.mxu0 %v1184
        %7124 = vmatmul.mubr.bf16.gmra.mrb[0].mxu0 %v973
        %v7125 = vpop.f32.mrb[0].mxu0
        %v7126 = vadd.f32 0.0, %v7125
        %v7127 = vpop.f32.mrb[0].mxu0
        %v7128 = vpop.f32.mrb[0].mxu0
        %v7129 = vadd.f32 0.0, %v7128
        %v7130 = vpop.f32.mrb[0].mxu0
        %7131 = vmatprep.mubr.bf16.mxu0 %v1187
        %7132 = vmatmul.mubr.bf16.gmra.mrb[0].mxu0 %v975
        %v7133 = vpop.f32.mrb[0].mxu0
        %v7134 = vadd.f32 0.0, %v7133
        %v7135 = vpop.f32.mrb[0].mxu0
        %v7136 = vpop.f32.mrb[0].mxu0
        %v7137 = vadd.f32 0.0, %v7136
        %v7138 = vpop.f32.mrb[0].mxu0
        %7139 = vmatprep.mubr.bf16.mxu0 %v1190
        %7140 = vmatmul.mubr.bf16.gmra.mrb[0].mxu0 %v977
        %v7141 = vpop.f32.mrb[0].mxu0
        %v7142 = vadd.f32 0.0, %v7141
        %v7143 = vpop.f32.mrb[0].mxu0
        %v7144 = vpop.f32.mrb[0].mxu0
        %v7145 = vadd.f32 0.0, %v7144
        %v7146 = vpop.f32.mrb[0].mxu0
        %7147 = vmatprep.mubr.bf16.mxu0 %v1193
        %7148 = vmatmul.mubr.bf16.gmra.mrb[0].mxu0 %v979
        %v7149 = vpop.f32.mrb[0].mxu0
        %v7150 = vadd.f32 0.0, %v7149
        %v7151 = vpop.f32.mrb[0].mxu0
        %v7152 = vpop.f32.mrb[0].mxu0
        %v7153 = vadd.f32 0.0, %v7152
        %v7154 = vpop.f32.mrb[0].mxu0
        %7155 = vmatprep.mubr.bf16.mxu0 %v1196
        %7156 = vmatmul.mubr.bf16.gmra.mrb[0].mxu0 %v981
        %v7157 = vpop.f32.mrb[0].mxu0
        %v7158 = vadd.f32 0.0, %v7157
        %v7159 = vpop.f32.mrb[0].mxu0
        %v7160 = vpop.f32.mrb[0].mxu0
        %v7161 = vadd.f32 0.0, %v7160
        %v7162 = vpop.f32.mrb[0].mxu0
        %7163 = vdwg.mxu0
        %v7164 = vmax.f32 %v6846, %v6926
        %v7165 = vmax.f32 %v6849, %v6929
        %v7166 = vmax.f32 %v6854, %v6934
        %v7167 = vmax.f32 %v6857, %v6937
        %v7168 = vmax.f32 %v6862, %v6942
        %v7169 = vmax.f32 %v6865, %v6945
        %v7170 = vmax.f32 %v6870, %v6950
        %v7171 = vmax.f32 %v6873, %v6953
        %v7172 = vmax.f32 %v6878, %v6958
        %v7173 = vmax.f32 %v6881, %v6961
        %v7174 = vmax.f32 %v6886, %v6966
        %v7175 = vmax.f32 %v6889, %v6969
        %v7176 = vmax.f32 %v6894, %v6974
        %v7177 = vmax.f32 %v6897, %v6977
        %v7178 = vmax.f32 %v6902, %v6982
        %v7179 = vmax.f32 %v6905, %v6985
        %v7180 = vmax.f32 %v6910, %v6990
        %v7181 = vmax.f32 %v6913, %v6993
        %v7182 = vmax.f32 %v6918, %v6998
        %v7183 = vmax.f32 %v6921, %v7001
        %v7184 = vmax.f32 %v7006, %v7086
        %v7185 = vmax.f32 %v7009, %v7089
        %v7186 = vmax.f32 %v7014, %v7094
        %v7187 = vmax.f32 %v7017, %v7097
        %v7188 = vmax.f32 %v7022, %v7102
        %v7189 = vmax.f32 %v7025, %v7105
        %v7190 = vmax.f32 %v7030, %v7110
        %v7191 = vmax.f32 %v7033, %v7113
        %v7192 = vmax.f32 %v7038, %v7118
        %v7193 = vmax.f32 %v7041, %v7121
        %v7194 = vmax.f32 %v7046, %v7126
        %v7195 = vmax.f32 %v7049, %v7129
        %v7196 = vmax.f32 %v7054, %v7134
        %v7197 = vmax.f32 %v7057, %v7137
        %v7198 = vmax.f32 %v7062, %v7142
        %v7199 = vmax.f32 %v7065, %v7145
        %v7200 = vmax.f32 %v7070, %v7150
        %v7201 = vmax.f32 %v7073, %v7153
        %v7202 = vmax.f32 %v7078, %v7158
        %v7203 = vmax.f32 %v7081, %v7161
        %v7204 = vmax.f32 %v7164, %v7184
        %v7205 = vmax.f32 %v7165, %v7185
        %v7206 = vmax.f32 %v7166, %v7186
        %v7207 = vmax.f32 %v7167, %v7187
        %v7208 = vmax.f32 %v7168, %v7188
        %v7209 = vmax.f32 %v7169, %v7189
        %v7210 = vmax.f32 %v7170, %v7190
        %v7211 = vmax.f32 %v7171, %v7191
        %v7212 = vmax.f32 %v7172, %v7192
        %v7213 = vmax.f32 %v7173, %v7193
        %v7214 = vmax.f32 %v7174, %v7194
        %v7215 = vmax.f32 %v7175, %v7195
        %v7216 = vmax.f32 %v7176, %v7196
        %v7217 = vmax.f32 %v7177, %v7197
        %v7218 = vmax.f32 %v7178, %v7198
        %v7219 = vmax.f32 %v7179, %v7199
        %v7220 = vmax.f32 %v7180, %v7200
        %v7221 = vmax.f32 %v7181, %v7201
        %v7222 = vmax.f32 %v7182, %v7202
        %v7223 = vmax.f32 %v7183, %v7203
        %v7224 = vadd.f32 %v7204, %v1614
        %v7225 = vadd.f32 %v7205, %v1619
        %v7226 = vadd.f32 %v7206, %v1624
        %v7227 = vadd.f32 %v7207, %v1629
        %v7228 = vadd.f32 %v7208, %v1634
        %v7229 = vadd.f32 %v7209, %v1639
        %v7230 = vadd.f32 %v7210, %v1644
        %v7231 = vadd.f32 %v7211, %v1649
        %v7232 = vadd.f32 %v7212, %v1654
        %v7233 = vadd.f32 %v7213, %v1659
        %v7234 = vadd.f32 %v7214, %v1664
        %v7235 = vadd.f32 %v7215, %v1669
        %v7236 = vadd.f32 %v7216, %v1674
        %v7237 = vadd.f32 %v7217, %v1679
        %v7238 = vadd.f32 %v7218, %v1684
        %v7239 = vadd.f32 %v7219, %v1689
        %v7240 = vadd.f32 %v7220, %v1694
        %v7241 = vadd.f32 %v7221, %v1699
        %v7242 = vadd.f32 %v7222, %v1704
        %v7243 = vadd.f32 %v7223, %v1709
        %v7244 = vmax.f32 %v7224, 0.0
        %v7245 = vmax.f32 %v7225, 0.0
        %v7246 = vmax.f32 %v7226, 0.0
        %v7247 = vmax.f32 %v7227, 0.0
        %v7248 = vmax.f32 %v7228, 0.0
        %v7249 = vmax.f32 %v7229, 0.0
        %v7250 = vmax.f32 %v7230, 0.0
        %v7251 = vmax.f32 %v7231, 0.0
        %v7252 = vmax.f32 %v7232, 0.0
        %v7253 = vmax.f32 %v7233, 0.0
        %v7254 = vmax.f32 %v7234, 0.0
        %v7255 = vmax.f32 %v7235, 0.0
        %v7256 = vmax.f32 %v7236, 0.0
        %v7257 = vmax.f32 %v7237, 0.0
        %v7258 = vmax.f32 %v7238, 0.0
        %v7259 = vmax.f32 %v7239, 0.0
        %v7260 = vmax.f32 %v7240, 0.0
        %v7261 = vmax.f32 %v7241, 0.0
        %v7262 = vmax.f32 %v7242, 0.0
        %v7263 = vmax.f32 %v7243, 0.0
        %s7264 = scalar_lea.vmem %s3, 288
        %v7265 = vld [vmem:[%s7264] sm:$0xff]
        %v7266 = vld [vmem:[%s7264 + $0x8] sm:$0xff]
        %v7267 = vld [vmem:[%s7264 + $0x10] sm:$0xff]
        %v7268 = vld [vmem:[%s7264 + $0x18] sm:$0xff]
        %v7270 = vsel %vm2285, %v7266, 0
        %v7273 = vsel %vm2285, %v7268, 0
        %7275 = vmatprep.subr.mxu0 0.0
        %7276 = vmatpush1.msra.mxu0 %v7244
        %7277 = vmatprep.subr.mxu0 0.0
        %7278 = vmatpush1.msra.mxu0 %v7245
        %7279 = vmatprep.subr.mxu0 0.0
        %7280 = vmatpush1.msra.mxu0 %v7246
        %7281 = vmatprep.subr.mxu0 0.0
        %7282 = vmatpush1.msra.mxu0 %v7247
        %7283 = vmatprep.subr.mxu0 0.0
        %7284 = vmatpush1.msra.mxu0 %v7248
        %7285 = vmatprep.subr.mxu0 0.0
        %7286 = vmatpush1.msra.mxu0 %v7249
        %7287 = vmatprep.subr.mxu0 0.0
        %7288 = vmatpush1.msra.mxu0 %v7250
        %7289 = vmatprep.subr.mxu0 0.0
        %7290 = vmatpush1.msra.mxu0 %v7251
        %7291 = vmatprep.subr.mxu0 0.0
        %7292 = vmatpush1.msra.mxu0 %v7252
        %7293 = vmatprep.subr.mxu0 0.0
        %7294 = vmatpush1.msra.mxu0 %v7253
        %7295 = vmatprep.subr.mxu0 0.0
        %7296 = vmatpush1.msra.mxu0 %v7254
        %7297 = vmatprep.subr.mxu0 0.0
        %7298 = vmatpush1.msra.mxu0 %v7255
        %7299 = vmatprep.subr.mxu0 0.0
        %7300 = vmatpush1.msra.mxu0 %v7256
        %7301 = vmatprep.subr.mxu0 0.0
        %7302 = vmatpush1.msra.mxu0 %v7257
        %7303 = vmatprep.subr.mxu0 0.0
        %7304 = vmatpush1.msra.mxu0 %v7258
        %7305 = vmatprep.subr.mxu0 0.0
        %7306 = vmatpush1.msra.mxu0 %v7259
        %7307 = vmatprep.subr.mxu0 0.0
        %7308 = vmatpush1.msra.mxu0 %v7260
        %7309 = vmatprep.subr.mxu0 0.0
        %7310 = vmatpush1.msra.mxu0 %v7261
        %7311 = vmatprep.subr.mxu0 0.0
        %7312 = vmatpush1.msra.mxu0 %v7262
        %7313 = vmatprep.subr.mxu0 0.0
        %7314 = vmatpush1.msra.mxu0 %v7263
        %7315 = vmatprep.subr.mxu0 0.0
        %7316 = vmatpush1.msra.mxu0 0.0
        %7317 = vmatprep.subr.mxu0 0.0
        %7318 = vmatpush1.msra.mxu0 0.0
        %7319 = vmatprep.subr.mxu0 0.0
        %7320 = vmatpush1.msra.mxu0 0.0
        %7321 = vmatprep.subr.mxu0 0.0
        %7322 = vmatpush1.msra.mxu0 0.0
        %7323 = vmatprep.subr.mxu0 0.0
        %7324 = vmatpush1.msra.mxu0 0.0
        %7325 = vmatprep.subr.mxu0 0.0
        %7326 = vmatpush1.msra.mxu0 0.0
        %7327 = vmatprep.subr.mxu0 0.0
        %7328 = vmatpush1.msra.mxu0 0.0
        %7329 = vmatprep.subr.mxu0 0.0
        %7330 = vmatpush1.msra.mxu0 0.0
        %7331 = vmatprep.subr.mxu0 0.0
        %7332 = vmatpush1.msra.mxu0 0.0
        %7333 = vmatprep.subr.mxu0 0.0
        %7334 = vmatpush1.msra.mxu0 0.0
        %7335 = vmatprep.subr.mxu0 0.0
        %7336 = vmatpush1.msra.mxu0 0.0
        %7337 = vmatprep.subr.mxu0 0.0
        %7338 = vmatpush1.msra.mxu0 0.0
        %7339 = vmatprep.mubr.f32.mxu0 %v7270
        %7340 = vmatmul.mubr.f32.gmra.mrb[0].mxu0 %v7265
        %v7341 = vpop.f32.mrb[0].mxu0
        %v7342 = vadd.f32 0.0, %v7341
        %v7343 = vpop.f32.mrb[0].mxu0
        %7344 = vmatprep.mubr.f32.mxu0 %v7273
        %7345 = vmatmul.mubr.f32.gmra.mrb[0].mxu0 %v7267
        %v7346 = vpop.f32.mrb[0].mxu0
        %v7347 = vadd.f32 0.0, %v7346
        %v7348 = vpop.f32.mrb[0].mxu0
        %7349 = vdwg.mxu0
        %v7350 = vadd.f32 %v6737, %v7342
        %v7351 = vadd.f32 %v6738, %v7347
        %v7352 = vld [vmem:[%s4] sm:$0xff]
        %v7353 = vld [vmem:[%s4 + $0x8] sm:$0xff]
        %7355 = vset.pattern.permute.xlu0 0
        %7356 = vperm.xlu0 %7355, %v7352
        %v7357 = vpop.permute.xlu0 %7356
        %7360 = vset.pattern.permute.xlu0 0
        %7361 = vperm.xlu0 %7360, %v7353
        %v7362 = vpop.permute.xlu0 %7361
        %v7364 = vadd.f32 %v7350, %v7357
        %v7365 = vadd.f32 %v7351, %v7362
        %v7366 = vmax.f32 %v7364, %v7365
        %v7367 = vrot.slane %v7366, 4
        %v7368 = vmax.f32 %v7366, %v7367
        %v7369 = vrot.slane %v7368, 2
        %v7370 = vmax.f32 %v7368, %v7369
        %v7371 = vrot.slane %v7370, 1
        %v7372 = vmax.f32 %v7370, %v7371
        %v7373 = vsub.f32 %v7364, %v7372
        %v7374 = vsub.f32 %v7365, %v7372
        %v7375 = vmul.f32 %v7373, 1.442695
        %v7376 = vpow.pop %v7375
        %v7377 = vmul.f32 %v7374, 1.442695
        %v7378 = vpow.pop %v7377
        %v7379 = vadd.f32 %v7376, %v7378
        %v7380 = vrot.slane %v7379, 4
        %v7381 = vadd.f32 %v7379, %v7380
        %v7382 = vrot.slane %v7381, 2
        %v7383 = vadd.f32 %v7381, %v7382
        %v7384 = vrot.slane %v7383, 1
        %v7385 = vadd.f32 %v7383, %v7384
        %v7386 = vlog2.pop %v7385
        %v7387 = vmul.f32 %v7386, 0.6931472
        %v7388 = vsub.f32 %v7373, %v7387
        %v7389 = vsub.f32 %v7374, %v7387
        %7390 = vst [vmem:[%s543] sm:$0xff] %v7388
        %7391 = vst [vmem:[%s543 + $0x8] sm:$0xff] %v7389
        %s7392 = sand.u32 %s134, 1
        %s7393 = sand.u32 %s134, 1
        %s7394 = smul.addr %s7393, 16
        %s7395 = scalar_lea.vmem [#allocation3], %s7394
        // Predicated region
        $region82: #{conv_model_forward.1} parent=76 // pred_check
          %p7396 = pneg %p144
        $region83: #{conv_model_forward.1} parent=76 // pred_check_branch
          %7398 = sbr.rel (%p7396) target = $region85
        $region84: #{conv_model_forward.1} parent=76 // pred_region
          %s7399 = smul.addr %s16, 8
          %s7400 = scalar_lea.vmem %s5, %s7399
          // Predicated region
          $region86: #{conv_model_forward.1} parent=84 // pred_check
            _
          $region87: #{conv_model_forward.1} parent=84 // pred_check_branch
            %7402 = sbr.rel (0) target = $region89
          $region88: #{conv_model_forward.1} parent=84 // pred_region
            // Predicated region
            $region90: #{conv_model_forward.1} parent=88 // pred_check
              _
            $region91: #{conv_model_forward.1} parent=88 // pred_check_branch
              %7404 = sbr.rel (0) target = $region93
            $region92: #{conv_model_forward.1} parent=88 // pred_region
              // Predicated region
              $region105: #{conv_model_forward.1} parent=92 // pred_check
                _
              $region106: #{conv_model_forward.1} parent=92 // pred_check_branch
                %7421 = sbr.rel (0) target = $region108
              $region107: #{conv_model_forward.1} parent=92 // pred_region
                loop: start=0, step=1, limit=1
                $region109: #{conv_model_forward.1} parent=107 // loop_pre_header
                  _
                $region110: #{conv_model_forward.1} parent=107 // loop_header
                  %s7423 = sphi 0, %s7427
                  %p7424 = scmp.ge.s32.totalorder %s7423, 1
                  %s7428 = sphi %s7395, %s7395
                  %s7429 = sphi %s7400, %s7400
                $region111: #{conv_model_forward.1} parent=107 // loop_header_branch
                  %7426 = sbr.rel (%p7424) target = $region115
                $region112: #{conv_model_forward.1} parent=107 // loop_body
                  %v7430 = vld [vmem:[%s7428] sm:$0xff]
                  %7431 = vst [vmem:[%s7429] sm:$0xff] %v7430
                  %v7432 = vld [vmem:[%s7428 + $0x8] sm:$0xff]
                  %7433 = vst [vmem:[%s7429 + $0x28] sm:$0xff] %v7432
                $region113: #{conv_model_forward.1} parent=107 // loop_footer
                  %s7427 = sadd.s32 1, %s7423
                $region114: #{conv_model_forward.1} parent=107 // loop_footer_branch
                  %7422 = sbr.rel target = $region110
                $region115: #{conv_model_forward.1} parent=107 // loop_exit
                  _
              $region108: #{conv_model_forward.1} parent=92 // pred_fallthru
                _
              // Predicated region
              $region116: #{conv_model_forward.1} parent=92 // pred_check
                _
              $region117: #{conv_model_forward.1} parent=92 // pred_check_branch
                %7435 = sbr.rel target = $region119
              $region118: #{conv_model_forward.1} parent=92 // pred_region
                _
              $region119: #{conv_model_forward.1} parent=92 // pred_fallthru
                _
            $region93: #{conv_model_forward.1} parent=88 // pred_fallthru
              _
            // Predicated region
            $region94: #{conv_model_forward.1} parent=88 // pred_check
              _
            $region95: #{conv_model_forward.1} parent=88 // pred_check_branch
              %7406 = sbr.rel target = $region97
            $region96: #{conv_model_forward.1} parent=88 // pred_region
              loop: start=0, step=1, limit=1
              $region98: #{conv_model_forward.1} parent=96 // loop_pre_header
                _
              $region99: #{conv_model_forward.1} parent=96 // loop_header
                %s7409 = sphi 0, %s7413
                %p7410 = scmp.ge.s32.totalorder %s7409, 1
                %s7414 = sphi %s7395, %s7395
                %s7415 = sphi %s7400, %s7400
              $region100: #{conv_model_forward.1} parent=96 // loop_header_branch
                %7412 = sbr.rel (%p7410) target = $region104
              $region101: #{conv_model_forward.1} parent=96 // loop_body
                %v7416 = vld [vmem:[%s7414] sm:$0xff]
                %7417 = vst [vmem:[%s7415] sm:$0xff] %v7416
                %v7418 = vld [vmem:[%s7414 + $0x8] sm:$0xff]
                %7419 = vst [vmem:[%s7415 + $0x28] sm:$0xff] %v7418
              $region102: #{conv_model_forward.1} parent=96 // loop_footer
                %s7413 = sadd.s32 1, %s7409
              $region103: #{conv_model_forward.1} parent=96 // loop_footer_branch
                %7408 = sbr.rel target = $region99
              $region104: #{conv_model_forward.1} parent=96 // loop_exit
                _
            $region97: #{conv_model_forward.1} parent=88 // pred_fallthru
              _
          $region89: #{conv_model_forward.1} parent=84 // pred_fallthru
            _
          %7436 = vnop
        $region85: #{conv_model_forward.1} parent=76 // pred_fallthru
          _
      $region77: #{conv_model_forward.1} parent=5 // pred_fallthru
        _
      %p7437 = scmp.le.s32.totalorder 2, %s11
      // Predicated region
      $region120: #{conv_model_forward.1} parent=5 // pred_check
        %p7438 = pneg %p7437
      $region121: #{conv_model_forward.1} parent=5 // pred_check_branch
        %7440 = sbr.rel (%p7438) target = $region123
      $region122: #{conv_model_forward.1} parent=5 // pred_region
        %s7441 = ssub.s32 %s11, 2
        // Predicated region
        $region124: #{conv_model_forward.1} parent=122 // pred_check
          %p7442 = pneg %p150
        $region125: #{conv_model_forward.1} parent=122 // pred_check_branch
          %7444 = sbr.rel (%p7442) target = $region127
        $region126: #{conv_model_forward.1} parent=122 // pred_region
          %s7445 = sand.u32 %s135, 1
          %s7446 = sand.u32 %s135, 1
          %s7447 = smul.addr %s7446, 16
          %s7448 = scalar_lea.vmem [#allocation3], %s7447
        $region127: #{conv_model_forward.1} parent=122 // pred_fallthru
          _
      $region123: #{conv_model_forward.1} parent=5 // pred_fallthru
        _
    $region6: #{conv_model_forward.1} parent=1 // loop_footer
      %s15 = sadd.s32 1, %s11
    $region7: #{conv_model_forward.1} parent=1 // loop_footer_branch
      %10 = sbr.rel target = $region3
    $region8: #{conv_model_forward.1} parent=1 // loop_exit
      _

</llo_original>
